<compile_context>
chip_gen: v6e
topology: v6e:2x2x1
jax: 0.10.0
libtpu: 0.0.40
codegen_flags: <defaults>
</compile_context>

<pallas_src>
import functools

import jax
import jax.numpy as jnp
import numpy as np
from jax import lax
from jax.experimental import pallas as pl
from jax.experimental.pallas import tpu as pltpu

HIDDEN = 128   # LSTM hidden size (2 layers)
MLP1 = 64
MLP2 = 64
OUT = 4


def lstm_mlp_kernel(x_ref,
                    wih0_ref, b0_ref, whh0_ref,
                    w1_ref, b1_ref,
                    wa_ref, ba_ref, wb_ref, bb_ref, wc_ref, bc_ref,
                    out_ref,
                    gin_ref, h1slab_ref,
                    *, batch, seq):
    H = HIDDEN

    # ---- Hoisted layer-0 input projection: one big batched matmul. ----
    # x_ref is time-major flattened: row t*batch + b == (time t, batch b).
    gin_ref[...] = (jnp.dot(x_ref[...], wih0_ref[...],
                            preferred_element_type=jnp.float32)
                    + b0_ref[...])

    def gates(g):
        i = jax.nn.sigmoid(g[:, 0 * H:1 * H])
        f = jax.nn.sigmoid(g[:, 1 * H:2 * H])
        gg = jnp.tanh(g[:, 2 * H:3 * H])
        o = jax.nn.sigmoid(g[:, 3 * H:4 * H])
        return i, f, gg, o

    def step(t, carry):
        h0, c0, h1, c1 = carry
        row = pl.multiple_of(t * batch, batch)   # batch=8 -> sublane aligned

        # ---- LSTM layer 0: only the recurrent matmul is on the serial path.
        g0 = gin_ref[pl.ds(row, batch), :] + jnp.dot(
            h0, whh0_ref[...], preferred_element_type=jnp.float32)
        i0, f0, gg0, o0 = gates(g0)
        c0 = f0 * c0 + i0 * gg0
        h0 = o0 * jnp.tanh(c0)

        # ---- LSTM layer 1: fused [h0, h1] @ [Wih1; Whh1] -> one MXU push.
        hcat = jnp.concatenate([h0, h1], axis=-1)            # (B, 2H)
        g1 = jnp.dot(hcat, w1_ref[...],
                     preferred_element_type=jnp.float32) + b1_ref[...]
        i1, f1, gg1, o1 = gates(g1)
        c1 = f1 * c1 + i1 * gg1
        h1 = o1 * jnp.tanh(c1)

        # Lane-dense (128-wide) per-step store; MLP head runs after the loop.
        h1slab_ref[pl.ds(row, batch), :] = h1
        return (h0, c0, h1, c1)

    z = jnp.zeros((batch, H), jnp.float32)
    lax.fori_loop(0, seq, step, (z, z, z, z), unroll=True)

    # ---- Batched MLP head over the whole (T*B, 128) hidden-state slab. ----
    y = jnp.tanh(jnp.dot(h1slab_ref[...], wa_ref[...],
                         preferred_element_type=jnp.float32) + ba_ref[...])
    y = jnp.tanh(jnp.dot(y, wb_ref[...],
                         preferred_element_type=jnp.float32) + bb_ref[...])
    y = jnp.dot(y, wc_ref[...], preferred_element_type=jnp.float32) + bc_ref[...]
    out_ref[...] = y.astype(out_ref.dtype)


@jax.jit
def rnn_forward(x, params):
    """x: (B, T, D) float32 -> (B, T, 4) float32."""
    B, T, D = x.shape
    (wih0, whh0, b0, wih1, whh1, b1, wa, ba, wb, bb, wc, bc) = params

    # Time-major, flattened: row t*B + b is (time t, batch b).
    x2d = jnp.transpose(x, (1, 0, 2)).reshape(T * B, D)
    # Pre-stack layer-1 weights so g1 = [h0, h1] @ [Wih1; Whh1] + b1.
    w1 = jnp.concatenate([wih1, whh1], axis=0)               # (2H, 4H)

    full = lambda a: pl.BlockSpec(a.shape, lambda *_: (0,) * a.ndim)
    kernel = functools.partial(lstm_mlp_kernel, batch=B, seq=T)

    out2d = pl.pallas_call(
        kernel,
        out_shape=jax.ShapeDtypeStruct((T * B, OUT), jnp.float32),
        grid_spec=pltpu.PrefetchScalarGridSpec(
            num_scalar_prefetch=0,
            grid=(1,),   # whole sequence in one kernel invocation
            in_specs=[
                full(x2d),
                full(wih0), full(b0), full(whh0),
                full(w1), full(b1),
                full(wa), full(ba), full(wb), full(bb), full(wc), full(bc),
            ],
            out_specs=pl.BlockSpec((T * B, OUT), lambda i: (0, 0)),
            scratch_shapes=[
                pltpu.VMEM((T * B, 4 * HIDDEN), jnp.float32),  # hoisted x@Wih0+b0
                pltpu.VMEM((T * B, HIDDEN), jnp.float32),      # per-step h1 slab
            ],
        ),
        compiler_params=pltpu.CompilerParams(
            dimension_semantics=("arbitrary",)),
    )(x2d, wih0, b0, whh0, w1, b1, wa, ba, wb, bb, wc, bc)

    return jnp.transpose(out2d.reshape(T, B, OUT), (1, 0, 2))  # (B, T, 4)


def make_params(key, input_size):
    """Deterministic parameter init matching the torch module's shapes.

    All matmul weights are stored pre-transposed: y = x @ W + b.
    LSTM biases b_ih and b_hh are fused (b = b_ih + b_hh).
    """
    ks = jax.random.split(key, 12)
    s = 0.1
    wih0 = s * jax.random.normal(ks[0], (input_size, 4 * HIDDEN), jnp.float32)
    whh0 = s * jax.random.normal(ks[1], (HIDDEN, 4 * HIDDEN), jnp.float32)
    b0 = s * jax.random.normal(ks[2], (1, 4 * HIDDEN), jnp.float32)
    wih1 = s * jax.random.normal(ks[3], (HIDDEN, 4 * HIDDEN), jnp.float32)
    whh1 = s * jax.random.normal(ks[4], (HIDDEN, 4 * HIDDEN), jnp.float32)
    b1 = s * jax.random.normal(ks[5], (1, 4 * HIDDEN), jnp.float32)
    wa = s * jax.random.normal(ks[6], (HIDDEN, MLP1), jnp.float32)
    ba = s * jax.random.normal(ks[7], (1, MLP1), jnp.float32)
    wb = s * jax.random.normal(ks[8], (MLP1, MLP2), jnp.float32)
    bb = s * jax.random.normal(ks[9], (1, MLP2), jnp.float32)
    wc = s * jax.random.normal(ks[10], (MLP2, OUT), jnp.float32)
    bc = s * jax.random.normal(ks[11], (1, OUT), jnp.float32)
    return (wih0, whh0, b0, wih1, whh1, b1, wa, ba, wb, bb, wc, bc)


def rnn_forward_ref(x, params):
    """Pure-JAX reference (same math as torch.nn.LSTM with zero init state)."""
    (wih0, whh0, b0, wih1, whh1, b1, wa, ba, wb, bb, wc, bc) = params
    B, T, D = x.shape

    def cell(x_t, h, c, wih, whh, b):
        g = x_t @ wih + h @ whh + b
        i = jax.nn.sigmoid(g[:, 0 * HIDDEN:1 * HIDDEN])
        f = jax.nn.sigmoid(g[:, 1 * HIDDEN:2 * HIDDEN])
        gg = jnp.tanh(g[:, 2 * HIDDEN:3 * HIDDEN])
        o = jax.nn.sigmoid(g[:, 3 * HIDDEN:4 * HIDDEN])
        c = f * c + i * gg
        h = o * jnp.tanh(c)
        return h, c

    h0 = jnp.zeros((B, HIDDEN), jnp.float32)
    c0 = jnp.zeros((B, HIDDEN), jnp.float32)
    h1 = jnp.zeros((B, HIDDEN), jnp.float32)
    c1 = jnp.zeros((B, HIDDEN), jnp.float32)
    outs = []
    for t in range(T):
        h0, c0 = cell(x[:, t, :], h0, c0, wih0, whh0, b0)
        h1, c1 = cell(h0, h1, c1, wih1, whh1, b1)
        y = jnp.tanh(h1 @ wa + ba)
        y = jnp.tanh(y @ wb + bb)
        y = y @ wc + bc
        outs.append(y)
    return jnp.stack(outs, axis=1)


if __name__ == "__main__":
    B, T, D = 8, 8, 16
    key = jax.random.PRNGKey(0)
    kx, kp = jax.random.split(key)
    x = jax.random.normal(kx, (B, T, D), jnp.float32)
    params = make_params(kp, D)

    out = jax.block_until_ready(rnn_forward(x, params))

    ref = rnn_forward_ref(x, params)
    assert out.shape == (B, T, OUT), out.shape
    np.testing.assert_allclose(np.asarray(out), np.asarray(ref),
                               rtol=1e-4, atol=1e-4)
    print("KERNEL_OK")
</pallas_src>

<mosaic_0001>
module attributes {stable_mosaic.version = 11 : i64} {
  func.func @lstm_mlp_kernel(%arg0: i32, %arg1: memref<64x16xf32, #tpu.memory_space<vmem>>, %arg2: memref<16x512xf32, #tpu.memory_space<vmem>>, %arg3: memref<1x512xf32, #tpu.memory_space<vmem>>, %arg4: memref<128x512xf32, #tpu.memory_space<vmem>>, %arg5: memref<256x512xf32, #tpu.memory_space<vmem>>, %arg6: memref<1x512xf32, #tpu.memory_space<vmem>>, %arg7: memref<128x64xf32, #tpu.memory_space<vmem>>, %arg8: memref<1x64xf32, #tpu.memory_space<vmem>>, %arg9: memref<64x64xf32, #tpu.memory_space<vmem>>, %arg10: memref<1x64xf32, #tpu.memory_space<vmem>>, %arg11: memref<64x4xf32, #tpu.memory_space<vmem>>, %arg12: memref<1x4xf32, #tpu.memory_space<vmem>>, %arg13: memref<64x4xf32, #tpu.memory_space<vmem>>, %arg14: memref<64x512xf32, #tpu.memory_space<vmem>>, %arg15: memref<64x128xf32, #tpu.memory_space<vmem>>) attributes {dimension_semantics = [#tpu.dimension_semantics<arbitrary>], iteration_bounds = array<i64: 1>, scalar_prefetch = 0 : i64, scratch_operands = 2 : i64, tpu.core_type = #tpu.core_type<tc>, window_params = [{pipeline_mode = #tpu.pipeline_mode<synchronous>, transform_indices = @transform_0, window_bounds = array<i64: 64, 16>}, {pipeline_mode = #tpu.pipeline_mode<synchronous>, transform_indices = @transform_1, window_bounds = array<i64: 16, 512>}, {pipeline_mode = #tpu.pipeline_mode<synchronous>, transform_indices = @transform_2, window_bounds = array<i64: 1, 512>}, {pipeline_mode = #tpu.pipeline_mode<synchronous>, transform_indices = @transform_3, window_bounds = array<i64: 128, 512>}, {pipeline_mode = #tpu.pipeline_mode<synchronous>, transform_indices = @transform_4, window_bounds = array<i64: 256, 512>}, {pipeline_mode = #tpu.pipeline_mode<synchronous>, transform_indices = @transform_5, window_bounds = array<i64: 1, 512>}, {pipeline_mode = #tpu.pipeline_mode<synchronous>, transform_indices = @transform_6, window_bounds = array<i64: 128, 64>}, {pipeline_mode = #tpu.pipeline_mode<synchronous>, transform_indices = @transform_7, window_bounds = array<i64: 1, 64>}, {pipeline_mode = #tpu.pipeline_mode<synchronous>, transform_indices = @transform_8, window_bounds = array<i64: 64, 64>}, {pipeline_mode = #tpu.pipeline_mode<synchronous>, transform_indices = @transform_9, window_bounds = array<i64: 1, 64>}, {pipeline_mode = #tpu.pipeline_mode<synchronous>, transform_indices = @transform_10, window_bounds = array<i64: 64, 4>}, {pipeline_mode = #tpu.pipeline_mode<synchronous>, transform_indices = @transform_11, window_bounds = array<i64: 1, 4>}, {pipeline_mode = #tpu.pipeline_mode<synchronous>, transform_indices = @transform_12, window_bounds = array<i64: 64, 4>}]} {
    %c0 = arith.constant 0 : index
    %c0_0 = arith.constant 0 : index
    %0 = vector.load %arg1[%c0, %c0_0] : memref<64x16xf32, #tpu.memory_space<vmem>>, vector<64x16xf32>
    %c0_1 = arith.constant 0 : index
    %c0_2 = arith.constant 0 : index
    %1 = vector.load %arg2[%c0_1, %c0_2] : memref<16x512xf32, #tpu.memory_space<vmem>>, vector<16x512xf32>
    %cst = arith.constant dense<0.000000e+00> : vector<64x512xf32>
    %2 = tpu.matmul %0, %1, %cst {dimension_numbers = #tpu.dot_dimension_numbers<[1], [0], [0], [1], [0, 0, 1, 1], [], []>} : vector<64x16xf32>, vector<16x512xf32>, vector<64x512xf32> -> vector<64x512xf32>
    %c0_3 = arith.constant 0 : index
    %c0_4 = arith.constant 0 : index
    %3 = vector.load %arg3[%c0_3, %c0_4] : memref<1x512xf32, #tpu.memory_space<vmem>>, vector<1x512xf32>
    %4 = vector.broadcast %3 : vector<1x512xf32> to vector<64x512xf32>
    %5 = arith.addf %2, %4 : vector<64x512xf32>
    %c0_5 = arith.constant 0 : index
    %c0_6 = arith.constant 0 : index
    %6 = vector.load %arg14[%c0_5, %c0_6] : memref<64x512xf32, #tpu.memory_space<vmem>>, vector<64x512xf32>
    tpu.vector_store %arg14[%c0_5, %c0_6], %5 {strides = array<i32>} : memref<64x512xf32, #tpu.memory_space<vmem>>, vector<64x512xf32>,
    %cst_7 = arith.constant 0.000000e+00 : f32
    %7 = vector.broadcast %cst_7 : f32 to vector<8x128xf32>
    %c0_i32 = arith.constant 0 : i32
    %c8_i32 = arith.constant 8 : i32
    %8 = arith.muli %c0_i32, %c8_i32 : i32
    %9 = tpu.assume_multiple %8, 8 : i32
    %10 = arith.index_cast %9 : i32 to index
    %c0_8 = arith.constant 0 : index
    %11 = vector.load %arg14[%10, %c0_8] : memref<64x512xf32, #tpu.memory_space<vmem>>, vector<8x512xf32>
    %c0_9 = arith.constant 0 : index
    %c0_10 = arith.constant 0 : index
    %12 = vector.load %arg4[%c0_9, %c0_10] : memref<128x512xf32, #tpu.memory_space<vmem>>, vector<128x512xf32>
    %cst_11 = arith.constant dense<0.000000e+00> : vector<8x512xf32>
    %13 = tpu.matmul %7, %12, %cst_11 {dimension_numbers = #tpu.dot_dimension_numbers<[1], [0], [0], [1], [0, 0, 1, 1], [], []>} : vector<8x128xf32>, vector<128x512xf32>, vector<8x512xf32> -> vector<8x512xf32>
    %14 = arith.addf %11, %13 : vector<8x512xf32>
    %15 = vector.extract_strided_slice %14 {offsets = [0, 0], sizes = [8, 128], strides = [1, 1]} : vector<8x512xf32> to vector<8x128xf32>
    %16 = arith.negf %15 : vector<8x128xf32>
    %17 = math.exp %16 : vector<8x128xf32>
    %cst_12 = arith.constant 1.000000e+00 : f32
    %18 = vector.broadcast %cst_12 : f32 to vector<8x128xf32>
    %19 = arith.addf %18, %17 : vector<8x128xf32>
    %20 = arith.divf %18, %19 : vector<8x128xf32>
    %21 = vector.extract_strided_slice %14 {offsets = [0, 128], sizes = [8, 128], strides = [1, 1]} : vector<8x512xf32> to vector<8x128xf32>
    %22 = arith.negf %21 : vector<8x128xf32>
    %23 = math.exp %22 : vector<8x128xf32>
    %cst_13 = arith.constant 1.000000e+00 : f32
    %24 = vector.broadcast %cst_13 : f32 to vector<8x128xf32>
    %25 = arith.addf %24, %23 : vector<8x128xf32>
    %26 = arith.divf %24, %25 : vector<8x128xf32>
    %27 = vector.extract_strided_slice %14 {offsets = [0, 256], sizes = [8, 128], strides = [1, 1]} : vector<8x512xf32> to vector<8x128xf32>
    %28 = math.tanh %27 : vector<8x128xf32>
    %29 = vector.extract_strided_slice %14 {offsets = [0, 384], sizes = [8, 128], strides = [1, 1]} : vector<8x512xf32> to vector<8x128xf32>
    %30 = arith.negf %29 : vector<8x128xf32>
    %31 = math.exp %30 : vector<8x128xf32>
    %cst_14 = arith.constant 1.000000e+00 : f32
    %32 = vector.broadcast %cst_14 : f32 to vector<8x128xf32>
    %33 = arith.addf %32, %31 : vector<8x128xf32>
    %34 = arith.divf %32, %33 : vector<8x128xf32>
    %35 = arith.mulf %26, %7 : vector<8x128xf32>
    %36 = arith.mulf %20, %28 : vector<8x128xf32>
    %37 = arith.addf %35, %36 : vector<8x128xf32>
    %38 = math.tanh %37 : vector<8x128xf32>
    %39 = arith.mulf %34, %38 : vector<8x128xf32>
    %40 = tpu.concatenate %39, %7 in 1 : vector<8x128xf32>, vector<8x128xf32> -> vector<8x256xf32>
    %c0_15 = arith.constant 0 : index
    %c0_16 = arith.constant 0 : index
    %41 = vector.load %arg5[%c0_15, %c0_16] : memref<256x512xf32, #tpu.memory_space<vmem>>, vector<256x512xf32>
    %cst_17 = arith.constant dense<0.000000e+00> : vector<8x512xf32>
    %42 = tpu.matmul %40, %41, %cst_17 {dimension_numbers = #tpu.dot_dimension_numbers<[1], [0], [0], [1], [0, 0, 1, 1], [], []>} : vector<8x256xf32>, vector<256x512xf32>, vector<8x512xf32> -> vector<8x512xf32>
    %c0_18 = arith.constant 0 : index
    %c0_19 = arith.constant 0 : index
    %43 = vector.load %arg6[%c0_18, %c0_19] : memref<1x512xf32, #tpu.memory_space<vmem>>, vector<1x512xf32>
    %44 = vector.broadcast %43 : vector<1x512xf32> to vector<8x512xf32>
    %45 = arith.addf %42, %44 : vector<8x512xf32>
    %46 = vector.extract_strided_slice %45 {offsets = [0, 0], sizes = [8, 128], strides = [1, 1]} : vector<8x512xf32> to vector<8x128xf32>
    %47 = arith.negf %46 : vector<8x128xf32>
    %48 = math.exp %47 : vector<8x128xf32>
    %cst_20 = arith.constant 1.000000e+00 : f32
    %49 = vector.broadcast %cst_20 : f32 to vector<8x128xf32>
    %50 = arith.addf %49, %48 : vector<8x128xf32>
    %51 = arith.divf %49, %50 : vector<8x128xf32>
    %52 = vector.extract_strided_slice %45 {offsets = [0, 128], sizes = [8, 128], strides = [1, 1]} : vector<8x512xf32> to vector<8x128xf32>
    %53 = arith.negf %52 : vector<8x128xf32>
    %54 = math.exp %53 : vector<8x128xf32>
    %cst_21 = arith.constant 1.000000e+00 : f32
    %55 = vector.broadcast %cst_21 : f32 to vector<8x128xf32>
    %56 = arith.addf %55, %54 : vector<8x128xf32>
    %57 = arith.divf %55, %56 : vector<8x128xf32>
    %58 = vector.extract_strided_slice %45 {offsets = [0, 256], sizes = [8, 128], strides = [1, 1]} : vector<8x512xf32> to vector<8x128xf32>
    %59 = math.tanh %58 : vector<8x128xf32>
    %60 = vector.extract_strided_slice %45 {offsets = [0, 384], sizes = [8, 128], strides = [1, 1]} : vector<8x512xf32> to vector<8x128xf32>
    %61 = arith.negf %60 : vector<8x128xf32>
    %62 = math.exp %61 : vector<8x128xf32>
    %cst_22 = arith.constant 1.000000e+00 : f32
    %63 = vector.broadcast %cst_22 : f32 to vector<8x128xf32>
    %64 = arith.addf %63, %62 : vector<8x128xf32>
    %65 = arith.divf %63, %64 : vector<8x128xf32>
    %66 = arith.mulf %57, %7 : vector<8x128xf32>
    %67 = arith.mulf %51, %59 : vector<8x128xf32>
    %68 = arith.addf %66, %67 : vector<8x128xf32>
    %69 = math.tanh %68 : vector<8x128xf32>
    %70 = arith.mulf %65, %69 : vector<8x128xf32>
    %71 = arith.index_cast %9 : i32 to index
    %c0_23 = arith.constant 0 : index
    %72 = vector.load %arg15[%71, %c0_23] : memref<64x128xf32, #tpu.memory_space<vmem>>, vector<8x128xf32>
    tpu.vector_store %arg15[%71, %c0_23], %70 {strides = array<i32>} : memref<64x128xf32, #tpu.memory_space<vmem>>, vector<8x128xf32>,
    %c1_i32 = arith.constant 1 : i32
    %c8_i32_24 = arith.constant 8 : i32
    %73 = arith.muli %c1_i32, %c8_i32_24 : i32
    %74 = tpu.assume_multiple %73, 8 : i32
    %75 = arith.index_cast %74 : i32 to index
    %c0_25 = arith.constant 0 : index
    %76 = vector.load %arg14[%75, %c0_25] : memref<64x512xf32, #tpu.memory_space<vmem>>, vector<8x512xf32>
    %c0_26 = arith.constant 0 : index
    %c0_27 = arith.constant 0 : index
    %77 = vector.load %arg4[%c0_26, %c0_27] : memref<128x512xf32, #tpu.memory_space<vmem>>, vector<128x512xf32>
    %cst_28 = arith.constant dense<0.000000e+00> : vector<8x512xf32>
    %78 = tpu.matmul %39, %77, %cst_28 {dimension_numbers = #tpu.dot_dimension_numbers<[1], [0], [0], [1], [0, 0, 1, 1], [], []>} : vector<8x128xf32>, vector<128x512xf32>, vector<8x512xf32> -> vector<8x512xf32>
    %79 = arith.addf %76, %78 : vector<8x512xf32>
    %80 = vector.extract_strided_slice %79 {offsets = [0, 0], sizes = [8, 128], strides = [1, 1]} : vector<8x512xf32> to vector<8x128xf32>
    %81 = arith.negf %80 : vector<8x128xf32>
    %82 = math.exp %81 : vector<8x128xf32>
    %cst_29 = arith.constant 1.000000e+00 : f32
    %83 = vector.broadcast %cst_29 : f32 to vector<8x128xf32>
    %84 = arith.addf %83, %82 : vector<8x128xf32>
    %85 = arith.divf %83, %84 : vector<8x128xf32>
    %86 = vector.extract_strided_slice %79 {offsets = [0, 128], sizes = [8, 128], strides = [1, 1]} : vector<8x512xf32> to vector<8x128xf32>
    %87 = arith.negf %86 : vector<8x128xf32>
    %88 = math.exp %87 : vector<8x128xf32>
    %cst_30 = arith.constant 1.000000e+00 : f32
    %89 = vector.broadcast %cst_30 : f32 to vector<8x128xf32>
    %90 = arith.addf %89, %88 : vector<8x128xf32>
    %91 = arith.divf %89, %90 : vector<8x128xf32>
    %92 = vector.extract_strided_slice %79 {offsets = [0, 256], sizes = [8, 128], strides = [1, 1]} : vector<8x512xf32> to vector<8x128xf32>
    %93 = math.tanh %92 : vector<8x128xf32>
    %94 = vector.extract_strided_slice %79 {offsets = [0, 384], sizes = [8, 128], strides = [1, 1]} : vector<8x512xf32> to vector<8x128xf32>
    %95 = arith.negf %94 : vector<8x128xf32>
    %96 = math.exp %95 : vector<8x128xf32>
    %cst_31 = arith.constant 1.000000e+00 : f32
    %97 = vector.broadcast %cst_31 : f32 to vector<8x128xf32>
    %98 = arith.addf %97, %96 : vector<8x128xf32>
    %99 = arith.divf %97, %98 : vector<8x128xf32>
    %100 = arith.mulf %91, %37 : vector<8x128xf32>
    %101 = arith.mulf %85, %93 : vector<8x128xf32>
    %102 = arith.addf %100, %101 : vector<8x128xf32>
    %103 = math.tanh %102 : vector<8x128xf32>
    %104 = arith.mulf %99, %103 : vector<8x128xf32>
    %105 = tpu.concatenate %104, %70 in 1 : vector<8x128xf32>, vector<8x128xf32> -> vector<8x256xf32>
    %c0_32 = arith.constant 0 : index
    %c0_33 = arith.constant 0 : index
    %106 = vector.load %arg5[%c0_32, %c0_33] : memref<256x512xf32, #tpu.memory_space<vmem>>, vector<256x512xf32>
    %cst_34 = arith.constant dense<0.000000e+00> : vector<8x512xf32>
    %107 = tpu.matmul %105, %106, %cst_34 {dimension_numbers = #tpu.dot_dimension_numbers<[1], [0], [0], [1], [0, 0, 1, 1], [], []>} : vector<8x256xf32>, vector<256x512xf32>, vector<8x512xf32> -> vector<8x512xf32>
    %c0_35 = arith.constant 0 : index
    %c0_36 = arith.constant 0 : index
    %108 = vector.load %arg6[%c0_35, %c0_36] : memref<1x512xf32, #tpu.memory_space<vmem>>, vector<1x512xf32>
    %109 = vector.broadcast %108 : vector<1x512xf32> to vector<8x512xf32>
    %110 = arith.addf %107, %109 : vector<8x512xf32>
    %111 = vector.extract_strided_slice %110 {offsets = [0, 0], sizes = [8, 128], strides = [1, 1]} : vector<8x512xf32> to vector<8x128xf32>
    %112 = arith.negf %111 : vector<8x128xf32>
    %113 = math.exp %112 : vector<8x128xf32>
    %cst_37 = arith.constant 1.000000e+00 : f32
    %114 = vector.broadcast %cst_37 : f32 to vector<8x128xf32>
    %115 = arith.addf %114, %113 : vector<8x128xf32>
    %116 = arith.divf %114, %115 : vector<8x128xf32>
    %117 = vector.extract_strided_slice %110 {offsets = [0, 128], sizes = [8, 128], strides = [1, 1]} : vector<8x512xf32> to vector<8x128xf32>
    %118 = arith.negf %117 : vector<8x128xf32>
    %119 = math.exp %118 : vector<8x128xf32>
    %cst_38 = arith.constant 1.000000e+00 : f32
    %120 = vector.broadcast %cst_38 : f32 to vector<8x128xf32>
    %121 = arith.addf %120, %119 : vector<8x128xf32>
    %122 = arith.divf %120, %121 : vector<8x128xf32>
    %123 = vector.extract_strided_slice %110 {offsets = [0, 256], sizes = [8, 128], strides = [1, 1]} : vector<8x512xf32> to vector<8x128xf32>
    %124 = math.tanh %123 : vector<8x128xf32>
    %125 = vector.extract_strided_slice %110 {offsets = [0, 384], sizes = [8, 128], strides = [1, 1]} : vector<8x512xf32> to vector<8x128xf32>
    %126 = arith.negf %125 : vector<8x128xf32>
    %127 = math.exp %126 : vector<8x128xf32>
    %cst_39 = arith.constant 1.000000e+00 : f32
    %128 = vector.broadcast %cst_39 : f32 to vector<8x128xf32>
    %129 = arith.addf %128, %127 : vector<8x128xf32>
    %130 = arith.divf %128, %129 : vector<8x128xf32>
    %131 = arith.mulf %122, %68 : vector<8x128xf32>
    %132 = arith.mulf %116, %124 : vector<8x128xf32>
    %133 = arith.addf %131, %132 : vector<8x128xf32>
    %134 = math.tanh %133 : vector<8x128xf32>
    %135 = arith.mulf %130, %134 : vector<8x128xf32>
    %136 = arith.index_cast %74 : i32 to index
    %c0_40 = arith.constant 0 : index
    %137 = vector.load %arg15[%136, %c0_40] : memref<64x128xf32, #tpu.memory_space<vmem>>, vector<8x128xf32>
    tpu.vector_store %arg15[%136, %c0_40], %135 {strides = array<i32>} : memref<64x128xf32, #tpu.memory_space<vmem>>, vector<8x128xf32>,
    %c2_i32 = arith.constant 2 : i32
    %c8_i32_41 = arith.constant 8 : i32
    %138 = arith.muli %c2_i32, %c8_i32_41 : i32
    %139 = tpu.assume_multiple %138, 8 : i32
    %140 = arith.index_cast %139 : i32 to index
    %c0_42 = arith.constant 0 : index
    %141 = vector.load %arg14[%140, %c0_42] : memref<64x512xf32, #tpu.memory_space<vmem>>, vector<8x512xf32>
    %c0_43 = arith.constant 0 : index
    %c0_44 = arith.constant 0 : index
    %142 = vector.load %arg4[%c0_43, %c0_44] : memref<128x512xf32, #tpu.memory_space<vmem>>, vector<128x512xf32>
    %cst_45 = arith.constant dense<0.000000e+00> : vector<8x512xf32>
    %143 = tpu.matmul %104, %142, %cst_45 {dimension_numbers = #tpu.dot_dimension_numbers<[1], [0], [0], [1], [0, 0, 1, 1], [], []>} : vector<8x128xf32>, vector<128x512xf32>, vector<8x512xf32> -> vector<8x512xf32>
    %144 = arith.addf %141, %143 : vector<8x512xf32>
    %145 = vector.extract_strided_slice %144 {offsets = [0, 0], sizes = [8, 128], strides = [1, 1]} : vector<8x512xf32> to vector<8x128xf32>
    %146 = arith.negf %145 : vector<8x128xf32>
    %147 = math.exp %146 : vector<8x128xf32>
    %cst_46 = arith.constant 1.000000e+00 : f32
    %148 = vector.broadcast %cst_46 : f32 to vector<8x128xf32>
    %149 = arith.addf %148, %147 : vector<8x128xf32>
    %150 = arith.divf %148, %149 : vector<8x128xf32>
    %151 = vector.extract_strided_slice %144 {offsets = [0, 128], sizes = [8, 128], strides = [1, 1]} : vector<8x512xf32> to vector<8x128xf32>
    %152 = arith.negf %151 : vector<8x128xf32>
    %153 = math.exp %152 : vector<8x128xf32>
    %cst_47 = arith.constant 1.000000e+00 : f32
    %154 = vector.broadcast %cst_47 : f32 to vector<8x128xf32>
    %155 = arith.addf %154, %153 : vector<8x128xf32>
    %156 = arith.divf %154, %155 : vector<8x128xf32>
    %157 = vector.extract_strided_slice %144 {offsets = [0, 256], sizes = [8, 128], strides = [1, 1]} : vector<8x512xf32> to vector<8x128xf32>
    %158 = math.tanh %157 : vector<8x128xf32>
    %159 = vector.extract_strided_slice %144 {offsets = [0, 384], sizes = [8, 128], strides = [1, 1]} : vector<8x512xf32> to vector<8x128xf32>
    %160 = arith.negf %159 : vector<8x128xf32>
    %161 = math.exp %160 : vector<8x128xf32>
    %cst_48 = arith.constant 1.000000e+00 : f32
    %162 = vector.broadcast %cst_48 : f32 to vector<8x128xf32>
    %163 = arith.addf %162, %161 : vector<8x128xf32>
    %164 = arith.divf %162, %163 : vector<8x128xf32>
    %165 = arith.mulf %156, %102 : vector<8x128xf32>
    %166 = arith.mulf %150, %158 : vector<8x128xf32>
    %167 = arith.addf %165, %166 : vector<8x128xf32>
    %168 = math.tanh %167 : vector<8x128xf32>
    %169 = arith.mulf %164, %168 : vector<8x128xf32>
    %170 = tpu.concatenate %169, %135 in 1 : vector<8x128xf32>, vector<8x128xf32> -> vector<8x256xf32>
    %c0_49 = arith.constant 0 : index
    %c0_50 = arith.constant 0 : index
    %171 = vector.load %arg5[%c0_49, %c0_50] : memref<256x512xf32, #tpu.memory_space<vmem>>, vector<256x512xf32>
    %cst_51 = arith.constant dense<0.000000e+00> : vector<8x512xf32>
    %172 = tpu.matmul %170, %171, %cst_51 {dimension_numbers = #tpu.dot_dimension_numbers<[1], [0], [0], [1], [0, 0, 1, 1], [], []>} : vector<8x256xf32>, vector<256x512xf32>, vector<8x512xf32> -> vector<8x512xf32>
    %c0_52 = arith.constant 0 : index
    %c0_53 = arith.constant 0 : index
    %173 = vector.load %arg6[%c0_52, %c0_53] : memref<1x512xf32, #tpu.memory_space<vmem>>, vector<1x512xf32>
    %174 = vector.broadcast %173 : vector<1x512xf32> to vector<8x512xf32>
    %175 = arith.addf %172, %174 : vector<8x512xf32>
    %176 = vector.extract_strided_slice %175 {offsets = [0, 0], sizes = [8, 128], strides = [1, 1]} : vector<8x512xf32> to vector<8x128xf32>
    %177 = arith.negf %176 : vector<8x128xf32>
    %178 = math.exp %177 : vector<8x128xf32>
    %cst_54 = arith.constant 1.000000e+00 : f32
    %179 = vector.broadcast %cst_54 : f32 to vector<8x128xf32>
    %180 = arith.addf %179, %178 : vector<8x128xf32>
    %181 = arith.divf %179, %180 : vector<8x128xf32>
    %182 = vector.extract_strided_slice %175 {offsets = [0, 128], sizes = [8, 128], strides = [1, 1]} : vector<8x512xf32> to vector<8x128xf32>
    %183 = arith.negf %182 : vector<8x128xf32>
    %184 = math.exp %183 : vector<8x128xf32>
    %cst_55 = arith.constant 1.000000e+00 : f32
    %185 = vector.broadcast %cst_55 : f32 to vector<8x128xf32>
    %186 = arith.addf %185, %184 : vector<8x128xf32>
    %187 = arith.divf %185, %186 : vector<8x128xf32>
    %188 = vector.extract_strided_slice %175 {offsets = [0, 256], sizes = [8, 128], strides = [1, 1]} : vector<8x512xf32> to vector<8x128xf32>
    %189 = math.tanh %188 : vector<8x128xf32>
    %190 = vector.extract_strided_slice %175 {offsets = [0, 384], sizes = [8, 128], strides = [1, 1]} : vector<8x512xf32> to vector<8x128xf32>
    %191 = arith.negf %190 : vector<8x128xf32>
    %192 = math.exp %191 : vector<8x128xf32>
    %cst_56 = arith.constant 1.000000e+00 : f32
    %193 = vector.broadcast %cst_56 : f32 to vector<8x128xf32>
    %194 = arith.addf %193, %192 : vector<8x128xf32>
    %195 = arith.divf %193, %194 : vector<8x128xf32>
    %196 = arith.mulf %187, %133 : vector<8x128xf32>
    %197 = arith.mulf %181, %189 : vector<8x128xf32>
    %198 = arith.addf %196, %197 : vector<8x128xf32>
    %199 = math.tanh %198 : vector<8x128xf32>
    %200 = arith.mulf %195, %199 : vector<8x128xf32>
    %201 = arith.index_cast %139 : i32 to index
    %c0_57 = arith.constant 0 : index
    %202 = vector.load %arg15[%201, %c0_57] : memref<64x128xf32, #tpu.memory_space<vmem>>, vector<8x128xf32>
    tpu.vector_store %arg15[%201, %c0_57], %200 {strides = array<i32>} : memref<64x128xf32, #tpu.memory_space<vmem>>, vector<8x128xf32>,
    %c3_i32 = arith.constant 3 : i32
    %c8_i32_58 = arith.constant 8 : i32
    %203 = arith.muli %c3_i32, %c8_i32_58 : i32
    %204 = tpu.assume_multiple %203, 8 : i32
    %205 = arith.index_cast %204 : i32 to index
    %c0_59 = arith.constant 0 : index
    %206 = vector.load %arg14[%205, %c0_59] : memref<64x512xf32, #tpu.memory_space<vmem>>, vector<8x512xf32>
    %c0_60 = arith.constant 0 : index
    %c0_61 = arith.constant 0 : index
    %207 = vector.load %arg4[%c0_60, %c0_61] : memref<128x512xf32, #tpu.memory_space<vmem>>, vector<128x512xf32>
    %cst_62 = arith.constant dense<0.000000e+00> : vector<8x512xf32>
    %208 = tpu.matmul %169, %207, %cst_62 {dimension_numbers = #tpu.dot_dimension_numbers<[1], [0], [0], [1], [0, 0, 1, 1], [], []>} : vector<8x128xf32>, vector<128x512xf32>, vector<8x512xf32> -> vector<8x512xf32>
    %209 = arith.addf %206, %208 : vector<8x512xf32>
    %210 = vector.extract_strided_slice %209 {offsets = [0, 0], sizes = [8, 128], strides = [1, 1]} : vector<8x512xf32> to vector<8x128xf32>
    %211 = arith.negf %210 : vector<8x128xf32>
    %212 = math.exp %211 : vector<8x128xf32>
    %cst_63 = arith.constant 1.000000e+00 : f32
    %213 = vector.broadcast %cst_63 : f32 to vector<8x128xf32>
    %214 = arith.addf %213, %212 : vector<8x128xf32>
    %215 = arith.divf %213, %214 : vector<8x128xf32>
    %216 = vector.extract_strided_slice %209 {offsets = [0, 128], sizes = [8, 128], strides = [1, 1]} : vector<8x512xf32> to vector<8x128xf32>
    %217 = arith.negf %216 : vector<8x128xf32>
    %218 = math.exp %217 : vector<8x128xf32>
    %cst_64 = arith.constant 1.000000e+00 : f32
    %219 = vector.broadcast %cst_64 : f32 to vector<8x128xf32>
    %220 = arith.addf %219, %218 : vector<8x128xf32>
    %221 = arith.divf %219, %220 : vector<8x128xf32>
    %222 = vector.extract_strided_slice %209 {offsets = [0, 256], sizes = [8, 128], strides = [1, 1]} : vector<8x512xf32> to vector<8x128xf32>
    %223 = math.tanh %222 : vector<8x128xf32>
    %224 = vector.extract_strided_slice %209 {offsets = [0, 384], sizes = [8, 128], strides = [1, 1]} : vector<8x512xf32> to vector<8x128xf32>
    %225 = arith.negf %224 : vector<8x128xf32>
    %226 = math.exp %225 : vector<8x128xf32>
    %cst_65 = arith.constant 1.000000e+00 : f32
    %227 = vector.broadcast %cst_65 : f32 to vector<8x128xf32>
    %228 = arith.addf %227, %226 : vector<8x128xf32>
    %229 = arith.divf %227, %228 : vector<8x128xf32>
    %230 = arith.mulf %221, %167 : vector<8x128xf32>
    %231 = arith.mulf %215, %223 : vector<8x128xf32>
    %232 = arith.addf %230, %231 : vector<8x128xf32>
    %233 = math.tanh %232 : vector<8x128xf32>
    %234 = arith.mulf %229, %233 : vector<8x128xf32>
    %235 = tpu.concatenate %234, %200 in 1 : vector<8x128xf32>, vector<8x128xf32> -> vector<8x256xf32>
    %c0_66 = arith.constant 0 : index
    %c0_67 = arith.constant 0 : index
    %236 = vector.load %arg5[%c0_66, %c0_67] : memref<256x512xf32, #tpu.memory_space<vmem>>, vector<256x512xf32>
    %cst_68 = arith.constant dense<0.000000e+00> : vector<8x512xf32>
    %237 = tpu.matmul %235, %236, %cst_68 {dimension_numbers = #tpu.dot_dimension_numbers<[1], [0], [0], [1], [0, 0, 1, 1], [], []>} : vector<8x256xf32>, vector<256x512xf32>, vector<8x512xf32> -> vector<8x512xf32>
    %c0_69 = arith.constant 0 : index
    %c0_70 = arith.constant 0 : index
    %238 = vector.load %arg6[%c0_69, %c0_70] : memref<1x512xf32, #tpu.memory_space<vmem>>, vector<1x512xf32>
    %239 = vector.broadcast %238 : vector<1x512xf32> to vector<8x512xf32>
    %240 = arith.addf %237, %239 : vector<8x512xf32>
    %241 = vector.extract_strided_slice %240 {offsets = [0, 0], sizes = [8, 128], strides = [1, 1]} : vector<8x512xf32> to vector<8x128xf32>
    %242 = arith.negf %241 : vector<8x128xf32>
    %243 = math.exp %242 : vector<8x128xf32>
    %cst_71 = arith.constant 1.000000e+00 : f32
    %244 = vector.broadcast %cst_71 : f32 to vector<8x128xf32>
    %245 = arith.addf %244, %243 : vector<8x128xf32>
    %246 = arith.divf %244, %245 : vector<8x128xf32>
    %247 = vector.extract_strided_slice %240 {offsets = [0, 128], sizes = [8, 128], strides = [1, 1]} : vector<8x512xf32> to vector<8x128xf32>
    %248 = arith.negf %247 : vector<8x128xf32>
    %249 = math.exp %248 : vector<8x128xf32>
    %cst_72 = arith.constant 1.000000e+00 : f32
    %250 = vector.broadcast %cst_72 : f32 to vector<8x128xf32>
    %251 = arith.addf %250, %249 : vector<8x128xf32>
    %252 = arith.divf %250, %251 : vector<8x128xf32>
    %253 = vector.extract_strided_slice %240 {offsets = [0, 256], sizes = [8, 128], strides = [1, 1]} : vector<8x512xf32> to vector<8x128xf32>
    %254 = math.tanh %253 : vector<8x128xf32>
    %255 = vector.extract_strided_slice %240 {offsets = [0, 384], sizes = [8, 128], strides = [1, 1]} : vector<8x512xf32> to vector<8x128xf32>
    %256 = arith.negf %255 : vector<8x128xf32>
    %257 = math.exp %256 : vector<8x128xf32>
    %cst_73 = arith.constant 1.000000e+00 : f32
    %258 = vector.broadcast %cst_73 : f32 to vector<8x128xf32>
    %259 = arith.addf %258, %257 : vector<8x128xf32>
    %260 = arith.divf %258, %259 : vector<8x128xf32>
    %261 = arith.mulf %252, %198 : vector<8x128xf32>
    %262 = arith.mulf %246, %254 : vector<8x128xf32>
    %263 = arith.addf %261, %262 : vector<8x128xf32>
    %264 = math.tanh %263 : vector<8x128xf32>
    %265 = arith.mulf %260, %264 : vector<8x128xf32>
    %266 = arith.index_cast %204 : i32 to index
    %c0_74 = arith.constant 0 : index
    %267 = vector.load %arg15[%266, %c0_74] : memref<64x128xf32, #tpu.memory_space<vmem>>, vector<8x128xf32>
    tpu.vector_store %arg15[%266, %c0_74], %265 {strides = array<i32>} : memref<64x128xf32, #tpu.memory_space<vmem>>, vector<8x128xf32>,
    %c4_i32 = arith.constant 4 : i32
    %c8_i32_75 = arith.constant 8 : i32
    %268 = arith.muli %c4_i32, %c8_i32_75 : i32
    %269 = tpu.assume_multiple %268, 8 : i32
    %270 = arith.index_cast %269 : i32 to index
    %c0_76 = arith.constant 0 : index
    %271 = vector.load %arg14[%270, %c0_76] : memref<64x512xf32, #tpu.memory_space<vmem>>, vector<8x512xf32>
    %c0_77 = arith.constant 0 : index
    %c0_78 = arith.constant 0 : index
    %272 = vector.load %arg4[%c0_77, %c0_78] : memref<128x512xf32, #tpu.memory_space<vmem>>, vector<128x512xf32>
    %cst_79 = arith.constant dense<0.000000e+00> : vector<8x512xf32>
    %273 = tpu.matmul %234, %272, %cst_79 {dimension_numbers = #tpu.dot_dimension_numbers<[1], [0], [0], [1], [0, 0, 1, 1], [], []>} : vector<8x128xf32>, vector<128x512xf32>, vector<8x512xf32> -> vector<8x512xf32>
    %274 = arith.addf %271, %273 : vector<8x512xf32>
    %275 = vector.extract_strided_slice %274 {offsets = [0, 0], sizes = [8, 128], strides = [1, 1]} : vector<8x512xf32> to vector<8x128xf32>
    %276 = arith.negf %275 : vector<8x128xf32>
    %277 = math.exp %276 : vector<8x128xf32>
    %cst_80 = arith.constant 1.000000e+00 : f32
    %278 = vector.broadcast %cst_80 : f32 to vector<8x128xf32>
    %279 = arith.addf %278, %277 : vector<8x128xf32>
    %280 = arith.divf %278, %279 : vector<8x128xf32>
    %281 = vector.extract_strided_slice %274 {offsets = [0, 128], sizes = [8, 128], strides = [1, 1]} : vector<8x512xf32> to vector<8x128xf32>
    %282 = arith.negf %281 : vector<8x128xf32>
    %283 = math.exp %282 : vector<8x128xf32>
    %cst_81 = arith.constant 1.000000e+00 : f32
    %284 = vector.broadcast %cst_81 : f32 to vector<8x128xf32>
    %285 = arith.addf %284, %283 : vector<8x128xf32>
    %286 = arith.divf %284, %285 : vector<8x128xf32>
    %287 = vector.extract_strided_slice %274 {offsets = [0, 256], sizes = [8, 128], strides = [1, 1]} : vector<8x512xf32> to vector<8x128xf32>
    %288 = math.tanh %287 : vector<8x128xf32>
    %289 = vector.extract_strided_slice %274 {offsets = [0, 384], sizes = [8, 128], strides = [1, 1]} : vector<8x512xf32> to vector<8x128xf32>
    %290 = arith.negf %289 : vector<8x128xf32>
    %291 = math.exp %290 : vector<8x128xf32>
    %cst_82 = arith.constant 1.000000e+00 : f32
    %292 = vector.broadcast %cst_82 : f32 to vector<8x128xf32>
    %293 = arith.addf %292, %291 : vector<8x128xf32>
    %294 = arith.divf %292, %293 : vector<8x128xf32>
    %295 = arith.mulf %286, %232 : vector<8x128xf32>
    %296 = arith.mulf %280, %288 : vector<8x128xf32>
    %297 = arith.addf %295, %296 : vector<8x128xf32>
    %298 = math.tanh %297 : vector<8x128xf32>
    %299 = arith.mulf %294, %298 : vector<8x128xf32>
    %300 = tpu.concatenate %299, %265 in 1 : vector<8x128xf32>, vector<8x128xf32> -> vector<8x256xf32>
    %c0_83 = arith.constant 0 : index
    %c0_84 = arith.constant 0 : index
    %301 = vector.load %arg5[%c0_83, %c0_84] : memref<256x512xf32, #tpu.memory_space<vmem>>, vector<256x512xf32>
    %cst_85 = arith.constant dense<0.000000e+00> : vector<8x512xf32>
    %302 = tpu.matmul %300, %301, %cst_85 {dimension_numbers = #tpu.dot_dimension_numbers<[1], [0], [0], [1], [0, 0, 1, 1], [], []>} : vector<8x256xf32>, vector<256x512xf32>, vector<8x512xf32> -> vector<8x512xf32>
    %c0_86 = arith.constant 0 : index
    %c0_87 = arith.constant 0 : index
    %303 = vector.load %arg6[%c0_86, %c0_87] : memref<1x512xf32, #tpu.memory_space<vmem>>, vector<1x512xf32>
    %304 = vector.broadcast %303 : vector<1x512xf32> to vector<8x512xf32>
    %305 = arith.addf %302, %304 : vector<8x512xf32>
    %306 = vector.extract_strided_slice %305 {offsets = [0, 0], sizes = [8, 128], strides = [1, 1]} : vector<8x512xf32> to vector<8x128xf32>
    %307 = arith.negf %306 : vector<8x128xf32>
    %308 = math.exp %307 : vector<8x128xf32>
    %cst_88 = arith.constant 1.000000e+00 : f32
    %309 = vector.broadcast %cst_88 : f32 to vector<8x128xf32>
    %310 = arith.addf %309, %308 : vector<8x128xf32>
    %311 = arith.divf %309, %310 : vector<8x128xf32>
    %312 = vector.extract_strided_slice %305 {offsets = [0, 128], sizes = [8, 128], strides = [1, 1]} : vector<8x512xf32> to vector<8x128xf32>
    %313 = arith.negf %312 : vector<8x128xf32>
    %314 = math.exp %313 : vector<8x128xf32>
    %cst_89 = arith.constant 1.000000e+00 : f32
    %315 = vector.broadcast %cst_89 : f32 to vector<8x128xf32>
    %316 = arith.addf %315, %314 : vector<8x128xf32>
    %317 = arith.divf %315, %316 : vector<8x128xf32>
    %318 = vector.extract_strided_slice %305 {offsets = [0, 256], sizes = [8, 128], strides = [1, 1]} : vector<8x512xf32> to vector<8x128xf32>
    %319 = math.tanh %318 : vector<8x128xf32>
    %320 = vector.extract_strided_slice %305 {offsets = [0, 384], sizes = [8, 128], strides = [1, 1]} : vector<8x512xf32> to vector<8x128xf32>
    %321 = arith.negf %320 : vector<8x128xf32>
    %322 = math.exp %321 : vector<8x128xf32>
    %cst_90 = arith.constant 1.000000e+00 : f32
    %323 = vector.broadcast %cst_90 : f32 to vector<8x128xf32>
    %324 = arith.addf %323, %322 : vector<8x128xf32>
    %325 = arith.divf %323, %324 : vector<8x128xf32>
    %326 = arith.mulf %317, %263 : vector<8x128xf32>
    %327 = arith.mulf %311, %319 : vector<8x128xf32>
    %328 = arith.addf %326, %327 : vector<8x128xf32>
    %329 = math.tanh %328 : vector<8x128xf32>
    %330 = arith.mulf %325, %329 : vector<8x128xf32>
    %331 = arith.index_cast %269 : i32 to index
    %c0_91 = arith.constant 0 : index
    %332 = vector.load %arg15[%331, %c0_91] : memref<64x128xf32, #tpu.memory_space<vmem>>, vector<8x128xf32>
    tpu.vector_store %arg15[%331, %c0_91], %330 {strides = array<i32>} : memref<64x128xf32, #tpu.memory_space<vmem>>, vector<8x128xf32>,
    %c5_i32 = arith.constant 5 : i32
    %c8_i32_92 = arith.constant 8 : i32
    %333 = arith.muli %c5_i32, %c8_i32_92 : i32
    %334 = tpu.assume_multiple %333, 8 : i32
    %335 = arith.index_cast %334 : i32 to index
    %c0_93 = arith.constant 0 : index
    %336 = vector.load %arg14[%335, %c0_93] : memref<64x512xf32, #tpu.memory_space<vmem>>, vector<8x512xf32>
    %c0_94 = arith.constant 0 : index
    %c0_95 = arith.constant 0 : index
    %337 = vector.load %arg4[%c0_94, %c0_95] : memref<128x512xf32, #tpu.memory_space<vmem>>, vector<128x512xf32>
    %cst_96 = arith.constant dense<0.000000e+00> : vector<8x512xf32>
    %338 = tpu.matmul %299, %337, %cst_96 {dimension_numbers = #tpu.dot_dimension_numbers<[1], [0], [0], [1], [0, 0, 1, 1], [], []>} : vector<8x128xf32>, vector<128x512xf32>, vector<8x512xf32> -> vector<8x512xf32>
    %339 = arith.addf %336, %338 : vector<8x512xf32>
    %340 = vector.extract_strided_slice %339 {offsets = [0, 0], sizes = [8, 128], strides = [1, 1]} : vector<8x512xf32> to vector<8x128xf32>
    %341 = arith.negf %340 : vector<8x128xf32>
    %342 = math.exp %341 : vector<8x128xf32>
    %cst_97 = arith.constant 1.000000e+00 : f32
    %343 = vector.broadcast %cst_97 : f32 to vector<8x128xf32>
    %344 = arith.addf %343, %342 : vector<8x128xf32>
    %345 = arith.divf %343, %344 : vector<8x128xf32>
    %346 = vector.extract_strided_slice %339 {offsets = [0, 128], sizes = [8, 128], strides = [1, 1]} : vector<8x512xf32> to vector<8x128xf32>
    %347 = arith.negf %346 : vector<8x128xf32>
    %348 = math.exp %347 : vector<8x128xf32>
    %cst_98 = arith.constant 1.000000e+00 : f32
    %349 = vector.broadcast %cst_98 : f32 to vector<8x128xf32>
    %350 = arith.addf %349, %348 : vector<8x128xf32>
    %351 = arith.divf %349, %350 : vector<8x128xf32>
    %352 = vector.extract_strided_slice %339 {offsets = [0, 256], sizes = [8, 128], strides = [1, 1]} : vector<8x512xf32> to vector<8x128xf32>
    %353 = math.tanh %352 : vector<8x128xf32>
    %354 = vector.extract_strided_slice %339 {offsets = [0, 384], sizes = [8, 128], strides = [1, 1]} : vector<8x512xf32> to vector<8x128xf32>
    %355 = arith.negf %354 : vector<8x128xf32>
    %356 = math.exp %355 : vector<8x128xf32>
    %cst_99 = arith.constant 1.000000e+00 : f32
    %357 = vector.broadcast %cst_99 : f32 to vector<8x128xf32>
    %358 = arith.addf %357, %356 : vector<8x128xf32>
    %359 = arith.divf %357, %358 : vector<8x128xf32>
    %360 = arith.mulf %351, %297 : vector<8x128xf32>
    %361 = arith.mulf %345, %353 : vector<8x128xf32>
    %362 = arith.addf %360, %361 : vector<8x128xf32>
    %363 = math.tanh %362 : vector<8x128xf32>
    %364 = arith.mulf %359, %363 : vector<8x128xf32>
    %365 = tpu.concatenate %364, %330 in 1 : vector<8x128xf32>, vector<8x128xf32> -> vector<8x256xf32>
    %c0_100 = arith.constant 0 : index
    %c0_101 = arith.constant 0 : index
    %366 = vector.load %arg5[%c0_100, %c0_101] : memref<256x512xf32, #tpu.memory_space<vmem>>, vector<256x512xf32>
    %cst_102 = arith.constant dense<0.000000e+00> : vector<8x512xf32>
    %367 = tpu.matmul %365, %366, %cst_102 {dimension_numbers = #tpu.dot_dimension_numbers<[1], [0], [0], [1], [0, 0, 1, 1], [], []>} : vector<8x256xf32>, vector<256x512xf32>, vector<8x512xf32> -> vector<8x512xf32>
    %c0_103 = arith.constant 0 : index
    %c0_104 = arith.constant 0 : index
    %368 = vector.load %arg6[%c0_103, %c0_104] : memref<1x512xf32, #tpu.memory_space<vmem>>, vector<1x512xf32>
    %369 = vector.broadcast %368 : vector<1x512xf32> to vector<8x512xf32>
    %370 = arith.addf %367, %369 : vector<8x512xf32>
    %371 = vector.extract_strided_slice %370 {offsets = [0, 0], sizes = [8, 128], strides = [1, 1]} : vector<8x512xf32> to vector<8x128xf32>
    %372 = arith.negf %371 : vector<8x128xf32>
    %373 = math.exp %372 : vector<8x128xf32>
    %cst_105 = arith.constant 1.000000e+00 : f32
    %374 = vector.broadcast %cst_105 : f32 to vector<8x128xf32>
    %375 = arith.addf %374, %373 : vector<8x128xf32>
    %376 = arith.divf %374, %375 : vector<8x128xf32>
    %377 = vector.extract_strided_slice %370 {offsets = [0, 128], sizes = [8, 128], strides = [1, 1]} : vector<8x512xf32> to vector<8x128xf32>
    %378 = arith.negf %377 : vector<8x128xf32>
    %379 = math.exp %378 : vector<8x128xf32>
    %cst_106 = arith.constant 1.000000e+00 : f32
    %380 = vector.broadcast %cst_106 : f32 to vector<8x128xf32>
    %381 = arith.addf %380, %379 : vector<8x128xf32>
    %382 = arith.divf %380, %381 : vector<8x128xf32>
    %383 = vector.extract_strided_slice %370 {offsets = [0, 256], sizes = [8, 128], strides = [1, 1]} : vector<8x512xf32> to vector<8x128xf32>
    %384 = math.tanh %383 : vector<8x128xf32>
    %385 = vector.extract_strided_slice %370 {offsets = [0, 384], sizes = [8, 128], strides = [1, 1]} : vector<8x512xf32> to vector<8x128xf32>
    %386 = arith.negf %385 : vector<8x128xf32>
    %387 = math.exp %386 : vector<8x128xf32>
    %cst_107 = arith.constant 1.000000e+00 : f32
    %388 = vector.broadcast %cst_107 : f32 to vector<8x128xf32>
    %389 = arith.addf %388, %387 : vector<8x128xf32>
    %390 = arith.divf %388, %389 : vector<8x128xf32>
    %391 = arith.mulf %382, %328 : vector<8x128xf32>
    %392 = arith.mulf %376, %384 : vector<8x128xf32>
    %393 = arith.addf %391, %392 : vector<8x128xf32>
    %394 = math.tanh %393 : vector<8x128xf32>
    %395 = arith.mulf %390, %394 : vector<8x128xf32>
    %396 = arith.index_cast %334 : i32 to index
    %c0_108 = arith.constant 0 : index
    %397 = vector.load %arg15[%396, %c0_108] : memref<64x128xf32, #tpu.memory_space<vmem>>, vector<8x128xf32>
    tpu.vector_store %arg15[%396, %c0_108], %395 {strides = array<i32>} : memref<64x128xf32, #tpu.memory_space<vmem>>, vector<8x128xf32>,
    %c6_i32 = arith.constant 6 : i32
    %c8_i32_109 = arith.constant 8 : i32
    %398 = arith.muli %c6_i32, %c8_i32_109 : i32
    %399 = tpu.assume_multiple %398, 8 : i32
    %400 = arith.index_cast %399 : i32 to index
    %c0_110 = arith.constant 0 : index
    %401 = vector.load %arg14[%400, %c0_110] : memref<64x512xf32, #tpu.memory_space<vmem>>, vector<8x512xf32>
    %c0_111 = arith.constant 0 : index
    %c0_112 = arith.constant 0 : index
    %402 = vector.load %arg4[%c0_111, %c0_112] : memref<128x512xf32, #tpu.memory_space<vmem>>, vector<128x512xf32>
    %cst_113 = arith.constant dense<0.000000e+00> : vector<8x512xf32>
    %403 = tpu.matmul %364, %402, %cst_113 {dimension_numbers = #tpu.dot_dimension_numbers<[1], [0], [0], [1], [0, 0, 1, 1], [], []>} : vector<8x128xf32>, vector<128x512xf32>, vector<8x512xf32> -> vector<8x512xf32>
    %404 = arith.addf %401, %403 : vector<8x512xf32>
    %405 = vector.extract_strided_slice %404 {offsets = [0, 0], sizes = [8, 128], strides = [1, 1]} : vector<8x512xf32> to vector<8x128xf32>
    %406 = arith.negf %405 : vector<8x128xf32>
    %407 = math.exp %406 : vector<8x128xf32>
    %cst_114 = arith.constant 1.000000e+00 : f32
    %408 = vector.broadcast %cst_114 : f32 to vector<8x128xf32>
    %409 = arith.addf %408, %407 : vector<8x128xf32>
    %410 = arith.divf %408, %409 : vector<8x128xf32>
    %411 = vector.extract_strided_slice %404 {offsets = [0, 128], sizes = [8, 128], strides = [1, 1]} : vector<8x512xf32> to vector<8x128xf32>
    %412 = arith.negf %411 : vector<8x128xf32>
    %413 = math.exp %412 : vector<8x128xf32>
    %cst_115 = arith.constant 1.000000e+00 : f32
    %414 = vector.broadcast %cst_115 : f32 to vector<8x128xf32>
    %415 = arith.addf %414, %413 : vector<8x128xf32>
    %416 = arith.divf %414, %415 : vector<8x128xf32>
    %417 = vector.extract_strided_slice %404 {offsets = [0, 256], sizes = [8, 128], strides = [1, 1]} : vector<8x512xf32> to vector<8x128xf32>
    %418 = math.tanh %417 : vector<8x128xf32>
    %419 = vector.extract_strided_slice %404 {offsets = [0, 384], sizes = [8, 128], strides = [1, 1]} : vector<8x512xf32> to vector<8x128xf32>
    %420 = arith.negf %419 : vector<8x128xf32>
    %421 = math.exp %420 : vector<8x128xf32>
    %cst_116 = arith.constant 1.000000e+00 : f32
    %422 = vector.broadcast %cst_116 : f32 to vector<8x128xf32>
    %423 = arith.addf %422, %421 : vector<8x128xf32>
    %424 = arith.divf %422, %423 : vector<8x128xf32>
    %425 = arith.mulf %416, %362 : vector<8x128xf32>
    %426 = arith.mulf %410, %418 : vector<8x128xf32>
    %427 = arith.addf %425, %426 : vector<8x128xf32>
    %428 = math.tanh %427 : vector<8x128xf32>
    %429 = arith.mulf %424, %428 : vector<8x128xf32>
    %430 = tpu.concatenate %429, %395 in 1 : vector<8x128xf32>, vector<8x128xf32> -> vector<8x256xf32>
    %c0_117 = arith.constant 0 : index
    %c0_118 = arith.constant 0 : index
    %431 = vector.load %arg5[%c0_117, %c0_118] : memref<256x512xf32, #tpu.memory_space<vmem>>, vector<256x512xf32>
    %cst_119 = arith.constant dense<0.000000e+00> : vector<8x512xf32>
    %432 = tpu.matmul %430, %431, %cst_119 {dimension_numbers = #tpu.dot_dimension_numbers<[1], [0], [0], [1], [0, 0, 1, 1], [], []>} : vector<8x256xf32>, vector<256x512xf32>, vector<8x512xf32> -> vector<8x512xf32>
    %c0_120 = arith.constant 0 : index
    %c0_121 = arith.constant 0 : index
    %433 = vector.load %arg6[%c0_120, %c0_121] : memref<1x512xf32, #tpu.memory_space<vmem>>, vector<1x512xf32>
    %434 = vector.broadcast %433 : vector<1x512xf32> to vector<8x512xf32>
    %435 = arith.addf %432, %434 : vector<8x512xf32>
    %436 = vector.extract_strided_slice %435 {offsets = [0, 0], sizes = [8, 128], strides = [1, 1]} : vector<8x512xf32> to vector<8x128xf32>
    %437 = arith.negf %436 : vector<8x128xf32>
    %438 = math.exp %437 : vector<8x128xf32>
    %cst_122 = arith.constant 1.000000e+00 : f32
    %439 = vector.broadcast %cst_122 : f32 to vector<8x128xf32>
    %440 = arith.addf %439, %438 : vector<8x128xf32>
    %441 = arith.divf %439, %440 : vector<8x128xf32>
    %442 = vector.extract_strided_slice %435 {offsets = [0, 128], sizes = [8, 128], strides = [1, 1]} : vector<8x512xf32> to vector<8x128xf32>
    %443 = arith.negf %442 : vector<8x128xf32>
    %444 = math.exp %443 : vector<8x128xf32>
    %cst_123 = arith.constant 1.000000e+00 : f32
    %445 = vector.broadcast %cst_123 : f32 to vector<8x128xf32>
    %446 = arith.addf %445, %444 : vector<8x128xf32>
    %447 = arith.divf %445, %446 : vector<8x128xf32>
    %448 = vector.extract_strided_slice %435 {offsets = [0, 256], sizes = [8, 128], strides = [1, 1]} : vector<8x512xf32> to vector<8x128xf32>
    %449 = math.tanh %448 : vector<8x128xf32>
    %450 = vector.extract_strided_slice %435 {offsets = [0, 384], sizes = [8, 128], strides = [1, 1]} : vector<8x512xf32> to vector<8x128xf32>
    %451 = arith.negf %450 : vector<8x128xf32>
    %452 = math.exp %451 : vector<8x128xf32>
    %cst_124 = arith.constant 1.000000e+00 : f32
    %453 = vector.broadcast %cst_124 : f32 to vector<8x128xf32>
    %454 = arith.addf %453, %452 : vector<8x128xf32>
    %455 = arith.divf %453, %454 : vector<8x128xf32>
    %456 = arith.mulf %447, %393 : vector<8x128xf32>
    %457 = arith.mulf %441, %449 : vector<8x128xf32>
    %458 = arith.addf %456, %457 : vector<8x128xf32>
    %459 = math.tanh %458 : vector<8x128xf32>
    %460 = arith.mulf %455, %459 : vector<8x128xf32>
    %461 = arith.index_cast %399 : i32 to index
    %c0_125 = arith.constant 0 : index
    %462 = vector.load %arg15[%461, %c0_125] : memref<64x128xf32, #tpu.memory_space<vmem>>, vector<8x128xf32>
    tpu.vector_store %arg15[%461, %c0_125], %460 {strides = array<i32>} : memref<64x128xf32, #tpu.memory_space<vmem>>, vector<8x128xf32>,
    %c7_i32 = arith.constant 7 : i32
    %c8_i32_126 = arith.constant 8 : i32
    %463 = arith.muli %c7_i32, %c8_i32_126 : i32
    %464 = tpu.assume_multiple %463, 8 : i32
    %465 = arith.index_cast %464 : i32 to index
    %c0_127 = arith.constant 0 : index
    %466 = vector.load %arg14[%465, %c0_127] : memref<64x512xf32, #tpu.memory_space<vmem>>, vector<8x512xf32>
    %c0_128 = arith.constant 0 : index
    %c0_129 = arith.constant 0 : index
    %467 = vector.load %arg4[%c0_128, %c0_129] : memref<128x512xf32, #tpu.memory_space<vmem>>, vector<128x512xf32>
    %cst_130 = arith.constant dense<0.000000e+00> : vector<8x512xf32>
    %468 = tpu.matmul %429, %467, %cst_130 {dimension_numbers = #tpu.dot_dimension_numbers<[1], [0], [0], [1], [0, 0, 1, 1], [], []>} : vector<8x128xf32>, vector<128x512xf32>, vector<8x512xf32> -> vector<8x512xf32>
    %469 = arith.addf %466, %468 : vector<8x512xf32>
    %470 = vector.extract_strided_slice %469 {offsets = [0, 0], sizes = [8, 128], strides = [1, 1]} : vector<8x512xf32> to vector<8x128xf32>
    %471 = arith.negf %470 : vector<8x128xf32>
    %472 = math.exp %471 : vector<8x128xf32>
    %cst_131 = arith.constant 1.000000e+00 : f32
    %473 = vector.broadcast %cst_131 : f32 to vector<8x128xf32>
    %474 = arith.addf %473, %472 : vector<8x128xf32>
    %475 = arith.divf %473, %474 : vector<8x128xf32>
    %476 = vector.extract_strided_slice %469 {offsets = [0, 128], sizes = [8, 128], strides = [1, 1]} : vector<8x512xf32> to vector<8x128xf32>
    %477 = arith.negf %476 : vector<8x128xf32>
    %478 = math.exp %477 : vector<8x128xf32>
    %cst_132 = arith.constant 1.000000e+00 : f32
    %479 = vector.broadcast %cst_132 : f32 to vector<8x128xf32>
    %480 = arith.addf %479, %478 : vector<8x128xf32>
    %481 = arith.divf %479, %480 : vector<8x128xf32>
    %482 = vector.extract_strided_slice %469 {offsets = [0, 256], sizes = [8, 128], strides = [1, 1]} : vector<8x512xf32> to vector<8x128xf32>
    %483 = math.tanh %482 : vector<8x128xf32>
    %484 = vector.extract_strided_slice %469 {offsets = [0, 384], sizes = [8, 128], strides = [1, 1]} : vector<8x512xf32> to vector<8x128xf32>
    %485 = arith.negf %484 : vector<8x128xf32>
    %486 = math.exp %485 : vector<8x128xf32>
    %cst_133 = arith.constant 1.000000e+00 : f32
    %487 = vector.broadcast %cst_133 : f32 to vector<8x128xf32>
    %488 = arith.addf %487, %486 : vector<8x128xf32>
    %489 = arith.divf %487, %488 : vector<8x128xf32>
    %490 = arith.mulf %481, %427 : vector<8x128xf32>
    %491 = arith.mulf %475, %483 : vector<8x128xf32>
    %492 = arith.addf %490, %491 : vector<8x128xf32>
    %493 = math.tanh %492 : vector<8x128xf32>
    %494 = arith.mulf %489, %493 : vector<8x128xf32>
    %495 = tpu.concatenate %494, %460 in 1 : vector<8x128xf32>, vector<8x128xf32> -> vector<8x256xf32>
    %c0_134 = arith.constant 0 : index
    %c0_135 = arith.constant 0 : index
    %496 = vector.load %arg5[%c0_134, %c0_135] : memref<256x512xf32, #tpu.memory_space<vmem>>, vector<256x512xf32>
    %cst_136 = arith.constant dense<0.000000e+00> : vector<8x512xf32>
    %497 = tpu.matmul %495, %496, %cst_136 {dimension_numbers = #tpu.dot_dimension_numbers<[1], [0], [0], [1], [0, 0, 1, 1], [], []>} : vector<8x256xf32>, vector<256x512xf32>, vector<8x512xf32> -> vector<8x512xf32>
    %c0_137 = arith.constant 0 : index
    %c0_138 = arith.constant 0 : index
    %498 = vector.load %arg6[%c0_137, %c0_138] : memref<1x512xf32, #tpu.memory_space<vmem>>, vector<1x512xf32>
    %499 = vector.broadcast %498 : vector<1x512xf32> to vector<8x512xf32>
    %500 = arith.addf %497, %499 : vector<8x512xf32>
    %501 = vector.extract_strided_slice %500 {offsets = [0, 0], sizes = [8, 128], strides = [1, 1]} : vector<8x512xf32> to vector<8x128xf32>
    %502 = arith.negf %501 : vector<8x128xf32>
    %503 = math.exp %502 : vector<8x128xf32>
    %cst_139 = arith.constant 1.000000e+00 : f32
    %504 = vector.broadcast %cst_139 : f32 to vector<8x128xf32>
    %505 = arith.addf %504, %503 : vector<8x128xf32>
    %506 = arith.divf %504, %505 : vector<8x128xf32>
    %507 = vector.extract_strided_slice %500 {offsets = [0, 128], sizes = [8, 128], strides = [1, 1]} : vector<8x512xf32> to vector<8x128xf32>
    %508 = arith.negf %507 : vector<8x128xf32>
    %509 = math.exp %508 : vector<8x128xf32>
    %cst_140 = arith.constant 1.000000e+00 : f32
    %510 = vector.broadcast %cst_140 : f32 to vector<8x128xf32>
    %511 = arith.addf %510, %509 : vector<8x128xf32>
    %512 = arith.divf %510, %511 : vector<8x128xf32>
    %513 = vector.extract_strided_slice %500 {offsets = [0, 256], sizes = [8, 128], strides = [1, 1]} : vector<8x512xf32> to vector<8x128xf32>
    %514 = math.tanh %513 : vector<8x128xf32>
    %515 = vector.extract_strided_slice %500 {offsets = [0, 384], sizes = [8, 128], strides = [1, 1]} : vector<8x512xf32> to vector<8x128xf32>
    %516 = arith.negf %515 : vector<8x128xf32>
    %517 = math.exp %516 : vector<8x128xf32>
    %cst_141 = arith.constant 1.000000e+00 : f32
    %518 = vector.broadcast %cst_141 : f32 to vector<8x128xf32>
    %519 = arith.addf %518, %517 : vector<8x128xf32>
    %520 = arith.divf %518, %519 : vector<8x128xf32>
    %521 = arith.mulf %512, %458 : vector<8x128xf32>
    %522 = arith.mulf %506, %514 : vector<8x128xf32>
    %523 = arith.addf %521, %522 : vector<8x128xf32>
    %524 = math.tanh %523 : vector<8x128xf32>
    %525 = arith.mulf %520, %524 : vector<8x128xf32>
    %526 = arith.index_cast %464 : i32 to index
    %c0_142 = arith.constant 0 : index
    %527 = vector.load %arg15[%526, %c0_142] : memref<64x128xf32, #tpu.memory_space<vmem>>, vector<8x128xf32>
    tpu.vector_store %arg15[%526, %c0_142], %525 {strides = array<i32>} : memref<64x128xf32, #tpu.memory_space<vmem>>, vector<8x128xf32>,
    %c8_i32_143 = arith.constant 8 : i32
    %c0_144 = arith.constant 0 : index
    %c0_145 = arith.constant 0 : index
    %528 = vector.load %arg15[%c0_144, %c0_145] : memref<64x128xf32, #tpu.memory_space<vmem>>, vector<64x128xf32>
    %c0_146 = arith.constant 0 : index
    %c0_147 = arith.constant 0 : index
    %529 = vector.load %arg7[%c0_146, %c0_147] : memref<128x64xf32, #tpu.memory_space<vmem>>, vector<128x64xf32>
    %cst_148 = arith.constant dense<0.000000e+00> : vector<64x64xf32>
    %530 = tpu.matmul %528, %529, %cst_148 {dimension_numbers = #tpu.dot_dimension_numbers<[1], [0], [0], [1], [0, 0, 1, 1], [], []>} : vector<64x128xf32>, vector<128x64xf32>, vector<64x64xf32> -> vector<64x64xf32>
    %c0_149 = arith.constant 0 : index
    %c0_150 = arith.constant 0 : index
    %531 = vector.load %arg8[%c0_149, %c0_150] : memref<1x64xf32, #tpu.memory_space<vmem>>, vector<1x64xf32>
    %532 = vector.broadcast %531 : vector<1x64xf32> to vector<64x64xf32>
    %533 = arith.addf %530, %532 : vector<64x64xf32>
    %534 = math.tanh %533 : vector<64x64xf32>
    %c0_151 = arith.constant 0 : index
    %c0_152 = arith.constant 0 : index
    %535 = vector.load %arg9[%c0_151, %c0_152] : memref<64x64xf32, #tpu.memory_space<vmem>>, vector<64x64xf32>
    %cst_153 = arith.constant dense<0.000000e+00> : vector<64x64xf32>
    %536 = tpu.matmul %534, %535, %cst_153 {dimension_numbers = #tpu.dot_dimension_numbers<[1], [0], [0], [1], [0, 0, 1, 1], [], []>} : vector<64x64xf32>, vector<64x64xf32>, vector<64x64xf32> -> vector<64x64xf32>
    %c0_154 = arith.constant 0 : index
    %c0_155 = arith.constant 0 : index
    %537 = vector.load %arg10[%c0_154, %c0_155] : memref<1x64xf32, #tpu.memory_space<vmem>>, vector<1x64xf32>
    %538 = vector.broadcast %537 : vector<1x64xf32> to vector<64x64xf32>
    %539 = arith.addf %536, %538 : vector<64x64xf32>
    %540 = math.tanh %539 : vector<64x64xf32>
    %c0_156 = arith.constant 0 : index
    %c0_157 = arith.constant 0 : index
    %541 = vector.load %arg11[%c0_156, %c0_157] : memref<64x4xf32, #tpu.memory_space<vmem>>, vector<64x4xf32>
    %cst_158 = arith.constant dense<0.000000e+00> : vector<64x4xf32>
    %542 = tpu.matmul %540, %541, %cst_158 {dimension_numbers = #tpu.dot_dimension_numbers<[1], [0], [0], [1], [0, 0, 1, 1], [], []>} : vector<64x64xf32>, vector<64x4xf32>, vector<64x4xf32> -> vector<64x4xf32>
    %c0_159 = arith.constant 0 : index
    %c0_160 = arith.constant 0 : index
    %543 = vector.load %arg12[%c0_159, %c0_160] : memref<1x4xf32, #tpu.memory_space<vmem>>, vector<1x4xf32>
    %544 = vector.broadcast %543 : vector<1x4xf32> to vector<64x4xf32>
    %545 = arith.addf %542, %544 : vector<64x4xf32>
    %c0_161 = arith.constant 0 : index
    %c0_162 = arith.constant 0 : index
    %546 = vector.load %arg13[%c0_161, %c0_162] : memref<64x4xf32, #tpu.memory_space<vmem>>, vector<64x4xf32>
    tpu.vector_store %arg13[%c0_161, %c0_162], %545 {strides = array<i32>} : memref<64x4xf32, #tpu.memory_space<vmem>>, vector<64x4xf32>,
    return
  }
  func.func @transform_0(%arg0: i32) -> (i32, i32) {
    %c0_i32 = arith.constant 0 : i32
    %c0_i32_0 = arith.constant 0 : i32
    %c0_i32_1 = arith.constant 0 : i32
    return %c0_i32, %c0_i32_0 : i32, i32
  }
  func.func @transform_1(%arg0: i32) -> (i32, i32) {
    %c0_i32 = arith.constant 0 : i32
    %c0_i32_0 = arith.constant 0 : i32
    %c0_i32_1 = arith.constant 0 : i32
    return %c0_i32, %c0_i32_0 : i32, i32
  }
  func.func @transform_2(%arg0: i32) -> (i32, i32) {
    %c0_i32 = arith.constant 0 : i32
    %c0_i32_0 = arith.constant 0 : i32
    %c0_i32_1 = arith.constant 0 : i32
    return %c0_i32, %c0_i32_0 : i32, i32
  }
  func.func @transform_3(%arg0: i32) -> (i32, i32) {
    %c0_i32 = arith.constant 0 : i32
    %c0_i32_0 = arith.constant 0 : i32
    %c0_i32_1 = arith.constant 0 : i32
    return %c0_i32, %c0_i32_0 : i32, i32
  }
  func.func @transform_4(%arg0: i32) -> (i32, i32) {
    %c0_i32 = arith.constant 0 : i32
    %c0_i32_0 = arith.constant 0 : i32
    %c0_i32_1 = arith.constant 0 : i32
    return %c0_i32, %c0_i32_0 : i32, i32
  }
  func.func @transform_5(%arg0: i32) -> (i32, i32) {
    %c0_i32 = arith.constant 0 : i32
    %c0_i32_0 = arith.constant 0 : i32
    %c0_i32_1 = arith.constant 0 : i32
    return %c0_i32, %c0_i32_0 : i32, i32
  }
  func.func @transform_6(%arg0: i32) -> (i32, i32) {
    %c0_i32 = arith.constant 0 : i32
    %c0_i32_0 = arith.constant 0 : i32
    %c0_i32_1 = arith.constant 0 : i32
    return %c0_i32, %c0_i32_0 : i32, i32
  }
  func.func @transform_7(%arg0: i32) -> (i32, i32) {
    %c0_i32 = arith.constant 0 : i32
    %c0_i32_0 = arith.constant 0 : i32
    %c0_i32_1 = arith.constant 0 : i32
    return %c0_i32, %c0_i32_0 : i32, i32
  }
  func.func @transform_8(%arg0: i32) -> (i32, i32) {
    %c0_i32 = arith.constant 0 : i32
    %c0_i32_0 = arith.constant 0 : i32
    %c0_i32_1 = arith.constant 0 : i32
    return %c0_i32, %c0_i32_0 : i32, i32
  }
  func.func @transform_9(%arg0: i32) -> (i32, i32) {
    %c0_i32 = arith.constant 0 : i32
    %c0_i32_0 = arith.constant 0 : i32
    %c0_i32_1 = arith.constant 0 : i32
    return %c0_i32, %c0_i32_0 : i32, i32
  }
  func.func @transform_10(%arg0: i32) -> (i32, i32) {
    %c0_i32 = arith.constant 0 : i32
    %c0_i32_0 = arith.constant 0 : i32
    %c0_i32_1 = arith.constant 0 : i32
    return %c0_i32, %c0_i32_0 : i32, i32
  }
  func.func @transform_11(%arg0: i32) -> (i32, i32) {
    %c0_i32 = arith.constant 0 : i32
    %c0_i32_0 = arith.constant 0 : i32
    %c0_i32_1 = arith.constant 0 : i32
    return %c0_i32, %c0_i32_0 : i32, i32
  }
  func.func @transform_12(%arg0: i32) -> (i32, i32) {
    %c0_i32 = arith.constant 0 : i32
    %c0_i32_0 = arith.constant 0 : i32
    %c0_i32_1 = arith.constant 0 : i32
    return %c0_i32, %c0_i32_0 : i32, i32
  }
}

</mosaic_0001>

<llo_original>
// kernel: rnn_forward.1
$region0: #{rnn_forward.1}
  #allocation0 [shape = 'u32[]', space=smem, size = 0x4, offset = 0x4, fixed_abs, tag = 'smem constant byte address 0x4 - core index']
  #allocation1 [shape = 'u32[144,128]{1,0:T(1,128)}', space=vmem, size = 0x12000, scoped, tag = 'internal scratch']
  #allocation2 [shape = 'f32[64,512]{1,0:T(8,128)}', space=vmem, size = 0x20000, scoped, tag = 'scratch operand']
  #allocation3 [shape = 'f32[64,128]{1,0:T(8,128)}', space=vmem, size = 0x8000, scoped, tag = 'scratch operand']
  %s0 = inlined_call_operand.vmem [shape: f32[64,16], index: 0, kind: input, shape index: {}]
  %s1 = inlined_call_operand.vmem [shape: f32[16,512], index: 1, kind: input, shape index: {}]
  %s2 = inlined_call_operand.vmem [shape: f32[1,512], index: 2, kind: input, shape index: {}]
  %s3 = inlined_call_operand.vmem [shape: f32[128,512], index: 3, kind: input, shape index: {}]
  %s4 = inlined_call_operand.vmem [shape: f32[256,512], index: 4, kind: input, shape index: {}]
  %s5 = inlined_call_operand.vmem [shape: f32[1,512], index: 5, kind: input, shape index: {}]
  %s6 = inlined_call_operand.vmem [shape: f32[128,64], index: 6, kind: input, shape index: {}]
  %s7 = inlined_call_operand.vmem [shape: f32[1,64], index: 7, kind: input, shape index: {}]
  %s8 = inlined_call_operand.vmem [shape: f32[64,64], index: 8, kind: input, shape index: {}]
  %s9 = inlined_call_operand.vmem [shape: f32[1,64], index: 9, kind: input, shape index: {}]
  %s10 = inlined_call_operand.vmem [shape: f32[64,4], index: 10, kind: input, shape index: {}]
  %s11 = inlined_call_operand.vmem [shape: f32[1,4], index: 11, kind: input, shape index: {}]
  %s12 = inlined_call_operand.vmem [shape: f32[64,4], index: 12, kind: output, shape index: {}]
  %s13 = sld [smem:[#allocation0]]
  $region58: #{rnn_forward.1} parent=0
    _
  %s15 = ssub.s32 1, %s13
  %s16 = scalar_select 0, %s15, %s13
  // Predicated region
  $region2: #{rnn_forward.1} parent=0 // pred_check
    _
  $region3: #{rnn_forward.1} parent=0 // pred_check_branch
    %18 = sbr.rel (0) target = $region5
  $region4: #{rnn_forward.1} parent=0 // pred_region
    _
  $region5: #{rnn_forward.1} parent=0 // pred_fallthru
    _
  // Predicated region
  $region6: #{rnn_forward.1} parent=0 // pred_check
    _
  $region7: #{rnn_forward.1} parent=0 // pred_check_branch
    %20 = sbr.rel (0) target = $region9
  $region8: #{rnn_forward.1} parent=0 // pred_region
    _
  $region9: #{rnn_forward.1} parent=0 // pred_fallthru
    _
  // Predicated region
  $region10: #{rnn_forward.1} parent=0 // pred_check
    _
  $region11: #{rnn_forward.1} parent=0 // pred_check_branch
    %22 = sbr.rel (0) target = $region13
  $region12: #{rnn_forward.1} parent=0 // pred_region
    _
  $region13: #{rnn_forward.1} parent=0 // pred_fallthru
    _
  // Predicated region
  $region14: #{rnn_forward.1} parent=0 // pred_check
    _
  $region15: #{rnn_forward.1} parent=0 // pred_check_branch
    %24 = sbr.rel (0) target = $region17
  $region16: #{rnn_forward.1} parent=0 // pred_region
    _
  $region17: #{rnn_forward.1} parent=0 // pred_fallthru
    _
  // Predicated region
  $region18: #{rnn_forward.1} parent=0 // pred_check
    _
  $region19: #{rnn_forward.1} parent=0 // pred_check_branch
    %26 = sbr.rel (0) target = $region21
  $region20: #{rnn_forward.1} parent=0 // pred_region
    _
  $region21: #{rnn_forward.1} parent=0 // pred_fallthru
    _
  // Predicated region
  $region22: #{rnn_forward.1} parent=0 // pred_check
    _
  $region23: #{rnn_forward.1} parent=0 // pred_check_branch
    %28 = sbr.rel (0) target = $region25
  $region24: #{rnn_forward.1} parent=0 // pred_region
    _
  $region25: #{rnn_forward.1} parent=0 // pred_fallthru
    _
  // Predicated region
  $region26: #{rnn_forward.1} parent=0 // pred_check
    _
  $region27: #{rnn_forward.1} parent=0 // pred_check_branch
    %30 = sbr.rel (0) target = $region29
  $region28: #{rnn_forward.1} parent=0 // pred_region
    _
  $region29: #{rnn_forward.1} parent=0 // pred_fallthru
    _
  // Predicated region
  $region30: #{rnn_forward.1} parent=0 // pred_check
    _
  $region31: #{rnn_forward.1} parent=0 // pred_check_branch
    %32 = sbr.rel (0) target = $region33
  $region32: #{rnn_forward.1} parent=0 // pred_region
    _
  $region33: #{rnn_forward.1} parent=0 // pred_fallthru
    _
  // Predicated region
  $region34: #{rnn_forward.1} parent=0 // pred_check
    _
  $region35: #{rnn_forward.1} parent=0 // pred_check_branch
    %34 = sbr.rel (0) target = $region37
  $region36: #{rnn_forward.1} parent=0 // pred_region
    _
  $region37: #{rnn_forward.1} parent=0 // pred_fallthru
    _
  // Predicated region
  $region38: #{rnn_forward.1} parent=0 // pred_check
    _
  $region39: #{rnn_forward.1} parent=0 // pred_check_branch
    %36 = sbr.rel (0) target = $region41
  $region40: #{rnn_forward.1} parent=0 // pred_region
    _
  $region41: #{rnn_forward.1} parent=0 // pred_fallthru
    _
  // Predicated region
  $region42: #{rnn_forward.1} parent=0 // pred_check
    _
  $region43: #{rnn_forward.1} parent=0 // pred_check_branch
    %38 = sbr.rel (0) target = $region45
  $region44: #{rnn_forward.1} parent=0 // pred_region
    _
  $region45: #{rnn_forward.1} parent=0 // pred_fallthru
    _
  // Predicated region
  $region46: #{rnn_forward.1} parent=0 // pred_check
    _
  $region47: #{rnn_forward.1} parent=0 // pred_check_branch
    %40 = sbr.rel (0) target = $region49
  $region48: #{rnn_forward.1} parent=0 // pred_region
    _
  $region49: #{rnn_forward.1} parent=0 // pred_fallthru
    _
  %v41 = vld [vmem:[%s0] sm:$0xff]
  %v42 = vld [vmem:[%s0 + $0x8] sm:$0xff]
  %v43 = vld [vmem:[%s0 + $0x10] sm:$0xff]
  %v44 = vld [vmem:[%s0 + $0x18] sm:$0xff]
  %v45 = vld [vmem:[%s0 + $0x20] sm:$0xff]
  %v46 = vld [vmem:[%s0 + $0x28] sm:$0xff]
  %v47 = vld [vmem:[%s0 + $0x30] sm:$0xff]
  %v48 = vld [vmem:[%s0 + $0x38] sm:$0xff]
  %v49 = vld [vmem:[%s1] sm:$0xff]
  %v50 = vld [vmem:[%s1 + $0x8] sm:$0xff]
  %v51 = vld [vmem:[%s1 + $0x10] sm:$0xff]
  %v52 = vld [vmem:[%s1 + $0x18] sm:$0xff]
  %v53 = vld [vmem:[%s1 + $0x20] sm:$0xff]
  %v54 = vld [vmem:[%s1 + $0x28] sm:$0xff]
  %v55 = vld [vmem:[%s1 + $0x30] sm:$0xff]
  %v56 = vld [vmem:[%s1 + $0x38] sm:$0xff]
  %v57 = vld [vmem:[%s2] sm:$0xf]
  %v59 = vlaneseq
  %v60 = vshrl.u32 %v59, 7
  %v61 = vsub.s32 0, %v60
  %v62 = vrot.slane %v57, %v61
  %v63 = vlaneseq
  %v64 = vshrl.u32 %v63, 7
  %v65 = vsub.s32 1, %v64
  %v66 = vrot.slane %v57, %v65
  %v67 = vlaneseq
  %v68 = vshrl.u32 %v67, 7
  %v69 = vsub.s32 2, %v68
  %v70 = vrot.slane %v57, %v69
  %v71 = vlaneseq
  %v72 = vshrl.u32 %v71, 7
  %v73 = vsub.s32 3, %v72
  %v74 = vrot.slane %v57, %v73
  %vm79 = vcmask 130048
  %v81 = vsel %vm79, %v41, 0
  %v84 = vsel %vm79, %v42, 0
  %v87 = vsel %vm79, %v43, 0
  %v90 = vsel %vm79, %v44, 0
  %v93 = vsel %vm79, %v45, 0
  %v96 = vsel %vm79, %v46, 0
  %v99 = vsel %vm79, %v47, 0
  %v102 = vsel %vm79, %v48, 0
  %104 = vmatprep.subr.mxu0 0.0
  %105 = vmatpush1.msra.mxu0 0.0
  %106 = vmatprep.subr.mxu0 0.0
  %107 = vmatpush1.msra.mxu0 0.0
  %108 = vmatprep.subr.mxu0 0.0
  %109 = vmatpush1.msra.mxu0 0.0
  %110 = vmatprep.subr.mxu0 0.0
  %111 = vmatpush1.msra.mxu0 0.0
  %112 = vmatprep.subr.mxu0 0.0
  %113 = vmatpush1.msra.mxu0 0.0
  %114 = vmatprep.subr.mxu0 0.0
  %115 = vmatpush1.msra.mxu0 0.0
  %116 = vmatprep.subr.mxu0 0.0
  %117 = vmatpush1.msra.mxu0 0.0
  %118 = vmatprep.subr.mxu0 0.0
  %119 = vmatpush1.msra.mxu0 0.0
  %120 = vmatprep.subr.mxu0 0.0
  %121 = vmatpush1.msra.mxu0 0.0
  %122 = vmatprep.subr.mxu0 0.0
  %123 = vmatpush1.msra.mxu0 0.0
  %124 = vmatprep.subr.mxu0 0.0
  %125 = vmatpush1.msra.mxu0 0.0
  %126 = vmatprep.subr.mxu0 0.0
  %127 = vmatpush1.msra.mxu0 0.0
  %128 = vmatprep.subr.mxu0 0.0
  %129 = vmatpush1.msra.mxu0 0.0
  %130 = vmatprep.subr.mxu0 0.0
  %131 = vmatpush1.msra.mxu0 0.0
  %132 = vmatprep.subr.mxu0 %v54
  %133 = vmatpush1.msra.mxu0 %v53
  %134 = vmatprep.subr.mxu0 %v50
  %135 = vmatpush1.msra.mxu0 %v49
  %136 = vmatprep.subr.mxu0 0.0
  %137 = vmatpush2.msra.mxu0 0.0
  %138 = vmatprep.subr.mxu0 0.0
  %139 = vmatpush2.msra.mxu0 0.0
  %140 = vmatprep.subr.mxu0 0.0
  %141 = vmatpush2.msra.mxu0 0.0
  %142 = vmatprep.subr.mxu0 0.0
  %143 = vmatpush2.msra.mxu0 0.0
  %144 = vmatprep.subr.mxu0 0.0
  %145 = vmatpush2.msra.mxu0 0.0
  %146 = vmatprep.subr.mxu0 0.0
  %147 = vmatpush2.msra.mxu0 0.0
  %148 = vmatprep.subr.mxu0 0.0
  %149 = vmatpush2.msra.mxu0 0.0
  %150 = vmatprep.subr.mxu0 0.0
  %151 = vmatpush2.msra.mxu0 0.0
  %152 = vmatprep.subr.mxu0 0.0
  %153 = vmatpush2.msra.mxu0 0.0
  %154 = vmatprep.subr.mxu0 0.0
  %155 = vmatpush2.msra.mxu0 0.0
  %156 = vmatprep.subr.mxu0 0.0
  %157 = vmatpush2.msra.mxu0 0.0
  %158 = vmatprep.subr.mxu0 0.0
  %159 = vmatpush2.msra.mxu0 0.0
  %160 = vmatprep.subr.mxu0 0.0
  %161 = vmatpush2.msra.mxu0 0.0
  %162 = vmatprep.subr.mxu0 0.0
  %163 = vmatpush2.msra.mxu0 0.0
  %164 = vmatprep.subr.mxu0 0.0
  %165 = vmatpush2.msra.mxu0 0.0
  %166 = vmatprep.subr.mxu0 0.0
  %167 = vmatpush2.msra.mxu0 0.0
  %168 = vmatprep.mubr.f32.mxu0 0.0
  %169 = vmatmul.mubr.f32.gmra.mxu0 %v81
  %v170 = vpop.f32.mrf.mxu0
  %v171 = vadd.f32 %v62, %v170
  %v172 = vpop.f32.mrf.mxu0
  %v173 = vadd.f32 %v66, %v172
  %174 = vmatprep.mubr.f32.mxu0 0.0
  %175 = vmatmul.mubr.f32.gmra.mxu0 %v84
  %v176 = vpop.f32.mrf.mxu0
  %v177 = vadd.f32 %v62, %v176
  %v178 = vpop.f32.mrf.mxu0
  %v179 = vadd.f32 %v66, %v178
  %180 = vmatprep.mubr.f32.mxu0 0.0
  %181 = vmatmul.mubr.f32.gmra.mxu0 %v87
  %v182 = vpop.f32.mrf.mxu0
  %v183 = vadd.f32 %v62, %v182
  %v184 = vpop.f32.mrf.mxu0
  %v185 = vadd.f32 %v66, %v184
  %186 = vmatprep.mubr.f32.mxu0 0.0
  %187 = vmatmul.mubr.f32.gmra.mxu0 %v90
  %v188 = vpop.f32.mrf.mxu0
  %v189 = vadd.f32 %v62, %v188
  %v190 = vpop.f32.mrf.mxu0
  %v191 = vadd.f32 %v66, %v190
  %192 = vmatprep.mubr.f32.mxu0 0.0
  %193 = vmatmul.mubr.f32.gmra.mxu0 %v93
  %v194 = vpop.f32.mrf.mxu0
  %v195 = vadd.f32 %v62, %v194
  %v196 = vpop.f32.mrf.mxu0
  %v197 = vadd.f32 %v66, %v196
  %198 = vmatprep.mubr.f32.mxu0 0.0
  %199 = vmatmul.mubr.f32.gmra.mxu0 %v96
  %v200 = vpop.f32.mrf.mxu0
  %v201 = vadd.f32 %v62, %v200
  %v202 = vpop.f32.mrf.mxu0
  %v203 = vadd.f32 %v66, %v202
  %204 = vmatprep.mubr.f32.mxu0 0.0
  %205 = vmatmul.mubr.f32.gmra.mxu0 %v99
  %v206 = vpop.f32.mrf.mxu0
  %v207 = vadd.f32 %v62, %v206
  %v208 = vpop.f32.mrf.mxu0
  %v209 = vadd.f32 %v66, %v208
  %210 = vmatprep.mubr.f32.mxu0 0.0
  %211 = vmatmul.mubr.f32.gmra.mxu0 %v102
  %v212 = vpop.f32.mrf.mxu0
  %v213 = vadd.f32 %v62, %v212
  %v214 = vpop.f32.mrf.mxu0
  %v215 = vadd.f32 %v66, %v214
  %216 = vdwg.mxu0
  %217 = vmatprep.subr.mxu0 0.0
  %218 = vmatpush1.msra.mxu0 0.0
  %219 = vmatprep.subr.mxu0 0.0
  %220 = vmatpush1.msra.mxu0 0.0
  %221 = vmatprep.subr.mxu0 0.0
  %222 = vmatpush1.msra.mxu0 0.0
  %223 = vmatprep.subr.mxu0 0.0
  %224 = vmatpush1.msra.mxu0 0.0
  %225 = vmatprep.subr.mxu0 0.0
  %226 = vmatpush1.msra.mxu0 0.0
  %227 = vmatprep.subr.mxu0 0.0
  %228 = vmatpush1.msra.mxu0 0.0
  %229 = vmatprep.subr.mxu0 0.0
  %230 = vmatpush1.msra.mxu0 0.0
  %231 = vmatprep.subr.mxu0 0.0
  %232 = vmatpush1.msra.mxu0 0.0
  %233 = vmatprep.subr.mxu0 0.0
  %234 = vmatpush1.msra.mxu0 0.0
  %235 = vmatprep.subr.mxu0 0.0
  %236 = vmatpush1.msra.mxu0 0.0
  %237 = vmatprep.subr.mxu0 0.0
  %238 = vmatpush1.msra.mxu0 0.0
  %239 = vmatprep.subr.mxu0 0.0
  %240 = vmatpush1.msra.mxu0 0.0
  %241 = vmatprep.subr.mxu0 0.0
  %242 = vmatpush1.msra.mxu0 0.0
  %243 = vmatprep.subr.mxu0 0.0
  %244 = vmatpush1.msra.mxu0 0.0
  %245 = vmatprep.subr.mxu0 %v56
  %246 = vmatpush1.msra.mxu0 %v55
  %247 = vmatprep.subr.mxu0 %v52
  %248 = vmatpush1.msra.mxu0 %v51
  %249 = vmatprep.subr.mxu0 0.0
  %250 = vmatpush2.msra.mxu0 0.0
  %251 = vmatprep.subr.mxu0 0.0
  %252 = vmatpush2.msra.mxu0 0.0
  %253 = vmatprep.subr.mxu0 0.0
  %254 = vmatpush2.msra.mxu0 0.0
  %255 = vmatprep.subr.mxu0 0.0
  %256 = vmatpush2.msra.mxu0 0.0
  %257 = vmatprep.subr.mxu0 0.0
  %258 = vmatpush2.msra.mxu0 0.0
  %259 = vmatprep.subr.mxu0 0.0
  %260 = vmatpush2.msra.mxu0 0.0
  %261 = vmatprep.subr.mxu0 0.0
  %262 = vmatpush2.msra.mxu0 0.0
  %263 = vmatprep.subr.mxu0 0.0
  %264 = vmatpush2.msra.mxu0 0.0
  %265 = vmatprep.subr.mxu0 0.0
  %266 = vmatpush2.msra.mxu0 0.0
  %267 = vmatprep.subr.mxu0 0.0
  %268 = vmatpush2.msra.mxu0 0.0
  %269 = vmatprep.subr.mxu0 0.0
  %270 = vmatpush2.msra.mxu0 0.0
  %271 = vmatprep.subr.mxu0 0.0
  %272 = vmatpush2.msra.mxu0 0.0
  %273 = vmatprep.subr.mxu0 0.0
  %274 = vmatpush2.msra.mxu0 0.0
  %275 = vmatprep.subr.mxu0 0.0
  %276 = vmatpush2.msra.mxu0 0.0
  %277 = vmatprep.subr.mxu0 0.0
  %278 = vmatpush2.msra.mxu0 0.0
  %279 = vmatprep.subr.mxu0 0.0
  %280 = vmatpush2.msra.mxu0 0.0
  %281 = vmatprep.mubr.f32.mxu0 0.0
  %282 = vmatmul.mubr.f32.gmra.mxu0 %v81
  %v283 = vpop.f32.mrf.mxu0
  %v284 = vadd.f32 %v70, %v283
  %v285 = vpop.f32.mrf.mxu0
  %v286 = vadd.f32 %v74, %v285
  %287 = vmatprep.mubr.f32.mxu0 0.0
  %288 = vmatmul.mubr.f32.gmra.mxu0 %v84
  %v289 = vpop.f32.mrf.mxu0
  %v290 = vadd.f32 %v70, %v289
  %v291 = vpop.f32.mrf.mxu0
  %v292 = vadd.f32 %v74, %v291
  %293 = vmatprep.mubr.f32.mxu0 0.0
  %294 = vmatmul.mubr.f32.gmra.mxu0 %v87
  %v295 = vpop.f32.mrf.mxu0
  %v296 = vadd.f32 %v70, %v295
  %v297 = vpop.f32.mrf.mxu0
  %v298 = vadd.f32 %v74, %v297
  %299 = vmatprep.mubr.f32.mxu0 0.0
  %300 = vmatmul.mubr.f32.gmra.mxu0 %v90
  %v301 = vpop.f32.mrf.mxu0
  %v302 = vadd.f32 %v70, %v301
  %v303 = vpop.f32.mrf.mxu0
  %v304 = vadd.f32 %v74, %v303
  %305 = vmatprep.mubr.f32.mxu0 0.0
  %306 = vmatmul.mubr.f32.gmra.mxu0 %v93
  %v307 = vpop.f32.mrf.mxu0
  %v308 = vadd.f32 %v70, %v307
  %v309 = vpop.f32.mrf.mxu0
  %v310 = vadd.f32 %v74, %v309
  %311 = vmatprep.mubr.f32.mxu0 0.0
  %312 = vmatmul.mubr.f32.gmra.mxu0 %v96
  %v313 = vpop.f32.mrf.mxu0
  %v314 = vadd.f32 %v70, %v313
  %v315 = vpop.f32.mrf.mxu0
  %v316 = vadd.f32 %v74, %v315
  %317 = vmatprep.mubr.f32.mxu0 0.0
  %318 = vmatmul.mubr.f32.gmra.mxu0 %v99
  %v319 = vpop.f32.mrf.mxu0
  %v320 = vadd.f32 %v70, %v319
  %v321 = vpop.f32.mrf.mxu0
  %v322 = vadd.f32 %v74, %v321
  %323 = vmatprep.mubr.f32.mxu0 0.0
  %324 = vmatmul.mubr.f32.gmra.mxu0 %v102
  %v325 = vpop.f32.mrf.mxu0
  %v326 = vadd.f32 %v70, %v325
  %v327 = vpop.f32.mrf.mxu0
  %v328 = vadd.f32 %v74, %v327
  %329 = vdwg.mxu0
  %330 = vst [vmem:[#allocation2] sm:$0xff] %v171
  %331 = vst [vmem:[#allocation2 + $0x8] sm:$0xff] %v173
  %332 = vst [vmem:[#allocation2 + $0x10] sm:$0xff] %v284
  %333 = vst [vmem:[#allocation2 + $0x18] sm:$0xff] %v286
  %334 = vst [vmem:[#allocation2 + $0x20] sm:$0xff] %v177
  %335 = vst [vmem:[#allocation2 + $0x28] sm:$0xff] %v179
  %336 = vst [vmem:[#allocation2 + $0x30] sm:$0xff] %v290
  %337 = vst [vmem:[#allocation2 + $0x38] sm:$0xff] %v292
  %338 = vst [vmem:[#allocation2 + $0x40] sm:$0xff] %v183
  %339 = vst [vmem:[#allocation2 + $0x48] sm:$0xff] %v185
  %340 = vst [vmem:[#allocation2 + $0x50] sm:$0xff] %v296
  %341 = vst [vmem:[#allocation2 + $0x58] sm:$0xff] %v298
  %342 = vst [vmem:[#allocation2 + $0x60] sm:$0xff] %v189
  %343 = vst [vmem:[#allocation2 + $0x68] sm:$0xff] %v191
  %344 = vst [vmem:[#allocation2 + $0x70] sm:$0xff] %v302
  %345 = vst [vmem:[#allocation2 + $0x78] sm:$0xff] %v304
  %346 = vst [vmem:[#allocation2 + $0x80] sm:$0xff] %v195
  %347 = vst [vmem:[#allocation2 + $0x88] sm:$0xff] %v197
  %348 = vst [vmem:[#allocation2 + $0x90] sm:$0xff] %v308
  %349 = vst [vmem:[#allocation2 + $0x98] sm:$0xff] %v310
  %350 = vst [vmem:[#allocation2 + $0xa0] sm:$0xff] %v201
  %351 = vst [vmem:[#allocation2 + $0xa8] sm:$0xff] %v203
  %352 = vst [vmem:[#allocation2 + $0xb0] sm:$0xff] %v314
  %353 = vst [vmem:[#allocation2 + $0xb8] sm:$0xff] %v316
  %354 = vst [vmem:[#allocation2 + $0xc0] sm:$0xff] %v207
  %355 = vst [vmem:[#allocation2 + $0xc8] sm:$0xff] %v209
  %356 = vst [vmem:[#allocation2 + $0xd0] sm:$0xff] %v320
  %357 = vst [vmem:[#allocation2 + $0xd8] sm:$0xff] %v322
  %358 = vst [vmem:[#allocation2 + $0xe0] sm:$0xff] %v213
  %359 = vst [vmem:[#allocation2 + $0xe8] sm:$0xff] %v215
  %360 = vst [vmem:[#allocation2 + $0xf0] sm:$0xff] %v326
  %361 = vst [vmem:[#allocation2 + $0xf8] sm:$0xff] %v328
  %s362 = smul.u32 0, 4
  %s363 = smul.addr %s362, 8
  %s364 = scalar_lea.vmem [#allocation2], %s363
  %v365 = vld [vmem:[%s364] sm:$0xff]
  %v366 = vld [vmem:[%s364 + $0x8] sm:$0xff]
  %v367 = vld [vmem:[%s364 + $0x10] sm:$0xff]
  %v368 = vld [vmem:[%s364 + $0x18] sm:$0xff]
  %v369 = vld [vmem:[%s3] sm:$0xff]
  %v370 = vld [vmem:[%s3 + $0x8] sm:$0xff]
  %v371 = vld [vmem:[%s3 + $0x10] sm:$0xff]
  %v372 = vld [vmem:[%s3 + $0x18] sm:$0xff]
  %v373 = vld [vmem:[%s3 + $0x20] sm:$0xff]
  %v374 = vld [vmem:[%s3 + $0x28] sm:$0xff]
  %v375 = vld [vmem:[%s3 + $0x30] sm:$0xff]
  %v376 = vld [vmem:[%s3 + $0x38] sm:$0xff]
  %v377 = vld [vmem:[%s3 + $0x40] sm:$0xff]
  %v378 = vld [vmem:[%s3 + $0x48] sm:$0xff]
  %v379 = vld [vmem:[%s3 + $0x50] sm:$0xff]
  %v380 = vld [vmem:[%s3 + $0x58] sm:$0xff]
  %v381 = vld [vmem:[%s3 + $0x60] sm:$0xff]
  %v382 = vld [vmem:[%s3 + $0x68] sm:$0xff]
  %v383 = vld [vmem:[%s3 + $0x70] sm:$0xff]
  %v384 = vld [vmem:[%s3 + $0x78] sm:$0xff]
  %v385 = vld [vmem:[%s3 + $0x80] sm:$0xff]
  %v386 = vld [vmem:[%s3 + $0x88] sm:$0xff]
  %v387 = vld [vmem:[%s3 + $0x90] sm:$0xff]
  %v388 = vld [vmem:[%s3 + $0x98] sm:$0xff]
  %v389 = vld [vmem:[%s3 + $0xa0] sm:$0xff]
  %v390 = vld [vmem:[%s3 + $0xa8] sm:$0xff]
  %v391 = vld [vmem:[%s3 + $0xb0] sm:$0xff]
  %v392 = vld [vmem:[%s3 + $0xb8] sm:$0xff]
  %v393 = vld [vmem:[%s3 + $0xc0] sm:$0xff]
  %v394 = vld [vmem:[%s3 + $0xc8] sm:$0xff]
  %v395 = vld [vmem:[%s3 + $0xd0] sm:$0xff]
  %v396 = vld [vmem:[%s3 + $0xd8] sm:$0xff]
  %v397 = vld [vmem:[%s3 + $0xe0] sm:$0xff]
  %v398 = vld [vmem:[%s3 + $0xe8] sm:$0xff]
  %v399 = vld [vmem:[%s3 + $0xf0] sm:$0xff]
  %v400 = vld [vmem:[%s3 + $0xf8] sm:$0xff]
  %v401 = vld [vmem:[%s3 + $0x100] sm:$0xff]
  %v402 = vld [vmem:[%s3 + $0x108] sm:$0xff]
  %v403 = vld [vmem:[%s3 + $0x110] sm:$0xff]
  %v404 = vld [vmem:[%s3 + $0x118] sm:$0xff]
  %v405 = vld [vmem:[%s3 + $0x120] sm:$0xff]
  %v406 = vld [vmem:[%s3 + $0x128] sm:$0xff]
  %v407 = vld [vmem:[%s3 + $0x130] sm:$0xff]
  %v408 = vld [vmem:[%s3 + $0x138] sm:$0xff]
  %v409 = vld [vmem:[%s3 + $0x140] sm:$0xff]
  %v410 = vld [vmem:[%s3 + $0x148] sm:$0xff]
  %v411 = vld [vmem:[%s3 + $0x150] sm:$0xff]
  %v412 = vld [vmem:[%s3 + $0x158] sm:$0xff]
  %v413 = vld [vmem:[%s3 + $0x160] sm:$0xff]
  %v414 = vld [vmem:[%s3 + $0x168] sm:$0xff]
  %v415 = vld [vmem:[%s3 + $0x170] sm:$0xff]
  %v416 = vld [vmem:[%s3 + $0x178] sm:$0xff]
  %v417 = vld [vmem:[%s3 + $0x180] sm:$0xff]
  %v418 = vld [vmem:[%s3 + $0x188] sm:$0xff]
  %v419 = vld [vmem:[%s3 + $0x190] sm:$0xff]
  %v420 = vld [vmem:[%s3 + $0x198] sm:$0xff]
  %v421 = vld [vmem:[%s3 + $0x1a0] sm:$0xff]
  %v422 = vld [vmem:[%s3 + $0x1a8] sm:$0xff]
  %v423 = vld [vmem:[%s3 + $0x1b0] sm:$0xff]
  %v424 = vld [vmem:[%s3 + $0x1b8] sm:$0xff]
  %v425 = vld [vmem:[%s3 + $0x1c0] sm:$0xff]
  %v426 = vld [vmem:[%s3 + $0x1c8] sm:$0xff]
  %v427 = vld [vmem:[%s3 + $0x1d0] sm:$0xff]
  %v428 = vld [vmem:[%s3 + $0x1d8] sm:$0xff]
  %v429 = vld [vmem:[%s3 + $0x1e0] sm:$0xff]
  %v430 = vld [vmem:[%s3 + $0x1e8] sm:$0xff]
  %v431 = vld [vmem:[%s3 + $0x1f0] sm:$0xff]
  %v432 = vld [vmem:[%s3 + $0x1f8] sm:$0xff]
  %433 = vmatprep.subr.mxu0 %v430
  %434 = vmatpush1.msra.mxu0 %v429
  %435 = vmatprep.subr.mxu0 %v426
  %436 = vmatpush1.msra.mxu0 %v425
  %437 = vmatprep.subr.mxu0 %v422
  %438 = vmatpush1.msra.mxu0 %v421
  %439 = vmatprep.subr.mxu0 %v418
  %440 = vmatpush1.msra.mxu0 %v417
  %441 = vmatprep.subr.mxu0 %v414
  %442 = vmatpush1.msra.mxu0 %v413
  %443 = vmatprep.subr.mxu0 %v410
  %444 = vmatpush1.msra.mxu0 %v409
  %445 = vmatprep.subr.mxu0 %v406
  %446 = vmatpush1.msra.mxu0 %v405
  %447 = vmatprep.subr.mxu0 %v402
  %448 = vmatpush1.msra.mxu0 %v401
  %449 = vmatprep.subr.mxu0 %v398
  %450 = vmatpush1.msra.mxu0 %v397
  %451 = vmatprep.subr.mxu0 %v394
  %452 = vmatpush1.msra.mxu0 %v393
  %453 = vmatprep.subr.mxu0 %v390
  %454 = vmatpush1.msra.mxu0 %v389
  %455 = vmatprep.subr.mxu0 %v386
  %456 = vmatpush1.msra.mxu0 %v385
  %457 = vmatprep.subr.mxu0 %v382
  %458 = vmatpush1.msra.mxu0 %v381
  %459 = vmatprep.subr.mxu0 %v378
  %460 = vmatpush1.msra.mxu0 %v377
  %461 = vmatprep.subr.mxu0 %v374
  %462 = vmatpush1.msra.mxu0 %v373
  %463 = vmatprep.subr.mxu0 %v370
  %464 = vmatpush1.msra.mxu0 %v369
  %465 = vmatprep.subr.mxu0 0.0
  %466 = vmatpush2.msra.mxu0 0.0
  %467 = vmatprep.subr.mxu0 0.0
  %468 = vmatpush2.msra.mxu0 0.0
  %469 = vmatprep.subr.mxu0 0.0
  %470 = vmatpush2.msra.mxu0 0.0
  %471 = vmatprep.subr.mxu0 0.0
  %472 = vmatpush2.msra.mxu0 0.0
  %473 = vmatprep.subr.mxu0 0.0
  %474 = vmatpush2.msra.mxu0 0.0
  %475 = vmatprep.subr.mxu0 0.0
  %476 = vmatpush2.msra.mxu0 0.0
  %477 = vmatprep.subr.mxu0 0.0
  %478 = vmatpush2.msra.mxu0 0.0
  %479 = vmatprep.subr.mxu0 0.0
  %480 = vmatpush2.msra.mxu0 0.0
  %481 = vmatprep.subr.mxu0 0.0
  %482 = vmatpush2.msra.mxu0 0.0
  %483 = vmatprep.subr.mxu0 0.0
  %484 = vmatpush2.msra.mxu0 0.0
  %485 = vmatprep.subr.mxu0 0.0
  %486 = vmatpush2.msra.mxu0 0.0
  %487 = vmatprep.subr.mxu0 0.0
  %488 = vmatpush2.msra.mxu0 0.0
  %489 = vmatprep.subr.mxu0 0.0
  %490 = vmatpush2.msra.mxu0 0.0
  %491 = vmatprep.subr.mxu0 0.0
  %492 = vmatpush2.msra.mxu0 0.0
  %493 = vmatprep.subr.mxu0 0.0
  %494 = vmatpush2.msra.mxu0 0.0
  %495 = vmatprep.subr.mxu0 0.0
  %496 = vmatpush2.msra.mxu0 0.0
  %497 = vmatprep.mubr.f32.mxu0 0.0
  %498 = vmatmul.mubr.f32.gmra.mxu0 0.0
  %v499 = vpop.f32.mrf.mxu0
  %v500 = vadd.f32 0.0, %v499
  %v501 = vpop.f32.mrf.mxu0
  %v502 = vadd.f32 0.0, %v501
  %503 = vdwg.mxu0
  %504 = vmatprep.subr.mxu0 %v432
  %505 = vmatpush1.msra.mxu0 %v431
  %506 = vmatprep.subr.mxu0 %v428
  %507 = vmatpush1.msra.mxu0 %v427
  %508 = vmatprep.subr.mxu0 %v424
  %509 = vmatpush1.msra.mxu0 %v423
  %510 = vmatprep.subr.mxu0 %v420
  %511 = vmatpush1.msra.mxu0 %v419
  %512 = vmatprep.subr.mxu0 %v416
  %513 = vmatpush1.msra.mxu0 %v415
  %514 = vmatprep.subr.mxu0 %v412
  %515 = vmatpush1.msra.mxu0 %v411
  %516 = vmatprep.subr.mxu0 %v408
  %517 = vmatpush1.msra.mxu0 %v407
  %518 = vmatprep.subr.mxu0 %v404
  %519 = vmatpush1.msra.mxu0 %v403
  %520 = vmatprep.subr.mxu0 %v400
  %521 = vmatpush1.msra.mxu0 %v399
  %522 = vmatprep.subr.mxu0 %v396
  %523 = vmatpush1.msra.mxu0 %v395
  %524 = vmatprep.subr.mxu0 %v392
  %525 = vmatpush1.msra.mxu0 %v391
  %526 = vmatprep.subr.mxu0 %v388
  %527 = vmatpush1.msra.mxu0 %v387
  %528 = vmatprep.subr.mxu0 %v384
  %529 = vmatpush1.msra.mxu0 %v383
  %530 = vmatprep.subr.mxu0 %v380
  %531 = vmatpush1.msra.mxu0 %v379
  %532 = vmatprep.subr.mxu0 %v376
  %533 = vmatpush1.msra.mxu0 %v375
  %534 = vmatprep.subr.mxu0 %v372
  %535 = vmatpush1.msra.mxu0 %v371
  %536 = vmatprep.subr.mxu0 0.0
  %537 = vmatpush2.msra.mxu0 0.0
  %538 = vmatprep.subr.mxu0 0.0
  %539 = vmatpush2.msra.mxu0 0.0
  %540 = vmatprep.subr.mxu0 0.0
  %541 = vmatpush2.msra.mxu0 0.0
  %542 = vmatprep.subr.mxu0 0.0
  %543 = vmatpush2.msra.mxu0 0.0
  %544 = vmatprep.subr.mxu0 0.0
  %545 = vmatpush2.msra.mxu0 0.0
  %546 = vmatprep.subr.mxu0 0.0
  %547 = vmatpush2.msra.mxu0 0.0
  %548 = vmatprep.subr.mxu0 0.0
  %549 = vmatpush2.msra.mxu0 0.0
  %550 = vmatprep.subr.mxu0 0.0
  %551 = vmatpush2.msra.mxu0 0.0
  %552 = vmatprep.subr.mxu0 0.0
  %553 = vmatpush2.msra.mxu0 0.0
  %554 = vmatprep.subr.mxu0 0.0
  %555 = vmatpush2.msra.mxu0 0.0
  %556 = vmatprep.subr.mxu0 0.0
  %557 = vmatpush2.msra.mxu0 0.0
  %558 = vmatprep.subr.mxu0 0.0
  %559 = vmatpush2.msra.mxu0 0.0
  %560 = vmatprep.subr.mxu0 0.0
  %561 = vmatpush2.msra.mxu0 0.0
  %562 = vmatprep.subr.mxu0 0.0
  %563 = vmatpush2.msra.mxu0 0.0
  %564 = vmatprep.subr.mxu0 0.0
  %565 = vmatpush2.msra.mxu0 0.0
  %566 = vmatprep.subr.mxu0 0.0
  %567 = vmatpush2.msra.mxu0 0.0
  %568 = vmatprep.mubr.f32.mxu0 0.0
  %569 = vmatmul.mubr.f32.gmra.mxu0 0.0
  %v570 = vpop.f32.mrf.mxu0
  %v571 = vadd.f32 0.0, %v570
  %v572 = vpop.f32.mrf.mxu0
  %v573 = vadd.f32 0.0, %v572
  %574 = vdwg.mxu0
  %v575 = vadd.f32 %v365, %v500
  %v576 = vadd.f32 %v366, %v502
  %v577 = vadd.f32 %v367, %v571
  %v578 = vadd.f32 %v368, %v573
  %v579 = vxor.u32 %v575, 2147483648
  %v580 = vmul.f32 %v579, 1.442695
  %v581 = vpow.pop %v580
  %v582 = vadd.f32 %v581, 1.0
  %v583 = vrcp.pop %v582
  %v584 = vmul.f32 1.0, %v583
  %v585 = vxor.u32 %v576, 2147483648
  %v586 = vmul.f32 %v585, 1.442695
  %v587 = vpow.pop %v586
  %v588 = vadd.f32 %v587, 1.0
  %v589 = vrcp.pop %v588
  %v590 = vmul.f32 1.0, %v589
  %v591 = vtanh.pop %v577
  %v592 = vxor.u32 %v578, 2147483648
  %v593 = vmul.f32 %v592, 1.442695
  %v594 = vpow.pop %v593
  %v595 = vadd.f32 %v594, 1.0
  %v596 = vrcp.pop %v595
  %v597 = vmul.f32 1.0, %v596
  %v598 = vmul.f32 %v590, 0.0
  %v599 = vmul.f32 %v584, %v591
  %v600 = vadd.f32 %v598, %v599
  %v601 = vtanh.pop %v600
  %v602 = vmul.f32 %v597, %v601
  %v603 = vld [vmem:[%s4] sm:$0xff]
  %v604 = vld [vmem:[%s4 + $0x8] sm:$0xff]
  %v605 = vld [vmem:[%s4 + $0x10] sm:$0xff]
  %v606 = vld [vmem:[%s4 + $0x18] sm:$0xff]
  %v607 = vld [vmem:[%s4 + $0x20] sm:$0xff]
  %v608 = vld [vmem:[%s4 + $0x28] sm:$0xff]
  %v609 = vld [vmem:[%s4 + $0x30] sm:$0xff]
  %v610 = vld [vmem:[%s4 + $0x38] sm:$0xff]
  %v611 = vld [vmem:[%s4 + $0x40] sm:$0xff]
  %v612 = vld [vmem:[%s4 + $0x48] sm:$0xff]
  %v613 = vld [vmem:[%s4 + $0x50] sm:$0xff]
  %v614 = vld [vmem:[%s4 + $0x58] sm:$0xff]
  %v615 = vld [vmem:[%s4 + $0x60] sm:$0xff]
  %v616 = vld [vmem:[%s4 + $0x68] sm:$0xff]
  %v617 = vld [vmem:[%s4 + $0x70] sm:$0xff]
  %v618 = vld [vmem:[%s4 + $0x78] sm:$0xff]
  %v619 = vld [vmem:[%s4 + $0x80] sm:$0xff]
  %v620 = vld [vmem:[%s4 + $0x88] sm:$0xff]
  %v621 = vld [vmem:[%s4 + $0x90] sm:$0xff]
  %v622 = vld [vmem:[%s4 + $0x98] sm:$0xff]
  %v623 = vld [vmem:[%s4 + $0xa0] sm:$0xff]
  %v624 = vld [vmem:[%s4 + $0xa8] sm:$0xff]
  %v625 = vld [vmem:[%s4 + $0xb0] sm:$0xff]
  %v626 = vld [vmem:[%s4 + $0xb8] sm:$0xff]
  %v627 = vld [vmem:[%s4 + $0xc0] sm:$0xff]
  %v628 = vld [vmem:[%s4 + $0xc8] sm:$0xff]
  %v629 = vld [vmem:[%s4 + $0xd0] sm:$0xff]
  %v630 = vld [vmem:[%s4 + $0xd8] sm:$0xff]
  %v631 = vld [vmem:[%s4 + $0xe0] sm:$0xff]
  %v632 = vld [vmem:[%s4 + $0xe8] sm:$0xff]
  %v633 = vld [vmem:[%s4 + $0xf0] sm:$0xff]
  %v634 = vld [vmem:[%s4 + $0xf8] sm:$0xff]
  %v635 = vld [vmem:[%s4 + $0x100] sm:$0xff]
  %v636 = vld [vmem:[%s4 + $0x108] sm:$0xff]
  %v637 = vld [vmem:[%s4 + $0x110] sm:$0xff]
  %v638 = vld [vmem:[%s4 + $0x118] sm:$0xff]
  %v639 = vld [vmem:[%s4 + $0x120] sm:$0xff]
  %v640 = vld [vmem:[%s4 + $0x128] sm:$0xff]
  %v641 = vld [vmem:[%s4 + $0x130] sm:$0xff]
  %v642 = vld [vmem:[%s4 + $0x138] sm:$0xff]
  %v643 = vld [vmem:[%s4 + $0x140] sm:$0xff]
  %v644 = vld [vmem:[%s4 + $0x148] sm:$0xff]
  %v645 = vld [vmem:[%s4 + $0x150] sm:$0xff]
  %v646 = vld [vmem:[%s4 + $0x158] sm:$0xff]
  %v647 = vld [vmem:[%s4 + $0x160] sm:$0xff]
  %v648 = vld [vmem:[%s4 + $0x168] sm:$0xff]
  %v649 = vld [vmem:[%s4 + $0x170] sm:$0xff]
  %v650 = vld [vmem:[%s4 + $0x178] sm:$0xff]
  %v651 = vld [vmem:[%s4 + $0x180] sm:$0xff]
  %v652 = vld [vmem:[%s4 + $0x188] sm:$0xff]
  %v653 = vld [vmem:[%s4 + $0x190] sm:$0xff]
  %v654 = vld [vmem:[%s4 + $0x198] sm:$0xff]
  %v655 = vld [vmem:[%s4 + $0x1a0] sm:$0xff]
  %v656 = vld [vmem:[%s4 + $0x1a8] sm:$0xff]
  %v657 = vld [vmem:[%s4 + $0x1b0] sm:$0xff]
  %v658 = vld [vmem:[%s4 + $0x1b8] sm:$0xff]
  %v659 = vld [vmem:[%s4 + $0x1c0] sm:$0xff]
  %v660 = vld [vmem:[%s4 + $0x1c8] sm:$0xff]
  %v661 = vld [vmem:[%s4 + $0x1d0] sm:$0xff]
  %v662 = vld [vmem:[%s4 + $0x1d8] sm:$0xff]
  %v663 = vld [vmem:[%s4 + $0x1e0] sm:$0xff]
  %v664 = vld [vmem:[%s4 + $0x1e8] sm:$0xff]
  %v665 = vld [vmem:[%s4 + $0x1f0] sm:$0xff]
  %v666 = vld [vmem:[%s4 + $0x1f8] sm:$0xff]
  %v667 = vld [vmem:[%s4 + $0x200] sm:$0xff]
  %v668 = vld [vmem:[%s4 + $0x208] sm:$0xff]
  %v669 = vld [vmem:[%s4 + $0x210] sm:$0xff]
  %v670 = vld [vmem:[%s4 + $0x218] sm:$0xff]
  %v671 = vld [vmem:[%s4 + $0x220] sm:$0xff]
  %v672 = vld [vmem:[%s4 + $0x228] sm:$0xff]
  %v673 = vld [vmem:[%s4 + $0x230] sm:$0xff]
  %v674 = vld [vmem:[%s4 + $0x238] sm:$0xff]
  %v675 = vld [vmem:[%s4 + $0x240] sm:$0xff]
  %v676 = vld [vmem:[%s4 + $0x248] sm:$0xff]
  %v677 = vld [vmem:[%s4 + $0x250] sm:$0xff]
  %v678 = vld [vmem:[%s4 + $0x258] sm:$0xff]
  %v679 = vld [vmem:[%s4 + $0x260] sm:$0xff]
  %v680 = vld [vmem:[%s4 + $0x268] sm:$0xff]
  %v681 = vld [vmem:[%s4 + $0x270] sm:$0xff]
  %v682 = vld [vmem:[%s4 + $0x278] sm:$0xff]
  %v683 = vld [vmem:[%s4 + $0x280] sm:$0xff]
  %v684 = vld [vmem:[%s4 + $0x288] sm:$0xff]
  %v685 = vld [vmem:[%s4 + $0x290] sm:$0xff]
  %v686 = vld [vmem:[%s4 + $0x298] sm:$0xff]
  %v687 = vld [vmem:[%s4 + $0x2a0] sm:$0xff]
  %v688 = vld [vmem:[%s4 + $0x2a8] sm:$0xff]
  %v689 = vld [vmem:[%s4 + $0x2b0] sm:$0xff]
  %v690 = vld [vmem:[%s4 + $0x2b8] sm:$0xff]
  %v691 = vld [vmem:[%s4 + $0x2c0] sm:$0xff]
  %v692 = vld [vmem:[%s4 + $0x2c8] sm:$0xff]
  %v693 = vld [vmem:[%s4 + $0x2d0] sm:$0xff]
  %v694 = vld [vmem:[%s4 + $0x2d8] sm:$0xff]
  %v695 = vld [vmem:[%s4 + $0x2e0] sm:$0xff]
  %v696 = vld [vmem:[%s4 + $0x2e8] sm:$0xff]
  %v697 = vld [vmem:[%s4 + $0x2f0] sm:$0xff]
  %v698 = vld [vmem:[%s4 + $0x2f8] sm:$0xff]
  %v699 = vld [vmem:[%s4 + $0x300] sm:$0xff]
  %v700 = vld [vmem:[%s4 + $0x308] sm:$0xff]
  %v701 = vld [vmem:[%s4 + $0x310] sm:$0xff]
  %v702 = vld [vmem:[%s4 + $0x318] sm:$0xff]
  %v703 = vld [vmem:[%s4 + $0x320] sm:$0xff]
  %v704 = vld [vmem:[%s4 + $0x328] sm:$0xff]
  %v705 = vld [vmem:[%s4 + $0x330] sm:$0xff]
  %v706 = vld [vmem:[%s4 + $0x338] sm:$0xff]
  %v707 = vld [vmem:[%s4 + $0x340] sm:$0xff]
  %v708 = vld [vmem:[%s4 + $0x348] sm:$0xff]
  %v709 = vld [vmem:[%s4 + $0x350] sm:$0xff]
  %v710 = vld [vmem:[%s4 + $0x358] sm:$0xff]
  %v711 = vld [vmem:[%s4 + $0x360] sm:$0xff]
  %v712 = vld [vmem:[%s4 + $0x368] sm:$0xff]
  %v713 = vld [vmem:[%s4 + $0x370] sm:$0xff]
  %v714 = vld [vmem:[%s4 + $0x378] sm:$0xff]
  %v715 = vld [vmem:[%s4 + $0x380] sm:$0xff]
  %v716 = vld [vmem:[%s4 + $0x388] sm:$0xff]
  %v717 = vld [vmem:[%s4 + $0x390] sm:$0xff]
  %v718 = vld [vmem:[%s4 + $0x398] sm:$0xff]
  %v719 = vld [vmem:[%s4 + $0x3a0] sm:$0xff]
  %v720 = vld [vmem:[%s4 + $0x3a8] sm:$0xff]
  %v721 = vld [vmem:[%s4 + $0x3b0] sm:$0xff]
  %v722 = vld [vmem:[%s4 + $0x3b8] sm:$0xff]
  %v723 = vld [vmem:[%s4 + $0x3c0] sm:$0xff]
  %v724 = vld [vmem:[%s4 + $0x3c8] sm:$0xff]
  %v725 = vld [vmem:[%s4 + $0x3d0] sm:$0xff]
  %v726 = vld [vmem:[%s4 + $0x3d8] sm:$0xff]
  %v727 = vld [vmem:[%s4 + $0x3e0] sm:$0xff]
  %v728 = vld [vmem:[%s4 + $0x3e8] sm:$0xff]
  %v729 = vld [vmem:[%s4 + $0x3f0] sm:$0xff]
  %v730 = vld [vmem:[%s4 + $0x3f8] sm:$0xff]
  %v731 = vld [vmem:[%s5] sm:$0xf]
  %v733 = vlaneseq
  %v734 = vshrl.u32 %v733, 7
  %v735 = vsub.s32 0, %v734
  %v736 = vrot.slane %v731, %v735
  %v737 = vlaneseq
  %v738 = vshrl.u32 %v737, 7
  %v739 = vsub.s32 1, %v738
  %v740 = vrot.slane %v731, %v739
  %v741 = vlaneseq
  %v742 = vshrl.u32 %v741, 7
  %v743 = vsub.s32 2, %v742
  %v744 = vrot.slane %v731, %v743
  %v745 = vlaneseq
  %v746 = vshrl.u32 %v745, 7
  %v747 = vsub.s32 3, %v746
  %v748 = vrot.slane %v731, %v747
  %753 = vmatprep.subr.mxu0 %v664
  %754 = vmatpush1.msra.mxu0 %v663
  %755 = vmatprep.subr.mxu0 %v660
  %756 = vmatpush1.msra.mxu0 %v659
  %757 = vmatprep.subr.mxu0 %v656
  %758 = vmatpush1.msra.mxu0 %v655
  %759 = vmatprep.subr.mxu0 %v652
  %760 = vmatpush1.msra.mxu0 %v651
  %761 = vmatprep.subr.mxu0 %v648
  %762 = vmatpush1.msra.mxu0 %v647
  %763 = vmatprep.subr.mxu0 %v644
  %764 = vmatpush1.msra.mxu0 %v643
  %765 = vmatprep.subr.mxu0 %v640
  %766 = vmatpush1.msra.mxu0 %v639
  %767 = vmatprep.subr.mxu0 %v636
  %768 = vmatpush1.msra.mxu0 %v635
  %769 = vmatprep.subr.mxu0 %v632
  %770 = vmatpush1.msra.mxu0 %v631
  %771 = vmatprep.subr.mxu0 %v628
  %772 = vmatpush1.msra.mxu0 %v627
  %773 = vmatprep.subr.mxu0 %v624
  %774 = vmatpush1.msra.mxu0 %v623
  %775 = vmatprep.subr.mxu0 %v620
  %776 = vmatpush1.msra.mxu0 %v619
  %777 = vmatprep.subr.mxu0 %v616
  %778 = vmatpush1.msra.mxu0 %v615
  %779 = vmatprep.subr.mxu0 %v612
  %780 = vmatpush1.msra.mxu0 %v611
  %781 = vmatprep.subr.mxu0 %v608
  %782 = vmatpush1.msra.mxu0 %v607
  %783 = vmatprep.subr.mxu0 %v604
  %784 = vmatpush1.msra.mxu0 %v603
  %785 = vmatprep.subr.mxu0 %v728
  %786 = vmatpush2.msra.mxu0 %v727
  %787 = vmatprep.subr.mxu0 %v724
  %788 = vmatpush2.msra.mxu0 %v723
  %789 = vmatprep.subr.mxu0 %v720
  %790 = vmatpush2.msra.mxu0 %v719
  %791 = vmatprep.subr.mxu0 %v716
  %792 = vmatpush2.msra.mxu0 %v715
  %793 = vmatprep.subr.mxu0 %v712
  %794 = vmatpush2.msra.mxu0 %v711
  %795 = vmatprep.subr.mxu0 %v708
  %796 = vmatpush2.msra.mxu0 %v707
  %797 = vmatprep.subr.mxu0 %v704
  %798 = vmatpush2.msra.mxu0 %v703
  %799 = vmatprep.subr.mxu0 %v700
  %800 = vmatpush2.msra.mxu0 %v699
  %801 = vmatprep.subr.mxu0 %v696
  %802 = vmatpush2.msra.mxu0 %v695
  %803 = vmatprep.subr.mxu0 %v692
  %804 = vmatpush2.msra.mxu0 %v691
  %805 = vmatprep.subr.mxu0 %v688
  %806 = vmatpush2.msra.mxu0 %v687
  %807 = vmatprep.subr.mxu0 %v684
  %808 = vmatpush2.msra.mxu0 %v683
  %809 = vmatprep.subr.mxu0 %v680
  %810 = vmatpush2.msra.mxu0 %v679
  %811 = vmatprep.subr.mxu0 %v676
  %812 = vmatpush2.msra.mxu0 %v675
  %813 = vmatprep.subr.mxu0 %v672
  %814 = vmatpush2.msra.mxu0 %v671
  %815 = vmatprep.subr.mxu0 %v668
  %816 = vmatpush2.msra.mxu0 %v667
  %817 = vmatprep.mubr.f32.mxu0 0.0
  %818 = vmatmul.mubr.f32.gmra.mxu0 %v602
  %v819 = vpop.f32.mrf.mxu0
  %v820 = vadd.f32 %v736, %v819
  %v821 = vpop.f32.mrf.mxu0
  %v822 = vadd.f32 %v740, %v821
  %823 = vdwg.mxu0
  %824 = vmatprep.subr.mxu0 %v666
  %825 = vmatpush1.msra.mxu0 %v665
  %826 = vmatprep.subr.mxu0 %v662
  %827 = vmatpush1.msra.mxu0 %v661
  %828 = vmatprep.subr.mxu0 %v658
  %829 = vmatpush1.msra.mxu0 %v657
  %830 = vmatprep.subr.mxu0 %v654
  %831 = vmatpush1.msra.mxu0 %v653
  %832 = vmatprep.subr.mxu0 %v650
  %833 = vmatpush1.msra.mxu0 %v649
  %834 = vmatprep.subr.mxu0 %v646
  %835 = vmatpush1.msra.mxu0 %v645
  %836 = vmatprep.subr.mxu0 %v642
  %837 = vmatpush1.msra.mxu0 %v641
  %838 = vmatprep.subr.mxu0 %v638
  %839 = vmatpush1.msra.mxu0 %v637
  %840 = vmatprep.subr.mxu0 %v634
  %841 = vmatpush1.msra.mxu0 %v633
  %842 = vmatprep.subr.mxu0 %v630
  %843 = vmatpush1.msra.mxu0 %v629
  %844 = vmatprep.subr.mxu0 %v626
  %845 = vmatpush1.msra.mxu0 %v625
  %846 = vmatprep.subr.mxu0 %v622
  %847 = vmatpush1.msra.mxu0 %v621
  %848 = vmatprep.subr.mxu0 %v618
  %849 = vmatpush1.msra.mxu0 %v617
  %850 = vmatprep.subr.mxu0 %v614
  %851 = vmatpush1.msra.mxu0 %v613
  %852 = vmatprep.subr.mxu0 %v610
  %853 = vmatpush1.msra.mxu0 %v609
  %854 = vmatprep.subr.mxu0 %v606
  %855 = vmatpush1.msra.mxu0 %v605
  %856 = vmatprep.subr.mxu0 %v730
  %857 = vmatpush2.msra.mxu0 %v729
  %858 = vmatprep.subr.mxu0 %v726
  %859 = vmatpush2.msra.mxu0 %v725
  %860 = vmatprep.subr.mxu0 %v722
  %861 = vmatpush2.msra.mxu0 %v721
  %862 = vmatprep.subr.mxu0 %v718
  %863 = vmatpush2.msra.mxu0 %v717
  %864 = vmatprep.subr.mxu0 %v714
  %865 = vmatpush2.msra.mxu0 %v713
  %866 = vmatprep.subr.mxu0 %v710
  %867 = vmatpush2.msra.mxu0 %v709
  %868 = vmatprep.subr.mxu0 %v706
  %869 = vmatpush2.msra.mxu0 %v705
  %870 = vmatprep.subr.mxu0 %v702
  %871 = vmatpush2.msra.mxu0 %v701
  %872 = vmatprep.subr.mxu0 %v698
  %873 = vmatpush2.msra.mxu0 %v697
  %874 = vmatprep.subr.mxu0 %v694
  %875 = vmatpush2.msra.mxu0 %v693
  %876 = vmatprep.subr.mxu0 %v690
  %877 = vmatpush2.msra.mxu0 %v689
  %878 = vmatprep.subr.mxu0 %v686
  %879 = vmatpush2.msra.mxu0 %v685
  %880 = vmatprep.subr.mxu0 %v682
  %881 = vmatpush2.msra.mxu0 %v681
  %882 = vmatprep.subr.mxu0 %v678
  %883 = vmatpush2.msra.mxu0 %v677
  %884 = vmatprep.subr.mxu0 %v674
  %885 = vmatpush2.msra.mxu0 %v673
  %886 = vmatprep.subr.mxu0 %v670
  %887 = vmatpush2.msra.mxu0 %v669
  %888 = vmatprep.mubr.f32.mxu0 0.0
  %889 = vmatmul.mubr.f32.gmra.mxu0 %v602
  %v890 = vpop.f32.mrf.mxu0
  %v891 = vadd.f32 %v744, %v890
  %v892 = vpop.f32.mrf.mxu0
  %v893 = vadd.f32 %v748, %v892
  %894 = vdwg.mxu0
  %v895 = vxor.u32 %v820, 2147483648
  %v896 = vmul.f32 %v895, 1.442695
  %v897 = vpow.pop %v896
  %v898 = vadd.f32 %v897, 1.0
  %v899 = vrcp.pop %v898
  %v900 = vmul.f32 1.0, %v899
  %v901 = vxor.u32 %v822, 2147483648
  %v902 = vmul.f32 %v901, 1.442695
  %v903 = vpow.pop %v902
  %v904 = vadd.f32 %v903, 1.0
  %v905 = vrcp.pop %v904
  %v906 = vmul.f32 1.0, %v905
  %v907 = vtanh.pop %v891
  %v908 = vxor.u32 %v893, 2147483648
  %v909 = vmul.f32 %v908, 1.442695
  %v910 = vpow.pop %v909
  %v911 = vadd.f32 %v910, 1.0
  %v912 = vrcp.pop %v911
  %v913 = vmul.f32 1.0, %v912
  %v914 = vmul.f32 %v906, 0.0
  %v915 = vmul.f32 %v900, %v907
  %v916 = vadd.f32 %v914, %v915
  %v917 = vtanh.pop %v916
  %v918 = vmul.f32 %v913, %v917
  %919 = vst [vmem:[#allocation3] sm:$0xff] %v918
  %s920 = smul.u32 1, 4
  %s921 = smul.addr %s920, 8
  %s922 = scalar_lea.vmem [#allocation2], %s921
  %v923 = vld [vmem:[%s922] sm:$0xff]
  %v924 = vld [vmem:[%s922 + $0x8] sm:$0xff]
  %v925 = vld [vmem:[%s922 + $0x10] sm:$0xff]
  %v926 = vld [vmem:[%s922 + $0x18] sm:$0xff]
  %v927 = vld [vmem:[%s3] sm:$0xff]
  %v928 = vld [vmem:[%s3 + $0x8] sm:$0xff]
  %v929 = vld [vmem:[%s3 + $0x10] sm:$0xff]
  %v930 = vld [vmem:[%s3 + $0x18] sm:$0xff]
  %v931 = vld [vmem:[%s3 + $0x20] sm:$0xff]
  %v932 = vld [vmem:[%s3 + $0x28] sm:$0xff]
  %v933 = vld [vmem:[%s3 + $0x30] sm:$0xff]
  %v934 = vld [vmem:[%s3 + $0x38] sm:$0xff]
  %v935 = vld [vmem:[%s3 + $0x40] sm:$0xff]
  %v936 = vld [vmem:[%s3 + $0x48] sm:$0xff]
  %v937 = vld [vmem:[%s3 + $0x50] sm:$0xff]
  %v938 = vld [vmem:[%s3 + $0x58] sm:$0xff]
  %v939 = vld [vmem:[%s3 + $0x60] sm:$0xff]
  %v940 = vld [vmem:[%s3 + $0x68] sm:$0xff]
  %v941 = vld [vmem:[%s3 + $0x70] sm:$0xff]
  %v942 = vld [vmem:[%s3 + $0x78] sm:$0xff]
  %v943 = vld [vmem:[%s3 + $0x80] sm:$0xff]
  %v944 = vld [vmem:[%s3 + $0x88] sm:$0xff]
  %v945 = vld [vmem:[%s3 + $0x90] sm:$0xff]
  %v946 = vld [vmem:[%s3 + $0x98] sm:$0xff]
  %v947 = vld [vmem:[%s3 + $0xa0] sm:$0xff]
  %v948 = vld [vmem:[%s3 + $0xa8] sm:$0xff]
  %v949 = vld [vmem:[%s3 + $0xb0] sm:$0xff]
  %v950 = vld [vmem:[%s3 + $0xb8] sm:$0xff]
  %v951 = vld [vmem:[%s3 + $0xc0] sm:$0xff]
  %v952 = vld [vmem:[%s3 + $0xc8] sm:$0xff]
  %v953 = vld [vmem:[%s3 + $0xd0] sm:$0xff]
  %v954 = vld [vmem:[%s3 + $0xd8] sm:$0xff]
  %v955 = vld [vmem:[%s3 + $0xe0] sm:$0xff]
  %v956 = vld [vmem:[%s3 + $0xe8] sm:$0xff]
  %v957 = vld [vmem:[%s3 + $0xf0] sm:$0xff]
  %v958 = vld [vmem:[%s3 + $0xf8] sm:$0xff]
  %v959 = vld [vmem:[%s3 + $0x100] sm:$0xff]
  %v960 = vld [vmem:[%s3 + $0x108] sm:$0xff]
  %v961 = vld [vmem:[%s3 + $0x110] sm:$0xff]
  %v962 = vld [vmem:[%s3 + $0x118] sm:$0xff]
  %v963 = vld [vmem:[%s3 + $0x120] sm:$0xff]
  %v964 = vld [vmem:[%s3 + $0x128] sm:$0xff]
  %v965 = vld [vmem:[%s3 + $0x130] sm:$0xff]
  %v966 = vld [vmem:[%s3 + $0x138] sm:$0xff]
  %v967 = vld [vmem:[%s3 + $0x140] sm:$0xff]
  %v968 = vld [vmem:[%s3 + $0x148] sm:$0xff]
  %v969 = vld [vmem:[%s3 + $0x150] sm:$0xff]
  %v970 = vld [vmem:[%s3 + $0x158] sm:$0xff]
  %v971 = vld [vmem:[%s3 + $0x160] sm:$0xff]
  %v972 = vld [vmem:[%s3 + $0x168] sm:$0xff]
  %v973 = vld [vmem:[%s3 + $0x170] sm:$0xff]
  %v974 = vld [vmem:[%s3 + $0x178] sm:$0xff]
  %v975 = vld [vmem:[%s3 + $0x180] sm:$0xff]
  %v976 = vld [vmem:[%s3 + $0x188] sm:$0xff]
  %v977 = vld [vmem:[%s3 + $0x190] sm:$0xff]
  %v978 = vld [vmem:[%s3 + $0x198] sm:$0xff]
  %v979 = vld [vmem:[%s3 + $0x1a0] sm:$0xff]
  %v980 = vld [vmem:[%s3 + $0x1a8] sm:$0xff]
  %v981 = vld [vmem:[%s3 + $0x1b0] sm:$0xff]
  %v982 = vld [vmem:[%s3 + $0x1b8] sm:$0xff]
  %v983 = vld [vmem:[%s3 + $0x1c0] sm:$0xff]
  %v984 = vld [vmem:[%s3 + $0x1c8] sm:$0xff]
  %v985 = vld [vmem:[%s3 + $0x1d0] sm:$0xff]
  %v986 = vld [vmem:[%s3 + $0x1d8] sm:$0xff]
  %v987 = vld [vmem:[%s3 + $0x1e0] sm:$0xff]
  %v988 = vld [vmem:[%s3 + $0x1e8] sm:$0xff]
  %v989 = vld [vmem:[%s3 + $0x1f0] sm:$0xff]
  %v990 = vld [vmem:[%s3 + $0x1f8] sm:$0xff]
  %991 = vmatprep.subr.mxu0 %v988
  %992 = vmatpush1.msra.mxu0 %v987
  %993 = vmatprep.subr.mxu0 %v984
  %994 = vmatpush1.msra.mxu0 %v983
  %995 = vmatprep.subr.mxu0 %v980
  %996 = vmatpush1.msra.mxu0 %v979
  %997 = vmatprep.subr.mxu0 %v976
  %998 = vmatpush1.msra.mxu0 %v975
  %999 = vmatprep.subr.mxu0 %v972
  %1000 = vmatpush1.msra.mxu0 %v971
  %1001 = vmatprep.subr.mxu0 %v968
  %1002 = vmatpush1.msra.mxu0 %v967
  %1003 = vmatprep.subr.mxu0 %v964
  %1004 = vmatpush1.msra.mxu0 %v963
  %1005 = vmatprep.subr.mxu0 %v960
  %1006 = vmatpush1.msra.mxu0 %v959
  %1007 = vmatprep.subr.mxu0 %v956
  %1008 = vmatpush1.msra.mxu0 %v955
  %1009 = vmatprep.subr.mxu0 %v952
  %1010 = vmatpush1.msra.mxu0 %v951
  %1011 = vmatprep.subr.mxu0 %v948
  %1012 = vmatpush1.msra.mxu0 %v947
  %1013 = vmatprep.subr.mxu0 %v944
  %1014 = vmatpush1.msra.mxu0 %v943
  %1015 = vmatprep.subr.mxu0 %v940
  %1016 = vmatpush1.msra.mxu0 %v939
  %1017 = vmatprep.subr.mxu0 %v936
  %1018 = vmatpush1.msra.mxu0 %v935
  %1019 = vmatprep.subr.mxu0 %v932
  %1020 = vmatpush1.msra.mxu0 %v931
  %1021 = vmatprep.subr.mxu0 %v928
  %1022 = vmatpush1.msra.mxu0 %v927
  %1023 = vmatprep.subr.mxu0 0.0
  %1024 = vmatpush2.msra.mxu0 0.0
  %1025 = vmatprep.subr.mxu0 0.0
  %1026 = vmatpush2.msra.mxu0 0.0
  %1027 = vmatprep.subr.mxu0 0.0
  %1028 = vmatpush2.msra.mxu0 0.0
  %1029 = vmatprep.subr.mxu0 0.0
  %1030 = vmatpush2.msra.mxu0 0.0
  %1031 = vmatprep.subr.mxu0 0.0
  %1032 = vmatpush2.msra.mxu0 0.0
  %1033 = vmatprep.subr.mxu0 0.0
  %1034 = vmatpush2.msra.mxu0 0.0
  %1035 = vmatprep.subr.mxu0 0.0
  %1036 = vmatpush2.msra.mxu0 0.0
  %1037 = vmatprep.subr.mxu0 0.0
  %1038 = vmatpush2.msra.mxu0 0.0
  %1039 = vmatprep.subr.mxu0 0.0
  %1040 = vmatpush2.msra.mxu0 0.0
  %1041 = vmatprep.subr.mxu0 0.0
  %1042 = vmatpush2.msra.mxu0 0.0
  %1043 = vmatprep.subr.mxu0 0.0
  %1044 = vmatpush2.msra.mxu0 0.0
  %1045 = vmatprep.subr.mxu0 0.0
  %1046 = vmatpush2.msra.mxu0 0.0
  %1047 = vmatprep.subr.mxu0 0.0
  %1048 = vmatpush2.msra.mxu0 0.0
  %1049 = vmatprep.subr.mxu0 0.0
  %1050 = vmatpush2.msra.mxu0 0.0
  %1051 = vmatprep.subr.mxu0 0.0
  %1052 = vmatpush2.msra.mxu0 0.0
  %1053 = vmatprep.subr.mxu0 0.0
  %1054 = vmatpush2.msra.mxu0 0.0
  %1055 = vmatprep.mubr.f32.mxu0 0.0
  %1056 = vmatmul.mubr.f32.gmra.mxu0 %v602
  %v1057 = vpop.f32.mrf.mxu0
  %v1058 = vadd.f32 0.0, %v1057
  %v1059 = vpop.f32.mrf.mxu0
  %v1060 = vadd.f32 0.0, %v1059
  %1061 = vdwg.mxu0
  %1062 = vmatprep.subr.mxu0 %v990
  %1063 = vmatpush1.msra.mxu0 %v989
  %1064 = vmatprep.subr.mxu0 %v986
  %1065 = vmatpush1.msra.mxu0 %v985
  %1066 = vmatprep.subr.mxu0 %v982
  %1067 = vmatpush1.msra.mxu0 %v981
  %1068 = vmatprep.subr.mxu0 %v978
  %1069 = vmatpush1.msra.mxu0 %v977
  %1070 = vmatprep.subr.mxu0 %v974
  %1071 = vmatpush1.msra.mxu0 %v973
  %1072 = vmatprep.subr.mxu0 %v970
  %1073 = vmatpush1.msra.mxu0 %v969
  %1074 = vmatprep.subr.mxu0 %v966
  %1075 = vmatpush1.msra.mxu0 %v965
  %1076 = vmatprep.subr.mxu0 %v962
  %1077 = vmatpush1.msra.mxu0 %v961
  %1078 = vmatprep.subr.mxu0 %v958
  %1079 = vmatpush1.msra.mxu0 %v957
  %1080 = vmatprep.subr.mxu0 %v954
  %1081 = vmatpush1.msra.mxu0 %v953
  %1082 = vmatprep.subr.mxu0 %v950
  %1083 = vmatpush1.msra.mxu0 %v949
  %1084 = vmatprep.subr.mxu0 %v946
  %1085 = vmatpush1.msra.mxu0 %v945
  %1086 = vmatprep.subr.mxu0 %v942
  %1087 = vmatpush1.msra.mxu0 %v941
  %1088 = vmatprep.subr.mxu0 %v938
  %1089 = vmatpush1.msra.mxu0 %v937
  %1090 = vmatprep.subr.mxu0 %v934
  %1091 = vmatpush1.msra.mxu0 %v933
  %1092 = vmatprep.subr.mxu0 %v930
  %1093 = vmatpush1.msra.mxu0 %v929
  %1094 = vmatprep.subr.mxu0 0.0
  %1095 = vmatpush2.msra.mxu0 0.0
  %1096 = vmatprep.subr.mxu0 0.0
  %1097 = vmatpush2.msra.mxu0 0.0
  %1098 = vmatprep.subr.mxu0 0.0
  %1099 = vmatpush2.msra.mxu0 0.0
  %1100 = vmatprep.subr.mxu0 0.0
  %1101 = vmatpush2.msra.mxu0 0.0
  %1102 = vmatprep.subr.mxu0 0.0
  %1103 = vmatpush2.msra.mxu0 0.0
  %1104 = vmatprep.subr.mxu0 0.0
  %1105 = vmatpush2.msra.mxu0 0.0
  %1106 = vmatprep.subr.mxu0 0.0
  %1107 = vmatpush2.msra.mxu0 0.0
  %1108 = vmatprep.subr.mxu0 0.0
  %1109 = vmatpush2.msra.mxu0 0.0
  %1110 = vmatprep.subr.mxu0 0.0
  %1111 = vmatpush2.msra.mxu0 0.0
  %1112 = vmatprep.subr.mxu0 0.0
  %1113 = vmatpush2.msra.mxu0 0.0
  %1114 = vmatprep.subr.mxu0 0.0
  %1115 = vmatpush2.msra.mxu0 0.0
  %1116 = vmatprep.subr.mxu0 0.0
  %1117 = vmatpush2.msra.mxu0 0.0
  %1118 = vmatprep.subr.mxu0 0.0
  %1119 = vmatpush2.msra.mxu0 0.0
  %1120 = vmatprep.subr.mxu0 0.0
  %1121 = vmatpush2.msra.mxu0 0.0
  %1122 = vmatprep.subr.mxu0 0.0
  %1123 = vmatpush2.msra.mxu0 0.0
  %1124 = vmatprep.subr.mxu0 0.0
  %1125 = vmatpush2.msra.mxu0 0.0
  %1126 = vmatprep.mubr.f32.mxu0 0.0
  %1127 = vmatmul.mubr.f32.gmra.mxu0 %v602
  %v1128 = vpop.f32.mrf.mxu0
  %v1129 = vadd.f32 0.0, %v1128
  %v1130 = vpop.f32.mrf.mxu0
  %v1131 = vadd.f32 0.0, %v1130
  %1132 = vdwg.mxu0
  %v1133 = vadd.f32 %v923, %v1058
  %v1134 = vadd.f32 %v924, %v1060
  %v1135 = vadd.f32 %v925, %v1129
  %v1136 = vadd.f32 %v926, %v1131
  %v1137 = vxor.u32 %v1133, 2147483648
  %v1138 = vmul.f32 %v1137, 1.442695
  %v1139 = vpow.pop %v1138
  %v1140 = vadd.f32 %v1139, 1.0
  %v1141 = vrcp.pop %v1140
  %v1142 = vmul.f32 1.0, %v1141
  %v1143 = vxor.u32 %v1134, 2147483648
  %v1144 = vmul.f32 %v1143, 1.442695
  %v1145 = vpow.pop %v1144
  %v1146 = vadd.f32 %v1145, 1.0
  %v1147 = vrcp.pop %v1146
  %v1148 = vmul.f32 1.0, %v1147
  %v1149 = vtanh.pop %v1135
  %v1150 = vxor.u32 %v1136, 2147483648
  %v1151 = vmul.f32 %v1150, 1.442695
  %v1152 = vpow.pop %v1151
  %v1153 = vadd.f32 %v1152, 1.0
  %v1154 = vrcp.pop %v1153
  %v1155 = vmul.f32 1.0, %v1154
  %v1156 = vmul.f32 %v1148, %v600
  %v1157 = vmul.f32 %v1142, %v1149
  %v1158 = vadd.f32 %v1156, %v1157
  %v1159 = vtanh.pop %v1158
  %v1160 = vmul.f32 %v1155, %v1159
  %v1161 = vld [vmem:[%s4] sm:$0xff]
  %v1162 = vld [vmem:[%s4 + $0x8] sm:$0xff]
  %v1163 = vld [vmem:[%s4 + $0x10] sm:$0xff]
  %v1164 = vld [vmem:[%s4 + $0x18] sm:$0xff]
  %v1165 = vld [vmem:[%s4 + $0x20] sm:$0xff]
  %v1166 = vld [vmem:[%s4 + $0x28] sm:$0xff]
  %v1167 = vld [vmem:[%s4 + $0x30] sm:$0xff]
  %v1168 = vld [vmem:[%s4 + $0x38] sm:$0xff]
  %v1169 = vld [vmem:[%s4 + $0x40] sm:$0xff]
  %v1170 = vld [vmem:[%s4 + $0x48] sm:$0xff]
  %v1171 = vld [vmem:[%s4 + $0x50] sm:$0xff]
  %v1172 = vld [vmem:[%s4 + $0x58] sm:$0xff]
  %v1173 = vld [vmem:[%s4 + $0x60] sm:$0xff]
  %v1174 = vld [vmem:[%s4 + $0x68] sm:$0xff]
  %v1175 = vld [vmem:[%s4 + $0x70] sm:$0xff]
  %v1176 = vld [vmem:[%s4 + $0x78] sm:$0xff]
  %v1177 = vld [vmem:[%s4 + $0x80] sm:$0xff]
  %v1178 = vld [vmem:[%s4 + $0x88] sm:$0xff]
  %v1179 = vld [vmem:[%s4 + $0x90] sm:$0xff]
  %v1180 = vld [vmem:[%s4 + $0x98] sm:$0xff]
  %v1181 = vld [vmem:[%s4 + $0xa0] sm:$0xff]
  %v1182 = vld [vmem:[%s4 + $0xa8] sm:$0xff]
  %v1183 = vld [vmem:[%s4 + $0xb0] sm:$0xff]
  %v1184 = vld [vmem:[%s4 + $0xb8] sm:$0xff]
  %v1185 = vld [vmem:[%s4 + $0xc0] sm:$0xff]
  %v1186 = vld [vmem:[%s4 + $0xc8] sm:$0xff]
  %v1187 = vld [vmem:[%s4 + $0xd0] sm:$0xff]
  %v1188 = vld [vmem:[%s4 + $0xd8] sm:$0xff]
  %v1189 = vld [vmem:[%s4 + $0xe0] sm:$0xff]
  %v1190 = vld [vmem:[%s4 + $0xe8] sm:$0xff]
  %v1191 = vld [vmem:[%s4 + $0xf0] sm:$0xff]
  %v1192 = vld [vmem:[%s4 + $0xf8] sm:$0xff]
  %v1193 = vld [vmem:[%s4 + $0x100] sm:$0xff]
  %v1194 = vld [vmem:[%s4 + $0x108] sm:$0xff]
  %v1195 = vld [vmem:[%s4 + $0x110] sm:$0xff]
  %v1196 = vld [vmem:[%s4 + $0x118] sm:$0xff]
  %v1197 = vld [vmem:[%s4 + $0x120] sm:$0xff]
  %v1198 = vld [vmem:[%s4 + $0x128] sm:$0xff]
  %v1199 = vld [vmem:[%s4 + $0x130] sm:$0xff]
  %v1200 = vld [vmem:[%s4 + $0x138] sm:$0xff]
  %v1201 = vld [vmem:[%s4 + $0x140] sm:$0xff]
  %v1202 = vld [vmem:[%s4 + $0x148] sm:$0xff]
  %v1203 = vld [vmem:[%s4 + $0x150] sm:$0xff]
  %v1204 = vld [vmem:[%s4 + $0x158] sm:$0xff]
  %v1205 = vld [vmem:[%s4 + $0x160] sm:$0xff]
  %v1206 = vld [vmem:[%s4 + $0x168] sm:$0xff]
  %v1207 = vld [vmem:[%s4 + $0x170] sm:$0xff]
  %v1208 = vld [vmem:[%s4 + $0x178] sm:$0xff]
  %v1209 = vld [vmem:[%s4 + $0x180] sm:$0xff]
  %v1210 = vld [vmem:[%s4 + $0x188] sm:$0xff]
  %v1211 = vld [vmem:[%s4 + $0x190] sm:$0xff]
  %v1212 = vld [vmem:[%s4 + $0x198] sm:$0xff]
  %v1213 = vld [vmem:[%s4 + $0x1a0] sm:$0xff]
  %v1214 = vld [vmem:[%s4 + $0x1a8] sm:$0xff]
  %v1215 = vld [vmem:[%s4 + $0x1b0] sm:$0xff]
  %v1216 = vld [vmem:[%s4 + $0x1b8] sm:$0xff]
  %v1217 = vld [vmem:[%s4 + $0x1c0] sm:$0xff]
  %v1218 = vld [vmem:[%s4 + $0x1c8] sm:$0xff]
  %v1219 = vld [vmem:[%s4 + $0x1d0] sm:$0xff]
  %v1220 = vld [vmem:[%s4 + $0x1d8] sm:$0xff]
  %v1221 = vld [vmem:[%s4 + $0x1e0] sm:$0xff]
  %v1222 = vld [vmem:[%s4 + $0x1e8] sm:$0xff]
  %v1223 = vld [vmem:[%s4 + $0x1f0] sm:$0xff]
  %v1224 = vld [vmem:[%s4 + $0x1f8] sm:$0xff]
  %v1225 = vld [vmem:[%s4 + $0x200] sm:$0xff]
  %v1226 = vld [vmem:[%s4 + $0x208] sm:$0xff]
  %v1227 = vld [vmem:[%s4 + $0x210] sm:$0xff]
  %v1228 = vld [vmem:[%s4 + $0x218] sm:$0xff]
  %v1229 = vld [vmem:[%s4 + $0x220] sm:$0xff]
  %v1230 = vld [vmem:[%s4 + $0x228] sm:$0xff]
  %v1231 = vld [vmem:[%s4 + $0x230] sm:$0xff]
  %v1232 = vld [vmem:[%s4 + $0x238] sm:$0xff]
  %v1233 = vld [vmem:[%s4 + $0x240] sm:$0xff]
  %v1234 = vld [vmem:[%s4 + $0x248] sm:$0xff]
  %v1235 = vld [vmem:[%s4 + $0x250] sm:$0xff]
  %v1236 = vld [vmem:[%s4 + $0x258] sm:$0xff]
  %v1237 = vld [vmem:[%s4 + $0x260] sm:$0xff]
  %v1238 = vld [vmem:[%s4 + $0x268] sm:$0xff]
  %v1239 = vld [vmem:[%s4 + $0x270] sm:$0xff]
  %v1240 = vld [vmem:[%s4 + $0x278] sm:$0xff]
  %v1241 = vld [vmem:[%s4 + $0x280] sm:$0xff]
  %v1242 = vld [vmem:[%s4 + $0x288] sm:$0xff]
  %v1243 = vld [vmem:[%s4 + $0x290] sm:$0xff]
  %v1244 = vld [vmem:[%s4 + $0x298] sm:$0xff]
  %v1245 = vld [vmem:[%s4 + $0x2a0] sm:$0xff]
  %v1246 = vld [vmem:[%s4 + $0x2a8] sm:$0xff]
  %v1247 = vld [vmem:[%s4 + $0x2b0] sm:$0xff]
  %v1248 = vld [vmem:[%s4 + $0x2b8] sm:$0xff]
  %v1249 = vld [vmem:[%s4 + $0x2c0] sm:$0xff]
  %v1250 = vld [vmem:[%s4 + $0x2c8] sm:$0xff]
  %v1251 = vld [vmem:[%s4 + $0x2d0] sm:$0xff]
  %v1252 = vld [vmem:[%s4 + $0x2d8] sm:$0xff]
  %v1253 = vld [vmem:[%s4 + $0x2e0] sm:$0xff]
  %v1254 = vld [vmem:[%s4 + $0x2e8] sm:$0xff]
  %v1255 = vld [vmem:[%s4 + $0x2f0] sm:$0xff]
  %v1256 = vld [vmem:[%s4 + $0x2f8] sm:$0xff]
  %v1257 = vld [vmem:[%s4 + $0x300] sm:$0xff]
  %v1258 = vld [vmem:[%s4 + $0x308] sm:$0xff]
  %v1259 = vld [vmem:[%s4 + $0x310] sm:$0xff]
  %v1260 = vld [vmem:[%s4 + $0x318] sm:$0xff]
  %v1261 = vld [vmem:[%s4 + $0x320] sm:$0xff]
  %v1262 = vld [vmem:[%s4 + $0x328] sm:$0xff]
  %v1263 = vld [vmem:[%s4 + $0x330] sm:$0xff]
  %v1264 = vld [vmem:[%s4 + $0x338] sm:$0xff]
  %v1265 = vld [vmem:[%s4 + $0x340] sm:$0xff]
  %v1266 = vld [vmem:[%s4 + $0x348] sm:$0xff]
  %v1267 = vld [vmem:[%s4 + $0x350] sm:$0xff]
  %v1268 = vld [vmem:[%s4 + $0x358] sm:$0xff]
  %v1269 = vld [vmem:[%s4 + $0x360] sm:$0xff]
  %v1270 = vld [vmem:[%s4 + $0x368] sm:$0xff]
  %v1271 = vld [vmem:[%s4 + $0x370] sm:$0xff]
  %v1272 = vld [vmem:[%s4 + $0x378] sm:$0xff]
  %v1273 = vld [vmem:[%s4 + $0x380] sm:$0xff]
  %v1274 = vld [vmem:[%s4 + $0x388] sm:$0xff]
  %v1275 = vld [vmem:[%s4 + $0x390] sm:$0xff]
  %v1276 = vld [vmem:[%s4 + $0x398] sm:$0xff]
  %v1277 = vld [vmem:[%s4 + $0x3a0] sm:$0xff]
  %v1278 = vld [vmem:[%s4 + $0x3a8] sm:$0xff]
  %v1279 = vld [vmem:[%s4 + $0x3b0] sm:$0xff]
  %v1280 = vld [vmem:[%s4 + $0x3b8] sm:$0xff]
  %v1281 = vld [vmem:[%s4 + $0x3c0] sm:$0xff]
  %v1282 = vld [vmem:[%s4 + $0x3c8] sm:$0xff]
  %v1283 = vld [vmem:[%s4 + $0x3d0] sm:$0xff]
  %v1284 = vld [vmem:[%s4 + $0x3d8] sm:$0xff]
  %v1285 = vld [vmem:[%s4 + $0x3e0] sm:$0xff]
  %v1286 = vld [vmem:[%s4 + $0x3e8] sm:$0xff]
  %v1287 = vld [vmem:[%s4 + $0x3f0] sm:$0xff]
  %v1288 = vld [vmem:[%s4 + $0x3f8] sm:$0xff]
  %v1289 = vld [vmem:[%s5] sm:$0xf]
  %v1291 = vlaneseq
  %v1292 = vshrl.u32 %v1291, 7
  %v1293 = vsub.s32 0, %v1292
  %v1294 = vrot.slane %v1289, %v1293
  %v1295 = vlaneseq
  %v1296 = vshrl.u32 %v1295, 7
  %v1297 = vsub.s32 1, %v1296
  %v1298 = vrot.slane %v1289, %v1297
  %v1299 = vlaneseq
  %v1300 = vshrl.u32 %v1299, 7
  %v1301 = vsub.s32 2, %v1300
  %v1302 = vrot.slane %v1289, %v1301
  %v1303 = vlaneseq
  %v1304 = vshrl.u32 %v1303, 7
  %v1305 = vsub.s32 3, %v1304
  %v1306 = vrot.slane %v1289, %v1305
  %1311 = vmatprep.subr.mxu0 %v1222
  %1312 = vmatpush1.msra.mxu0 %v1221
  %1313 = vmatprep.subr.mxu0 %v1218
  %1314 = vmatpush1.msra.mxu0 %v1217
  %1315 = vmatprep.subr.mxu0 %v1214
  %1316 = vmatpush1.msra.mxu0 %v1213
  %1317 = vmatprep.subr.mxu0 %v1210
  %1318 = vmatpush1.msra.mxu0 %v1209
  %1319 = vmatprep.subr.mxu0 %v1206
  %1320 = vmatpush1.msra.mxu0 %v1205
  %1321 = vmatprep.subr.mxu0 %v1202
  %1322 = vmatpush1.msra.mxu0 %v1201
  %1323 = vmatprep.subr.mxu0 %v1198
  %1324 = vmatpush1.msra.mxu0 %v1197
  %1325 = vmatprep.subr.mxu0 %v1194
  %1326 = vmatpush1.msra.mxu0 %v1193
  %1327 = vmatprep.subr.mxu0 %v1190
  %1328 = vmatpush1.msra.mxu0 %v1189
  %1329 = vmatprep.subr.mxu0 %v1186
  %1330 = vmatpush1.msra.mxu0 %v1185
  %1331 = vmatprep.subr.mxu0 %v1182
  %1332 = vmatpush1.msra.mxu0 %v1181
  %1333 = vmatprep.subr.mxu0 %v1178
  %1334 = vmatpush1.msra.mxu0 %v1177
  %1335 = vmatprep.subr.mxu0 %v1174
  %1336 = vmatpush1.msra.mxu0 %v1173
  %1337 = vmatprep.subr.mxu0 %v1170
  %1338 = vmatpush1.msra.mxu0 %v1169
  %1339 = vmatprep.subr.mxu0 %v1166
  %1340 = vmatpush1.msra.mxu0 %v1165
  %1341 = vmatprep.subr.mxu0 %v1162
  %1342 = vmatpush1.msra.mxu0 %v1161
  %1343 = vmatprep.subr.mxu0 %v1286
  %1344 = vmatpush2.msra.mxu0 %v1285
  %1345 = vmatprep.subr.mxu0 %v1282
  %1346 = vmatpush2.msra.mxu0 %v1281
  %1347 = vmatprep.subr.mxu0 %v1278
  %1348 = vmatpush2.msra.mxu0 %v1277
  %1349 = vmatprep.subr.mxu0 %v1274
  %1350 = vmatpush2.msra.mxu0 %v1273
  %1351 = vmatprep.subr.mxu0 %v1270
  %1352 = vmatpush2.msra.mxu0 %v1269
  %1353 = vmatprep.subr.mxu0 %v1266
  %1354 = vmatpush2.msra.mxu0 %v1265
  %1355 = vmatprep.subr.mxu0 %v1262
  %1356 = vmatpush2.msra.mxu0 %v1261
  %1357 = vmatprep.subr.mxu0 %v1258
  %1358 = vmatpush2.msra.mxu0 %v1257
  %1359 = vmatprep.subr.mxu0 %v1254
  %1360 = vmatpush2.msra.mxu0 %v1253
  %1361 = vmatprep.subr.mxu0 %v1250
  %1362 = vmatpush2.msra.mxu0 %v1249
  %1363 = vmatprep.subr.mxu0 %v1246
  %1364 = vmatpush2.msra.mxu0 %v1245
  %1365 = vmatprep.subr.mxu0 %v1242
  %1366 = vmatpush2.msra.mxu0 %v1241
  %1367 = vmatprep.subr.mxu0 %v1238
  %1368 = vmatpush2.msra.mxu0 %v1237
  %1369 = vmatprep.subr.mxu0 %v1234
  %1370 = vmatpush2.msra.mxu0 %v1233
  %1371 = vmatprep.subr.mxu0 %v1230
  %1372 = vmatpush2.msra.mxu0 %v1229
  %1373 = vmatprep.subr.mxu0 %v1226
  %1374 = vmatpush2.msra.mxu0 %v1225
  %1375 = vmatprep.mubr.f32.mxu0 %v918
  %1376 = vmatmul.mubr.f32.gmra.mxu0 %v1160
  %v1377 = vpop.f32.mrf.mxu0
  %v1378 = vadd.f32 %v1294, %v1377
  %v1379 = vpop.f32.mrf.mxu0
  %v1380 = vadd.f32 %v1298, %v1379
  %1381 = vdwg.mxu0
  %1382 = vmatprep.subr.mxu0 %v1224
  %1383 = vmatpush1.msra.mxu0 %v1223
  %1384 = vmatprep.subr.mxu0 %v1220
  %1385 = vmatpush1.msra.mxu0 %v1219
  %1386 = vmatprep.subr.mxu0 %v1216
  %1387 = vmatpush1.msra.mxu0 %v1215
  %1388 = vmatprep.subr.mxu0 %v1212
  %1389 = vmatpush1.msra.mxu0 %v1211
  %1390 = vmatprep.subr.mxu0 %v1208
  %1391 = vmatpush1.msra.mxu0 %v1207
  %1392 = vmatprep.subr.mxu0 %v1204
  %1393 = vmatpush1.msra.mxu0 %v1203
  %1394 = vmatprep.subr.mxu0 %v1200
  %1395 = vmatpush1.msra.mxu0 %v1199
  %1396 = vmatprep.subr.mxu0 %v1196
  %1397 = vmatpush1.msra.mxu0 %v1195
  %1398 = vmatprep.subr.mxu0 %v1192
  %1399 = vmatpush1.msra.mxu0 %v1191
  %1400 = vmatprep.subr.mxu0 %v1188
  %1401 = vmatpush1.msra.mxu0 %v1187
  %1402 = vmatprep.subr.mxu0 %v1184
  %1403 = vmatpush1.msra.mxu0 %v1183
  %1404 = vmatprep.subr.mxu0 %v1180
  %1405 = vmatpush1.msra.mxu0 %v1179
  %1406 = vmatprep.subr.mxu0 %v1176
  %1407 = vmatpush1.msra.mxu0 %v1175
  %1408 = vmatprep.subr.mxu0 %v1172
  %1409 = vmatpush1.msra.mxu0 %v1171
  %1410 = vmatprep.subr.mxu0 %v1168
  %1411 = vmatpush1.msra.mxu0 %v1167
  %1412 = vmatprep.subr.mxu0 %v1164
  %1413 = vmatpush1.msra.mxu0 %v1163
  %1414 = vmatprep.subr.mxu0 %v1288
  %1415 = vmatpush2.msra.mxu0 %v1287
  %1416 = vmatprep.subr.mxu0 %v1284
  %1417 = vmatpush2.msra.mxu0 %v1283
  %1418 = vmatprep.subr.mxu0 %v1280
  %1419 = vmatpush2.msra.mxu0 %v1279
  %1420 = vmatprep.subr.mxu0 %v1276
  %1421 = vmatpush2.msra.mxu0 %v1275
  %1422 = vmatprep.subr.mxu0 %v1272
  %1423 = vmatpush2.msra.mxu0 %v1271
  %1424 = vmatprep.subr.mxu0 %v1268
  %1425 = vmatpush2.msra.mxu0 %v1267
  %1426 = vmatprep.subr.mxu0 %v1264
  %1427 = vmatpush2.msra.mxu0 %v1263
  %1428 = vmatprep.subr.mxu0 %v1260
  %1429 = vmatpush2.msra.mxu0 %v1259
  %1430 = vmatprep.subr.mxu0 %v1256
  %1431 = vmatpush2.msra.mxu0 %v1255
  %1432 = vmatprep.subr.mxu0 %v1252
  %1433 = vmatpush2.msra.mxu0 %v1251
  %1434 = vmatprep.subr.mxu0 %v1248
  %1435 = vmatpush2.msra.mxu0 %v1247
  %1436 = vmatprep.subr.mxu0 %v1244
  %1437 = vmatpush2.msra.mxu0 %v1243
  %1438 = vmatprep.subr.mxu0 %v1240
  %1439 = vmatpush2.msra.mxu0 %v1239
  %1440 = vmatprep.subr.mxu0 %v1236
  %1441 = vmatpush2.msra.mxu0 %v1235
  %1442 = vmatprep.subr.mxu0 %v1232
  %1443 = vmatpush2.msra.mxu0 %v1231
  %1444 = vmatprep.subr.mxu0 %v1228
  %1445 = vmatpush2.msra.mxu0 %v1227
  %1446 = vmatprep.mubr.f32.mxu0 %v918
  %1447 = vmatmul.mubr.f32.gmra.mxu0 %v1160
  %v1448 = vpop.f32.mrf.mxu0
  %v1449 = vadd.f32 %v1302, %v1448
  %v1450 = vpop.f32.mrf.mxu0
  %v1451 = vadd.f32 %v1306, %v1450
  %1452 = vdwg.mxu0
  %v1453 = vxor.u32 %v1378, 2147483648
  %v1454 = vmul.f32 %v1453, 1.442695
  %v1455 = vpow.pop %v1454
  %v1456 = vadd.f32 %v1455, 1.0
  %v1457 = vrcp.pop %v1456
  %v1458 = vmul.f32 1.0, %v1457
  %v1459 = vxor.u32 %v1380, 2147483648
  %v1460 = vmul.f32 %v1459, 1.442695
  %v1461 = vpow.pop %v1460
  %v1462 = vadd.f32 %v1461, 1.0
  %v1463 = vrcp.pop %v1462
  %v1464 = vmul.f32 1.0, %v1463
  %v1465 = vtanh.pop %v1449
  %v1466 = vxor.u32 %v1451, 2147483648
  %v1467 = vmul.f32 %v1466, 1.442695
  %v1468 = vpow.pop %v1467
  %v1469 = vadd.f32 %v1468, 1.0
  %v1470 = vrcp.pop %v1469
  %v1471 = vmul.f32 1.0, %v1470
  %v1472 = vmul.f32 %v1464, %v916
  %v1473 = vmul.f32 %v1458, %v1465
  %v1474 = vadd.f32 %v1472, %v1473
  %v1475 = vtanh.pop %v1474
  %v1476 = vmul.f32 %v1471, %v1475
  %s1477 = scalar_lea.vmem [#allocation3], 8
  %1478 = vst [vmem:[%s1477] sm:$0xff] %v1476
  %s1479 = smul.u32 2, 4
  %s1480 = smul.addr %s1479, 8
  %s1481 = scalar_lea.vmem [#allocation2], %s1480
  %v1482 = vld [vmem:[%s1481] sm:$0xff]
  %v1483 = vld [vmem:[%s1481 + $0x8] sm:$0xff]
  %v1484 = vld [vmem:[%s1481 + $0x10] sm:$0xff]
  %v1485 = vld [vmem:[%s1481 + $0x18] sm:$0xff]
  %v1486 = vld [vmem:[%s3] sm:$0xff]
  %v1487 = vld [vmem:[%s3 + $0x8] sm:$0xff]
  %v1488 = vld [vmem:[%s3 + $0x10] sm:$0xff]
  %v1489 = vld [vmem:[%s3 + $0x18] sm:$0xff]
  %v1490 = vld [vmem:[%s3 + $0x20] sm:$0xff]
  %v1491 = vld [vmem:[%s3 + $0x28] sm:$0xff]
  %v1492 = vld [vmem:[%s3 + $0x30] sm:$0xff]
  %v1493 = vld [vmem:[%s3 + $0x38] sm:$0xff]
  %v1494 = vld [vmem:[%s3 + $0x40] sm:$0xff]
  %v1495 = vld [vmem:[%s3 + $0x48] sm:$0xff]
  %v1496 = vld [vmem:[%s3 + $0x50] sm:$0xff]
  %v1497 = vld [vmem:[%s3 + $0x58] sm:$0xff]
  %v1498 = vld [vmem:[%s3 + $0x60] sm:$0xff]
  %v1499 = vld [vmem:[%s3 + $0x68] sm:$0xff]
  %v1500 = vld [vmem:[%s3 + $0x70] sm:$0xff]
  %v1501 = vld [vmem:[%s3 + $0x78] sm:$0xff]
  %v1502 = vld [vmem:[%s3 + $0x80] sm:$0xff]
  %v1503 = vld [vmem:[%s3 + $0x88] sm:$0xff]
  %v1504 = vld [vmem:[%s3 + $0x90] sm:$0xff]
  %v1505 = vld [vmem:[%s3 + $0x98] sm:$0xff]
  %v1506 = vld [vmem:[%s3 + $0xa0] sm:$0xff]
  %v1507 = vld [vmem:[%s3 + $0xa8] sm:$0xff]
  %v1508 = vld [vmem:[%s3 + $0xb0] sm:$0xff]
  %v1509 = vld [vmem:[%s3 + $0xb8] sm:$0xff]
  %v1510 = vld [vmem:[%s3 + $0xc0] sm:$0xff]
  %v1511 = vld [vmem:[%s3 + $0xc8] sm:$0xff]
  %v1512 = vld [vmem:[%s3 + $0xd0] sm:$0xff]
  %v1513 = vld [vmem:[%s3 + $0xd8] sm:$0xff]
  %v1514 = vld [vmem:[%s3 + $0xe0] sm:$0xff]
  %v1515 = vld [vmem:[%s3 + $0xe8] sm:$0xff]
  %v1516 = vld [vmem:[%s3 + $0xf0] sm:$0xff]
  %v1517 = vld [vmem:[%s3 + $0xf8] sm:$0xff]
  %v1518 = vld [vmem:[%s3 + $0x100] sm:$0xff]
  %v1519 = vld [vmem:[%s3 + $0x108] sm:$0xff]
  %v1520 = vld [vmem:[%s3 + $0x110] sm:$0xff]
  %v1521 = vld [vmem:[%s3 + $0x118] sm:$0xff]
  %v1522 = vld [vmem:[%s3 + $0x120] sm:$0xff]
  %v1523 = vld [vmem:[%s3 + $0x128] sm:$0xff]
  %v1524 = vld [vmem:[%s3 + $0x130] sm:$0xff]
  %v1525 = vld [vmem:[%s3 + $0x138] sm:$0xff]
  %v1526 = vld [vmem:[%s3 + $0x140] sm:$0xff]
  %v1527 = vld [vmem:[%s3 + $0x148] sm:$0xff]
  %v1528 = vld [vmem:[%s3 + $0x150] sm:$0xff]
  %v1529 = vld [vmem:[%s3 + $0x158] sm:$0xff]
  %v1530 = vld [vmem:[%s3 + $0x160] sm:$0xff]
  %v1531 = vld [vmem:[%s3 + $0x168] sm:$0xff]
  %v1532 = vld [vmem:[%s3 + $0x170] sm:$0xff]
  %v1533 = vld [vmem:[%s3 + $0x178] sm:$0xff]
  %v1534 = vld [vmem:[%s3 + $0x180] sm:$0xff]
  %v1535 = vld [vmem:[%s3 + $0x188] sm:$0xff]
  %v1536 = vld [vmem:[%s3 + $0x190] sm:$0xff]
  %v1537 = vld [vmem:[%s3 + $0x198] sm:$0xff]
  %v1538 = vld [vmem:[%s3 + $0x1a0] sm:$0xff]
  %v1539 = vld [vmem:[%s3 + $0x1a8] sm:$0xff]
  %v1540 = vld [vmem:[%s3 + $0x1b0] sm:$0xff]
  %v1541 = vld [vmem:[%s3 + $0x1b8] sm:$0xff]
  %v1542 = vld [vmem:[%s3 + $0x1c0] sm:$0xff]
  %v1543 = vld [vmem:[%s3 + $0x1c8] sm:$0xff]
  %v1544 = vld [vmem:[%s3 + $0x1d0] sm:$0xff]
  %v1545 = vld [vmem:[%s3 + $0x1d8] sm:$0xff]
  %v1546 = vld [vmem:[%s3 + $0x1e0] sm:$0xff]
  %v1547 = vld [vmem:[%s3 + $0x1e8] sm:$0xff]
  %v1548 = vld [vmem:[%s3 + $0x1f0] sm:$0xff]
  %v1549 = vld [vmem:[%s3 + $0x1f8] sm:$0xff]
  %1550 = vmatprep.subr.mxu0 %v1547
  %1551 = vmatpush1.msra.mxu0 %v1546
  %1552 = vmatprep.subr.mxu0 %v1543
  %1553 = vmatpush1.msra.mxu0 %v1542
  %1554 = vmatprep.subr.mxu0 %v1539
  %1555 = vmatpush1.msra.mxu0 %v1538
  %1556 = vmatprep.subr.mxu0 %v1535
  %1557 = vmatpush1.msra.mxu0 %v1534
  %1558 = vmatprep.subr.mxu0 %v1531
  %1559 = vmatpush1.msra.mxu0 %v1530
  %1560 = vmatprep.subr.mxu0 %v1527
  %1561 = vmatpush1.msra.mxu0 %v1526
  %1562 = vmatprep.subr.mxu0 %v1523
  %1563 = vmatpush1.msra.mxu0 %v1522
  %1564 = vmatprep.subr.mxu0 %v1519
  %1565 = vmatpush1.msra.mxu0 %v1518
  %1566 = vmatprep.subr.mxu0 %v1515
  %1567 = vmatpush1.msra.mxu0 %v1514
  %1568 = vmatprep.subr.mxu0 %v1511
  %1569 = vmatpush1.msra.mxu0 %v1510
  %1570 = vmatprep.subr.mxu0 %v1507
  %1571 = vmatpush1.msra.mxu0 %v1506
  %1572 = vmatprep.subr.mxu0 %v1503
  %1573 = vmatpush1.msra.mxu0 %v1502
  %1574 = vmatprep.subr.mxu0 %v1499
  %1575 = vmatpush1.msra.mxu0 %v1498
  %1576 = vmatprep.subr.mxu0 %v1495
  %1577 = vmatpush1.msra.mxu0 %v1494
  %1578 = vmatprep.subr.mxu0 %v1491
  %1579 = vmatpush1.msra.mxu0 %v1490
  %1580 = vmatprep.subr.mxu0 %v1487
  %1581 = vmatpush1.msra.mxu0 %v1486
  %1582 = vmatprep.subr.mxu0 0.0
  %1583 = vmatpush2.msra.mxu0 0.0
  %1584 = vmatprep.subr.mxu0 0.0
  %1585 = vmatpush2.msra.mxu0 0.0
  %1586 = vmatprep.subr.mxu0 0.0
  %1587 = vmatpush2.msra.mxu0 0.0
  %1588 = vmatprep.subr.mxu0 0.0
  %1589 = vmatpush2.msra.mxu0 0.0
  %1590 = vmatprep.subr.mxu0 0.0
  %1591 = vmatpush2.msra.mxu0 0.0
  %1592 = vmatprep.subr.mxu0 0.0
  %1593 = vmatpush2.msra.mxu0 0.0
  %1594 = vmatprep.subr.mxu0 0.0
  %1595 = vmatpush2.msra.mxu0 0.0
  %1596 = vmatprep.subr.mxu0 0.0
  %1597 = vmatpush2.msra.mxu0 0.0
  %1598 = vmatprep.subr.mxu0 0.0
  %1599 = vmatpush2.msra.mxu0 0.0
  %1600 = vmatprep.subr.mxu0 0.0
  %1601 = vmatpush2.msra.mxu0 0.0
  %1602 = vmatprep.subr.mxu0 0.0
  %1603 = vmatpush2.msra.mxu0 0.0
  %1604 = vmatprep.subr.mxu0 0.0
  %1605 = vmatpush2.msra.mxu0 0.0
  %1606 = vmatprep.subr.mxu0 0.0
  %1607 = vmatpush2.msra.mxu0 0.0
  %1608 = vmatprep.subr.mxu0 0.0
  %1609 = vmatpush2.msra.mxu0 0.0
  %1610 = vmatprep.subr.mxu0 0.0
  %1611 = vmatpush2.msra.mxu0 0.0
  %1612 = vmatprep.subr.mxu0 0.0
  %1613 = vmatpush2.msra.mxu0 0.0
  %1614 = vmatprep.mubr.f32.mxu0 0.0
  %1615 = vmatmul.mubr.f32.gmra.mxu0 %v1160
  %v1616 = vpop.f32.mrf.mxu0
  %v1617 = vadd.f32 0.0, %v1616
  %v1618 = vpop.f32.mrf.mxu0
  %v1619 = vadd.f32 0.0, %v1618
  %1620 = vdwg.mxu0
  %1621 = vmatprep.subr.mxu0 %v1549
  %1622 = vmatpush1.msra.mxu0 %v1548
  %1623 = vmatprep.subr.mxu0 %v1545
  %1624 = vmatpush1.msra.mxu0 %v1544
  %1625 = vmatprep.subr.mxu0 %v1541
  %1626 = vmatpush1.msra.mxu0 %v1540
  %1627 = vmatprep.subr.mxu0 %v1537
  %1628 = vmatpush1.msra.mxu0 %v1536
  %1629 = vmatprep.subr.mxu0 %v1533
  %1630 = vmatpush1.msra.mxu0 %v1532
  %1631 = vmatprep.subr.mxu0 %v1529
  %1632 = vmatpush1.msra.mxu0 %v1528
  %1633 = vmatprep.subr.mxu0 %v1525
  %1634 = vmatpush1.msra.mxu0 %v1524
  %1635 = vmatprep.subr.mxu0 %v1521
  %1636 = vmatpush1.msra.mxu0 %v1520
  %1637 = vmatprep.subr.mxu0 %v1517
  %1638 = vmatpush1.msra.mxu0 %v1516
  %1639 = vmatprep.subr.mxu0 %v1513
  %1640 = vmatpush1.msra.mxu0 %v1512
  %1641 = vmatprep.subr.mxu0 %v1509
  %1642 = vmatpush1.msra.mxu0 %v1508
  %1643 = vmatprep.subr.mxu0 %v1505
  %1644 = vmatpush1.msra.mxu0 %v1504
  %1645 = vmatprep.subr.mxu0 %v1501
  %1646 = vmatpush1.msra.mxu0 %v1500
  %1647 = vmatprep.subr.mxu0 %v1497
  %1648 = vmatpush1.msra.mxu0 %v1496
  %1649 = vmatprep.subr.mxu0 %v1493
  %1650 = vmatpush1.msra.mxu0 %v1492
  %1651 = vmatprep.subr.mxu0 %v1489
  %1652 = vmatpush1.msra.mxu0 %v1488
  %1653 = vmatprep.subr.mxu0 0.0
  %1654 = vmatpush2.msra.mxu0 0.0
  %1655 = vmatprep.subr.mxu0 0.0
  %1656 = vmatpush2.msra.mxu0 0.0
  %1657 = vmatprep.subr.mxu0 0.0
  %1658 = vmatpush2.msra.mxu0 0.0
  %1659 = vmatprep.subr.mxu0 0.0
  %1660 = vmatpush2.msra.mxu0 0.0
  %1661 = vmatprep.subr.mxu0 0.0
  %1662 = vmatpush2.msra.mxu0 0.0
  %1663 = vmatprep.subr.mxu0 0.0
  %1664 = vmatpush2.msra.mxu0 0.0
  %1665 = vmatprep.subr.mxu0 0.0
  %1666 = vmatpush2.msra.mxu0 0.0
  %1667 = vmatprep.subr.mxu0 0.0
  %1668 = vmatpush2.msra.mxu0 0.0
  %1669 = vmatprep.subr.mxu0 0.0
  %1670 = vmatpush2.msra.mxu0 0.0
  %1671 = vmatprep.subr.mxu0 0.0
  %1672 = vmatpush2.msra.mxu0 0.0
  %1673 = vmatprep.subr.mxu0 0.0
  %1674 = vmatpush2.msra.mxu0 0.0
  %1675 = vmatprep.subr.mxu0 0.0
  %1676 = vmatpush2.msra.mxu0 0.0
  %1677 = vmatprep.subr.mxu0 0.0
  %1678 = vmatpush2.msra.mxu0 0.0
  %1679 = vmatprep.subr.mxu0 0.0
  %1680 = vmatpush2.msra.mxu0 0.0
  %1681 = vmatprep.subr.mxu0 0.0
  %1682 = vmatpush2.msra.mxu0 0.0
  %1683 = vmatprep.subr.mxu0 0.0
  %1684 = vmatpush2.msra.mxu0 0.0
  %1685 = vmatprep.mubr.f32.mxu0 0.0
  %1686 = vmatmul.mubr.f32.gmra.mxu0 %v1160
  %v1687 = vpop.f32.mrf.mxu0
  %v1688 = vadd.f32 0.0, %v1687
  %v1689 = vpop.f32.mrf.mxu0
  %v1690 = vadd.f32 0.0, %v1689
  %1691 = vdwg.mxu0
  %v1692 = vadd.f32 %v1482, %v1617
  %v1693 = vadd.f32 %v1483, %v1619
  %v1694 = vadd.f32 %v1484, %v1688
  %v1695 = vadd.f32 %v1485, %v1690
  %v1696 = vxor.u32 %v1692, 2147483648
  %v1697 = vmul.f32 %v1696, 1.442695
  %v1698 = vpow.pop %v1697
  %v1699 = vadd.f32 %v1698, 1.0
  %v1700 = vrcp.pop %v1699
  %v1701 = vmul.f32 1.0, %v1700
  %v1702 = vxor.u32 %v1693, 2147483648
  %v1703 = vmul.f32 %v1702, 1.442695
  %v1704 = vpow.pop %v1703
  %v1705 = vadd.f32 %v1704, 1.0
  %v1706 = vrcp.pop %v1705
  %v1707 = vmul.f32 1.0, %v1706
  %v1708 = vtanh.pop %v1694
  %v1709 = vxor.u32 %v1695, 2147483648
  %v1710 = vmul.f32 %v1709, 1.442695
  %v1711 = vpow.pop %v1710
  %v1712 = vadd.f32 %v1711, 1.0
  %v1713 = vrcp.pop %v1712
  %v1714 = vmul.f32 1.0, %v1713
  %v1715 = vmul.f32 %v1707, %v1158
  %v1716 = vmul.f32 %v1701, %v1708
  %v1717 = vadd.f32 %v1715, %v1716
  %v1718 = vtanh.pop %v1717
  %v1719 = vmul.f32 %v1714, %v1718
  %v1720 = vld [vmem:[%s4] sm:$0xff]
  %v1721 = vld [vmem:[%s4 + $0x8] sm:$0xff]
  %v1722 = vld [vmem:[%s4 + $0x10] sm:$0xff]
  %v1723 = vld [vmem:[%s4 + $0x18] sm:$0xff]
  %v1724 = vld [vmem:[%s4 + $0x20] sm:$0xff]
  %v1725 = vld [vmem:[%s4 + $0x28] sm:$0xff]
  %v1726 = vld [vmem:[%s4 + $0x30] sm:$0xff]
  %v1727 = vld [vmem:[%s4 + $0x38] sm:$0xff]
  %v1728 = vld [vmem:[%s4 + $0x40] sm:$0xff]
  %v1729 = vld [vmem:[%s4 + $0x48] sm:$0xff]
  %v1730 = vld [vmem:[%s4 + $0x50] sm:$0xff]
  %v1731 = vld [vmem:[%s4 + $0x58] sm:$0xff]
  %v1732 = vld [vmem:[%s4 + $0x60] sm:$0xff]
  %v1733 = vld [vmem:[%s4 + $0x68] sm:$0xff]
  %v1734 = vld [vmem:[%s4 + $0x70] sm:$0xff]
  %v1735 = vld [vmem:[%s4 + $0x78] sm:$0xff]
  %v1736 = vld [vmem:[%s4 + $0x80] sm:$0xff]
  %v1737 = vld [vmem:[%s4 + $0x88] sm:$0xff]
  %v1738 = vld [vmem:[%s4 + $0x90] sm:$0xff]
  %v1739 = vld [vmem:[%s4 + $0x98] sm:$0xff]
  %v1740 = vld [vmem:[%s4 + $0xa0] sm:$0xff]
  %v1741 = vld [vmem:[%s4 + $0xa8] sm:$0xff]
  %v1742 = vld [vmem:[%s4 + $0xb0] sm:$0xff]
  %v1743 = vld [vmem:[%s4 + $0xb8] sm:$0xff]
  %v1744 = vld [vmem:[%s4 + $0xc0] sm:$0xff]
  %v1745 = vld [vmem:[%s4 + $0xc8] sm:$0xff]
  %v1746 = vld [vmem:[%s4 + $0xd0] sm:$0xff]
  %v1747 = vld [vmem:[%s4 + $0xd8] sm:$0xff]
  %v1748 = vld [vmem:[%s4 + $0xe0] sm:$0xff]
  %v1749 = vld [vmem:[%s4 + $0xe8] sm:$0xff]
  %v1750 = vld [vmem:[%s4 + $0xf0] sm:$0xff]
  %v1751 = vld [vmem:[%s4 + $0xf8] sm:$0xff]
  %v1752 = vld [vmem:[%s4 + $0x100] sm:$0xff]
  %v1753 = vld [vmem:[%s4 + $0x108] sm:$0xff]
  %v1754 = vld [vmem:[%s4 + $0x110] sm:$0xff]
  %v1755 = vld [vmem:[%s4 + $0x118] sm:$0xff]
  %v1756 = vld [vmem:[%s4 + $0x120] sm:$0xff]
  %v1757 = vld [vmem:[%s4 + $0x128] sm:$0xff]
  %v1758 = vld [vmem:[%s4 + $0x130] sm:$0xff]
  %v1759 = vld [vmem:[%s4 + $0x138] sm:$0xff]
  %v1760 = vld [vmem:[%s4 + $0x140] sm:$0xff]
  %v1761 = vld [vmem:[%s4 + $0x148] sm:$0xff]
  %v1762 = vld [vmem:[%s4 + $0x150] sm:$0xff]
  %v1763 = vld [vmem:[%s4 + $0x158] sm:$0xff]
  %v1764 = vld [vmem:[%s4 + $0x160] sm:$0xff]
  %v1765 = vld [vmem:[%s4 + $0x168] sm:$0xff]
  %v1766 = vld [vmem:[%s4 + $0x170] sm:$0xff]
  %v1767 = vld [vmem:[%s4 + $0x178] sm:$0xff]
  %v1768 = vld [vmem:[%s4 + $0x180] sm:$0xff]
  %v1769 = vld [vmem:[%s4 + $0x188] sm:$0xff]
  %v1770 = vld [vmem:[%s4 + $0x190] sm:$0xff]
  %v1771 = vld [vmem:[%s4 + $0x198] sm:$0xff]
  %v1772 = vld [vmem:[%s4 + $0x1a0] sm:$0xff]
  %v1773 = vld [vmem:[%s4 + $0x1a8] sm:$0xff]
  %v1774 = vld [vmem:[%s4 + $0x1b0] sm:$0xff]
  %v1775 = vld [vmem:[%s4 + $0x1b8] sm:$0xff]
  %v1776 = vld [vmem:[%s4 + $0x1c0] sm:$0xff]
  %v1777 = vld [vmem:[%s4 + $0x1c8] sm:$0xff]
  %v1778 = vld [vmem:[%s4 + $0x1d0] sm:$0xff]
  %v1779 = vld [vmem:[%s4 + $0x1d8] sm:$0xff]
  %v1780 = vld [vmem:[%s4 + $0x1e0] sm:$0xff]
  %v1781 = vld [vmem:[%s4 + $0x1e8] sm:$0xff]
  %v1782 = vld [vmem:[%s4 + $0x1f0] sm:$0xff]
  %v1783 = vld [vmem:[%s4 + $0x1f8] sm:$0xff]
  %v1784 = vld [vmem:[%s4 + $0x200] sm:$0xff]
  %v1785 = vld [vmem:[%s4 + $0x208] sm:$0xff]
  %v1786 = vld [vmem:[%s4 + $0x210] sm:$0xff]
  %v1787 = vld [vmem:[%s4 + $0x218] sm:$0xff]
  %v1788 = vld [vmem:[%s4 + $0x220] sm:$0xff]
  %v1789 = vld [vmem:[%s4 + $0x228] sm:$0xff]
  %v1790 = vld [vmem:[%s4 + $0x230] sm:$0xff]
  %v1791 = vld [vmem:[%s4 + $0x238] sm:$0xff]
  %v1792 = vld [vmem:[%s4 + $0x240] sm:$0xff]
  %v1793 = vld [vmem:[%s4 + $0x248] sm:$0xff]
  %v1794 = vld [vmem:[%s4 + $0x250] sm:$0xff]
  %v1795 = vld [vmem:[%s4 + $0x258] sm:$0xff]
  %v1796 = vld [vmem:[%s4 + $0x260] sm:$0xff]
  %v1797 = vld [vmem:[%s4 + $0x268] sm:$0xff]
  %v1798 = vld [vmem:[%s4 + $0x270] sm:$0xff]
  %v1799 = vld [vmem:[%s4 + $0x278] sm:$0xff]
  %v1800 = vld [vmem:[%s4 + $0x280] sm:$0xff]
  %v1801 = vld [vmem:[%s4 + $0x288] sm:$0xff]
  %v1802 = vld [vmem:[%s4 + $0x290] sm:$0xff]
  %v1803 = vld [vmem:[%s4 + $0x298] sm:$0xff]
  %v1804 = vld [vmem:[%s4 + $0x2a0] sm:$0xff]
  %v1805 = vld [vmem:[%s4 + $0x2a8] sm:$0xff]
  %v1806 = vld [vmem:[%s4 + $0x2b0] sm:$0xff]
  %v1807 = vld [vmem:[%s4 + $0x2b8] sm:$0xff]
  %v1808 = vld [vmem:[%s4 + $0x2c0] sm:$0xff]
  %v1809 = vld [vmem:[%s4 + $0x2c8] sm:$0xff]
  %v1810 = vld [vmem:[%s4 + $0x2d0] sm:$0xff]
  %v1811 = vld [vmem:[%s4 + $0x2d8] sm:$0xff]
  %v1812 = vld [vmem:[%s4 + $0x2e0] sm:$0xff]
  %v1813 = vld [vmem:[%s4 + $0x2e8] sm:$0xff]
  %v1814 = vld [vmem:[%s4 + $0x2f0] sm:$0xff]
  %v1815 = vld [vmem:[%s4 + $0x2f8] sm:$0xff]
  %v1816 = vld [vmem:[%s4 + $0x300] sm:$0xff]
  %v1817 = vld [vmem:[%s4 + $0x308] sm:$0xff]
  %v1818 = vld [vmem:[%s4 + $0x310] sm:$0xff]
  %v1819 = vld [vmem:[%s4 + $0x318] sm:$0xff]
  %v1820 = vld [vmem:[%s4 + $0x320] sm:$0xff]
  %v1821 = vld [vmem:[%s4 + $0x328] sm:$0xff]
  %v1822 = vld [vmem:[%s4 + $0x330] sm:$0xff]
  %v1823 = vld [vmem:[%s4 + $0x338] sm:$0xff]
  %v1824 = vld [vmem:[%s4 + $0x340] sm:$0xff]
  %v1825 = vld [vmem:[%s4 + $0x348] sm:$0xff]
  %v1826 = vld [vmem:[%s4 + $0x350] sm:$0xff]
  %v1827 = vld [vmem:[%s4 + $0x358] sm:$0xff]
  %v1828 = vld [vmem:[%s4 + $0x360] sm:$0xff]
  %v1829 = vld [vmem:[%s4 + $0x368] sm:$0xff]
  %v1830 = vld [vmem:[%s4 + $0x370] sm:$0xff]
  %v1831 = vld [vmem:[%s4 + $0x378] sm:$0xff]
  %v1832 = vld [vmem:[%s4 + $0x380] sm:$0xff]
  %v1833 = vld [vmem:[%s4 + $0x388] sm:$0xff]
  %v1834 = vld [vmem:[%s4 + $0x390] sm:$0xff]
  %v1835 = vld [vmem:[%s4 + $0x398] sm:$0xff]
  %v1836 = vld [vmem:[%s4 + $0x3a0] sm:$0xff]
  %v1837 = vld [vmem:[%s4 + $0x3a8] sm:$0xff]
  %v1838 = vld [vmem:[%s4 + $0x3b0] sm:$0xff]
  %v1839 = vld [vmem:[%s4 + $0x3b8] sm:$0xff]
  %v1840 = vld [vmem:[%s4 + $0x3c0] sm:$0xff]
  %v1841 = vld [vmem:[%s4 + $0x3c8] sm:$0xff]
  %v1842 = vld [vmem:[%s4 + $0x3d0] sm:$0xff]
  %v1843 = vld [vmem:[%s4 + $0x3d8] sm:$0xff]
  %v1844 = vld [vmem:[%s4 + $0x3e0] sm:$0xff]
  %v1845 = vld [vmem:[%s4 + $0x3e8] sm:$0xff]
  %v1846 = vld [vmem:[%s4 + $0x3f0] sm:$0xff]
  %v1847 = vld [vmem:[%s4 + $0x3f8] sm:$0xff]
  %v1848 = vld [vmem:[%s5] sm:$0xf]
  %v1850 = vlaneseq
  %v1851 = vshrl.u32 %v1850, 7
  %v1852 = vsub.s32 0, %v1851
  %v1853 = vrot.slane %v1848, %v1852
  %v1854 = vlaneseq
  %v1855 = vshrl.u32 %v1854, 7
  %v1856 = vsub.s32 1, %v1855
  %v1857 = vrot.slane %v1848, %v1856
  %v1858 = vlaneseq
  %v1859 = vshrl.u32 %v1858, 7
  %v1860 = vsub.s32 2, %v1859
  %v1861 = vrot.slane %v1848, %v1860
  %v1862 = vlaneseq
  %v1863 = vshrl.u32 %v1862, 7
  %v1864 = vsub.s32 3, %v1863
  %v1865 = vrot.slane %v1848, %v1864
  %1870 = vmatprep.subr.mxu0 %v1781
  %1871 = vmatpush1.msra.mxu0 %v1780
  %1872 = vmatprep.subr.mxu0 %v1777
  %1873 = vmatpush1.msra.mxu0 %v1776
  %1874 = vmatprep.subr.mxu0 %v1773
  %1875 = vmatpush1.msra.mxu0 %v1772
  %1876 = vmatprep.subr.mxu0 %v1769
  %1877 = vmatpush1.msra.mxu0 %v1768
  %1878 = vmatprep.subr.mxu0 %v1765
  %1879 = vmatpush1.msra.mxu0 %v1764
  %1880 = vmatprep.subr.mxu0 %v1761
  %1881 = vmatpush1.msra.mxu0 %v1760
  %1882 = vmatprep.subr.mxu0 %v1757
  %1883 = vmatpush1.msra.mxu0 %v1756
  %1884 = vmatprep.subr.mxu0 %v1753
  %1885 = vmatpush1.msra.mxu0 %v1752
  %1886 = vmatprep.subr.mxu0 %v1749
  %1887 = vmatpush1.msra.mxu0 %v1748
  %1888 = vmatprep.subr.mxu0 %v1745
  %1889 = vmatpush1.msra.mxu0 %v1744
  %1890 = vmatprep.subr.mxu0 %v1741
  %1891 = vmatpush1.msra.mxu0 %v1740
  %1892 = vmatprep.subr.mxu0 %v1737
  %1893 = vmatpush1.msra.mxu0 %v1736
  %1894 = vmatprep.subr.mxu0 %v1733
  %1895 = vmatpush1.msra.mxu0 %v1732
  %1896 = vmatprep.subr.mxu0 %v1729
  %1897 = vmatpush1.msra.mxu0 %v1728
  %1898 = vmatprep.subr.mxu0 %v1725
  %1899 = vmatpush1.msra.mxu0 %v1724
  %1900 = vmatprep.subr.mxu0 %v1721
  %1901 = vmatpush1.msra.mxu0 %v1720
  %1902 = vmatprep.subr.mxu0 %v1845
  %1903 = vmatpush2.msra.mxu0 %v1844
  %1904 = vmatprep.subr.mxu0 %v1841
  %1905 = vmatpush2.msra.mxu0 %v1840
  %1906 = vmatprep.subr.mxu0 %v1837
  %1907 = vmatpush2.msra.mxu0 %v1836
  %1908 = vmatprep.subr.mxu0 %v1833
  %1909 = vmatpush2.msra.mxu0 %v1832
  %1910 = vmatprep.subr.mxu0 %v1829
  %1911 = vmatpush2.msra.mxu0 %v1828
  %1912 = vmatprep.subr.mxu0 %v1825
  %1913 = vmatpush2.msra.mxu0 %v1824
  %1914 = vmatprep.subr.mxu0 %v1821
  %1915 = vmatpush2.msra.mxu0 %v1820
  %1916 = vmatprep.subr.mxu0 %v1817
  %1917 = vmatpush2.msra.mxu0 %v1816
  %1918 = vmatprep.subr.mxu0 %v1813
  %1919 = vmatpush2.msra.mxu0 %v1812
  %1920 = vmatprep.subr.mxu0 %v1809
  %1921 = vmatpush2.msra.mxu0 %v1808
  %1922 = vmatprep.subr.mxu0 %v1805
  %1923 = vmatpush2.msra.mxu0 %v1804
  %1924 = vmatprep.subr.mxu0 %v1801
  %1925 = vmatpush2.msra.mxu0 %v1800
  %1926 = vmatprep.subr.mxu0 %v1797
  %1927 = vmatpush2.msra.mxu0 %v1796
  %1928 = vmatprep.subr.mxu0 %v1793
  %1929 = vmatpush2.msra.mxu0 %v1792
  %1930 = vmatprep.subr.mxu0 %v1789
  %1931 = vmatpush2.msra.mxu0 %v1788
  %1932 = vmatprep.subr.mxu0 %v1785
  %1933 = vmatpush2.msra.mxu0 %v1784
  %1934 = vmatprep.mubr.f32.mxu0 %v1476
  %1935 = vmatmul.mubr.f32.gmra.mxu0 %v1719
  %v1936 = vpop.f32.mrf.mxu0
  %v1937 = vadd.f32 %v1853, %v1936
  %v1938 = vpop.f32.mrf.mxu0
  %v1939 = vadd.f32 %v1857, %v1938
  %1940 = vdwg.mxu0
  %1941 = vmatprep.subr.mxu0 %v1783
  %1942 = vmatpush1.msra.mxu0 %v1782
  %1943 = vmatprep.subr.mxu0 %v1779
  %1944 = vmatpush1.msra.mxu0 %v1778
  %1945 = vmatprep.subr.mxu0 %v1775
  %1946 = vmatpush1.msra.mxu0 %v1774
  %1947 = vmatprep.subr.mxu0 %v1771
  %1948 = vmatpush1.msra.mxu0 %v1770
  %1949 = vmatprep.subr.mxu0 %v1767
  %1950 = vmatpush1.msra.mxu0 %v1766
  %1951 = vmatprep.subr.mxu0 %v1763
  %1952 = vmatpush1.msra.mxu0 %v1762
  %1953 = vmatprep.subr.mxu0 %v1759
  %1954 = vmatpush1.msra.mxu0 %v1758
  %1955 = vmatprep.subr.mxu0 %v1755
  %1956 = vmatpush1.msra.mxu0 %v1754
  %1957 = vmatprep.subr.mxu0 %v1751
  %1958 = vmatpush1.msra.mxu0 %v1750
  %1959 = vmatprep.subr.mxu0 %v1747
  %1960 = vmatpush1.msra.mxu0 %v1746
  %1961 = vmatprep.subr.mxu0 %v1743
  %1962 = vmatpush1.msra.mxu0 %v1742
  %1963 = vmatprep.subr.mxu0 %v1739
  %1964 = vmatpush1.msra.mxu0 %v1738
  %1965 = vmatprep.subr.mxu0 %v1735
  %1966 = vmatpush1.msra.mxu0 %v1734
  %1967 = vmatprep.subr.mxu0 %v1731
  %1968 = vmatpush1.msra.mxu0 %v1730
  %1969 = vmatprep.subr.mxu0 %v1727
  %1970 = vmatpush1.msra.mxu0 %v1726
  %1971 = vmatprep.subr.mxu0 %v1723
  %1972 = vmatpush1.msra.mxu0 %v1722
  %1973 = vmatprep.subr.mxu0 %v1847
  %1974 = vmatpush2.msra.mxu0 %v1846
  %1975 = vmatprep.subr.mxu0 %v1843
  %1976 = vmatpush2.msra.mxu0 %v1842
  %1977 = vmatprep.subr.mxu0 %v1839
  %1978 = vmatpush2.msra.mxu0 %v1838
  %1979 = vmatprep.subr.mxu0 %v1835
  %1980 = vmatpush2.msra.mxu0 %v1834
  %1981 = vmatprep.subr.mxu0 %v1831
  %1982 = vmatpush2.msra.mxu0 %v1830
  %1983 = vmatprep.subr.mxu0 %v1827
  %1984 = vmatpush2.msra.mxu0 %v1826
  %1985 = vmatprep.subr.mxu0 %v1823
  %1986 = vmatpush2.msra.mxu0 %v1822
  %1987 = vmatprep.subr.mxu0 %v1819
  %1988 = vmatpush2.msra.mxu0 %v1818
  %1989 = vmatprep.subr.mxu0 %v1815
  %1990 = vmatpush2.msra.mxu0 %v1814
  %1991 = vmatprep.subr.mxu0 %v1811
  %1992 = vmatpush2.msra.mxu0 %v1810
  %1993 = vmatprep.subr.mxu0 %v1807
  %1994 = vmatpush2.msra.mxu0 %v1806
  %1995 = vmatprep.subr.mxu0 %v1803
  %1996 = vmatpush2.msra.mxu0 %v1802
  %1997 = vmatprep.subr.mxu0 %v1799
  %1998 = vmatpush2.msra.mxu0 %v1798
  %1999 = vmatprep.subr.mxu0 %v1795
  %2000 = vmatpush2.msra.mxu0 %v1794
  %2001 = vmatprep.subr.mxu0 %v1791
  %2002 = vmatpush2.msra.mxu0 %v1790
  %2003 = vmatprep.subr.mxu0 %v1787
  %2004 = vmatpush2.msra.mxu0 %v1786
  %2005 = vmatprep.mubr.f32.mxu0 %v1476
  %2006 = vmatmul.mubr.f32.gmra.mxu0 %v1719
  %v2007 = vpop.f32.mrf.mxu0
  %v2008 = vadd.f32 %v1861, %v2007
  %v2009 = vpop.f32.mrf.mxu0
  %v2010 = vadd.f32 %v1865, %v2009
  %2011 = vdwg.mxu0
  %v2012 = vxor.u32 %v1937, 2147483648
  %v2013 = vmul.f32 %v2012, 1.442695
  %v2014 = vpow.pop %v2013
  %v2015 = vadd.f32 %v2014, 1.0
  %v2016 = vrcp.pop %v2015
  %v2017 = vmul.f32 1.0, %v2016
  %v2018 = vxor.u32 %v1939, 2147483648
  %v2019 = vmul.f32 %v2018, 1.442695
  %v2020 = vpow.pop %v2019
  %v2021 = vadd.f32 %v2020, 1.0
  %v2022 = vrcp.pop %v2021
  %v2023 = vmul.f32 1.0, %v2022
  %v2024 = vtanh.pop %v2008
  %v2025 = vxor.u32 %v2010, 2147483648
  %v2026 = vmul.f32 %v2025, 1.442695
  %v2027 = vpow.pop %v2026
  %v2028 = vadd.f32 %v2027, 1.0
  %v2029 = vrcp.pop %v2028
  %v2030 = vmul.f32 1.0, %v2029
  %v2031 = vmul.f32 %v2023, %v1474
  %v2032 = vmul.f32 %v2017, %v2024
  %v2033 = vadd.f32 %v2031, %v2032
  %v2034 = vtanh.pop %v2033
  %v2035 = vmul.f32 %v2030, %v2034
  %s2036 = scalar_lea.vmem [#allocation3], 16
  %2037 = vst [vmem:[%s2036] sm:$0xff] %v2035
  %s2038 = smul.u32 3, 4
  %s2039 = smul.addr %s2038, 8
  %s2040 = scalar_lea.vmem [#allocation2], %s2039
  %v2041 = vld [vmem:[%s2040] sm:$0xff]
  %v2042 = vld [vmem:[%s2040 + $0x8] sm:$0xff]
  %v2043 = vld [vmem:[%s2040 + $0x10] sm:$0xff]
  %v2044 = vld [vmem:[%s2040 + $0x18] sm:$0xff]
  %v2045 = vld [vmem:[%s3] sm:$0xff]
  %v2046 = vld [vmem:[%s3 + $0x8] sm:$0xff]
  %v2047 = vld [vmem:[%s3 + $0x10] sm:$0xff]
  %v2048 = vld [vmem:[%s3 + $0x18] sm:$0xff]
  %v2049 = vld [vmem:[%s3 + $0x20] sm:$0xff]
  %v2050 = vld [vmem:[%s3 + $0x28] sm:$0xff]
  %v2051 = vld [vmem:[%s3 + $0x30] sm:$0xff]
  %v2052 = vld [vmem:[%s3 + $0x38] sm:$0xff]
  %v2053 = vld [vmem:[%s3 + $0x40] sm:$0xff]
  %v2054 = vld [vmem:[%s3 + $0x48] sm:$0xff]
  %v2055 = vld [vmem:[%s3 + $0x50] sm:$0xff]
  %v2056 = vld [vmem:[%s3 + $0x58] sm:$0xff]
  %v2057 = vld [vmem:[%s3 + $0x60] sm:$0xff]
  %v2058 = vld [vmem:[%s3 + $0x68] sm:$0xff]
  %v2059 = vld [vmem:[%s3 + $0x70] sm:$0xff]
  %v2060 = vld [vmem:[%s3 + $0x78] sm:$0xff]
  %v2061 = vld [vmem:[%s3 + $0x80] sm:$0xff]
  %v2062 = vld [vmem:[%s3 + $0x88] sm:$0xff]
  %v2063 = vld [vmem:[%s3 + $0x90] sm:$0xff]
  %v2064 = vld [vmem:[%s3 + $0x98] sm:$0xff]
  %v2065 = vld [vmem:[%s3 + $0xa0] sm:$0xff]
  %v2066 = vld [vmem:[%s3 + $0xa8] sm:$0xff]
  %v2067 = vld [vmem:[%s3 + $0xb0] sm:$0xff]
  %v2068 = vld [vmem:[%s3 + $0xb8] sm:$0xff]
  %v2069 = vld [vmem:[%s3 + $0xc0] sm:$0xff]
  %v2070 = vld [vmem:[%s3 + $0xc8] sm:$0xff]
  %v2071 = vld [vmem:[%s3 + $0xd0] sm:$0xff]
  %v2072 = vld [vmem:[%s3 + $0xd8] sm:$0xff]
  %v2073 = vld [vmem:[%s3 + $0xe0] sm:$0xff]
  %v2074 = vld [vmem:[%s3 + $0xe8] sm:$0xff]
  %v2075 = vld [vmem:[%s3 + $0xf0] sm:$0xff]
  %v2076 = vld [vmem:[%s3 + $0xf8] sm:$0xff]
  %v2077 = vld [vmem:[%s3 + $0x100] sm:$0xff]
  %v2078 = vld [vmem:[%s3 + $0x108] sm:$0xff]
  %v2079 = vld [vmem:[%s3 + $0x110] sm:$0xff]
  %v2080 = vld [vmem:[%s3 + $0x118] sm:$0xff]
  %v2081 = vld [vmem:[%s3 + $0x120] sm:$0xff]
  %v2082 = vld [vmem:[%s3 + $0x128] sm:$0xff]
  %v2083 = vld [vmem:[%s3 + $0x130] sm:$0xff]
  %v2084 = vld [vmem:[%s3 + $0x138] sm:$0xff]
  %v2085 = vld [vmem:[%s3 + $0x140] sm:$0xff]
  %v2086 = vld [vmem:[%s3 + $0x148] sm:$0xff]
  %v2087 = vld [vmem:[%s3 + $0x150] sm:$0xff]
  %v2088 = vld [vmem:[%s3 + $0x158] sm:$0xff]
  %v2089 = vld [vmem:[%s3 + $0x160] sm:$0xff]
  %v2090 = vld [vmem:[%s3 + $0x168] sm:$0xff]
  %v2091 = vld [vmem:[%s3 + $0x170] sm:$0xff]
  %v2092 = vld [vmem:[%s3 + $0x178] sm:$0xff]
  %v2093 = vld [vmem:[%s3 + $0x180] sm:$0xff]
  %v2094 = vld [vmem:[%s3 + $0x188] sm:$0xff]
  %v2095 = vld [vmem:[%s3 + $0x190] sm:$0xff]
  %v2096 = vld [vmem:[%s3 + $0x198] sm:$0xff]
  %v2097 = vld [vmem:[%s3 + $0x1a0] sm:$0xff]
  %v2098 = vld [vmem:[%s3 + $0x1a8] sm:$0xff]
  %v2099 = vld [vmem:[%s3 + $0x1b0] sm:$0xff]
  %v2100 = vld [vmem:[%s3 + $0x1b8] sm:$0xff]
  %v2101 = vld [vmem:[%s3 + $0x1c0] sm:$0xff]
  %v2102 = vld [vmem:[%s3 + $0x1c8] sm:$0xff]
  %v2103 = vld [vmem:[%s3 + $0x1d0] sm:$0xff]
  %v2104 = vld [vmem:[%s3 + $0x1d8] sm:$0xff]
  %v2105 = vld [vmem:[%s3 + $0x1e0] sm:$0xff]
  %v2106 = vld [vmem:[%s3 + $0x1e8] sm:$0xff]
  %v2107 = vld [vmem:[%s3 + $0x1f0] sm:$0xff]
  %v2108 = vld [vmem:[%s3 + $0x1f8] sm:$0xff]
  %2109 = vmatprep.subr.mxu0 %v2106
  %2110 = vmatpush1.msra.mxu0 %v2105
  %2111 = vmatprep.subr.mxu0 %v2102
  %2112 = vmatpush1.msra.mxu0 %v2101
  %2113 = vmatprep.subr.mxu0 %v2098
  %2114 = vmatpush1.msra.mxu0 %v2097
  %2115 = vmatprep.subr.mxu0 %v2094
  %2116 = vmatpush1.msra.mxu0 %v2093
  %2117 = vmatprep.subr.mxu0 %v2090
  %2118 = vmatpush1.msra.mxu0 %v2089
  %2119 = vmatprep.subr.mxu0 %v2086
  %2120 = vmatpush1.msra.mxu0 %v2085
  %2121 = vmatprep.subr.mxu0 %v2082
  %2122 = vmatpush1.msra.mxu0 %v2081
  %2123 = vmatprep.subr.mxu0 %v2078
  %2124 = vmatpush1.msra.mxu0 %v2077
  %2125 = vmatprep.subr.mxu0 %v2074
  %2126 = vmatpush1.msra.mxu0 %v2073
  %2127 = vmatprep.subr.mxu0 %v2070
  %2128 = vmatpush1.msra.mxu0 %v2069
  %2129 = vmatprep.subr.mxu0 %v2066
  %2130 = vmatpush1.msra.mxu0 %v2065
  %2131 = vmatprep.subr.mxu0 %v2062
  %2132 = vmatpush1.msra.mxu0 %v2061
  %2133 = vmatprep.subr.mxu0 %v2058
  %2134 = vmatpush1.msra.mxu0 %v2057
  %2135 = vmatprep.subr.mxu0 %v2054
  %2136 = vmatpush1.msra.mxu0 %v2053
  %2137 = vmatprep.subr.mxu0 %v2050
  %2138 = vmatpush1.msra.mxu0 %v2049
  %2139 = vmatprep.subr.mxu0 %v2046
  %2140 = vmatpush1.msra.mxu0 %v2045
  %2141 = vmatprep.subr.mxu0 0.0
  %2142 = vmatpush2.msra.mxu0 0.0
  %2143 = vmatprep.subr.mxu0 0.0
  %2144 = vmatpush2.msra.mxu0 0.0
  %2145 = vmatprep.subr.mxu0 0.0
  %2146 = vmatpush2.msra.mxu0 0.0
  %2147 = vmatprep.subr.mxu0 0.0
  %2148 = vmatpush2.msra.mxu0 0.0
  %2149 = vmatprep.subr.mxu0 0.0
  %2150 = vmatpush2.msra.mxu0 0.0
  %2151 = vmatprep.subr.mxu0 0.0
  %2152 = vmatpush2.msra.mxu0 0.0
  %2153 = vmatprep.subr.mxu0 0.0
  %2154 = vmatpush2.msra.mxu0 0.0
  %2155 = vmatprep.subr.mxu0 0.0
  %2156 = vmatpush2.msra.mxu0 0.0
  %2157 = vmatprep.subr.mxu0 0.0
  %2158 = vmatpush2.msra.mxu0 0.0
  %2159 = vmatprep.subr.mxu0 0.0
  %2160 = vmatpush2.msra.mxu0 0.0
  %2161 = vmatprep.subr.mxu0 0.0
  %2162 = vmatpush2.msra.mxu0 0.0
  %2163 = vmatprep.subr.mxu0 0.0
  %2164 = vmatpush2.msra.mxu0 0.0
  %2165 = vmatprep.subr.mxu0 0.0
  %2166 = vmatpush2.msra.mxu0 0.0
  %2167 = vmatprep.subr.mxu0 0.0
  %2168 = vmatpush2.msra.mxu0 0.0
  %2169 = vmatprep.subr.mxu0 0.0
  %2170 = vmatpush2.msra.mxu0 0.0
  %2171 = vmatprep.subr.mxu0 0.0
  %2172 = vmatpush2.msra.mxu0 0.0
  %2173 = vmatprep.mubr.f32.mxu0 0.0
  %2174 = vmatmul.mubr.f32.gmra.mxu0 %v1719
  %v2175 = vpop.f32.mrf.mxu0
  %v2176 = vadd.f32 0.0, %v2175
  %v2177 = vpop.f32.mrf.mxu0
  %v2178 = vadd.f32 0.0, %v2177
  %2179 = vdwg.mxu0
  %2180 = vmatprep.subr.mxu0 %v2108
  %2181 = vmatpush1.msra.mxu0 %v2107
  %2182 = vmatprep.subr.mxu0 %v2104
  %2183 = vmatpush1.msra.mxu0 %v2103
  %2184 = vmatprep.subr.mxu0 %v2100
  %2185 = vmatpush1.msra.mxu0 %v2099
  %2186 = vmatprep.subr.mxu0 %v2096
  %2187 = vmatpush1.msra.mxu0 %v2095
  %2188 = vmatprep.subr.mxu0 %v2092
  %2189 = vmatpush1.msra.mxu0 %v2091
  %2190 = vmatprep.subr.mxu0 %v2088
  %2191 = vmatpush1.msra.mxu0 %v2087
  %2192 = vmatprep.subr.mxu0 %v2084
  %2193 = vmatpush1.msra.mxu0 %v2083
  %2194 = vmatprep.subr.mxu0 %v2080
  %2195 = vmatpush1.msra.mxu0 %v2079
  %2196 = vmatprep.subr.mxu0 %v2076
  %2197 = vmatpush1.msra.mxu0 %v2075
  %2198 = vmatprep.subr.mxu0 %v2072
  %2199 = vmatpush1.msra.mxu0 %v2071
  %2200 = vmatprep.subr.mxu0 %v2068
  %2201 = vmatpush1.msra.mxu0 %v2067
  %2202 = vmatprep.subr.mxu0 %v2064
  %2203 = vmatpush1.msra.mxu0 %v2063
  %2204 = vmatprep.subr.mxu0 %v2060
  %2205 = vmatpush1.msra.mxu0 %v2059
  %2206 = vmatprep.subr.mxu0 %v2056
  %2207 = vmatpush1.msra.mxu0 %v2055
  %2208 = vmatprep.subr.mxu0 %v2052
  %2209 = vmatpush1.msra.mxu0 %v2051
  %2210 = vmatprep.subr.mxu0 %v2048
  %2211 = vmatpush1.msra.mxu0 %v2047
  %2212 = vmatprep.subr.mxu0 0.0
  %2213 = vmatpush2.msra.mxu0 0.0
  %2214 = vmatprep.subr.mxu0 0.0
  %2215 = vmatpush2.msra.mxu0 0.0
  %2216 = vmatprep.subr.mxu0 0.0
  %2217 = vmatpush2.msra.mxu0 0.0
  %2218 = vmatprep.subr.mxu0 0.0
  %2219 = vmatpush2.msra.mxu0 0.0
  %2220 = vmatprep.subr.mxu0 0.0
  %2221 = vmatpush2.msra.mxu0 0.0
  %2222 = vmatprep.subr.mxu0 0.0
  %2223 = vmatpush2.msra.mxu0 0.0
  %2224 = vmatprep.subr.mxu0 0.0
  %2225 = vmatpush2.msra.mxu0 0.0
  %2226 = vmatprep.subr.mxu0 0.0
  %2227 = vmatpush2.msra.mxu0 0.0
  %2228 = vmatprep.subr.mxu0 0.0
  %2229 = vmatpush2.msra.mxu0 0.0
  %2230 = vmatprep.subr.mxu0 0.0
  %2231 = vmatpush2.msra.mxu0 0.0
  %2232 = vmatprep.subr.mxu0 0.0
  %2233 = vmatpush2.msra.mxu0 0.0
  %2234 = vmatprep.subr.mxu0 0.0
  %2235 = vmatpush2.msra.mxu0 0.0
  %2236 = vmatprep.subr.mxu0 0.0
  %2237 = vmatpush2.msra.mxu0 0.0
  %2238 = vmatprep.subr.mxu0 0.0
  %2239 = vmatpush2.msra.mxu0 0.0
  %2240 = vmatprep.subr.mxu0 0.0
  %2241 = vmatpush2.msra.mxu0 0.0
  %2242 = vmatprep.subr.mxu0 0.0
  %2243 = vmatpush2.msra.mxu0 0.0
  %2244 = vmatprep.mubr.f32.mxu0 0.0
  %2245 = vmatmul.mubr.f32.gmra.mxu0 %v1719
  %v2246 = vpop.f32.mrf.mxu0
  %v2247 = vadd.f32 0.0, %v2246
  %v2248 = vpop.f32.mrf.mxu0
  %v2249 = vadd.f32 0.0, %v2248
  %2250 = vdwg.mxu0
  %v2251 = vadd.f32 %v2041, %v2176
  %v2252 = vadd.f32 %v2042, %v2178
  %v2253 = vadd.f32 %v2043, %v2247
  %v2254 = vadd.f32 %v2044, %v2249
  %v2255 = vxor.u32 %v2251, 2147483648
  %v2256 = vmul.f32 %v2255, 1.442695
  %v2257 = vpow.pop %v2256
  %v2258 = vadd.f32 %v2257, 1.0
  %v2259 = vrcp.pop %v2258
  %v2260 = vmul.f32 1.0, %v2259
  %v2261 = vxor.u32 %v2252, 2147483648
  %v2262 = vmul.f32 %v2261, 1.442695
  %v2263 = vpow.pop %v2262
  %v2264 = vadd.f32 %v2263, 1.0
  %v2265 = vrcp.pop %v2264
  %v2266 = vmul.f32 1.0, %v2265
  %v2267 = vtanh.pop %v2253
  %v2268 = vxor.u32 %v2254, 2147483648
  %v2269 = vmul.f32 %v2268, 1.442695
  %v2270 = vpow.pop %v2269
  %v2271 = vadd.f32 %v2270, 1.0
  %v2272 = vrcp.pop %v2271
  %v2273 = vmul.f32 1.0, %v2272
  %v2274 = vmul.f32 %v2266, %v1717
  %v2275 = vmul.f32 %v2260, %v2267
  %v2276 = vadd.f32 %v2274, %v2275
  %v2277 = vtanh.pop %v2276
  %v2278 = vmul.f32 %v2273, %v2277
  %v2279 = vld [vmem:[%s4] sm:$0xff]
  %v2280 = vld [vmem:[%s4 + $0x8] sm:$0xff]
  %v2281 = vld [vmem:[%s4 + $0x10] sm:$0xff]
  %v2282 = vld [vmem:[%s4 + $0x18] sm:$0xff]
  %v2283 = vld [vmem:[%s4 + $0x20] sm:$0xff]
  %v2284 = vld [vmem:[%s4 + $0x28] sm:$0xff]
  %v2285 = vld [vmem:[%s4 + $0x30] sm:$0xff]
  %v2286 = vld [vmem:[%s4 + $0x38] sm:$0xff]
  %v2287 = vld [vmem:[%s4 + $0x40] sm:$0xff]
  %v2288 = vld [vmem:[%s4 + $0x48] sm:$0xff]
  %v2289 = vld [vmem:[%s4 + $0x50] sm:$0xff]
  %v2290 = vld [vmem:[%s4 + $0x58] sm:$0xff]
  %v2291 = vld [vmem:[%s4 + $0x60] sm:$0xff]
  %v2292 = vld [vmem:[%s4 + $0x68] sm:$0xff]
  %v2293 = vld [vmem:[%s4 + $0x70] sm:$0xff]
  %v2294 = vld [vmem:[%s4 + $0x78] sm:$0xff]
  %v2295 = vld [vmem:[%s4 + $0x80] sm:$0xff]
  %v2296 = vld [vmem:[%s4 + $0x88] sm:$0xff]
  %v2297 = vld [vmem:[%s4 + $0x90] sm:$0xff]
  %v2298 = vld [vmem:[%s4 + $0x98] sm:$0xff]
  %v2299 = vld [vmem:[%s4 + $0xa0] sm:$0xff]
  %v2300 = vld [vmem:[%s4 + $0xa8] sm:$0xff]
  %v2301 = vld [vmem:[%s4 + $0xb0] sm:$0xff]
  %v2302 = vld [vmem:[%s4 + $0xb8] sm:$0xff]
  %v2303 = vld [vmem:[%s4 + $0xc0] sm:$0xff]
  %v2304 = vld [vmem:[%s4 + $0xc8] sm:$0xff]
  %v2305 = vld [vmem:[%s4 + $0xd0] sm:$0xff]
  %v2306 = vld [vmem:[%s4 + $0xd8] sm:$0xff]
  %v2307 = vld [vmem:[%s4 + $0xe0] sm:$0xff]
  %v2308 = vld [vmem:[%s4 + $0xe8] sm:$0xff]
  %v2309 = vld [vmem:[%s4 + $0xf0] sm:$0xff]
  %v2310 = vld [vmem:[%s4 + $0xf8] sm:$0xff]
  %v2311 = vld [vmem:[%s4 + $0x100] sm:$0xff]
  %v2312 = vld [vmem:[%s4 + $0x108] sm:$0xff]
  %v2313 = vld [vmem:[%s4 + $0x110] sm:$0xff]
  %v2314 = vld [vmem:[%s4 + $0x118] sm:$0xff]
  %v2315 = vld [vmem:[%s4 + $0x120] sm:$0xff]
  %v2316 = vld [vmem:[%s4 + $0x128] sm:$0xff]
  %v2317 = vld [vmem:[%s4 + $0x130] sm:$0xff]
  %v2318 = vld [vmem:[%s4 + $0x138] sm:$0xff]
  %v2319 = vld [vmem:[%s4 + $0x140] sm:$0xff]
  %v2320 = vld [vmem:[%s4 + $0x148] sm:$0xff]
  %v2321 = vld [vmem:[%s4 + $0x150] sm:$0xff]
  %v2322 = vld [vmem:[%s4 + $0x158] sm:$0xff]
  %v2323 = vld [vmem:[%s4 + $0x160] sm:$0xff]
  %v2324 = vld [vmem:[%s4 + $0x168] sm:$0xff]
  %v2325 = vld [vmem:[%s4 + $0x170] sm:$0xff]
  %v2326 = vld [vmem:[%s4 + $0x178] sm:$0xff]
  %v2327 = vld [vmem:[%s4 + $0x180] sm:$0xff]
  %v2328 = vld [vmem:[%s4 + $0x188] sm:$0xff]
  %v2329 = vld [vmem:[%s4 + $0x190] sm:$0xff]
  %v2330 = vld [vmem:[%s4 + $0x198] sm:$0xff]
  %v2331 = vld [vmem:[%s4 + $0x1a0] sm:$0xff]
  %v2332 = vld [vmem:[%s4 + $0x1a8] sm:$0xff]
  %v2333 = vld [vmem:[%s4 + $0x1b0] sm:$0xff]
  %v2334 = vld [vmem:[%s4 + $0x1b8] sm:$0xff]
  %v2335 = vld [vmem:[%s4 + $0x1c0] sm:$0xff]
  %v2336 = vld [vmem:[%s4 + $0x1c8] sm:$0xff]
  %v2337 = vld [vmem:[%s4 + $0x1d0] sm:$0xff]
  %v2338 = vld [vmem:[%s4 + $0x1d8] sm:$0xff]
  %v2339 = vld [vmem:[%s4 + $0x1e0] sm:$0xff]
  %v2340 = vld [vmem:[%s4 + $0x1e8] sm:$0xff]
  %v2341 = vld [vmem:[%s4 + $0x1f0] sm:$0xff]
  %v2342 = vld [vmem:[%s4 + $0x1f8] sm:$0xff]
  %v2343 = vld [vmem:[%s4 + $0x200] sm:$0xff]
  %v2344 = vld [vmem:[%s4 + $0x208] sm:$0xff]
  %v2345 = vld [vmem:[%s4 + $0x210] sm:$0xff]
  %v2346 = vld [vmem:[%s4 + $0x218] sm:$0xff]
  %v2347 = vld [vmem:[%s4 + $0x220] sm:$0xff]
  %v2348 = vld [vmem:[%s4 + $0x228] sm:$0xff]
  %v2349 = vld [vmem:[%s4 + $0x230] sm:$0xff]
  %v2350 = vld [vmem:[%s4 + $0x238] sm:$0xff]
  %v2351 = vld [vmem:[%s4 + $0x240] sm:$0xff]
  %v2352 = vld [vmem:[%s4 + $0x248] sm:$0xff]
  %v2353 = vld [vmem:[%s4 + $0x250] sm:$0xff]
  %v2354 = vld [vmem:[%s4 + $0x258] sm:$0xff]
  %v2355 = vld [vmem:[%s4 + $0x260] sm:$0xff]
  %v2356 = vld [vmem:[%s4 + $0x268] sm:$0xff]
  %v2357 = vld [vmem:[%s4 + $0x270] sm:$0xff]
  %v2358 = vld [vmem:[%s4 + $0x278] sm:$0xff]
  %v2359 = vld [vmem:[%s4 + $0x280] sm:$0xff]
  %v2360 = vld [vmem:[%s4 + $0x288] sm:$0xff]
  %v2361 = vld [vmem:[%s4 + $0x290] sm:$0xff]
  %v2362 = vld [vmem:[%s4 + $0x298] sm:$0xff]
  %v2363 = vld [vmem:[%s4 + $0x2a0] sm:$0xff]
  %v2364 = vld [vmem:[%s4 + $0x2a8] sm:$0xff]
  %v2365 = vld [vmem:[%s4 + $0x2b0] sm:$0xff]
  %v2366 = vld [vmem:[%s4 + $0x2b8] sm:$0xff]
  %v2367 = vld [vmem:[%s4 + $0x2c0] sm:$0xff]
  %v2368 = vld [vmem:[%s4 + $0x2c8] sm:$0xff]
  %v2369 = vld [vmem:[%s4 + $0x2d0] sm:$0xff]
  %v2370 = vld [vmem:[%s4 + $0x2d8] sm:$0xff]
  %v2371 = vld [vmem:[%s4 + $0x2e0] sm:$0xff]
  %v2372 = vld [vmem:[%s4 + $0x2e8] sm:$0xff]
  %v2373 = vld [vmem:[%s4 + $0x2f0] sm:$0xff]
  %v2374 = vld [vmem:[%s4 + $0x2f8] sm:$0xff]
  %v2375 = vld [vmem:[%s4 + $0x300] sm:$0xff]
  %v2376 = vld [vmem:[%s4 + $0x308] sm:$0xff]
  %v2377 = vld [vmem:[%s4 + $0x310] sm:$0xff]
  %v2378 = vld [vmem:[%s4 + $0x318] sm:$0xff]
  %v2379 = vld [vmem:[%s4 + $0x320] sm:$0xff]
  %v2380 = vld [vmem:[%s4 + $0x328] sm:$0xff]
  %v2381 = vld [vmem:[%s4 + $0x330] sm:$0xff]
  %v2382 = vld [vmem:[%s4 + $0x338] sm:$0xff]
  %v2383 = vld [vmem:[%s4 + $0x340] sm:$0xff]
  %v2384 = vld [vmem:[%s4 + $0x348] sm:$0xff]
  %v2385 = vld [vmem:[%s4 + $0x350] sm:$0xff]
  %v2386 = vld [vmem:[%s4 + $0x358] sm:$0xff]
  %v2387 = vld [vmem:[%s4 + $0x360] sm:$0xff]
  %v2388 = vld [vmem:[%s4 + $0x368] sm:$0xff]
  %v2389 = vld [vmem:[%s4 + $0x370] sm:$0xff]
  %v2390 = vld [vmem:[%s4 + $0x378] sm:$0xff]
  %v2391 = vld [vmem:[%s4 + $0x380] sm:$0xff]
  %v2392 = vld [vmem:[%s4 + $0x388] sm:$0xff]
  %v2393 = vld [vmem:[%s4 + $0x390] sm:$0xff]
  %v2394 = vld [vmem:[%s4 + $0x398] sm:$0xff]
  %v2395 = vld [vmem:[%s4 + $0x3a0] sm:$0xff]
  %v2396 = vld [vmem:[%s4 + $0x3a8] sm:$0xff]
  %v2397 = vld [vmem:[%s4 + $0x3b0] sm:$0xff]
  %v2398 = vld [vmem:[%s4 + $0x3b8] sm:$0xff]
  %v2399 = vld [vmem:[%s4 + $0x3c0] sm:$0xff]
  %v2400 = vld [vmem:[%s4 + $0x3c8] sm:$0xff]
  %v2401 = vld [vmem:[%s4 + $0x3d0] sm:$0xff]
  %v2402 = vld [vmem:[%s4 + $0x3d8] sm:$0xff]
  %v2403 = vld [vmem:[%s4 + $0x3e0] sm:$0xff]
  %v2404 = vld [vmem:[%s4 + $0x3e8] sm:$0xff]
  %v2405 = vld [vmem:[%s4 + $0x3f0] sm:$0xff]
  %v2406 = vld [vmem:[%s4 + $0x3f8] sm:$0xff]
  %v2407 = vld [vmem:[%s5] sm:$0xf]
  %v2409 = vlaneseq
  %v2410 = vshrl.u32 %v2409, 7
  %v2411 = vsub.s32 0, %v2410
  %v2412 = vrot.slane %v2407, %v2411
  %v2413 = vlaneseq
  %v2414 = vshrl.u32 %v2413, 7
  %v2415 = vsub.s32 1, %v2414
  %v2416 = vrot.slane %v2407, %v2415
  %v2417 = vlaneseq
  %v2418 = vshrl.u32 %v2417, 7
  %v2419 = vsub.s32 2, %v2418
  %v2420 = vrot.slane %v2407, %v2419
  %v2421 = vlaneseq
  %v2422 = vshrl.u32 %v2421, 7
  %v2423 = vsub.s32 3, %v2422
  %v2424 = vrot.slane %v2407, %v2423
  %2429 = vmatprep.subr.mxu0 %v2340
  %2430 = vmatpush1.msra.mxu0 %v2339
  %2431 = vmatprep.subr.mxu0 %v2336
  %2432 = vmatpush1.msra.mxu0 %v2335
  %2433 = vmatprep.subr.mxu0 %v2332
  %2434 = vmatpush1.msra.mxu0 %v2331
  %2435 = vmatprep.subr.mxu0 %v2328
  %2436 = vmatpush1.msra.mxu0 %v2327
  %2437 = vmatprep.subr.mxu0 %v2324
  %2438 = vmatpush1.msra.mxu0 %v2323
  %2439 = vmatprep.subr.mxu0 %v2320
  %2440 = vmatpush1.msra.mxu0 %v2319
  %2441 = vmatprep.subr.mxu0 %v2316
  %2442 = vmatpush1.msra.mxu0 %v2315
  %2443 = vmatprep.subr.mxu0 %v2312
  %2444 = vmatpush1.msra.mxu0 %v2311
  %2445 = vmatprep.subr.mxu0 %v2308
  %2446 = vmatpush1.msra.mxu0 %v2307
  %2447 = vmatprep.subr.mxu0 %v2304
  %2448 = vmatpush1.msra.mxu0 %v2303
  %2449 = vmatprep.subr.mxu0 %v2300
  %2450 = vmatpush1.msra.mxu0 %v2299
  %2451 = vmatprep.subr.mxu0 %v2296
  %2452 = vmatpush1.msra.mxu0 %v2295
  %2453 = vmatprep.subr.mxu0 %v2292
  %2454 = vmatpush1.msra.mxu0 %v2291
  %2455 = vmatprep.subr.mxu0 %v2288
  %2456 = vmatpush1.msra.mxu0 %v2287
  %2457 = vmatprep.subr.mxu0 %v2284
  %2458 = vmatpush1.msra.mxu0 %v2283
  %2459 = vmatprep.subr.mxu0 %v2280
  %2460 = vmatpush1.msra.mxu0 %v2279
  %2461 = vmatprep.subr.mxu0 %v2404
  %2462 = vmatpush2.msra.mxu0 %v2403
  %2463 = vmatprep.subr.mxu0 %v2400
  %2464 = vmatpush2.msra.mxu0 %v2399
  %2465 = vmatprep.subr.mxu0 %v2396
  %2466 = vmatpush2.msra.mxu0 %v2395
  %2467 = vmatprep.subr.mxu0 %v2392
  %2468 = vmatpush2.msra.mxu0 %v2391
  %2469 = vmatprep.subr.mxu0 %v2388
  %2470 = vmatpush2.msra.mxu0 %v2387
  %2471 = vmatprep.subr.mxu0 %v2384
  %2472 = vmatpush2.msra.mxu0 %v2383
  %2473 = vmatprep.subr.mxu0 %v2380
  %2474 = vmatpush2.msra.mxu0 %v2379
  %2475 = vmatprep.subr.mxu0 %v2376
  %2476 = vmatpush2.msra.mxu0 %v2375
  %2477 = vmatprep.subr.mxu0 %v2372
  %2478 = vmatpush2.msra.mxu0 %v2371
  %2479 = vmatprep.subr.mxu0 %v2368
  %2480 = vmatpush2.msra.mxu0 %v2367
  %2481 = vmatprep.subr.mxu0 %v2364
  %2482 = vmatpush2.msra.mxu0 %v2363
  %2483 = vmatprep.subr.mxu0 %v2360
  %2484 = vmatpush2.msra.mxu0 %v2359
  %2485 = vmatprep.subr.mxu0 %v2356
  %2486 = vmatpush2.msra.mxu0 %v2355
  %2487 = vmatprep.subr.mxu0 %v2352
  %2488 = vmatpush2.msra.mxu0 %v2351
  %2489 = vmatprep.subr.mxu0 %v2348
  %2490 = vmatpush2.msra.mxu0 %v2347
  %2491 = vmatprep.subr.mxu0 %v2344
  %2492 = vmatpush2.msra.mxu0 %v2343
  %2493 = vmatprep.mubr.f32.mxu0 %v2035
  %2494 = vmatmul.mubr.f32.gmra.mxu0 %v2278
  %v2495 = vpop.f32.mrf.mxu0
  %v2496 = vadd.f32 %v2412, %v2495
  %v2497 = vpop.f32.mrf.mxu0
  %v2498 = vadd.f32 %v2416, %v2497
  %2499 = vdwg.mxu0
  %2500 = vmatprep.subr.mxu0 %v2342
  %2501 = vmatpush1.msra.mxu0 %v2341
  %2502 = vmatprep.subr.mxu0 %v2338
  %2503 = vmatpush1.msra.mxu0 %v2337
  %2504 = vmatprep.subr.mxu0 %v2334
  %2505 = vmatpush1.msra.mxu0 %v2333
  %2506 = vmatprep.subr.mxu0 %v2330
  %2507 = vmatpush1.msra.mxu0 %v2329
  %2508 = vmatprep.subr.mxu0 %v2326
  %2509 = vmatpush1.msra.mxu0 %v2325
  %2510 = vmatprep.subr.mxu0 %v2322
  %2511 = vmatpush1.msra.mxu0 %v2321
  %2512 = vmatprep.subr.mxu0 %v2318
  %2513 = vmatpush1.msra.mxu0 %v2317
  %2514 = vmatprep.subr.mxu0 %v2314
  %2515 = vmatpush1.msra.mxu0 %v2313
  %2516 = vmatprep.subr.mxu0 %v2310
  %2517 = vmatpush1.msra.mxu0 %v2309
  %2518 = vmatprep.subr.mxu0 %v2306
  %2519 = vmatpush1.msra.mxu0 %v2305
  %2520 = vmatprep.subr.mxu0 %v2302
  %2521 = vmatpush1.msra.mxu0 %v2301
  %2522 = vmatprep.subr.mxu0 %v2298
  %2523 = vmatpush1.msra.mxu0 %v2297
  %2524 = vmatprep.subr.mxu0 %v2294
  %2525 = vmatpush1.msra.mxu0 %v2293
  %2526 = vmatprep.subr.mxu0 %v2290
  %2527 = vmatpush1.msra.mxu0 %v2289
  %2528 = vmatprep.subr.mxu0 %v2286
  %2529 = vmatpush1.msra.mxu0 %v2285
  %2530 = vmatprep.subr.mxu0 %v2282
  %2531 = vmatpush1.msra.mxu0 %v2281
  %2532 = vmatprep.subr.mxu0 %v2406
  %2533 = vmatpush2.msra.mxu0 %v2405
  %2534 = vmatprep.subr.mxu0 %v2402
  %2535 = vmatpush2.msra.mxu0 %v2401
  %2536 = vmatprep.subr.mxu0 %v2398
  %2537 = vmatpush2.msra.mxu0 %v2397
  %2538 = vmatprep.subr.mxu0 %v2394
  %2539 = vmatpush2.msra.mxu0 %v2393
  %2540 = vmatprep.subr.mxu0 %v2390
  %2541 = vmatpush2.msra.mxu0 %v2389
  %2542 = vmatprep.subr.mxu0 %v2386
  %2543 = vmatpush2.msra.mxu0 %v2385
  %2544 = vmatprep.subr.mxu0 %v2382
  %2545 = vmatpush2.msra.mxu0 %v2381
  %2546 = vmatprep.subr.mxu0 %v2378
  %2547 = vmatpush2.msra.mxu0 %v2377
  %2548 = vmatprep.subr.mxu0 %v2374
  %2549 = vmatpush2.msra.mxu0 %v2373
  %2550 = vmatprep.subr.mxu0 %v2370
  %2551 = vmatpush2.msra.mxu0 %v2369
  %2552 = vmatprep.subr.mxu0 %v2366
  %2553 = vmatpush2.msra.mxu0 %v2365
  %2554 = vmatprep.subr.mxu0 %v2362
  %2555 = vmatpush2.msra.mxu0 %v2361
  %2556 = vmatprep.subr.mxu0 %v2358
  %2557 = vmatpush2.msra.mxu0 %v2357
  %2558 = vmatprep.subr.mxu0 %v2354
  %2559 = vmatpush2.msra.mxu0 %v2353
  %2560 = vmatprep.subr.mxu0 %v2350
  %2561 = vmatpush2.msra.mxu0 %v2349
  %2562 = vmatprep.subr.mxu0 %v2346
  %2563 = vmatpush2.msra.mxu0 %v2345
  %2564 = vmatprep.mubr.f32.mxu0 %v2035
  %2565 = vmatmul.mubr.f32.gmra.mxu0 %v2278
  %v2566 = vpop.f32.mrf.mxu0
  %v2567 = vadd.f32 %v2420, %v2566
  %v2568 = vpop.f32.mrf.mxu0
  %v2569 = vadd.f32 %v2424, %v2568
  %2570 = vdwg.mxu0
  %v2571 = vxor.u32 %v2496, 2147483648
  %v2572 = vmul.f32 %v2571, 1.442695
  %v2573 = vpow.pop %v2572
  %v2574 = vadd.f32 %v2573, 1.0
  %v2575 = vrcp.pop %v2574
  %v2576 = vmul.f32 1.0, %v2575
  %v2577 = vxor.u32 %v2498, 2147483648
  %v2578 = vmul.f32 %v2577, 1.442695
  %v2579 = vpow.pop %v2578
  %v2580 = vadd.f32 %v2579, 1.0
  %v2581 = vrcp.pop %v2580
  %v2582 = vmul.f32 1.0, %v2581
  %v2583 = vtanh.pop %v2567
  %v2584 = vxor.u32 %v2569, 2147483648
  %v2585 = vmul.f32 %v2584, 1.442695
  %v2586 = vpow.pop %v2585
  %v2587 = vadd.f32 %v2586, 1.0
  %v2588 = vrcp.pop %v2587
  %v2589 = vmul.f32 1.0, %v2588
  %v2590 = vmul.f32 %v2582, %v2033
  %v2591 = vmul.f32 %v2576, %v2583
  %v2592 = vadd.f32 %v2590, %v2591
  %v2593 = vtanh.pop %v2592
  %v2594 = vmul.f32 %v2589, %v2593
  %s2595 = scalar_lea.vmem [#allocation3], 24
  %2596 = vst [vmem:[%s2595] sm:$0xff] %v2594
  %s2597 = smul.u32 4, 4
  %s2598 = smul.addr %s2597, 8
  %s2599 = scalar_lea.vmem [#allocation2], %s2598
  %v2600 = vld [vmem:[%s2599] sm:$0xff]
  %v2601 = vld [vmem:[%s2599 + $0x8] sm:$0xff]
  %v2602 = vld [vmem:[%s2599 + $0x10] sm:$0xff]
  %v2603 = vld [vmem:[%s2599 + $0x18] sm:$0xff]
  %v2604 = vld [vmem:[%s3] sm:$0xff]
  %v2605 = vld [vmem:[%s3 + $0x8] sm:$0xff]
  %v2606 = vld [vmem:[%s3 + $0x10] sm:$0xff]
  %v2607 = vld [vmem:[%s3 + $0x18] sm:$0xff]
  %v2608 = vld [vmem:[%s3 + $0x20] sm:$0xff]
  %v2609 = vld [vmem:[%s3 + $0x28] sm:$0xff]
  %v2610 = vld [vmem:[%s3 + $0x30] sm:$0xff]
  %v2611 = vld [vmem:[%s3 + $0x38] sm:$0xff]
  %v2612 = vld [vmem:[%s3 + $0x40] sm:$0xff]
  %v2613 = vld [vmem:[%s3 + $0x48] sm:$0xff]
  %v2614 = vld [vmem:[%s3 + $0x50] sm:$0xff]
  %v2615 = vld [vmem:[%s3 + $0x58] sm:$0xff]
  %v2616 = vld [vmem:[%s3 + $0x60] sm:$0xff]
  %v2617 = vld [vmem:[%s3 + $0x68] sm:$0xff]
  %v2618 = vld [vmem:[%s3 + $0x70] sm:$0xff]
  %v2619 = vld [vmem:[%s3 + $0x78] sm:$0xff]
  %v2620 = vld [vmem:[%s3 + $0x80] sm:$0xff]
  %v2621 = vld [vmem:[%s3 + $0x88] sm:$0xff]
  %v2622 = vld [vmem:[%s3 + $0x90] sm:$0xff]
  %v2623 = vld [vmem:[%s3 + $0x98] sm:$0xff]
  %v2624 = vld [vmem:[%s3 + $0xa0] sm:$0xff]
  %v2625 = vld [vmem:[%s3 + $0xa8] sm:$0xff]
  %v2626 = vld [vmem:[%s3 + $0xb0] sm:$0xff]
  %v2627 = vld [vmem:[%s3 + $0xb8] sm:$0xff]
  %v2628 = vld [vmem:[%s3 + $0xc0] sm:$0xff]
  %v2629 = vld [vmem:[%s3 + $0xc8] sm:$0xff]
  %v2630 = vld [vmem:[%s3 + $0xd0] sm:$0xff]
  %v2631 = vld [vmem:[%s3 + $0xd8] sm:$0xff]
  %v2632 = vld [vmem:[%s3 + $0xe0] sm:$0xff]
  %v2633 = vld [vmem:[%s3 + $0xe8] sm:$0xff]
  %v2634 = vld [vmem:[%s3 + $0xf0] sm:$0xff]
  %v2635 = vld [vmem:[%s3 + $0xf8] sm:$0xff]
  %v2636 = vld [vmem:[%s3 + $0x100] sm:$0xff]
  %v2637 = vld [vmem:[%s3 + $0x108] sm:$0xff]
  %v2638 = vld [vmem:[%s3 + $0x110] sm:$0xff]
  %v2639 = vld [vmem:[%s3 + $0x118] sm:$0xff]
  %v2640 = vld [vmem:[%s3 + $0x120] sm:$0xff]
  %v2641 = vld [vmem:[%s3 + $0x128] sm:$0xff]
  %v2642 = vld [vmem:[%s3 + $0x130] sm:$0xff]
  %v2643 = vld [vmem:[%s3 + $0x138] sm:$0xff]
  %v2644 = vld [vmem:[%s3 + $0x140] sm:$0xff]
  %v2645 = vld [vmem:[%s3 + $0x148] sm:$0xff]
  %v2646 = vld [vmem:[%s3 + $0x150] sm:$0xff]
  %v2647 = vld [vmem:[%s3 + $0x158] sm:$0xff]
  %v2648 = vld [vmem:[%s3 + $0x160] sm:$0xff]
  %v2649 = vld [vmem:[%s3 + $0x168] sm:$0xff]
  %v2650 = vld [vmem:[%s3 + $0x170] sm:$0xff]
  %v2651 = vld [vmem:[%s3 + $0x178] sm:$0xff]
  %v2652 = vld [vmem:[%s3 + $0x180] sm:$0xff]
  %v2653 = vld [vmem:[%s3 + $0x188] sm:$0xff]
  %v2654 = vld [vmem:[%s3 + $0x190] sm:$0xff]
  %v2655 = vld [vmem:[%s3 + $0x198] sm:$0xff]
  %v2656 = vld [vmem:[%s3 + $0x1a0] sm:$0xff]
  %v2657 = vld [vmem:[%s3 + $0x1a8] sm:$0xff]
  %v2658 = vld [vmem:[%s3 + $0x1b0] sm:$0xff]
  %v2659 = vld [vmem:[%s3 + $0x1b8] sm:$0xff]
  %v2660 = vld [vmem:[%s3 + $0x1c0] sm:$0xff]
  %v2661 = vld [vmem:[%s3 + $0x1c8] sm:$0xff]
  %v2662 = vld [vmem:[%s3 + $0x1d0] sm:$0xff]
  %v2663 = vld [vmem:[%s3 + $0x1d8] sm:$0xff]
  %v2664 = vld [vmem:[%s3 + $0x1e0] sm:$0xff]
  %v2665 = vld [vmem:[%s3 + $0x1e8] sm:$0xff]
  %v2666 = vld [vmem:[%s3 + $0x1f0] sm:$0xff]
  %v2667 = vld [vmem:[%s3 + $0x1f8] sm:$0xff]
  %2668 = vmatprep.subr.mxu0 %v2665
  %2669 = vmatpush1.msra.mxu0 %v2664
  %2670 = vmatprep.subr.mxu0 %v2661
  %2671 = vmatpush1.msra.mxu0 %v2660
  %2672 = vmatprep.subr.mxu0 %v2657
  %2673 = vmatpush1.msra.mxu0 %v2656
  %2674 = vmatprep.subr.mxu0 %v2653
  %2675 = vmatpush1.msra.mxu0 %v2652
  %2676 = vmatprep.subr.mxu0 %v2649
  %2677 = vmatpush1.msra.mxu0 %v2648
  %2678 = vmatprep.subr.mxu0 %v2645
  %2679 = vmatpush1.msra.mxu0 %v2644
  %2680 = vmatprep.subr.mxu0 %v2641
  %2681 = vmatpush1.msra.mxu0 %v2640
  %2682 = vmatprep.subr.mxu0 %v2637
  %2683 = vmatpush1.msra.mxu0 %v2636
  %2684 = vmatprep.subr.mxu0 %v2633
  %2685 = vmatpush1.msra.mxu0 %v2632
  %2686 = vmatprep.subr.mxu0 %v2629
  %2687 = vmatpush1.msra.mxu0 %v2628
  %2688 = vmatprep.subr.mxu0 %v2625
  %2689 = vmatpush1.msra.mxu0 %v2624
  %2690 = vmatprep.subr.mxu0 %v2621
  %2691 = vmatpush1.msra.mxu0 %v2620
  %2692 = vmatprep.subr.mxu0 %v2617
  %2693 = vmatpush1.msra.mxu0 %v2616
  %2694 = vmatprep.subr.mxu0 %v2613
  %2695 = vmatpush1.msra.mxu0 %v2612
  %2696 = vmatprep.subr.mxu0 %v2609
  %2697 = vmatpush1.msra.mxu0 %v2608
  %2698 = vmatprep.subr.mxu0 %v2605
  %2699 = vmatpush1.msra.mxu0 %v2604
  %2700 = vmatprep.subr.mxu0 0.0
  %2701 = vmatpush2.msra.mxu0 0.0
  %2702 = vmatprep.subr.mxu0 0.0
  %2703 = vmatpush2.msra.mxu0 0.0
  %2704 = vmatprep.subr.mxu0 0.0
  %2705 = vmatpush2.msra.mxu0 0.0
  %2706 = vmatprep.subr.mxu0 0.0
  %2707 = vmatpush2.msra.mxu0 0.0
  %2708 = vmatprep.subr.mxu0 0.0
  %2709 = vmatpush2.msra.mxu0 0.0
  %2710 = vmatprep.subr.mxu0 0.0
  %2711 = vmatpush2.msra.mxu0 0.0
  %2712 = vmatprep.subr.mxu0 0.0
  %2713 = vmatpush2.msra.mxu0 0.0
  %2714 = vmatprep.subr.mxu0 0.0
  %2715 = vmatpush2.msra.mxu0 0.0
  %2716 = vmatprep.subr.mxu0 0.0
  %2717 = vmatpush2.msra.mxu0 0.0
  %2718 = vmatprep.subr.mxu0 0.0
  %2719 = vmatpush2.msra.mxu0 0.0
  %2720 = vmatprep.subr.mxu0 0.0
  %2721 = vmatpush2.msra.mxu0 0.0
  %2722 = vmatprep.subr.mxu0 0.0
  %2723 = vmatpush2.msra.mxu0 0.0
  %2724 = vmatprep.subr.mxu0 0.0
  %2725 = vmatpush2.msra.mxu0 0.0
  %2726 = vmatprep.subr.mxu0 0.0
  %2727 = vmatpush2.msra.mxu0 0.0
  %2728 = vmatprep.subr.mxu0 0.0
  %2729 = vmatpush2.msra.mxu0 0.0
  %2730 = vmatprep.subr.mxu0 0.0
  %2731 = vmatpush2.msra.mxu0 0.0
  %2732 = vmatprep.mubr.f32.mxu0 0.0
  %2733 = vmatmul.mubr.f32.gmra.mxu0 %v2278
  %v2734 = vpop.f32.mrf.mxu0
  %v2735 = vadd.f32 0.0, %v2734
  %v2736 = vpop.f32.mrf.mxu0
  %v2737 = vadd.f32 0.0, %v2736
  %2738 = vdwg.mxu0
  %2739 = vmatprep.subr.mxu0 %v2667
  %2740 = vmatpush1.msra.mxu0 %v2666
  %2741 = vmatprep.subr.mxu0 %v2663
  %2742 = vmatpush1.msra.mxu0 %v2662
  %2743 = vmatprep.subr.mxu0 %v2659
  %2744 = vmatpush1.msra.mxu0 %v2658
  %2745 = vmatprep.subr.mxu0 %v2655
  %2746 = vmatpush1.msra.mxu0 %v2654
  %2747 = vmatprep.subr.mxu0 %v2651
  %2748 = vmatpush1.msra.mxu0 %v2650
  %2749 = vmatprep.subr.mxu0 %v2647
  %2750 = vmatpush1.msra.mxu0 %v2646
  %2751 = vmatprep.subr.mxu0 %v2643
  %2752 = vmatpush1.msra.mxu0 %v2642
  %2753 = vmatprep.subr.mxu0 %v2639
  %2754 = vmatpush1.msra.mxu0 %v2638
  %2755 = vmatprep.subr.mxu0 %v2635
  %2756 = vmatpush1.msra.mxu0 %v2634
  %2757 = vmatprep.subr.mxu0 %v2631
  %2758 = vmatpush1.msra.mxu0 %v2630
  %2759 = vmatprep.subr.mxu0 %v2627
  %2760 = vmatpush1.msra.mxu0 %v2626
  %2761 = vmatprep.subr.mxu0 %v2623
  %2762 = vmatpush1.msra.mxu0 %v2622
  %2763 = vmatprep.subr.mxu0 %v2619
  %2764 = vmatpush1.msra.mxu0 %v2618
  %2765 = vmatprep.subr.mxu0 %v2615
  %2766 = vmatpush1.msra.mxu0 %v2614
  %2767 = vmatprep.subr.mxu0 %v2611
  %2768 = vmatpush1.msra.mxu0 %v2610
  %2769 = vmatprep.subr.mxu0 %v2607
  %2770 = vmatpush1.msra.mxu0 %v2606
  %2771 = vmatprep.subr.mxu0 0.0
  %2772 = vmatpush2.msra.mxu0 0.0
  %2773 = vmatprep.subr.mxu0 0.0
  %2774 = vmatpush2.msra.mxu0 0.0
  %2775 = vmatprep.subr.mxu0 0.0
  %2776 = vmatpush2.msra.mxu0 0.0
  %2777 = vmatprep.subr.mxu0 0.0
  %2778 = vmatpush2.msra.mxu0 0.0
  %2779 = vmatprep.subr.mxu0 0.0
  %2780 = vmatpush2.msra.mxu0 0.0
  %2781 = vmatprep.subr.mxu0 0.0
  %2782 = vmatpush2.msra.mxu0 0.0
  %2783 = vmatprep.subr.mxu0 0.0
  %2784 = vmatpush2.msra.mxu0 0.0
  %2785 = vmatprep.subr.mxu0 0.0
  %2786 = vmatpush2.msra.mxu0 0.0
  %2787 = vmatprep.subr.mxu0 0.0
  %2788 = vmatpush2.msra.mxu0 0.0
  %2789 = vmatprep.subr.mxu0 0.0
  %2790 = vmatpush2.msra.mxu0 0.0
  %2791 = vmatprep.subr.mxu0 0.0
  %2792 = vmatpush2.msra.mxu0 0.0
  %2793 = vmatprep.subr.mxu0 0.0
  %2794 = vmatpush2.msra.mxu0 0.0
  %2795 = vmatprep.subr.mxu0 0.0
  %2796 = vmatpush2.msra.mxu0 0.0
  %2797 = vmatprep.subr.mxu0 0.0
  %2798 = vmatpush2.msra.mxu0 0.0
  %2799 = vmatprep.subr.mxu0 0.0
  %2800 = vmatpush2.msra.mxu0 0.0
  %2801 = vmatprep.subr.mxu0 0.0
  %2802 = vmatpush2.msra.mxu0 0.0
  %2803 = vmatprep.mubr.f32.mxu0 0.0
  %2804 = vmatmul.mubr.f32.gmra.mxu0 %v2278
  %v2805 = vpop.f32.mrf.mxu0
  %v2806 = vadd.f32 0.0, %v2805
  %v2807 = vpop.f32.mrf.mxu0
  %v2808 = vadd.f32 0.0, %v2807
  %2809 = vdwg.mxu0
  %v2810 = vadd.f32 %v2600, %v2735
  %v2811 = vadd.f32 %v2601, %v2737
  %v2812 = vadd.f32 %v2602, %v2806
  %v2813 = vadd.f32 %v2603, %v2808
  %v2814 = vxor.u32 %v2810, 2147483648
  %v2815 = vmul.f32 %v2814, 1.442695
  %v2816 = vpow.pop %v2815
  %v2817 = vadd.f32 %v2816, 1.0
  %v2818 = vrcp.pop %v2817
  %v2819 = vmul.f32 1.0, %v2818
  %v2820 = vxor.u32 %v2811, 2147483648
  %v2821 = vmul.f32 %v2820, 1.442695
  %v2822 = vpow.pop %v2821
  %v2823 = vadd.f32 %v2822, 1.0
  %v2824 = vrcp.pop %v2823
  %v2825 = vmul.f32 1.0, %v2824
  %v2826 = vtanh.pop %v2812
  %v2827 = vxor.u32 %v2813, 2147483648
  %v2828 = vmul.f32 %v2827, 1.442695
  %v2829 = vpow.pop %v2828
  %v2830 = vadd.f32 %v2829, 1.0
  %v2831 = vrcp.pop %v2830
  %v2832 = vmul.f32 1.0, %v2831
  %v2833 = vmul.f32 %v2825, %v2276
  %v2834 = vmul.f32 %v2819, %v2826
  %v2835 = vadd.f32 %v2833, %v2834
  %v2836 = vtanh.pop %v2835
  %v2837 = vmul.f32 %v2832, %v2836
  %v2838 = vld [vmem:[%s4] sm:$0xff]
  %v2839 = vld [vmem:[%s4 + $0x8] sm:$0xff]
  %v2840 = vld [vmem:[%s4 + $0x10] sm:$0xff]
  %v2841 = vld [vmem:[%s4 + $0x18] sm:$0xff]
  %v2842 = vld [vmem:[%s4 + $0x20] sm:$0xff]
  %v2843 = vld [vmem:[%s4 + $0x28] sm:$0xff]
  %v2844 = vld [vmem:[%s4 + $0x30] sm:$0xff]
  %v2845 = vld [vmem:[%s4 + $0x38] sm:$0xff]
  %v2846 = vld [vmem:[%s4 + $0x40] sm:$0xff]
  %v2847 = vld [vmem:[%s4 + $0x48] sm:$0xff]
  %v2848 = vld [vmem:[%s4 + $0x50] sm:$0xff]
  %v2849 = vld [vmem:[%s4 + $0x58] sm:$0xff]
  %v2850 = vld [vmem:[%s4 + $0x60] sm:$0xff]
  %v2851 = vld [vmem:[%s4 + $0x68] sm:$0xff]
  %v2852 = vld [vmem:[%s4 + $0x70] sm:$0xff]
  %v2853 = vld [vmem:[%s4 + $0x78] sm:$0xff]
  %v2854 = vld [vmem:[%s4 + $0x80] sm:$0xff]
  %v2855 = vld [vmem:[%s4 + $0x88] sm:$0xff]
  %v2856 = vld [vmem:[%s4 + $0x90] sm:$0xff]
  %v2857 = vld [vmem:[%s4 + $0x98] sm:$0xff]
  %v2858 = vld [vmem:[%s4 + $0xa0] sm:$0xff]
  %v2859 = vld [vmem:[%s4 + $0xa8] sm:$0xff]
  %v2860 = vld [vmem:[%s4 + $0xb0] sm:$0xff]
  %v2861 = vld [vmem:[%s4 + $0xb8] sm:$0xff]
  %v2862 = vld [vmem:[%s4 + $0xc0] sm:$0xff]
  %v2863 = vld [vmem:[%s4 + $0xc8] sm:$0xff]
  %v2864 = vld [vmem:[%s4 + $0xd0] sm:$0xff]
  %v2865 = vld [vmem:[%s4 + $0xd8] sm:$0xff]
  %v2866 = vld [vmem:[%s4 + $0xe0] sm:$0xff]
  %v2867 = vld [vmem:[%s4 + $0xe8] sm:$0xff]
  %v2868 = vld [vmem:[%s4 + $0xf0] sm:$0xff]
  %v2869 = vld [vmem:[%s4 + $0xf8] sm:$0xff]
  %v2870 = vld [vmem:[%s4 + $0x100] sm:$0xff]
  %v2871 = vld [vmem:[%s4 + $0x108] sm:$0xff]
  %v2872 = vld [vmem:[%s4 + $0x110] sm:$0xff]
  %v2873 = vld [vmem:[%s4 + $0x118] sm:$0xff]
  %v2874 = vld [vmem:[%s4 + $0x120] sm:$0xff]
  %v2875 = vld [vmem:[%s4 + $0x128] sm:$0xff]
  %v2876 = vld [vmem:[%s4 + $0x130] sm:$0xff]
  %v2877 = vld [vmem:[%s4 + $0x138] sm:$0xff]
  %v2878 = vld [vmem:[%s4 + $0x140] sm:$0xff]
  %v2879 = vld [vmem:[%s4 + $0x148] sm:$0xff]
  %v2880 = vld [vmem:[%s4 + $0x150] sm:$0xff]
  %v2881 = vld [vmem:[%s4 + $0x158] sm:$0xff]
  %v2882 = vld [vmem:[%s4 + $0x160] sm:$0xff]
  %v2883 = vld [vmem:[%s4 + $0x168] sm:$0xff]
  %v2884 = vld [vmem:[%s4 + $0x170] sm:$0xff]
  %v2885 = vld [vmem:[%s4 + $0x178] sm:$0xff]
  %v2886 = vld [vmem:[%s4 + $0x180] sm:$0xff]
  %v2887 = vld [vmem:[%s4 + $0x188] sm:$0xff]
  %v2888 = vld [vmem:[%s4 + $0x190] sm:$0xff]
  %v2889 = vld [vmem:[%s4 + $0x198] sm:$0xff]
  %v2890 = vld [vmem:[%s4 + $0x1a0] sm:$0xff]
  %v2891 = vld [vmem:[%s4 + $0x1a8] sm:$0xff]
  %v2892 = vld [vmem:[%s4 + $0x1b0] sm:$0xff]
  %v2893 = vld [vmem:[%s4 + $0x1b8] sm:$0xff]
  %v2894 = vld [vmem:[%s4 + $0x1c0] sm:$0xff]
  %v2895 = vld [vmem:[%s4 + $0x1c8] sm:$0xff]
  %v2896 = vld [vmem:[%s4 + $0x1d0] sm:$0xff]
  %v2897 = vld [vmem:[%s4 + $0x1d8] sm:$0xff]
  %v2898 = vld [vmem:[%s4 + $0x1e0] sm:$0xff]
  %v2899 = vld [vmem:[%s4 + $0x1e8] sm:$0xff]
  %v2900 = vld [vmem:[%s4 + $0x1f0] sm:$0xff]
  %v2901 = vld [vmem:[%s4 + $0x1f8] sm:$0xff]
  %v2902 = vld [vmem:[%s4 + $0x200] sm:$0xff]
  %v2903 = vld [vmem:[%s4 + $0x208] sm:$0xff]
  %v2904 = vld [vmem:[%s4 + $0x210] sm:$0xff]
  %v2905 = vld [vmem:[%s4 + $0x218] sm:$0xff]
  %v2906 = vld [vmem:[%s4 + $0x220] sm:$0xff]
  %v2907 = vld [vmem:[%s4 + $0x228] sm:$0xff]
  %v2908 = vld [vmem:[%s4 + $0x230] sm:$0xff]
  %v2909 = vld [vmem:[%s4 + $0x238] sm:$0xff]
  %v2910 = vld [vmem:[%s4 + $0x240] sm:$0xff]
  %v2911 = vld [vmem:[%s4 + $0x248] sm:$0xff]
  %v2912 = vld [vmem:[%s4 + $0x250] sm:$0xff]
  %v2913 = vld [vmem:[%s4 + $0x258] sm:$0xff]
  %v2914 = vld [vmem:[%s4 + $0x260] sm:$0xff]
  %v2915 = vld [vmem:[%s4 + $0x268] sm:$0xff]
  %v2916 = vld [vmem:[%s4 + $0x270] sm:$0xff]
  %v2917 = vld [vmem:[%s4 + $0x278] sm:$0xff]
  %v2918 = vld [vmem:[%s4 + $0x280] sm:$0xff]
  %v2919 = vld [vmem:[%s4 + $0x288] sm:$0xff]
  %v2920 = vld [vmem:[%s4 + $0x290] sm:$0xff]
  %v2921 = vld [vmem:[%s4 + $0x298] sm:$0xff]
  %v2922 = vld [vmem:[%s4 + $0x2a0] sm:$0xff]
  %v2923 = vld [vmem:[%s4 + $0x2a8] sm:$0xff]
  %v2924 = vld [vmem:[%s4 + $0x2b0] sm:$0xff]
  %v2925 = vld [vmem:[%s4 + $0x2b8] sm:$0xff]
  %v2926 = vld [vmem:[%s4 + $0x2c0] sm:$0xff]
  %v2927 = vld [vmem:[%s4 + $0x2c8] sm:$0xff]
  %v2928 = vld [vmem:[%s4 + $0x2d0] sm:$0xff]
  %v2929 = vld [vmem:[%s4 + $0x2d8] sm:$0xff]
  %v2930 = vld [vmem:[%s4 + $0x2e0] sm:$0xff]
  %v2931 = vld [vmem:[%s4 + $0x2e8] sm:$0xff]
  %v2932 = vld [vmem:[%s4 + $0x2f0] sm:$0xff]
  %v2933 = vld [vmem:[%s4 + $0x2f8] sm:$0xff]
  %v2934 = vld [vmem:[%s4 + $0x300] sm:$0xff]
  %v2935 = vld [vmem:[%s4 + $0x308] sm:$0xff]
  %v2936 = vld [vmem:[%s4 + $0x310] sm:$0xff]
  %v2937 = vld [vmem:[%s4 + $0x318] sm:$0xff]
  %v2938 = vld [vmem:[%s4 + $0x320] sm:$0xff]
  %v2939 = vld [vmem:[%s4 + $0x328] sm:$0xff]
  %v2940 = vld [vmem:[%s4 + $0x330] sm:$0xff]
  %v2941 = vld [vmem:[%s4 + $0x338] sm:$0xff]
  %v2942 = vld [vmem:[%s4 + $0x340] sm:$0xff]
  %v2943 = vld [vmem:[%s4 + $0x348] sm:$0xff]
  %v2944 = vld [vmem:[%s4 + $0x350] sm:$0xff]
  %v2945 = vld [vmem:[%s4 + $0x358] sm:$0xff]
  %v2946 = vld [vmem:[%s4 + $0x360] sm:$0xff]
  %v2947 = vld [vmem:[%s4 + $0x368] sm:$0xff]
  %v2948 = vld [vmem:[%s4 + $0x370] sm:$0xff]
  %v2949 = vld [vmem:[%s4 + $0x378] sm:$0xff]
  %v2950 = vld [vmem:[%s4 + $0x380] sm:$0xff]
  %v2951 = vld [vmem:[%s4 + $0x388] sm:$0xff]
  %v2952 = vld [vmem:[%s4 + $0x390] sm:$0xff]
  %v2953 = vld [vmem:[%s4 + $0x398] sm:$0xff]
  %v2954 = vld [vmem:[%s4 + $0x3a0] sm:$0xff]
  %v2955 = vld [vmem:[%s4 + $0x3a8] sm:$0xff]
  %v2956 = vld [vmem:[%s4 + $0x3b0] sm:$0xff]
  %v2957 = vld [vmem:[%s4 + $0x3b8] sm:$0xff]
  %v2958 = vld [vmem:[%s4 + $0x3c0] sm:$0xff]
  %v2959 = vld [vmem:[%s4 + $0x3c8] sm:$0xff]
  %v2960 = vld [vmem:[%s4 + $0x3d0] sm:$0xff]
  %v2961 = vld [vmem:[%s4 + $0x3d8] sm:$0xff]
  %v2962 = vld [vmem:[%s4 + $0x3e0] sm:$0xff]
  %v2963 = vld [vmem:[%s4 + $0x3e8] sm:$0xff]
  %v2964 = vld [vmem:[%s4 + $0x3f0] sm:$0xff]
  %v2965 = vld [vmem:[%s4 + $0x3f8] sm:$0xff]
  %v2966 = vld [vmem:[%s5] sm:$0xf]
  %v2968 = vlaneseq
  %v2969 = vshrl.u32 %v2968, 7
  %v2970 = vsub.s32 0, %v2969
  %v2971 = vrot.slane %v2966, %v2970
  %v2972 = vlaneseq
  %v2973 = vshrl.u32 %v2972, 7
  %v2974 = vsub.s32 1, %v2973
  %v2975 = vrot.slane %v2966, %v2974
  %v2976 = vlaneseq
  %v2977 = vshrl.u32 %v2976, 7
  %v2978 = vsub.s32 2, %v2977
  %v2979 = vrot.slane %v2966, %v2978
  %v2980 = vlaneseq
  %v2981 = vshrl.u32 %v2980, 7
  %v2982 = vsub.s32 3, %v2981
  %v2983 = vrot.slane %v2966, %v2982
  %2988 = vmatprep.subr.mxu0 %v2899
  %2989 = vmatpush1.msra.mxu0 %v2898
  %2990 = vmatprep.subr.mxu0 %v2895
  %2991 = vmatpush1.msra.mxu0 %v2894
  %2992 = vmatprep.subr.mxu0 %v2891
  %2993 = vmatpush1.msra.mxu0 %v2890
  %2994 = vmatprep.subr.mxu0 %v2887
  %2995 = vmatpush1.msra.mxu0 %v2886
  %2996 = vmatprep.subr.mxu0 %v2883
  %2997 = vmatpush1.msra.mxu0 %v2882
  %2998 = vmatprep.subr.mxu0 %v2879
  %2999 = vmatpush1.msra.mxu0 %v2878
  %3000 = vmatprep.subr.mxu0 %v2875
  %3001 = vmatpush1.msra.mxu0 %v2874
  %3002 = vmatprep.subr.mxu0 %v2871
  %3003 = vmatpush1.msra.mxu0 %v2870
  %3004 = vmatprep.subr.mxu0 %v2867
  %3005 = vmatpush1.msra.mxu0 %v2866
  %3006 = vmatprep.subr.mxu0 %v2863
  %3007 = vmatpush1.msra.mxu0 %v2862
  %3008 = vmatprep.subr.mxu0 %v2859
  %3009 = vmatpush1.msra.mxu0 %v2858
  %3010 = vmatprep.subr.mxu0 %v2855
  %3011 = vmatpush1.msra.mxu0 %v2854
  %3012 = vmatprep.subr.mxu0 %v2851
  %3013 = vmatpush1.msra.mxu0 %v2850
  %3014 = vmatprep.subr.mxu0 %v2847
  %3015 = vmatpush1.msra.mxu0 %v2846
  %3016 = vmatprep.subr.mxu0 %v2843
  %3017 = vmatpush1.msra.mxu0 %v2842
  %3018 = vmatprep.subr.mxu0 %v2839
  %3019 = vmatpush1.msra.mxu0 %v2838
  %3020 = vmatprep.subr.mxu0 %v2963
  %3021 = vmatpush2.msra.mxu0 %v2962
  %3022 = vmatprep.subr.mxu0 %v2959
  %3023 = vmatpush2.msra.mxu0 %v2958
  %3024 = vmatprep.subr.mxu0 %v2955
  %3025 = vmatpush2.msra.mxu0 %v2954
  %3026 = vmatprep.subr.mxu0 %v2951
  %3027 = vmatpush2.msra.mxu0 %v2950
  %3028 = vmatprep.subr.mxu0 %v2947
  %3029 = vmatpush2.msra.mxu0 %v2946
  %3030 = vmatprep.subr.mxu0 %v2943
  %3031 = vmatpush2.msra.mxu0 %v2942
  %3032 = vmatprep.subr.mxu0 %v2939
  %3033 = vmatpush2.msra.mxu0 %v2938
  %3034 = vmatprep.subr.mxu0 %v2935
  %3035 = vmatpush2.msra.mxu0 %v2934
  %3036 = vmatprep.subr.mxu0 %v2931
  %3037 = vmatpush2.msra.mxu0 %v2930
  %3038 = vmatprep.subr.mxu0 %v2927
  %3039 = vmatpush2.msra.mxu0 %v2926
  %3040 = vmatprep.subr.mxu0 %v2923
  %3041 = vmatpush2.msra.mxu0 %v2922
  %3042 = vmatprep.subr.mxu0 %v2919
  %3043 = vmatpush2.msra.mxu0 %v2918
  %3044 = vmatprep.subr.mxu0 %v2915
  %3045 = vmatpush2.msra.mxu0 %v2914
  %3046 = vmatprep.subr.mxu0 %v2911
  %3047 = vmatpush2.msra.mxu0 %v2910
  %3048 = vmatprep.subr.mxu0 %v2907
  %3049 = vmatpush2.msra.mxu0 %v2906
  %3050 = vmatprep.subr.mxu0 %v2903
  %3051 = vmatpush2.msra.mxu0 %v2902
  %3052 = vmatprep.mubr.f32.mxu0 %v2594
  %3053 = vmatmul.mubr.f32.gmra.mxu0 %v2837
  %v3054 = vpop.f32.mrf.mxu0
  %v3055 = vadd.f32 %v2971, %v3054
  %v3056 = vpop.f32.mrf.mxu0
  %v3057 = vadd.f32 %v2975, %v3056
  %3058 = vdwg.mxu0
  %3059 = vmatprep.subr.mxu0 %v2901
  %3060 = vmatpush1.msra.mxu0 %v2900
  %3061 = vmatprep.subr.mxu0 %v2897
  %3062 = vmatpush1.msra.mxu0 %v2896
  %3063 = vmatprep.subr.mxu0 %v2893
  %3064 = vmatpush1.msra.mxu0 %v2892
  %3065 = vmatprep.subr.mxu0 %v2889
  %3066 = vmatpush1.msra.mxu0 %v2888
  %3067 = vmatprep.subr.mxu0 %v2885
  %3068 = vmatpush1.msra.mxu0 %v2884
  %3069 = vmatprep.subr.mxu0 %v2881
  %3070 = vmatpush1.msra.mxu0 %v2880
  %3071 = vmatprep.subr.mxu0 %v2877
  %3072 = vmatpush1.msra.mxu0 %v2876
  %3073 = vmatprep.subr.mxu0 %v2873
  %3074 = vmatpush1.msra.mxu0 %v2872
  %3075 = vmatprep.subr.mxu0 %v2869
  %3076 = vmatpush1.msra.mxu0 %v2868
  %3077 = vmatprep.subr.mxu0 %v2865
  %3078 = vmatpush1.msra.mxu0 %v2864
  %3079 = vmatprep.subr.mxu0 %v2861
  %3080 = vmatpush1.msra.mxu0 %v2860
  %3081 = vmatprep.subr.mxu0 %v2857
  %3082 = vmatpush1.msra.mxu0 %v2856
  %3083 = vmatprep.subr.mxu0 %v2853
  %3084 = vmatpush1.msra.mxu0 %v2852
  %3085 = vmatprep.subr.mxu0 %v2849
  %3086 = vmatpush1.msra.mxu0 %v2848
  %3087 = vmatprep.subr.mxu0 %v2845
  %3088 = vmatpush1.msra.mxu0 %v2844
  %3089 = vmatprep.subr.mxu0 %v2841
  %3090 = vmatpush1.msra.mxu0 %v2840
  %3091 = vmatprep.subr.mxu0 %v2965
  %3092 = vmatpush2.msra.mxu0 %v2964
  %3093 = vmatprep.subr.mxu0 %v2961
  %3094 = vmatpush2.msra.mxu0 %v2960
  %3095 = vmatprep.subr.mxu0 %v2957
  %3096 = vmatpush2.msra.mxu0 %v2956
  %3097 = vmatprep.subr.mxu0 %v2953
  %3098 = vmatpush2.msra.mxu0 %v2952
  %3099 = vmatprep.subr.mxu0 %v2949
  %3100 = vmatpush2.msra.mxu0 %v2948
  %3101 = vmatprep.subr.mxu0 %v2945
  %3102 = vmatpush2.msra.mxu0 %v2944
  %3103 = vmatprep.subr.mxu0 %v2941
  %3104 = vmatpush2.msra.mxu0 %v2940
  %3105 = vmatprep.subr.mxu0 %v2937
  %3106 = vmatpush2.msra.mxu0 %v2936
  %3107 = vmatprep.subr.mxu0 %v2933
  %3108 = vmatpush2.msra.mxu0 %v2932
  %3109 = vmatprep.subr.mxu0 %v2929
  %3110 = vmatpush2.msra.mxu0 %v2928
  %3111 = vmatprep.subr.mxu0 %v2925
  %3112 = vmatpush2.msra.mxu0 %v2924
  %3113 = vmatprep.subr.mxu0 %v2921
  %3114 = vmatpush2.msra.mxu0 %v2920
  %3115 = vmatprep.subr.mxu0 %v2917
  %3116 = vmatpush2.msra.mxu0 %v2916
  %3117 = vmatprep.subr.mxu0 %v2913
  %3118 = vmatpush2.msra.mxu0 %v2912
  %3119 = vmatprep.subr.mxu0 %v2909
  %3120 = vmatpush2.msra.mxu0 %v2908
  %3121 = vmatprep.subr.mxu0 %v2905
  %3122 = vmatpush2.msra.mxu0 %v2904
  %3123 = vmatprep.mubr.f32.mxu0 %v2594
  %3124 = vmatmul.mubr.f32.gmra.mxu0 %v2837
  %v3125 = vpop.f32.mrf.mxu0
  %v3126 = vadd.f32 %v2979, %v3125
  %v3127 = vpop.f32.mrf.mxu0
  %v3128 = vadd.f32 %v2983, %v3127
  %3129 = vdwg.mxu0
  %v3130 = vxor.u32 %v3055, 2147483648
  %v3131 = vmul.f32 %v3130, 1.442695
  %v3132 = vpow.pop %v3131
  %v3133 = vadd.f32 %v3132, 1.0
  %v3134 = vrcp.pop %v3133
  %v3135 = vmul.f32 1.0, %v3134
  %v3136 = vxor.u32 %v3057, 2147483648
  %v3137 = vmul.f32 %v3136, 1.442695
  %v3138 = vpow.pop %v3137
  %v3139 = vadd.f32 %v3138, 1.0
  %v3140 = vrcp.pop %v3139
  %v3141 = vmul.f32 1.0, %v3140
  %v3142 = vtanh.pop %v3126
  %v3143 = vxor.u32 %v3128, 2147483648
  %v3144 = vmul.f32 %v3143, 1.442695
  %v3145 = vpow.pop %v3144
  %v3146 = vadd.f32 %v3145, 1.0
  %v3147 = vrcp.pop %v3146
  %v3148 = vmul.f32 1.0, %v3147
  %v3149 = vmul.f32 %v3141, %v2592
  %v3150 = vmul.f32 %v3135, %v3142
  %v3151 = vadd.f32 %v3149, %v3150
  %v3152 = vtanh.pop %v3151
  %v3153 = vmul.f32 %v3148, %v3152
  %s3154 = scalar_lea.vmem [#allocation3], 32
  %3155 = vst [vmem:[%s3154] sm:$0xff] %v3153
  %s3156 = smul.u32 5, 4
  %s3157 = smul.addr %s3156, 8
  %s3158 = scalar_lea.vmem [#allocation2], %s3157
  %v3159 = vld [vmem:[%s3158] sm:$0xff]
  %v3160 = vld [vmem:[%s3158 + $0x8] sm:$0xff]
  %v3161 = vld [vmem:[%s3158 + $0x10] sm:$0xff]
  %v3162 = vld [vmem:[%s3158 + $0x18] sm:$0xff]
  %v3163 = vld [vmem:[%s3] sm:$0xff]
  %v3164 = vld [vmem:[%s3 + $0x8] sm:$0xff]
  %v3165 = vld [vmem:[%s3 + $0x10] sm:$0xff]
  %v3166 = vld [vmem:[%s3 + $0x18] sm:$0xff]
  %v3167 = vld [vmem:[%s3 + $0x20] sm:$0xff]
  %v3168 = vld [vmem:[%s3 + $0x28] sm:$0xff]
  %v3169 = vld [vmem:[%s3 + $0x30] sm:$0xff]
  %v3170 = vld [vmem:[%s3 + $0x38] sm:$0xff]
  %v3171 = vld [vmem:[%s3 + $0x40] sm:$0xff]
  %v3172 = vld [vmem:[%s3 + $0x48] sm:$0xff]
  %v3173 = vld [vmem:[%s3 + $0x50] sm:$0xff]
  %v3174 = vld [vmem:[%s3 + $0x58] sm:$0xff]
  %v3175 = vld [vmem:[%s3 + $0x60] sm:$0xff]
  %v3176 = vld [vmem:[%s3 + $0x68] sm:$0xff]
  %v3177 = vld [vmem:[%s3 + $0x70] sm:$0xff]
  %v3178 = vld [vmem:[%s3 + $0x78] sm:$0xff]
  %v3179 = vld [vmem:[%s3 + $0x80] sm:$0xff]
  %v3180 = vld [vmem:[%s3 + $0x88] sm:$0xff]
  %v3181 = vld [vmem:[%s3 + $0x90] sm:$0xff]
  %v3182 = vld [vmem:[%s3 + $0x98] sm:$0xff]
  %v3183 = vld [vmem:[%s3 + $0xa0] sm:$0xff]
  %v3184 = vld [vmem:[%s3 + $0xa8] sm:$0xff]
  %v3185 = vld [vmem:[%s3 + $0xb0] sm:$0xff]
  %v3186 = vld [vmem:[%s3 + $0xb8] sm:$0xff]
  %v3187 = vld [vmem:[%s3 + $0xc0] sm:$0xff]
  %v3188 = vld [vmem:[%s3 + $0xc8] sm:$0xff]
  %v3189 = vld [vmem:[%s3 + $0xd0] sm:$0xff]
  %v3190 = vld [vmem:[%s3 + $0xd8] sm:$0xff]
  %v3191 = vld [vmem:[%s3 + $0xe0] sm:$0xff]
  %v3192 = vld [vmem:[%s3 + $0xe8] sm:$0xff]
  %v3193 = vld [vmem:[%s3 + $0xf0] sm:$0xff]
  %v3194 = vld [vmem:[%s3 + $0xf8] sm:$0xff]
  %v3195 = vld [vmem:[%s3 + $0x100] sm:$0xff]
  %v3196 = vld [vmem:[%s3 + $0x108] sm:$0xff]
  %v3197 = vld [vmem:[%s3 + $0x110] sm:$0xff]
  %v3198 = vld [vmem:[%s3 + $0x118] sm:$0xff]
  %v3199 = vld [vmem:[%s3 + $0x120] sm:$0xff]
  %v3200 = vld [vmem:[%s3 + $0x128] sm:$0xff]
  %v3201 = vld [vmem:[%s3 + $0x130] sm:$0xff]
  %v3202 = vld [vmem:[%s3 + $0x138] sm:$0xff]
  %v3203 = vld [vmem:[%s3 + $0x140] sm:$0xff]
  %v3204 = vld [vmem:[%s3 + $0x148] sm:$0xff]
  %v3205 = vld [vmem:[%s3 + $0x150] sm:$0xff]
  %v3206 = vld [vmem:[%s3 + $0x158] sm:$0xff]
  %v3207 = vld [vmem:[%s3 + $0x160] sm:$0xff]
  %v3208 = vld [vmem:[%s3 + $0x168] sm:$0xff]
  %v3209 = vld [vmem:[%s3 + $0x170] sm:$0xff]
  %v3210 = vld [vmem:[%s3 + $0x178] sm:$0xff]
  %v3211 = vld [vmem:[%s3 + $0x180] sm:$0xff]
  %v3212 = vld [vmem:[%s3 + $0x188] sm:$0xff]
  %v3213 = vld [vmem:[%s3 + $0x190] sm:$0xff]
  %v3214 = vld [vmem:[%s3 + $0x198] sm:$0xff]
  %v3215 = vld [vmem:[%s3 + $0x1a0] sm:$0xff]
  %v3216 = vld [vmem:[%s3 + $0x1a8] sm:$0xff]
  %v3217 = vld [vmem:[%s3 + $0x1b0] sm:$0xff]
  %v3218 = vld [vmem:[%s3 + $0x1b8] sm:$0xff]
  %v3219 = vld [vmem:[%s3 + $0x1c0] sm:$0xff]
  %v3220 = vld [vmem:[%s3 + $0x1c8] sm:$0xff]
  %v3221 = vld [vmem:[%s3 + $0x1d0] sm:$0xff]
  %v3222 = vld [vmem:[%s3 + $0x1d8] sm:$0xff]
  %v3223 = vld [vmem:[%s3 + $0x1e0] sm:$0xff]
  %v3224 = vld [vmem:[%s3 + $0x1e8] sm:$0xff]
  %v3225 = vld [vmem:[%s3 + $0x1f0] sm:$0xff]
  %v3226 = vld [vmem:[%s3 + $0x1f8] sm:$0xff]
  %3227 = vmatprep.subr.mxu0 %v3224
  %3228 = vmatpush1.msra.mxu0 %v3223
  %3229 = vmatprep.subr.mxu0 %v3220
  %3230 = vmatpush1.msra.mxu0 %v3219
  %3231 = vmatprep.subr.mxu0 %v3216
  %3232 = vmatpush1.msra.mxu0 %v3215
  %3233 = vmatprep.subr.mxu0 %v3212
  %3234 = vmatpush1.msra.mxu0 %v3211
  %3235 = vmatprep.subr.mxu0 %v3208
  %3236 = vmatpush1.msra.mxu0 %v3207
  %3237 = vmatprep.subr.mxu0 %v3204
  %3238 = vmatpush1.msra.mxu0 %v3203
  %3239 = vmatprep.subr.mxu0 %v3200
  %3240 = vmatpush1.msra.mxu0 %v3199
  %3241 = vmatprep.subr.mxu0 %v3196
  %3242 = vmatpush1.msra.mxu0 %v3195
  %3243 = vmatprep.subr.mxu0 %v3192
  %3244 = vmatpush1.msra.mxu0 %v3191
  %3245 = vmatprep.subr.mxu0 %v3188
  %3246 = vmatpush1.msra.mxu0 %v3187
  %3247 = vmatprep.subr.mxu0 %v3184
  %3248 = vmatpush1.msra.mxu0 %v3183
  %3249 = vmatprep.subr.mxu0 %v3180
  %3250 = vmatpush1.msra.mxu0 %v3179
  %3251 = vmatprep.subr.mxu0 %v3176
  %3252 = vmatpush1.msra.mxu0 %v3175
  %3253 = vmatprep.subr.mxu0 %v3172
  %3254 = vmatpush1.msra.mxu0 %v3171
  %3255 = vmatprep.subr.mxu0 %v3168
  %3256 = vmatpush1.msra.mxu0 %v3167
  %3257 = vmatprep.subr.mxu0 %v3164
  %3258 = vmatpush1.msra.mxu0 %v3163
  %3259 = vmatprep.subr.mxu0 0.0
  %3260 = vmatpush2.msra.mxu0 0.0
  %3261 = vmatprep.subr.mxu0 0.0
  %3262 = vmatpush2.msra.mxu0 0.0
  %3263 = vmatprep.subr.mxu0 0.0
  %3264 = vmatpush2.msra.mxu0 0.0
  %3265 = vmatprep.subr.mxu0 0.0
  %3266 = vmatpush2.msra.mxu0 0.0
  %3267 = vmatprep.subr.mxu0 0.0
  %3268 = vmatpush2.msra.mxu0 0.0
  %3269 = vmatprep.subr.mxu0 0.0
  %3270 = vmatpush2.msra.mxu0 0.0
  %3271 = vmatprep.subr.mxu0 0.0
  %3272 = vmatpush2.msra.mxu0 0.0
  %3273 = vmatprep.subr.mxu0 0.0
  %3274 = vmatpush2.msra.mxu0 0.0
  %3275 = vmatprep.subr.mxu0 0.0
  %3276 = vmatpush2.msra.mxu0 0.0
  %3277 = vmatprep.subr.mxu0 0.0
  %3278 = vmatpush2.msra.mxu0 0.0
  %3279 = vmatprep.subr.mxu0 0.0
  %3280 = vmatpush2.msra.mxu0 0.0
  %3281 = vmatprep.subr.mxu0 0.0
  %3282 = vmatpush2.msra.mxu0 0.0
  %3283 = vmatprep.subr.mxu0 0.0
  %3284 = vmatpush2.msra.mxu0 0.0
  %3285 = vmatprep.subr.mxu0 0.0
  %3286 = vmatpush2.msra.mxu0 0.0
  %3287 = vmatprep.subr.mxu0 0.0
  %3288 = vmatpush2.msra.mxu0 0.0
  %3289 = vmatprep.subr.mxu0 0.0
  %3290 = vmatpush2.msra.mxu0 0.0
  %3291 = vmatprep.mubr.f32.mxu0 0.0
  %3292 = vmatmul.mubr.f32.gmra.mxu0 %v2837
  %v3293 = vpop.f32.mrf.mxu0
  %v3294 = vadd.f32 0.0, %v3293
  %v3295 = vpop.f32.mrf.mxu0
  %v3296 = vadd.f32 0.0, %v3295
  %3297 = vdwg.mxu0
  %3298 = vmatprep.subr.mxu0 %v3226
  %3299 = vmatpush1.msra.mxu0 %v3225
  %3300 = vmatprep.subr.mxu0 %v3222
  %3301 = vmatpush1.msra.mxu0 %v3221
  %3302 = vmatprep.subr.mxu0 %v3218
  %3303 = vmatpush1.msra.mxu0 %v3217
  %3304 = vmatprep.subr.mxu0 %v3214
  %3305 = vmatpush1.msra.mxu0 %v3213
  %3306 = vmatprep.subr.mxu0 %v3210
  %3307 = vmatpush1.msra.mxu0 %v3209
  %3308 = vmatprep.subr.mxu0 %v3206
  %3309 = vmatpush1.msra.mxu0 %v3205
  %3310 = vmatprep.subr.mxu0 %v3202
  %3311 = vmatpush1.msra.mxu0 %v3201
  %3312 = vmatprep.subr.mxu0 %v3198
  %3313 = vmatpush1.msra.mxu0 %v3197
  %3314 = vmatprep.subr.mxu0 %v3194
  %3315 = vmatpush1.msra.mxu0 %v3193
  %3316 = vmatprep.subr.mxu0 %v3190
  %3317 = vmatpush1.msra.mxu0 %v3189
  %3318 = vmatprep.subr.mxu0 %v3186
  %3319 = vmatpush1.msra.mxu0 %v3185
  %3320 = vmatprep.subr.mxu0 %v3182
  %3321 = vmatpush1.msra.mxu0 %v3181
  %3322 = vmatprep.subr.mxu0 %v3178
  %3323 = vmatpush1.msra.mxu0 %v3177
  %3324 = vmatprep.subr.mxu0 %v3174
  %3325 = vmatpush1.msra.mxu0 %v3173
  %3326 = vmatprep.subr.mxu0 %v3170
  %3327 = vmatpush1.msra.mxu0 %v3169
  %3328 = vmatprep.subr.mxu0 %v3166
  %3329 = vmatpush1.msra.mxu0 %v3165
  %3330 = vmatprep.subr.mxu0 0.0
  %3331 = vmatpush2.msra.mxu0 0.0
  %3332 = vmatprep.subr.mxu0 0.0
  %3333 = vmatpush2.msra.mxu0 0.0
  %3334 = vmatprep.subr.mxu0 0.0
  %3335 = vmatpush2.msra.mxu0 0.0
  %3336 = vmatprep.subr.mxu0 0.0
  %3337 = vmatpush2.msra.mxu0 0.0
  %3338 = vmatprep.subr.mxu0 0.0
  %3339 = vmatpush2.msra.mxu0 0.0
  %3340 = vmatprep.subr.mxu0 0.0
  %3341 = vmatpush2.msra.mxu0 0.0
  %3342 = vmatprep.subr.mxu0 0.0
  %3343 = vmatpush2.msra.mxu0 0.0
  %3344 = vmatprep.subr.mxu0 0.0
  %3345 = vmatpush2.msra.mxu0 0.0
  %3346 = vmatprep.subr.mxu0 0.0
  %3347 = vmatpush2.msra.mxu0 0.0
  %3348 = vmatprep.subr.mxu0 0.0
  %3349 = vmatpush2.msra.mxu0 0.0
  %3350 = vmatprep.subr.mxu0 0.0
  %3351 = vmatpush2.msra.mxu0 0.0
  %3352 = vmatprep.subr.mxu0 0.0
  %3353 = vmatpush2.msra.mxu0 0.0
  %3354 = vmatprep.subr.mxu0 0.0
  %3355 = vmatpush2.msra.mxu0 0.0
  %3356 = vmatprep.subr.mxu0 0.0
  %3357 = vmatpush2.msra.mxu0 0.0
  %3358 = vmatprep.subr.mxu0 0.0
  %3359 = vmatpush2.msra.mxu0 0.0
  %3360 = vmatprep.subr.mxu0 0.0
  %3361 = vmatpush2.msra.mxu0 0.0
  %3362 = vmatprep.mubr.f32.mxu0 0.0
  %3363 = vmatmul.mubr.f32.gmra.mxu0 %v2837
  %v3364 = vpop.f32.mrf.mxu0
  %v3365 = vadd.f32 0.0, %v3364
  %v3366 = vpop.f32.mrf.mxu0
  %v3367 = vadd.f32 0.0, %v3366
  %3368 = vdwg.mxu0
  %v3369 = vadd.f32 %v3159, %v3294
  %v3370 = vadd.f32 %v3160, %v3296
  %v3371 = vadd.f32 %v3161, %v3365
  %v3372 = vadd.f32 %v3162, %v3367
  %v3373 = vxor.u32 %v3369, 2147483648
  %v3374 = vmul.f32 %v3373, 1.442695
  %v3375 = vpow.pop %v3374
  %v3376 = vadd.f32 %v3375, 1.0
  %v3377 = vrcp.pop %v3376
  %v3378 = vmul.f32 1.0, %v3377
  %v3379 = vxor.u32 %v3370, 2147483648
  %v3380 = vmul.f32 %v3379, 1.442695
  %v3381 = vpow.pop %v3380
  %v3382 = vadd.f32 %v3381, 1.0
  %v3383 = vrcp.pop %v3382
  %v3384 = vmul.f32 1.0, %v3383
  %v3385 = vtanh.pop %v3371
  %v3386 = vxor.u32 %v3372, 2147483648
  %v3387 = vmul.f32 %v3386, 1.442695
  %v3388 = vpow.pop %v3387
  %v3389 = vadd.f32 %v3388, 1.0
  %v3390 = vrcp.pop %v3389
  %v3391 = vmul.f32 1.0, %v3390
  %v3392 = vmul.f32 %v3384, %v2835
  %v3393 = vmul.f32 %v3378, %v3385
  %v3394 = vadd.f32 %v3392, %v3393
  %v3395 = vtanh.pop %v3394
  %v3396 = vmul.f32 %v3391, %v3395
  %v3397 = vld [vmem:[%s4] sm:$0xff]
  %v3398 = vld [vmem:[%s4 + $0x8] sm:$0xff]
  %v3399 = vld [vmem:[%s4 + $0x10] sm:$0xff]
  %v3400 = vld [vmem:[%s4 + $0x18] sm:$0xff]
  %v3401 = vld [vmem:[%s4 + $0x20] sm:$0xff]
  %v3402 = vld [vmem:[%s4 + $0x28] sm:$0xff]
  %v3403 = vld [vmem:[%s4 + $0x30] sm:$0xff]
  %v3404 = vld [vmem:[%s4 + $0x38] sm:$0xff]
  %v3405 = vld [vmem:[%s4 + $0x40] sm:$0xff]
  %v3406 = vld [vmem:[%s4 + $0x48] sm:$0xff]
  %v3407 = vld [vmem:[%s4 + $0x50] sm:$0xff]
  %v3408 = vld [vmem:[%s4 + $0x58] sm:$0xff]
  %v3409 = vld [vmem:[%s4 + $0x60] sm:$0xff]
  %v3410 = vld [vmem:[%s4 + $0x68] sm:$0xff]
  %v3411 = vld [vmem:[%s4 + $0x70] sm:$0xff]
  %v3412 = vld [vmem:[%s4 + $0x78] sm:$0xff]
  %v3413 = vld [vmem:[%s4 + $0x80] sm:$0xff]
  %v3414 = vld [vmem:[%s4 + $0x88] sm:$0xff]
  %v3415 = vld [vmem:[%s4 + $0x90] sm:$0xff]
  %v3416 = vld [vmem:[%s4 + $0x98] sm:$0xff]
  %v3417 = vld [vmem:[%s4 + $0xa0] sm:$0xff]
  %v3418 = vld [vmem:[%s4 + $0xa8] sm:$0xff]
  %v3419 = vld [vmem:[%s4 + $0xb0] sm:$0xff]
  %v3420 = vld [vmem:[%s4 + $0xb8] sm:$0xff]
  %v3421 = vld [vmem:[%s4 + $0xc0] sm:$0xff]
  %v3422 = vld [vmem:[%s4 + $0xc8] sm:$0xff]
  %v3423 = vld [vmem:[%s4 + $0xd0] sm:$0xff]
  %v3424 = vld [vmem:[%s4 + $0xd8] sm:$0xff]
  %v3425 = vld [vmem:[%s4 + $0xe0] sm:$0xff]
  %v3426 = vld [vmem:[%s4 + $0xe8] sm:$0xff]
  %v3427 = vld [vmem:[%s4 + $0xf0] sm:$0xff]
  %v3428 = vld [vmem:[%s4 + $0xf8] sm:$0xff]
  %v3429 = vld [vmem:[%s4 + $0x100] sm:$0xff]
  %v3430 = vld [vmem:[%s4 + $0x108] sm:$0xff]
  %v3431 = vld [vmem:[%s4 + $0x110] sm:$0xff]
  %v3432 = vld [vmem:[%s4 + $0x118] sm:$0xff]
  %v3433 = vld [vmem:[%s4 + $0x120] sm:$0xff]
  %v3434 = vld [vmem:[%s4 + $0x128] sm:$0xff]
  %v3435 = vld [vmem:[%s4 + $0x130] sm:$0xff]
  %v3436 = vld [vmem:[%s4 + $0x138] sm:$0xff]
  %v3437 = vld [vmem:[%s4 + $0x140] sm:$0xff]
  %v3438 = vld [vmem:[%s4 + $0x148] sm:$0xff]
  %v3439 = vld [vmem:[%s4 + $0x150] sm:$0xff]
  %v3440 = vld [vmem:[%s4 + $0x158] sm:$0xff]
  %v3441 = vld [vmem:[%s4 + $0x160] sm:$0xff]
  %v3442 = vld [vmem:[%s4 + $0x168] sm:$0xff]
  %v3443 = vld [vmem:[%s4 + $0x170] sm:$0xff]
  %v3444 = vld [vmem:[%s4 + $0x178] sm:$0xff]
  %v3445 = vld [vmem:[%s4 + $0x180] sm:$0xff]
  %v3446 = vld [vmem:[%s4 + $0x188] sm:$0xff]
  %v3447 = vld [vmem:[%s4 + $0x190] sm:$0xff]
  %v3448 = vld [vmem:[%s4 + $0x198] sm:$0xff]
  %v3449 = vld [vmem:[%s4 + $0x1a0] sm:$0xff]
  %v3450 = vld [vmem:[%s4 + $0x1a8] sm:$0xff]
  %v3451 = vld [vmem:[%s4 + $0x1b0] sm:$0xff]
  %v3452 = vld [vmem:[%s4 + $0x1b8] sm:$0xff]
  %v3453 = vld [vmem:[%s4 + $0x1c0] sm:$0xff]
  %v3454 = vld [vmem:[%s4 + $0x1c8] sm:$0xff]
  %v3455 = vld [vmem:[%s4 + $0x1d0] sm:$0xff]
  %v3456 = vld [vmem:[%s4 + $0x1d8] sm:$0xff]
  %v3457 = vld [vmem:[%s4 + $0x1e0] sm:$0xff]
  %v3458 = vld [vmem:[%s4 + $0x1e8] sm:$0xff]
  %v3459 = vld [vmem:[%s4 + $0x1f0] sm:$0xff]
  %v3460 = vld [vmem:[%s4 + $0x1f8] sm:$0xff]
  %v3461 = vld [vmem:[%s4 + $0x200] sm:$0xff]
  %v3462 = vld [vmem:[%s4 + $0x208] sm:$0xff]
  %v3463 = vld [vmem:[%s4 + $0x210] sm:$0xff]
  %v3464 = vld [vmem:[%s4 + $0x218] sm:$0xff]
  %v3465 = vld [vmem:[%s4 + $0x220] sm:$0xff]
  %v3466 = vld [vmem:[%s4 + $0x228] sm:$0xff]
  %v3467 = vld [vmem:[%s4 + $0x230] sm:$0xff]
  %v3468 = vld [vmem:[%s4 + $0x238] sm:$0xff]
  %v3469 = vld [vmem:[%s4 + $0x240] sm:$0xff]
  %v3470 = vld [vmem:[%s4 + $0x248] sm:$0xff]
  %v3471 = vld [vmem:[%s4 + $0x250] sm:$0xff]
  %v3472 = vld [vmem:[%s4 + $0x258] sm:$0xff]
  %v3473 = vld [vmem:[%s4 + $0x260] sm:$0xff]
  %v3474 = vld [vmem:[%s4 + $0x268] sm:$0xff]
  %v3475 = vld [vmem:[%s4 + $0x270] sm:$0xff]
  %v3476 = vld [vmem:[%s4 + $0x278] sm:$0xff]
  %v3477 = vld [vmem:[%s4 + $0x280] sm:$0xff]
  %v3478 = vld [vmem:[%s4 + $0x288] sm:$0xff]
  %v3479 = vld [vmem:[%s4 + $0x290] sm:$0xff]
  %v3480 = vld [vmem:[%s4 + $0x298] sm:$0xff]
  %v3481 = vld [vmem:[%s4 + $0x2a0] sm:$0xff]
  %v3482 = vld [vmem:[%s4 + $0x2a8] sm:$0xff]
  %v3483 = vld [vmem:[%s4 + $0x2b0] sm:$0xff]
  %v3484 = vld [vmem:[%s4 + $0x2b8] sm:$0xff]
  %v3485 = vld [vmem:[%s4 + $0x2c0] sm:$0xff]
  %v3486 = vld [vmem:[%s4 + $0x2c8] sm:$0xff]
  %v3487 = vld [vmem:[%s4 + $0x2d0] sm:$0xff]
  %v3488 = vld [vmem:[%s4 + $0x2d8] sm:$0xff]
  %v3489 = vld [vmem:[%s4 + $0x2e0] sm:$0xff]
  %v3490 = vld [vmem:[%s4 + $0x2e8] sm:$0xff]
  %v3491 = vld [vmem:[%s4 + $0x2f0] sm:$0xff]
  %v3492 = vld [vmem:[%s4 + $0x2f8] sm:$0xff]
  %v3493 = vld [vmem:[%s4 + $0x300] sm:$0xff]
  %v3494 = vld [vmem:[%s4 + $0x308] sm:$0xff]
  %v3495 = vld [vmem:[%s4 + $0x310] sm:$0xff]
  %v3496 = vld [vmem:[%s4 + $0x318] sm:$0xff]
  %v3497 = vld [vmem:[%s4 + $0x320] sm:$0xff]
  %v3498 = vld [vmem:[%s4 + $0x328] sm:$0xff]
  %v3499 = vld [vmem:[%s4 + $0x330] sm:$0xff]
  %v3500 = vld [vmem:[%s4 + $0x338] sm:$0xff]
  %v3501 = vld [vmem:[%s4 + $0x340] sm:$0xff]
  %v3502 = vld [vmem:[%s4 + $0x348] sm:$0xff]
  %v3503 = vld [vmem:[%s4 + $0x350] sm:$0xff]
  %v3504 = vld [vmem:[%s4 + $0x358] sm:$0xff]
  %v3505 = vld [vmem:[%s4 + $0x360] sm:$0xff]
  %v3506 = vld [vmem:[%s4 + $0x368] sm:$0xff]
  %v3507 = vld [vmem:[%s4 + $0x370] sm:$0xff]
  %v3508 = vld [vmem:[%s4 + $0x378] sm:$0xff]
  %v3509 = vld [vmem:[%s4 + $0x380] sm:$0xff]
  %v3510 = vld [vmem:[%s4 + $0x388] sm:$0xff]
  %v3511 = vld [vmem:[%s4 + $0x390] sm:$0xff]
  %v3512 = vld [vmem:[%s4 + $0x398] sm:$0xff]
  %v3513 = vld [vmem:[%s4 + $0x3a0] sm:$0xff]
  %v3514 = vld [vmem:[%s4 + $0x3a8] sm:$0xff]
  %v3515 = vld [vmem:[%s4 + $0x3b0] sm:$0xff]
  %v3516 = vld [vmem:[%s4 + $0x3b8] sm:$0xff]
  %v3517 = vld [vmem:[%s4 + $0x3c0] sm:$0xff]
  %v3518 = vld [vmem:[%s4 + $0x3c8] sm:$0xff]
  %v3519 = vld [vmem:[%s4 + $0x3d0] sm:$0xff]
  %v3520 = vld [vmem:[%s4 + $0x3d8] sm:$0xff]
  %v3521 = vld [vmem:[%s4 + $0x3e0] sm:$0xff]
  %v3522 = vld [vmem:[%s4 + $0x3e8] sm:$0xff]
  %v3523 = vld [vmem:[%s4 + $0x3f0] sm:$0xff]
  %v3524 = vld [vmem:[%s4 + $0x3f8] sm:$0xff]
  %v3525 = vld [vmem:[%s5] sm:$0xf]
  %v3527 = vlaneseq
  %v3528 = vshrl.u32 %v3527, 7
  %v3529 = vsub.s32 0, %v3528
  %v3530 = vrot.slane %v3525, %v3529
  %v3531 = vlaneseq
  %v3532 = vshrl.u32 %v3531, 7
  %v3533 = vsub.s32 1, %v3532
  %v3534 = vrot.slane %v3525, %v3533
  %v3535 = vlaneseq
  %v3536 = vshrl.u32 %v3535, 7
  %v3537 = vsub.s32 2, %v3536
  %v3538 = vrot.slane %v3525, %v3537
  %v3539 = vlaneseq
  %v3540 = vshrl.u32 %v3539, 7
  %v3541 = vsub.s32 3, %v3540
  %v3542 = vrot.slane %v3525, %v3541
  %3547 = vmatprep.subr.mxu0 %v3458
  %3548 = vmatpush1.msra.mxu0 %v3457
  %3549 = vmatprep.subr.mxu0 %v3454
  %3550 = vmatpush1.msra.mxu0 %v3453
  %3551 = vmatprep.subr.mxu0 %v3450
  %3552 = vmatpush1.msra.mxu0 %v3449
  %3553 = vmatprep.subr.mxu0 %v3446
  %3554 = vmatpush1.msra.mxu0 %v3445
  %3555 = vmatprep.subr.mxu0 %v3442
  %3556 = vmatpush1.msra.mxu0 %v3441
  %3557 = vmatprep.subr.mxu0 %v3438
  %3558 = vmatpush1.msra.mxu0 %v3437
  %3559 = vmatprep.subr.mxu0 %v3434
  %3560 = vmatpush1.msra.mxu0 %v3433
  %3561 = vmatprep.subr.mxu0 %v3430
  %3562 = vmatpush1.msra.mxu0 %v3429
  %3563 = vmatprep.subr.mxu0 %v3426
  %3564 = vmatpush1.msra.mxu0 %v3425
  %3565 = vmatprep.subr.mxu0 %v3422
  %3566 = vmatpush1.msra.mxu0 %v3421
  %3567 = vmatprep.subr.mxu0 %v3418
  %3568 = vmatpush1.msra.mxu0 %v3417
  %3569 = vmatprep.subr.mxu0 %v3414
  %3570 = vmatpush1.msra.mxu0 %v3413
  %3571 = vmatprep.subr.mxu0 %v3410
  %3572 = vmatpush1.msra.mxu0 %v3409
  %3573 = vmatprep.subr.mxu0 %v3406
  %3574 = vmatpush1.msra.mxu0 %v3405
  %3575 = vmatprep.subr.mxu0 %v3402
  %3576 = vmatpush1.msra.mxu0 %v3401
  %3577 = vmatprep.subr.mxu0 %v3398
  %3578 = vmatpush1.msra.mxu0 %v3397
  %3579 = vmatprep.subr.mxu0 %v3522
  %3580 = vmatpush2.msra.mxu0 %v3521
  %3581 = vmatprep.subr.mxu0 %v3518
  %3582 = vmatpush2.msra.mxu0 %v3517
  %3583 = vmatprep.subr.mxu0 %v3514
  %3584 = vmatpush2.msra.mxu0 %v3513
  %3585 = vmatprep.subr.mxu0 %v3510
  %3586 = vmatpush2.msra.mxu0 %v3509
  %3587 = vmatprep.subr.mxu0 %v3506
  %3588 = vmatpush2.msra.mxu0 %v3505
  %3589 = vmatprep.subr.mxu0 %v3502
  %3590 = vmatpush2.msra.mxu0 %v3501
  %3591 = vmatprep.subr.mxu0 %v3498
  %3592 = vmatpush2.msra.mxu0 %v3497
  %3593 = vmatprep.subr.mxu0 %v3494
  %3594 = vmatpush2.msra.mxu0 %v3493
  %3595 = vmatprep.subr.mxu0 %v3490
  %3596 = vmatpush2.msra.mxu0 %v3489
  %3597 = vmatprep.subr.mxu0 %v3486
  %3598 = vmatpush2.msra.mxu0 %v3485
  %3599 = vmatprep.subr.mxu0 %v3482
  %3600 = vmatpush2.msra.mxu0 %v3481
  %3601 = vmatprep.subr.mxu0 %v3478
  %3602 = vmatpush2.msra.mxu0 %v3477
  %3603 = vmatprep.subr.mxu0 %v3474
  %3604 = vmatpush2.msra.mxu0 %v3473
  %3605 = vmatprep.subr.mxu0 %v3470
  %3606 = vmatpush2.msra.mxu0 %v3469
  %3607 = vmatprep.subr.mxu0 %v3466
  %3608 = vmatpush2.msra.mxu0 %v3465
  %3609 = vmatprep.subr.mxu0 %v3462
  %3610 = vmatpush2.msra.mxu0 %v3461
  %3611 = vmatprep.mubr.f32.mxu0 %v3153
  %3612 = vmatmul.mubr.f32.gmra.mxu0 %v3396
  %v3613 = vpop.f32.mrf.mxu0
  %v3614 = vadd.f32 %v3530, %v3613
  %v3615 = vpop.f32.mrf.mxu0
  %v3616 = vadd.f32 %v3534, %v3615
  %3617 = vdwg.mxu0
  %3618 = vmatprep.subr.mxu0 %v3460
  %3619 = vmatpush1.msra.mxu0 %v3459
  %3620 = vmatprep.subr.mxu0 %v3456
  %3621 = vmatpush1.msra.mxu0 %v3455
  %3622 = vmatprep.subr.mxu0 %v3452
  %3623 = vmatpush1.msra.mxu0 %v3451
  %3624 = vmatprep.subr.mxu0 %v3448
  %3625 = vmatpush1.msra.mxu0 %v3447
  %3626 = vmatprep.subr.mxu0 %v3444
  %3627 = vmatpush1.msra.mxu0 %v3443
  %3628 = vmatprep.subr.mxu0 %v3440
  %3629 = vmatpush1.msra.mxu0 %v3439
  %3630 = vmatprep.subr.mxu0 %v3436
  %3631 = vmatpush1.msra.mxu0 %v3435
  %3632 = vmatprep.subr.mxu0 %v3432
  %3633 = vmatpush1.msra.mxu0 %v3431
  %3634 = vmatprep.subr.mxu0 %v3428
  %3635 = vmatpush1.msra.mxu0 %v3427
  %3636 = vmatprep.subr.mxu0 %v3424
  %3637 = vmatpush1.msra.mxu0 %v3423
  %3638 = vmatprep.subr.mxu0 %v3420
  %3639 = vmatpush1.msra.mxu0 %v3419
  %3640 = vmatprep.subr.mxu0 %v3416
  %3641 = vmatpush1.msra.mxu0 %v3415
  %3642 = vmatprep.subr.mxu0 %v3412
  %3643 = vmatpush1.msra.mxu0 %v3411
  %3644 = vmatprep.subr.mxu0 %v3408
  %3645 = vmatpush1.msra.mxu0 %v3407
  %3646 = vmatprep.subr.mxu0 %v3404
  %3647 = vmatpush1.msra.mxu0 %v3403
  %3648 = vmatprep.subr.mxu0 %v3400
  %3649 = vmatpush1.msra.mxu0 %v3399
  %3650 = vmatprep.subr.mxu0 %v3524
  %3651 = vmatpush2.msra.mxu0 %v3523
  %3652 = vmatprep.subr.mxu0 %v3520
  %3653 = vmatpush2.msra.mxu0 %v3519
  %3654 = vmatprep.subr.mxu0 %v3516
  %3655 = vmatpush2.msra.mxu0 %v3515
  %3656 = vmatprep.subr.mxu0 %v3512
  %3657 = vmatpush2.msra.mxu0 %v3511
  %3658 = vmatprep.subr.mxu0 %v3508
  %3659 = vmatpush2.msra.mxu0 %v3507
  %3660 = vmatprep.subr.mxu0 %v3504
  %3661 = vmatpush2.msra.mxu0 %v3503
  %3662 = vmatprep.subr.mxu0 %v3500
  %3663 = vmatpush2.msra.mxu0 %v3499
  %3664 = vmatprep.subr.mxu0 %v3496
  %3665 = vmatpush2.msra.mxu0 %v3495
  %3666 = vmatprep.subr.mxu0 %v3492
  %3667 = vmatpush2.msra.mxu0 %v3491
  %3668 = vmatprep.subr.mxu0 %v3488
  %3669 = vmatpush2.msra.mxu0 %v3487
  %3670 = vmatprep.subr.mxu0 %v3484
  %3671 = vmatpush2.msra.mxu0 %v3483
  %3672 = vmatprep.subr.mxu0 %v3480
  %3673 = vmatpush2.msra.mxu0 %v3479
  %3674 = vmatprep.subr.mxu0 %v3476
  %3675 = vmatpush2.msra.mxu0 %v3475
  %3676 = vmatprep.subr.mxu0 %v3472
  %3677 = vmatpush2.msra.mxu0 %v3471
  %3678 = vmatprep.subr.mxu0 %v3468
  %3679 = vmatpush2.msra.mxu0 %v3467
  %3680 = vmatprep.subr.mxu0 %v3464
  %3681 = vmatpush2.msra.mxu0 %v3463
  %3682 = vmatprep.mubr.f32.mxu0 %v3153
  %3683 = vmatmul.mubr.f32.gmra.mxu0 %v3396
  %v3684 = vpop.f32.mrf.mxu0
  %v3685 = vadd.f32 %v3538, %v3684
  %v3686 = vpop.f32.mrf.mxu0
  %v3687 = vadd.f32 %v3542, %v3686
  %3688 = vdwg.mxu0
  %v3689 = vxor.u32 %v3614, 2147483648
  %v3690 = vmul.f32 %v3689, 1.442695
  %v3691 = vpow.pop %v3690
  %v3692 = vadd.f32 %v3691, 1.0
  %v3693 = vrcp.pop %v3692
  %v3694 = vmul.f32 1.0, %v3693
  %v3695 = vxor.u32 %v3616, 2147483648
  %v3696 = vmul.f32 %v3695, 1.442695
  %v3697 = vpow.pop %v3696
  %v3698 = vadd.f32 %v3697, 1.0
  %v3699 = vrcp.pop %v3698
  %v3700 = vmul.f32 1.0, %v3699
  %v3701 = vtanh.pop %v3685
  %v3702 = vxor.u32 %v3687, 2147483648
  %v3703 = vmul.f32 %v3702, 1.442695
  %v3704 = vpow.pop %v3703
  %v3705 = vadd.f32 %v3704, 1.0
  %v3706 = vrcp.pop %v3705
  %v3707 = vmul.f32 1.0, %v3706
  %v3708 = vmul.f32 %v3700, %v3151
  %v3709 = vmul.f32 %v3694, %v3701
  %v3710 = vadd.f32 %v3708, %v3709
  %v3711 = vtanh.pop %v3710
  %v3712 = vmul.f32 %v3707, %v3711
  %s3713 = scalar_lea.vmem [#allocation3], 40
  %3714 = vst [vmem:[%s3713] sm:$0xff] %v3712
  %s3715 = smul.u32 6, 4
  %s3716 = smul.addr %s3715, 8
  %s3717 = scalar_lea.vmem [#allocation2], %s3716
  %v3718 = vld [vmem:[%s3717] sm:$0xff]
  %v3719 = vld [vmem:[%s3717 + $0x8] sm:$0xff]
  %v3720 = vld [vmem:[%s3717 + $0x10] sm:$0xff]
  %v3721 = vld [vmem:[%s3717 + $0x18] sm:$0xff]
  %v3722 = vld [vmem:[%s3] sm:$0xff]
  %v3723 = vld [vmem:[%s3 + $0x8] sm:$0xff]
  %v3724 = vld [vmem:[%s3 + $0x10] sm:$0xff]
  %v3725 = vld [vmem:[%s3 + $0x18] sm:$0xff]
  %v3726 = vld [vmem:[%s3 + $0x20] sm:$0xff]
  %v3727 = vld [vmem:[%s3 + $0x28] sm:$0xff]
  %v3728 = vld [vmem:[%s3 + $0x30] sm:$0xff]
  %v3729 = vld [vmem:[%s3 + $0x38] sm:$0xff]
  %v3730 = vld [vmem:[%s3 + $0x40] sm:$0xff]
  %v3731 = vld [vmem:[%s3 + $0x48] sm:$0xff]
  %v3732 = vld [vmem:[%s3 + $0x50] sm:$0xff]
  %v3733 = vld [vmem:[%s3 + $0x58] sm:$0xff]
  %v3734 = vld [vmem:[%s3 + $0x60] sm:$0xff]
  %v3735 = vld [vmem:[%s3 + $0x68] sm:$0xff]
  %v3736 = vld [vmem:[%s3 + $0x70] sm:$0xff]
  %v3737 = vld [vmem:[%s3 + $0x78] sm:$0xff]
  %v3738 = vld [vmem:[%s3 + $0x80] sm:$0xff]
  %v3739 = vld [vmem:[%s3 + $0x88] sm:$0xff]
  %v3740 = vld [vmem:[%s3 + $0x90] sm:$0xff]
  %v3741 = vld [vmem:[%s3 + $0x98] sm:$0xff]
  %v3742 = vld [vmem:[%s3 + $0xa0] sm:$0xff]
  %v3743 = vld [vmem:[%s3 + $0xa8] sm:$0xff]
  %v3744 = vld [vmem:[%s3 + $0xb0] sm:$0xff]
  %v3745 = vld [vmem:[%s3 + $0xb8] sm:$0xff]
  %v3746 = vld [vmem:[%s3 + $0xc0] sm:$0xff]
  %v3747 = vld [vmem:[%s3 + $0xc8] sm:$0xff]
  %v3748 = vld [vmem:[%s3 + $0xd0] sm:$0xff]
  %v3749 = vld [vmem:[%s3 + $0xd8] sm:$0xff]
  %v3750 = vld [vmem:[%s3 + $0xe0] sm:$0xff]
  %v3751 = vld [vmem:[%s3 + $0xe8] sm:$0xff]
  %v3752 = vld [vmem:[%s3 + $0xf0] sm:$0xff]
  %v3753 = vld [vmem:[%s3 + $0xf8] sm:$0xff]
  %v3754 = vld [vmem:[%s3 + $0x100] sm:$0xff]
  %v3755 = vld [vmem:[%s3 + $0x108] sm:$0xff]
  %v3756 = vld [vmem:[%s3 + $0x110] sm:$0xff]
  %v3757 = vld [vmem:[%s3 + $0x118] sm:$0xff]
  %v3758 = vld [vmem:[%s3 + $0x120] sm:$0xff]
  %v3759 = vld [vmem:[%s3 + $0x128] sm:$0xff]
  %v3760 = vld [vmem:[%s3 + $0x130] sm:$0xff]
  %v3761 = vld [vmem:[%s3 + $0x138] sm:$0xff]
  %v3762 = vld [vmem:[%s3 + $0x140] sm:$0xff]
  %v3763 = vld [vmem:[%s3 + $0x148] sm:$0xff]
  %v3764 = vld [vmem:[%s3 + $0x150] sm:$0xff]
  %v3765 = vld [vmem:[%s3 + $0x158] sm:$0xff]
  %v3766 = vld [vmem:[%s3 + $0x160] sm:$0xff]
  %v3767 = vld [vmem:[%s3 + $0x168] sm:$0xff]
  %v3768 = vld [vmem:[%s3 + $0x170] sm:$0xff]
  %v3769 = vld [vmem:[%s3 + $0x178] sm:$0xff]
  %v3770 = vld [vmem:[%s3 + $0x180] sm:$0xff]
  %v3771 = vld [vmem:[%s3 + $0x188] sm:$0xff]
  %v3772 = vld [vmem:[%s3 + $0x190] sm:$0xff]
  %v3773 = vld [vmem:[%s3 + $0x198] sm:$0xff]
  %v3774 = vld [vmem:[%s3 + $0x1a0] sm:$0xff]
  %v3775 = vld [vmem:[%s3 + $0x1a8] sm:$0xff]
  %v3776 = vld [vmem:[%s3 + $0x1b0] sm:$0xff]
  %v3777 = vld [vmem:[%s3 + $0x1b8] sm:$0xff]
  %v3778 = vld [vmem:[%s3 + $0x1c0] sm:$0xff]
  %v3779 = vld [vmem:[%s3 + $0x1c8] sm:$0xff]
  %v3780 = vld [vmem:[%s3 + $0x1d0] sm:$0xff]
  %v3781 = vld [vmem:[%s3 + $0x1d8] sm:$0xff]
  %v3782 = vld [vmem:[%s3 + $0x1e0] sm:$0xff]
  %v3783 = vld [vmem:[%s3 + $0x1e8] sm:$0xff]
  %v3784 = vld [vmem:[%s3 + $0x1f0] sm:$0xff]
  %v3785 = vld [vmem:[%s3 + $0x1f8] sm:$0xff]
  %3786 = vmatprep.subr.mxu0 %v3783
  %3787 = vmatpush1.msra.mxu0 %v3782
  %3788 = vmatprep.subr.mxu0 %v3779
  %3789 = vmatpush1.msra.mxu0 %v3778
  %3790 = vmatprep.subr.mxu0 %v3775
  %3791 = vmatpush1.msra.mxu0 %v3774
  %3792 = vmatprep.subr.mxu0 %v3771
  %3793 = vmatpush1.msra.mxu0 %v3770
  %3794 = vmatprep.subr.mxu0 %v3767
  %3795 = vmatpush1.msra.mxu0 %v3766
  %3796 = vmatprep.subr.mxu0 %v3763
  %3797 = vmatpush1.msra.mxu0 %v3762
  %3798 = vmatprep.subr.mxu0 %v3759
  %3799 = vmatpush1.msra.mxu0 %v3758
  %3800 = vmatprep.subr.mxu0 %v3755
  %3801 = vmatpush1.msra.mxu0 %v3754
  %3802 = vmatprep.subr.mxu0 %v3751
  %3803 = vmatpush1.msra.mxu0 %v3750
  %3804 = vmatprep.subr.mxu0 %v3747
  %3805 = vmatpush1.msra.mxu0 %v3746
  %3806 = vmatprep.subr.mxu0 %v3743
  %3807 = vmatpush1.msra.mxu0 %v3742
  %3808 = vmatprep.subr.mxu0 %v3739
  %3809 = vmatpush1.msra.mxu0 %v3738
  %3810 = vmatprep.subr.mxu0 %v3735
  %3811 = vmatpush1.msra.mxu0 %v3734
  %3812 = vmatprep.subr.mxu0 %v3731
  %3813 = vmatpush1.msra.mxu0 %v3730
  %3814 = vmatprep.subr.mxu0 %v3727
  %3815 = vmatpush1.msra.mxu0 %v3726
  %3816 = vmatprep.subr.mxu0 %v3723
  %3817 = vmatpush1.msra.mxu0 %v3722
  %3818 = vmatprep.subr.mxu0 0.0
  %3819 = vmatpush2.msra.mxu0 0.0
  %3820 = vmatprep.subr.mxu0 0.0
  %3821 = vmatpush2.msra.mxu0 0.0
  %3822 = vmatprep.subr.mxu0 0.0
  %3823 = vmatpush2.msra.mxu0 0.0
  %3824 = vmatprep.subr.mxu0 0.0
  %3825 = vmatpush2.msra.mxu0 0.0
  %3826 = vmatprep.subr.mxu0 0.0
  %3827 = vmatpush2.msra.mxu0 0.0
  %3828 = vmatprep.subr.mxu0 0.0
  %3829 = vmatpush2.msra.mxu0 0.0
  %3830 = vmatprep.subr.mxu0 0.0
  %3831 = vmatpush2.msra.mxu0 0.0
  %3832 = vmatprep.subr.mxu0 0.0
  %3833 = vmatpush2.msra.mxu0 0.0
  %3834 = vmatprep.subr.mxu0 0.0
  %3835 = vmatpush2.msra.mxu0 0.0
  %3836 = vmatprep.subr.mxu0 0.0
  %3837 = vmatpush2.msra.mxu0 0.0
  %3838 = vmatprep.subr.mxu0 0.0
  %3839 = vmatpush2.msra.mxu0 0.0
  %3840 = vmatprep.subr.mxu0 0.0
  %3841 = vmatpush2.msra.mxu0 0.0
  %3842 = vmatprep.subr.mxu0 0.0
  %3843 = vmatpush2.msra.mxu0 0.0
  %3844 = vmatprep.subr.mxu0 0.0
  %3845 = vmatpush2.msra.mxu0 0.0
  %3846 = vmatprep.subr.mxu0 0.0
  %3847 = vmatpush2.msra.mxu0 0.0
  %3848 = vmatprep.subr.mxu0 0.0
  %3849 = vmatpush2.msra.mxu0 0.0
  %3850 = vmatprep.mubr.f32.mxu0 0.0
  %3851 = vmatmul.mubr.f32.gmra.mxu0 %v3396
  %v3852 = vpop.f32.mrf.mxu0
  %v3853 = vadd.f32 0.0, %v3852
  %v3854 = vpop.f32.mrf.mxu0
  %v3855 = vadd.f32 0.0, %v3854
  %3856 = vdwg.mxu0
  %3857 = vmatprep.subr.mxu0 %v3785
  %3858 = vmatpush1.msra.mxu0 %v3784
  %3859 = vmatprep.subr.mxu0 %v3781
  %3860 = vmatpush1.msra.mxu0 %v3780
  %3861 = vmatprep.subr.mxu0 %v3777
  %3862 = vmatpush1.msra.mxu0 %v3776
  %3863 = vmatprep.subr.mxu0 %v3773
  %3864 = vmatpush1.msra.mxu0 %v3772
  %3865 = vmatprep.subr.mxu0 %v3769
  %3866 = vmatpush1.msra.mxu0 %v3768
  %3867 = vmatprep.subr.mxu0 %v3765
  %3868 = vmatpush1.msra.mxu0 %v3764
  %3869 = vmatprep.subr.mxu0 %v3761
  %3870 = vmatpush1.msra.mxu0 %v3760
  %3871 = vmatprep.subr.mxu0 %v3757
  %3872 = vmatpush1.msra.mxu0 %v3756
  %3873 = vmatprep.subr.mxu0 %v3753
  %3874 = vmatpush1.msra.mxu0 %v3752
  %3875 = vmatprep.subr.mxu0 %v3749
  %3876 = vmatpush1.msra.mxu0 %v3748
  %3877 = vmatprep.subr.mxu0 %v3745
  %3878 = vmatpush1.msra.mxu0 %v3744
  %3879 = vmatprep.subr.mxu0 %v3741
  %3880 = vmatpush1.msra.mxu0 %v3740
  %3881 = vmatprep.subr.mxu0 %v3737
  %3882 = vmatpush1.msra.mxu0 %v3736
  %3883 = vmatprep.subr.mxu0 %v3733
  %3884 = vmatpush1.msra.mxu0 %v3732
  %3885 = vmatprep.subr.mxu0 %v3729
  %3886 = vmatpush1.msra.mxu0 %v3728
  %3887 = vmatprep.subr.mxu0 %v3725
  %3888 = vmatpush1.msra.mxu0 %v3724
  %3889 = vmatprep.subr.mxu0 0.0
  %3890 = vmatpush2.msra.mxu0 0.0
  %3891 = vmatprep.subr.mxu0 0.0
  %3892 = vmatpush2.msra.mxu0 0.0
  %3893 = vmatprep.subr.mxu0 0.0
  %3894 = vmatpush2.msra.mxu0 0.0
  %3895 = vmatprep.subr.mxu0 0.0
  %3896 = vmatpush2.msra.mxu0 0.0
  %3897 = vmatprep.subr.mxu0 0.0
  %3898 = vmatpush2.msra.mxu0 0.0
  %3899 = vmatprep.subr.mxu0 0.0
  %3900 = vmatpush2.msra.mxu0 0.0
  %3901 = vmatprep.subr.mxu0 0.0
  %3902 = vmatpush2.msra.mxu0 0.0
  %3903 = vmatprep.subr.mxu0 0.0
  %3904 = vmatpush2.msra.mxu0 0.0
  %3905 = vmatprep.subr.mxu0 0.0
  %3906 = vmatpush2.msra.mxu0 0.0
  %3907 = vmatprep.subr.mxu0 0.0
  %3908 = vmatpush2.msra.mxu0 0.0
  %3909 = vmatprep.subr.mxu0 0.0
  %3910 = vmatpush2.msra.mxu0 0.0
  %3911 = vmatprep.subr.mxu0 0.0
  %3912 = vmatpush2.msra.mxu0 0.0
  %3913 = vmatprep.subr.mxu0 0.0
  %3914 = vmatpush2.msra.mxu0 0.0
  %3915 = vmatprep.subr.mxu0 0.0
  %3916 = vmatpush2.msra.mxu0 0.0
  %3917 = vmatprep.subr.mxu0 0.0
  %3918 = vmatpush2.msra.mxu0 0.0
  %3919 = vmatprep.subr.mxu0 0.0
  %3920 = vmatpush2.msra.mxu0 0.0
  %3921 = vmatprep.mubr.f32.mxu0 0.0
  %3922 = vmatmul.mubr.f32.gmra.mxu0 %v3396
  %v3923 = vpop.f32.mrf.mxu0
  %v3924 = vadd.f32 0.0, %v3923
  %v3925 = vpop.f32.mrf.mxu0
  %v3926 = vadd.f32 0.0, %v3925
  %3927 = vdwg.mxu0
  %v3928 = vadd.f32 %v3718, %v3853
  %v3929 = vadd.f32 %v3719, %v3855
  %v3930 = vadd.f32 %v3720, %v3924
  %v3931 = vadd.f32 %v3721, %v3926
  %v3932 = vxor.u32 %v3928, 2147483648
  %v3933 = vmul.f32 %v3932, 1.442695
  %v3934 = vpow.pop %v3933
  %v3935 = vadd.f32 %v3934, 1.0
  %v3936 = vrcp.pop %v3935
  %v3937 = vmul.f32 1.0, %v3936
  %v3938 = vxor.u32 %v3929, 2147483648
  %v3939 = vmul.f32 %v3938, 1.442695
  %v3940 = vpow.pop %v3939
  %v3941 = vadd.f32 %v3940, 1.0
  %v3942 = vrcp.pop %v3941
  %v3943 = vmul.f32 1.0, %v3942
  %v3944 = vtanh.pop %v3930
  %v3945 = vxor.u32 %v3931, 2147483648
  %v3946 = vmul.f32 %v3945, 1.442695
  %v3947 = vpow.pop %v3946
  %v3948 = vadd.f32 %v3947, 1.0
  %v3949 = vrcp.pop %v3948
  %v3950 = vmul.f32 1.0, %v3949
  %v3951 = vmul.f32 %v3943, %v3394
  %v3952 = vmul.f32 %v3937, %v3944
  %v3953 = vadd.f32 %v3951, %v3952
  %v3954 = vtanh.pop %v3953
  %v3955 = vmul.f32 %v3950, %v3954
  %v3956 = vld [vmem:[%s4] sm:$0xff]
  %v3957 = vld [vmem:[%s4 + $0x8] sm:$0xff]
  %v3958 = vld [vmem:[%s4 + $0x10] sm:$0xff]
  %v3959 = vld [vmem:[%s4 + $0x18] sm:$0xff]
  %v3960 = vld [vmem:[%s4 + $0x20] sm:$0xff]
  %v3961 = vld [vmem:[%s4 + $0x28] sm:$0xff]
  %v3962 = vld [vmem:[%s4 + $0x30] sm:$0xff]
  %v3963 = vld [vmem:[%s4 + $0x38] sm:$0xff]
  %v3964 = vld [vmem:[%s4 + $0x40] sm:$0xff]
  %v3965 = vld [vmem:[%s4 + $0x48] sm:$0xff]
  %v3966 = vld [vmem:[%s4 + $0x50] sm:$0xff]
  %v3967 = vld [vmem:[%s4 + $0x58] sm:$0xff]
  %v3968 = vld [vmem:[%s4 + $0x60] sm:$0xff]
  %v3969 = vld [vmem:[%s4 + $0x68] sm:$0xff]
  %v3970 = vld [vmem:[%s4 + $0x70] sm:$0xff]
  %v3971 = vld [vmem:[%s4 + $0x78] sm:$0xff]
  %v3972 = vld [vmem:[%s4 + $0x80] sm:$0xff]
  %v3973 = vld [vmem:[%s4 + $0x88] sm:$0xff]
  %v3974 = vld [vmem:[%s4 + $0x90] sm:$0xff]
  %v3975 = vld [vmem:[%s4 + $0x98] sm:$0xff]
  %v3976 = vld [vmem:[%s4 + $0xa0] sm:$0xff]
  %v3977 = vld [vmem:[%s4 + $0xa8] sm:$0xff]
  %v3978 = vld [vmem:[%s4 + $0xb0] sm:$0xff]
  %v3979 = vld [vmem:[%s4 + $0xb8] sm:$0xff]
  %v3980 = vld [vmem:[%s4 + $0xc0] sm:$0xff]
  %v3981 = vld [vmem:[%s4 + $0xc8] sm:$0xff]
  %v3982 = vld [vmem:[%s4 + $0xd0] sm:$0xff]
  %v3983 = vld [vmem:[%s4 + $0xd8] sm:$0xff]
  %v3984 = vld [vmem:[%s4 + $0xe0] sm:$0xff]
  %v3985 = vld [vmem:[%s4 + $0xe8] sm:$0xff]
  %v3986 = vld [vmem:[%s4 + $0xf0] sm:$0xff]
  %v3987 = vld [vmem:[%s4 + $0xf8] sm:$0xff]
  %v3988 = vld [vmem:[%s4 + $0x100] sm:$0xff]
  %v3989 = vld [vmem:[%s4 + $0x108] sm:$0xff]
  %v3990 = vld [vmem:[%s4 + $0x110] sm:$0xff]
  %v3991 = vld [vmem:[%s4 + $0x118] sm:$0xff]
  %v3992 = vld [vmem:[%s4 + $0x120] sm:$0xff]
  %v3993 = vld [vmem:[%s4 + $0x128] sm:$0xff]
  %v3994 = vld [vmem:[%s4 + $0x130] sm:$0xff]
  %v3995 = vld [vmem:[%s4 + $0x138] sm:$0xff]
  %v3996 = vld [vmem:[%s4 + $0x140] sm:$0xff]
  %v3997 = vld [vmem:[%s4 + $0x148] sm:$0xff]
  %v3998 = vld [vmem:[%s4 + $0x150] sm:$0xff]
  %v3999 = vld [vmem:[%s4 + $0x158] sm:$0xff]
  %v4000 = vld [vmem:[%s4 + $0x160] sm:$0xff]
  %v4001 = vld [vmem:[%s4 + $0x168] sm:$0xff]
  %v4002 = vld [vmem:[%s4 + $0x170] sm:$0xff]
  %v4003 = vld [vmem:[%s4 + $0x178] sm:$0xff]
  %v4004 = vld [vmem:[%s4 + $0x180] sm:$0xff]
  %v4005 = vld [vmem:[%s4 + $0x188] sm:$0xff]
  %v4006 = vld [vmem:[%s4 + $0x190] sm:$0xff]
  %v4007 = vld [vmem:[%s4 + $0x198] sm:$0xff]
  %v4008 = vld [vmem:[%s4 + $0x1a0] sm:$0xff]
  %v4009 = vld [vmem:[%s4 + $0x1a8] sm:$0xff]
  %v4010 = vld [vmem:[%s4 + $0x1b0] sm:$0xff]
  %v4011 = vld [vmem:[%s4 + $0x1b8] sm:$0xff]
  %v4012 = vld [vmem:[%s4 + $0x1c0] sm:$0xff]
  %v4013 = vld [vmem:[%s4 + $0x1c8] sm:$0xff]
  %v4014 = vld [vmem:[%s4 + $0x1d0] sm:$0xff]
  %v4015 = vld [vmem:[%s4 + $0x1d8] sm:$0xff]
  %v4016 = vld [vmem:[%s4 + $0x1e0] sm:$0xff]
  %v4017 = vld [vmem:[%s4 + $0x1e8] sm:$0xff]
  %v4018 = vld [vmem:[%s4 + $0x1f0] sm:$0xff]
  %v4019 = vld [vmem:[%s4 + $0x1f8] sm:$0xff]
  %v4020 = vld [vmem:[%s4 + $0x200] sm:$0xff]
  %v4021 = vld [vmem:[%s4 + $0x208] sm:$0xff]
  %v4022 = vld [vmem:[%s4 + $0x210] sm:$0xff]
  %v4023 = vld [vmem:[%s4 + $0x218] sm:$0xff]
  %v4024 = vld [vmem:[%s4 + $0x220] sm:$0xff]
  %v4025 = vld [vmem:[%s4 + $0x228] sm:$0xff]
  %v4026 = vld [vmem:[%s4 + $0x230] sm:$0xff]
  %v4027 = vld [vmem:[%s4 + $0x238] sm:$0xff]
  %v4028 = vld [vmem:[%s4 + $0x240] sm:$0xff]
  %v4029 = vld [vmem:[%s4 + $0x248] sm:$0xff]
  %v4030 = vld [vmem:[%s4 + $0x250] sm:$0xff]
  %v4031 = vld [vmem:[%s4 + $0x258] sm:$0xff]
  %v4032 = vld [vmem:[%s4 + $0x260] sm:$0xff]
  %v4033 = vld [vmem:[%s4 + $0x268] sm:$0xff]
  %v4034 = vld [vmem:[%s4 + $0x270] sm:$0xff]
  %v4035 = vld [vmem:[%s4 + $0x278] sm:$0xff]
  %v4036 = vld [vmem:[%s4 + $0x280] sm:$0xff]
  %v4037 = vld [vmem:[%s4 + $0x288] sm:$0xff]
  %v4038 = vld [vmem:[%s4 + $0x290] sm:$0xff]
  %v4039 = vld [vmem:[%s4 + $0x298] sm:$0xff]
  %v4040 = vld [vmem:[%s4 + $0x2a0] sm:$0xff]
  %v4041 = vld [vmem:[%s4 + $0x2a8] sm:$0xff]
  %v4042 = vld [vmem:[%s4 + $0x2b0] sm:$0xff]
  %v4043 = vld [vmem:[%s4 + $0x2b8] sm:$0xff]
  %v4044 = vld [vmem:[%s4 + $0x2c0] sm:$0xff]
  %v4045 = vld [vmem:[%s4 + $0x2c8] sm:$0xff]
  %v4046 = vld [vmem:[%s4 + $0x2d0] sm:$0xff]
  %v4047 = vld [vmem:[%s4 + $0x2d8] sm:$0xff]
  %v4048 = vld [vmem:[%s4 + $0x2e0] sm:$0xff]
  %v4049 = vld [vmem:[%s4 + $0x2e8] sm:$0xff]
  %v4050 = vld [vmem:[%s4 + $0x2f0] sm:$0xff]
  %v4051 = vld [vmem:[%s4 + $0x2f8] sm:$0xff]
  %v4052 = vld [vmem:[%s4 + $0x300] sm:$0xff]
  %v4053 = vld [vmem:[%s4 + $0x308] sm:$0xff]
  %v4054 = vld [vmem:[%s4 + $0x310] sm:$0xff]
  %v4055 = vld [vmem:[%s4 + $0x318] sm:$0xff]
  %v4056 = vld [vmem:[%s4 + $0x320] sm:$0xff]
  %v4057 = vld [vmem:[%s4 + $0x328] sm:$0xff]
  %v4058 = vld [vmem:[%s4 + $0x330] sm:$0xff]
  %v4059 = vld [vmem:[%s4 + $0x338] sm:$0xff]
  %v4060 = vld [vmem:[%s4 + $0x340] sm:$0xff]
  %v4061 = vld [vmem:[%s4 + $0x348] sm:$0xff]
  %v4062 = vld [vmem:[%s4 + $0x350] sm:$0xff]
  %v4063 = vld [vmem:[%s4 + $0x358] sm:$0xff]
  %v4064 = vld [vmem:[%s4 + $0x360] sm:$0xff]
  %v4065 = vld [vmem:[%s4 + $0x368] sm:$0xff]
  %v4066 = vld [vmem:[%s4 + $0x370] sm:$0xff]
  %v4067 = vld [vmem:[%s4 + $0x378] sm:$0xff]
  %v4068 = vld [vmem:[%s4 + $0x380] sm:$0xff]
  %v4069 = vld [vmem:[%s4 + $0x388] sm:$0xff]
  %v4070 = vld [vmem:[%s4 + $0x390] sm:$0xff]
  %v4071 = vld [vmem:[%s4 + $0x398] sm:$0xff]
  %v4072 = vld [vmem:[%s4 + $0x3a0] sm:$0xff]
  %v4073 = vld [vmem:[%s4 + $0x3a8] sm:$0xff]
  %v4074 = vld [vmem:[%s4 + $0x3b0] sm:$0xff]
  %v4075 = vld [vmem:[%s4 + $0x3b8] sm:$0xff]
  %v4076 = vld [vmem:[%s4 + $0x3c0] sm:$0xff]
  %v4077 = vld [vmem:[%s4 + $0x3c8] sm:$0xff]
  %v4078 = vld [vmem:[%s4 + $0x3d0] sm:$0xff]
  %v4079 = vld [vmem:[%s4 + $0x3d8] sm:$0xff]
  %v4080 = vld [vmem:[%s4 + $0x3e0] sm:$0xff]
  %v4081 = vld [vmem:[%s4 + $0x3e8] sm:$0xff]
  %v4082 = vld [vmem:[%s4 + $0x3f0] sm:$0xff]
  %v4083 = vld [vmem:[%s4 + $0x3f8] sm:$0xff]
  %v4084 = vld [vmem:[%s5] sm:$0xf]
  %v4086 = vlaneseq
  %v4087 = vshrl.u32 %v4086, 7
  %v4088 = vsub.s32 0, %v4087
  %v4089 = vrot.slane %v4084, %v4088
  %v4090 = vlaneseq
  %v4091 = vshrl.u32 %v4090, 7
  %v4092 = vsub.s32 1, %v4091
  %v4093 = vrot.slane %v4084, %v4092
  %v4094 = vlaneseq
  %v4095 = vshrl.u32 %v4094, 7
  %v4096 = vsub.s32 2, %v4095
  %v4097 = vrot.slane %v4084, %v4096
  %v4098 = vlaneseq
  %v4099 = vshrl.u32 %v4098, 7
  %v4100 = vsub.s32 3, %v4099
  %v4101 = vrot.slane %v4084, %v4100
  %4106 = vmatprep.subr.mxu0 %v4017
  %4107 = vmatpush1.msra.mxu0 %v4016
  %4108 = vmatprep.subr.mxu0 %v4013
  %4109 = vmatpush1.msra.mxu0 %v4012
  %4110 = vmatprep.subr.mxu0 %v4009
  %4111 = vmatpush1.msra.mxu0 %v4008
  %4112 = vmatprep.subr.mxu0 %v4005
  %4113 = vmatpush1.msra.mxu0 %v4004
  %4114 = vmatprep.subr.mxu0 %v4001
  %4115 = vmatpush1.msra.mxu0 %v4000
  %4116 = vmatprep.subr.mxu0 %v3997
  %4117 = vmatpush1.msra.mxu0 %v3996
  %4118 = vmatprep.subr.mxu0 %v3993
  %4119 = vmatpush1.msra.mxu0 %v3992
  %4120 = vmatprep.subr.mxu0 %v3989
  %4121 = vmatpush1.msra.mxu0 %v3988
  %4122 = vmatprep.subr.mxu0 %v3985
  %4123 = vmatpush1.msra.mxu0 %v3984
  %4124 = vmatprep.subr.mxu0 %v3981
  %4125 = vmatpush1.msra.mxu0 %v3980
  %4126 = vmatprep.subr.mxu0 %v3977
  %4127 = vmatpush1.msra.mxu0 %v3976
  %4128 = vmatprep.subr.mxu0 %v3973
  %4129 = vmatpush1.msra.mxu0 %v3972
  %4130 = vmatprep.subr.mxu0 %v3969
  %4131 = vmatpush1.msra.mxu0 %v3968
  %4132 = vmatprep.subr.mxu0 %v3965
  %4133 = vmatpush1.msra.mxu0 %v3964
  %4134 = vmatprep.subr.mxu0 %v3961
  %4135 = vmatpush1.msra.mxu0 %v3960
  %4136 = vmatprep.subr.mxu0 %v3957
  %4137 = vmatpush1.msra.mxu0 %v3956
  %4138 = vmatprep.subr.mxu0 %v4081
  %4139 = vmatpush2.msra.mxu0 %v4080
  %4140 = vmatprep.subr.mxu0 %v4077
  %4141 = vmatpush2.msra.mxu0 %v4076
  %4142 = vmatprep.subr.mxu0 %v4073
  %4143 = vmatpush2.msra.mxu0 %v4072
  %4144 = vmatprep.subr.mxu0 %v4069
  %4145 = vmatpush2.msra.mxu0 %v4068
  %4146 = vmatprep.subr.mxu0 %v4065
  %4147 = vmatpush2.msra.mxu0 %v4064
  %4148 = vmatprep.subr.mxu0 %v4061
  %4149 = vmatpush2.msra.mxu0 %v4060
  %4150 = vmatprep.subr.mxu0 %v4057
  %4151 = vmatpush2.msra.mxu0 %v4056
  %4152 = vmatprep.subr.mxu0 %v4053
  %4153 = vmatpush2.msra.mxu0 %v4052
  %4154 = vmatprep.subr.mxu0 %v4049
  %4155 = vmatpush2.msra.mxu0 %v4048
  %4156 = vmatprep.subr.mxu0 %v4045
  %4157 = vmatpush2.msra.mxu0 %v4044
  %4158 = vmatprep.subr.mxu0 %v4041
  %4159 = vmatpush2.msra.mxu0 %v4040
  %4160 = vmatprep.subr.mxu0 %v4037
  %4161 = vmatpush2.msra.mxu0 %v4036
  %4162 = vmatprep.subr.mxu0 %v4033
  %4163 = vmatpush2.msra.mxu0 %v4032
  %4164 = vmatprep.subr.mxu0 %v4029
  %4165 = vmatpush2.msra.mxu0 %v4028
  %4166 = vmatprep.subr.mxu0 %v4025
  %4167 = vmatpush2.msra.mxu0 %v4024
  %4168 = vmatprep.subr.mxu0 %v4021
  %4169 = vmatpush2.msra.mxu0 %v4020
  %4170 = vmatprep.mubr.f32.mxu0 %v3712
  %4171 = vmatmul.mubr.f32.gmra.mxu0 %v3955
  %v4172 = vpop.f32.mrf.mxu0
  %v4173 = vadd.f32 %v4089, %v4172
  %v4174 = vpop.f32.mrf.mxu0
  %v4175 = vadd.f32 %v4093, %v4174
  %4176 = vdwg.mxu0
  %4177 = vmatprep.subr.mxu0 %v4019
  %4178 = vmatpush1.msra.mxu0 %v4018
  %4179 = vmatprep.subr.mxu0 %v4015
  %4180 = vmatpush1.msra.mxu0 %v4014
  %4181 = vmatprep.subr.mxu0 %v4011
  %4182 = vmatpush1.msra.mxu0 %v4010
  %4183 = vmatprep.subr.mxu0 %v4007
  %4184 = vmatpush1.msra.mxu0 %v4006
  %4185 = vmatprep.subr.mxu0 %v4003
  %4186 = vmatpush1.msra.mxu0 %v4002
  %4187 = vmatprep.subr.mxu0 %v3999
  %4188 = vmatpush1.msra.mxu0 %v3998
  %4189 = vmatprep.subr.mxu0 %v3995
  %4190 = vmatpush1.msra.mxu0 %v3994
  %4191 = vmatprep.subr.mxu0 %v3991
  %4192 = vmatpush1.msra.mxu0 %v3990
  %4193 = vmatprep.subr.mxu0 %v3987
  %4194 = vmatpush1.msra.mxu0 %v3986
  %4195 = vmatprep.subr.mxu0 %v3983
  %4196 = vmatpush1.msra.mxu0 %v3982
  %4197 = vmatprep.subr.mxu0 %v3979
  %4198 = vmatpush1.msra.mxu0 %v3978
  %4199 = vmatprep.subr.mxu0 %v3975
  %4200 = vmatpush1.msra.mxu0 %v3974
  %4201 = vmatprep.subr.mxu0 %v3971
  %4202 = vmatpush1.msra.mxu0 %v3970
  %4203 = vmatprep.subr.mxu0 %v3967
  %4204 = vmatpush1.msra.mxu0 %v3966
  %4205 = vmatprep.subr.mxu0 %v3963
  %4206 = vmatpush1.msra.mxu0 %v3962
  %4207 = vmatprep.subr.mxu0 %v3959
  %4208 = vmatpush1.msra.mxu0 %v3958
  %4209 = vmatprep.subr.mxu0 %v4083
  %4210 = vmatpush2.msra.mxu0 %v4082
  %4211 = vmatprep.subr.mxu0 %v4079
  %4212 = vmatpush2.msra.mxu0 %v4078
  %4213 = vmatprep.subr.mxu0 %v4075
  %4214 = vmatpush2.msra.mxu0 %v4074
  %4215 = vmatprep.subr.mxu0 %v4071
  %4216 = vmatpush2.msra.mxu0 %v4070
  %4217 = vmatprep.subr.mxu0 %v4067
  %4218 = vmatpush2.msra.mxu0 %v4066
  %4219 = vmatprep.subr.mxu0 %v4063
  %4220 = vmatpush2.msra.mxu0 %v4062
  %4221 = vmatprep.subr.mxu0 %v4059
  %4222 = vmatpush2.msra.mxu0 %v4058
  %4223 = vmatprep.subr.mxu0 %v4055
  %4224 = vmatpush2.msra.mxu0 %v4054
  %4225 = vmatprep.subr.mxu0 %v4051
  %4226 = vmatpush2.msra.mxu0 %v4050
  %4227 = vmatprep.subr.mxu0 %v4047
  %4228 = vmatpush2.msra.mxu0 %v4046
  %4229 = vmatprep.subr.mxu0 %v4043
  %4230 = vmatpush2.msra.mxu0 %v4042
  %4231 = vmatprep.subr.mxu0 %v4039
  %4232 = vmatpush2.msra.mxu0 %v4038
  %4233 = vmatprep.subr.mxu0 %v4035
  %4234 = vmatpush2.msra.mxu0 %v4034
  %4235 = vmatprep.subr.mxu0 %v4031
  %4236 = vmatpush2.msra.mxu0 %v4030
  %4237 = vmatprep.subr.mxu0 %v4027
  %4238 = vmatpush2.msra.mxu0 %v4026
  %4239 = vmatprep.subr.mxu0 %v4023
  %4240 = vmatpush2.msra.mxu0 %v4022
  %4241 = vmatprep.mubr.f32.mxu0 %v3712
  %4242 = vmatmul.mubr.f32.gmra.mxu0 %v3955
  %v4243 = vpop.f32.mrf.mxu0
  %v4244 = vadd.f32 %v4097, %v4243
  %v4245 = vpop.f32.mrf.mxu0
  %v4246 = vadd.f32 %v4101, %v4245
  %4247 = vdwg.mxu0
  %v4248 = vxor.u32 %v4173, 2147483648
  %v4249 = vmul.f32 %v4248, 1.442695
  %v4250 = vpow.pop %v4249
  %v4251 = vadd.f32 %v4250, 1.0
  %v4252 = vrcp.pop %v4251
  %v4253 = vmul.f32 1.0, %v4252
  %v4254 = vxor.u32 %v4175, 2147483648
  %v4255 = vmul.f32 %v4254, 1.442695
  %v4256 = vpow.pop %v4255
  %v4257 = vadd.f32 %v4256, 1.0
  %v4258 = vrcp.pop %v4257
  %v4259 = vmul.f32 1.0, %v4258
  %v4260 = vtanh.pop %v4244
  %v4261 = vxor.u32 %v4246, 2147483648
  %v4262 = vmul.f32 %v4261, 1.442695
  %v4263 = vpow.pop %v4262
  %v4264 = vadd.f32 %v4263, 1.0
  %v4265 = vrcp.pop %v4264
  %v4266 = vmul.f32 1.0, %v4265
  %v4267 = vmul.f32 %v4259, %v3710
  %v4268 = vmul.f32 %v4253, %v4260
  %v4269 = vadd.f32 %v4267, %v4268
  %v4270 = vtanh.pop %v4269
  %v4271 = vmul.f32 %v4266, %v4270
  %s4272 = scalar_lea.vmem [#allocation3], 48
  %4273 = vst [vmem:[%s4272] sm:$0xff] %v4271
  %s4274 = smul.u32 7, 4
  %s4275 = smul.addr %s4274, 8
  %s4276 = scalar_lea.vmem [#allocation2], %s4275
  %v4277 = vld [vmem:[%s4276] sm:$0xff]
  %v4278 = vld [vmem:[%s4276 + $0x8] sm:$0xff]
  %v4279 = vld [vmem:[%s4276 + $0x10] sm:$0xff]
  %v4280 = vld [vmem:[%s4276 + $0x18] sm:$0xff]
  %v4281 = vld [vmem:[%s3] sm:$0xff]
  %v4282 = vld [vmem:[%s3 + $0x8] sm:$0xff]
  %v4283 = vld [vmem:[%s3 + $0x10] sm:$0xff]
  %v4284 = vld [vmem:[%s3 + $0x18] sm:$0xff]
  %v4285 = vld [vmem:[%s3 + $0x20] sm:$0xff]
  %v4286 = vld [vmem:[%s3 + $0x28] sm:$0xff]
  %v4287 = vld [vmem:[%s3 + $0x30] sm:$0xff]
  %v4288 = vld [vmem:[%s3 + $0x38] sm:$0xff]
  %v4289 = vld [vmem:[%s3 + $0x40] sm:$0xff]
  %v4290 = vld [vmem:[%s3 + $0x48] sm:$0xff]
  %v4291 = vld [vmem:[%s3 + $0x50] sm:$0xff]
  %v4292 = vld [vmem:[%s3 + $0x58] sm:$0xff]
  %v4293 = vld [vmem:[%s3 + $0x60] sm:$0xff]
  %v4294 = vld [vmem:[%s3 + $0x68] sm:$0xff]
  %v4295 = vld [vmem:[%s3 + $0x70] sm:$0xff]
  %v4296 = vld [vmem:[%s3 + $0x78] sm:$0xff]
  %v4297 = vld [vmem:[%s3 + $0x80] sm:$0xff]
  %v4298 = vld [vmem:[%s3 + $0x88] sm:$0xff]
  %v4299 = vld [vmem:[%s3 + $0x90] sm:$0xff]
  %v4300 = vld [vmem:[%s3 + $0x98] sm:$0xff]
  %v4301 = vld [vmem:[%s3 + $0xa0] sm:$0xff]
  %v4302 = vld [vmem:[%s3 + $0xa8] sm:$0xff]
  %v4303 = vld [vmem:[%s3 + $0xb0] sm:$0xff]
  %v4304 = vld [vmem:[%s3 + $0xb8] sm:$0xff]
  %v4305 = vld [vmem:[%s3 + $0xc0] sm:$0xff]
  %v4306 = vld [vmem:[%s3 + $0xc8] sm:$0xff]
  %v4307 = vld [vmem:[%s3 + $0xd0] sm:$0xff]
  %v4308 = vld [vmem:[%s3 + $0xd8] sm:$0xff]
  %v4309 = vld [vmem:[%s3 + $0xe0] sm:$0xff]
  %v4310 = vld [vmem:[%s3 + $0xe8] sm:$0xff]
  %v4311 = vld [vmem:[%s3 + $0xf0] sm:$0xff]
  %v4312 = vld [vmem:[%s3 + $0xf8] sm:$0xff]
  %v4313 = vld [vmem:[%s3 + $0x100] sm:$0xff]
  %v4314 = vld [vmem:[%s3 + $0x108] sm:$0xff]
  %v4315 = vld [vmem:[%s3 + $0x110] sm:$0xff]
  %v4316 = vld [vmem:[%s3 + $0x118] sm:$0xff]
  %v4317 = vld [vmem:[%s3 + $0x120] sm:$0xff]
  %v4318 = vld [vmem:[%s3 + $0x128] sm:$0xff]
  %v4319 = vld [vmem:[%s3 + $0x130] sm:$0xff]
  %v4320 = vld [vmem:[%s3 + $0x138] sm:$0xff]
  %v4321 = vld [vmem:[%s3 + $0x140] sm:$0xff]
  %v4322 = vld [vmem:[%s3 + $0x148] sm:$0xff]
  %v4323 = vld [vmem:[%s3 + $0x150] sm:$0xff]
  %v4324 = vld [vmem:[%s3 + $0x158] sm:$0xff]
  %v4325 = vld [vmem:[%s3 + $0x160] sm:$0xff]
  %v4326 = vld [vmem:[%s3 + $0x168] sm:$0xff]
  %v4327 = vld [vmem:[%s3 + $0x170] sm:$0xff]
  %v4328 = vld [vmem:[%s3 + $0x178] sm:$0xff]
  %v4329 = vld [vmem:[%s3 + $0x180] sm:$0xff]
  %v4330 = vld [vmem:[%s3 + $0x188] sm:$0xff]
  %v4331 = vld [vmem:[%s3 + $0x190] sm:$0xff]
  %v4332 = vld [vmem:[%s3 + $0x198] sm:$0xff]
  %v4333 = vld [vmem:[%s3 + $0x1a0] sm:$0xff]
  %v4334 = vld [vmem:[%s3 + $0x1a8] sm:$0xff]
  %v4335 = vld [vmem:[%s3 + $0x1b0] sm:$0xff]
  %v4336 = vld [vmem:[%s3 + $0x1b8] sm:$0xff]
  %v4337 = vld [vmem:[%s3 + $0x1c0] sm:$0xff]
  %v4338 = vld [vmem:[%s3 + $0x1c8] sm:$0xff]
  %v4339 = vld [vmem:[%s3 + $0x1d0] sm:$0xff]
  %v4340 = vld [vmem:[%s3 + $0x1d8] sm:$0xff]
  %v4341 = vld [vmem:[%s3 + $0x1e0] sm:$0xff]
  %v4342 = vld [vmem:[%s3 + $0x1e8] sm:$0xff]
  %v4343 = vld [vmem:[%s3 + $0x1f0] sm:$0xff]
  %v4344 = vld [vmem:[%s3 + $0x1f8] sm:$0xff]
  %4345 = vmatprep.subr.mxu0 %v4342
  %4346 = vmatpush1.msra.mxu0 %v4341
  %4347 = vmatprep.subr.mxu0 %v4338
  %4348 = vmatpush1.msra.mxu0 %v4337
  %4349 = vmatprep.subr.mxu0 %v4334
  %4350 = vmatpush1.msra.mxu0 %v4333
  %4351 = vmatprep.subr.mxu0 %v4330
  %4352 = vmatpush1.msra.mxu0 %v4329
  %4353 = vmatprep.subr.mxu0 %v4326
  %4354 = vmatpush1.msra.mxu0 %v4325
  %4355 = vmatprep.subr.mxu0 %v4322
  %4356 = vmatpush1.msra.mxu0 %v4321
  %4357 = vmatprep.subr.mxu0 %v4318
  %4358 = vmatpush1.msra.mxu0 %v4317
  %4359 = vmatprep.subr.mxu0 %v4314
  %4360 = vmatpush1.msra.mxu0 %v4313
  %4361 = vmatprep.subr.mxu0 %v4310
  %4362 = vmatpush1.msra.mxu0 %v4309
  %4363 = vmatprep.subr.mxu0 %v4306
  %4364 = vmatpush1.msra.mxu0 %v4305
  %4365 = vmatprep.subr.mxu0 %v4302
  %4366 = vmatpush1.msra.mxu0 %v4301
  %4367 = vmatprep.subr.mxu0 %v4298
  %4368 = vmatpush1.msra.mxu0 %v4297
  %4369 = vmatprep.subr.mxu0 %v4294
  %4370 = vmatpush1.msra.mxu0 %v4293
  %4371 = vmatprep.subr.mxu0 %v4290
  %4372 = vmatpush1.msra.mxu0 %v4289
  %4373 = vmatprep.subr.mxu0 %v4286
  %4374 = vmatpush1.msra.mxu0 %v4285
  %4375 = vmatprep.subr.mxu0 %v4282
  %4376 = vmatpush1.msra.mxu0 %v4281
  %4377 = vmatprep.subr.mxu0 0.0
  %4378 = vmatpush2.msra.mxu0 0.0
  %4379 = vmatprep.subr.mxu0 0.0
  %4380 = vmatpush2.msra.mxu0 0.0
  %4381 = vmatprep.subr.mxu0 0.0
  %4382 = vmatpush2.msra.mxu0 0.0
  %4383 = vmatprep.subr.mxu0 0.0
  %4384 = vmatpush2.msra.mxu0 0.0
  %4385 = vmatprep.subr.mxu0 0.0
  %4386 = vmatpush2.msra.mxu0 0.0
  %4387 = vmatprep.subr.mxu0 0.0
  %4388 = vmatpush2.msra.mxu0 0.0
  %4389 = vmatprep.subr.mxu0 0.0
  %4390 = vmatpush2.msra.mxu0 0.0
  %4391 = vmatprep.subr.mxu0 0.0
  %4392 = vmatpush2.msra.mxu0 0.0
  %4393 = vmatprep.subr.mxu0 0.0
  %4394 = vmatpush2.msra.mxu0 0.0
  %4395 = vmatprep.subr.mxu0 0.0
  %4396 = vmatpush2.msra.mxu0 0.0
  %4397 = vmatprep.subr.mxu0 0.0
  %4398 = vmatpush2.msra.mxu0 0.0
  %4399 = vmatprep.subr.mxu0 0.0
  %4400 = vmatpush2.msra.mxu0 0.0
  %4401 = vmatprep.subr.mxu0 0.0
  %4402 = vmatpush2.msra.mxu0 0.0
  %4403 = vmatprep.subr.mxu0 0.0
  %4404 = vmatpush2.msra.mxu0 0.0
  %4405 = vmatprep.subr.mxu0 0.0
  %4406 = vmatpush2.msra.mxu0 0.0
  %4407 = vmatprep.subr.mxu0 0.0
  %4408 = vmatpush2.msra.mxu0 0.0
  %4409 = vmatprep.mubr.f32.mxu0 0.0
  %4410 = vmatmul.mubr.f32.gmra.mxu0 %v3955
  %v4411 = vpop.f32.mrf.mxu0
  %v4412 = vadd.f32 0.0, %v4411
  %v4413 = vpop.f32.mrf.mxu0
  %v4414 = vadd.f32 0.0, %v4413
  %4415 = vdwg.mxu0
  %4416 = vmatprep.subr.mxu0 %v4344
  %4417 = vmatpush1.msra.mxu0 %v4343
  %4418 = vmatprep.subr.mxu0 %v4340
  %4419 = vmatpush1.msra.mxu0 %v4339
  %4420 = vmatprep.subr.mxu0 %v4336
  %4421 = vmatpush1.msra.mxu0 %v4335
  %4422 = vmatprep.subr.mxu0 %v4332
  %4423 = vmatpush1.msra.mxu0 %v4331
  %4424 = vmatprep.subr.mxu0 %v4328
  %4425 = vmatpush1.msra.mxu0 %v4327
  %4426 = vmatprep.subr.mxu0 %v4324
  %4427 = vmatpush1.msra.mxu0 %v4323
  %4428 = vmatprep.subr.mxu0 %v4320
  %4429 = vmatpush1.msra.mxu0 %v4319
  %4430 = vmatprep.subr.mxu0 %v4316
  %4431 = vmatpush1.msra.mxu0 %v4315
  %4432 = vmatprep.subr.mxu0 %v4312
  %4433 = vmatpush1.msra.mxu0 %v4311
  %4434 = vmatprep.subr.mxu0 %v4308
  %4435 = vmatpush1.msra.mxu0 %v4307
  %4436 = vmatprep.subr.mxu0 %v4304
  %4437 = vmatpush1.msra.mxu0 %v4303
  %4438 = vmatprep.subr.mxu0 %v4300
  %4439 = vmatpush1.msra.mxu0 %v4299
  %4440 = vmatprep.subr.mxu0 %v4296
  %4441 = vmatpush1.msra.mxu0 %v4295
  %4442 = vmatprep.subr.mxu0 %v4292
  %4443 = vmatpush1.msra.mxu0 %v4291
  %4444 = vmatprep.subr.mxu0 %v4288
  %4445 = vmatpush1.msra.mxu0 %v4287
  %4446 = vmatprep.subr.mxu0 %v4284
  %4447 = vmatpush1.msra.mxu0 %v4283
  %4448 = vmatprep.subr.mxu0 0.0
  %4449 = vmatpush2.msra.mxu0 0.0
  %4450 = vmatprep.subr.mxu0 0.0
  %4451 = vmatpush2.msra.mxu0 0.0
  %4452 = vmatprep.subr.mxu0 0.0
  %4453 = vmatpush2.msra.mxu0 0.0
  %4454 = vmatprep.subr.mxu0 0.0
  %4455 = vmatpush2.msra.mxu0 0.0
  %4456 = vmatprep.subr.mxu0 0.0
  %4457 = vmatpush2.msra.mxu0 0.0
  %4458 = vmatprep.subr.mxu0 0.0
  %4459 = vmatpush2.msra.mxu0 0.0
  %4460 = vmatprep.subr.mxu0 0.0
  %4461 = vmatpush2.msra.mxu0 0.0
  %4462 = vmatprep.subr.mxu0 0.0
  %4463 = vmatpush2.msra.mxu0 0.0
  %4464 = vmatprep.subr.mxu0 0.0
  %4465 = vmatpush2.msra.mxu0 0.0
  %4466 = vmatprep.subr.mxu0 0.0
  %4467 = vmatpush2.msra.mxu0 0.0
  %4468 = vmatprep.subr.mxu0 0.0
  %4469 = vmatpush2.msra.mxu0 0.0
  %4470 = vmatprep.subr.mxu0 0.0
  %4471 = vmatpush2.msra.mxu0 0.0
  %4472 = vmatprep.subr.mxu0 0.0
  %4473 = vmatpush2.msra.mxu0 0.0
  %4474 = vmatprep.subr.mxu0 0.0
  %4475 = vmatpush2.msra.mxu0 0.0
  %4476 = vmatprep.subr.mxu0 0.0
  %4477 = vmatpush2.msra.mxu0 0.0
  %4478 = vmatprep.subr.mxu0 0.0
  %4479 = vmatpush2.msra.mxu0 0.0
  %4480 = vmatprep.mubr.f32.mxu0 0.0
  %4481 = vmatmul.mubr.f32.gmra.mxu0 %v3955
  %v4482 = vpop.f32.mrf.mxu0
  %v4483 = vadd.f32 0.0, %v4482
  %v4484 = vpop.f32.mrf.mxu0
  %v4485 = vadd.f32 0.0, %v4484
  %4486 = vdwg.mxu0
  %v4487 = vadd.f32 %v4277, %v4412
  %v4488 = vadd.f32 %v4278, %v4414
  %v4489 = vadd.f32 %v4279, %v4483
  %v4490 = vadd.f32 %v4280, %v4485
  %v4491 = vxor.u32 %v4487, 2147483648
  %v4492 = vmul.f32 %v4491, 1.442695
  %v4493 = vpow.pop %v4492
  %v4494 = vadd.f32 %v4493, 1.0
  %v4495 = vrcp.pop %v4494
  %v4496 = vmul.f32 1.0, %v4495
  %v4497 = vxor.u32 %v4488, 2147483648
  %v4498 = vmul.f32 %v4497, 1.442695
  %v4499 = vpow.pop %v4498
  %v4500 = vadd.f32 %v4499, 1.0
  %v4501 = vrcp.pop %v4500
  %v4502 = vmul.f32 1.0, %v4501
  %v4503 = vtanh.pop %v4489
  %v4504 = vxor.u32 %v4490, 2147483648
  %v4505 = vmul.f32 %v4504, 1.442695
  %v4506 = vpow.pop %v4505
  %v4507 = vadd.f32 %v4506, 1.0
  %v4508 = vrcp.pop %v4507
  %v4509 = vmul.f32 1.0, %v4508
  %v4510 = vmul.f32 %v4502, %v3953
  %v4511 = vmul.f32 %v4496, %v4503
  %v4512 = vadd.f32 %v4510, %v4511
  %v4513 = vtanh.pop %v4512
  %v4514 = vmul.f32 %v4509, %v4513
  %v4515 = vld [vmem:[%s4] sm:$0xff]
  %v4516 = vld [vmem:[%s4 + $0x8] sm:$0xff]
  %v4517 = vld [vmem:[%s4 + $0x10] sm:$0xff]
  %v4518 = vld [vmem:[%s4 + $0x18] sm:$0xff]
  %v4519 = vld [vmem:[%s4 + $0x20] sm:$0xff]
  %v4520 = vld [vmem:[%s4 + $0x28] sm:$0xff]
  %v4521 = vld [vmem:[%s4 + $0x30] sm:$0xff]
  %v4522 = vld [vmem:[%s4 + $0x38] sm:$0xff]
  %v4523 = vld [vmem:[%s4 + $0x40] sm:$0xff]
  %v4524 = vld [vmem:[%s4 + $0x48] sm:$0xff]
  %v4525 = vld [vmem:[%s4 + $0x50] sm:$0xff]
  %v4526 = vld [vmem:[%s4 + $0x58] sm:$0xff]
  %v4527 = vld [vmem:[%s4 + $0x60] sm:$0xff]
  %v4528 = vld [vmem:[%s4 + $0x68] sm:$0xff]
  %v4529 = vld [vmem:[%s4 + $0x70] sm:$0xff]
  %v4530 = vld [vmem:[%s4 + $0x78] sm:$0xff]
  %v4531 = vld [vmem:[%s4 + $0x80] sm:$0xff]
  %v4532 = vld [vmem:[%s4 + $0x88] sm:$0xff]
  %v4533 = vld [vmem:[%s4 + $0x90] sm:$0xff]
  %v4534 = vld [vmem:[%s4 + $0x98] sm:$0xff]
  %v4535 = vld [vmem:[%s4 + $0xa0] sm:$0xff]
  %v4536 = vld [vmem:[%s4 + $0xa8] sm:$0xff]
  %v4537 = vld [vmem:[%s4 + $0xb0] sm:$0xff]
  %v4538 = vld [vmem:[%s4 + $0xb8] sm:$0xff]
  %v4539 = vld [vmem:[%s4 + $0xc0] sm:$0xff]
  %v4540 = vld [vmem:[%s4 + $0xc8] sm:$0xff]
  %v4541 = vld [vmem:[%s4 + $0xd0] sm:$0xff]
  %v4542 = vld [vmem:[%s4 + $0xd8] sm:$0xff]
  %v4543 = vld [vmem:[%s4 + $0xe0] sm:$0xff]
  %v4544 = vld [vmem:[%s4 + $0xe8] sm:$0xff]
  %v4545 = vld [vmem:[%s4 + $0xf0] sm:$0xff]
  %v4546 = vld [vmem:[%s4 + $0xf8] sm:$0xff]
  %v4547 = vld [vmem:[%s4 + $0x100] sm:$0xff]
  %v4548 = vld [vmem:[%s4 + $0x108] sm:$0xff]
  %v4549 = vld [vmem:[%s4 + $0x110] sm:$0xff]
  %v4550 = vld [vmem:[%s4 + $0x118] sm:$0xff]
  %v4551 = vld [vmem:[%s4 + $0x120] sm:$0xff]
  %v4552 = vld [vmem:[%s4 + $0x128] sm:$0xff]
  %v4553 = vld [vmem:[%s4 + $0x130] sm:$0xff]
  %v4554 = vld [vmem:[%s4 + $0x138] sm:$0xff]
  %v4555 = vld [vmem:[%s4 + $0x140] sm:$0xff]
  %v4556 = vld [vmem:[%s4 + $0x148] sm:$0xff]
  %v4557 = vld [vmem:[%s4 + $0x150] sm:$0xff]
  %v4558 = vld [vmem:[%s4 + $0x158] sm:$0xff]
  %v4559 = vld [vmem:[%s4 + $0x160] sm:$0xff]
  %v4560 = vld [vmem:[%s4 + $0x168] sm:$0xff]
  %v4561 = vld [vmem:[%s4 + $0x170] sm:$0xff]
  %v4562 = vld [vmem:[%s4 + $0x178] sm:$0xff]
  %v4563 = vld [vmem:[%s4 + $0x180] sm:$0xff]
  %v4564 = vld [vmem:[%s4 + $0x188] sm:$0xff]
  %v4565 = vld [vmem:[%s4 + $0x190] sm:$0xff]
  %v4566 = vld [vmem:[%s4 + $0x198] sm:$0xff]
  %v4567 = vld [vmem:[%s4 + $0x1a0] sm:$0xff]
  %v4568 = vld [vmem:[%s4 + $0x1a8] sm:$0xff]
  %v4569 = vld [vmem:[%s4 + $0x1b0] sm:$0xff]
  %v4570 = vld [vmem:[%s4 + $0x1b8] sm:$0xff]
  %v4571 = vld [vmem:[%s4 + $0x1c0] sm:$0xff]
  %v4572 = vld [vmem:[%s4 + $0x1c8] sm:$0xff]
  %v4573 = vld [vmem:[%s4 + $0x1d0] sm:$0xff]
  %v4574 = vld [vmem:[%s4 + $0x1d8] sm:$0xff]
  %v4575 = vld [vmem:[%s4 + $0x1e0] sm:$0xff]
  %v4576 = vld [vmem:[%s4 + $0x1e8] sm:$0xff]
  %v4577 = vld [vmem:[%s4 + $0x1f0] sm:$0xff]
  %v4578 = vld [vmem:[%s4 + $0x1f8] sm:$0xff]
  %v4579 = vld [vmem:[%s4 + $0x200] sm:$0xff]
  %v4580 = vld [vmem:[%s4 + $0x208] sm:$0xff]
  %v4581 = vld [vmem:[%s4 + $0x210] sm:$0xff]
  %v4582 = vld [vmem:[%s4 + $0x218] sm:$0xff]
  %v4583 = vld [vmem:[%s4 + $0x220] sm:$0xff]
  %v4584 = vld [vmem:[%s4 + $0x228] sm:$0xff]
  %v4585 = vld [vmem:[%s4 + $0x230] sm:$0xff]
  %v4586 = vld [vmem:[%s4 + $0x238] sm:$0xff]
  %v4587 = vld [vmem:[%s4 + $0x240] sm:$0xff]
  %v4588 = vld [vmem:[%s4 + $0x248] sm:$0xff]
  %v4589 = vld [vmem:[%s4 + $0x250] sm:$0xff]
  %v4590 = vld [vmem:[%s4 + $0x258] sm:$0xff]
  %v4591 = vld [vmem:[%s4 + $0x260] sm:$0xff]
  %v4592 = vld [vmem:[%s4 + $0x268] sm:$0xff]
  %v4593 = vld [vmem:[%s4 + $0x270] sm:$0xff]
  %v4594 = vld [vmem:[%s4 + $0x278] sm:$0xff]
  %v4595 = vld [vmem:[%s4 + $0x280] sm:$0xff]
  %v4596 = vld [vmem:[%s4 + $0x288] sm:$0xff]
  %v4597 = vld [vmem:[%s4 + $0x290] sm:$0xff]
  %v4598 = vld [vmem:[%s4 + $0x298] sm:$0xff]
  %v4599 = vld [vmem:[%s4 + $0x2a0] sm:$0xff]
  %v4600 = vld [vmem:[%s4 + $0x2a8] sm:$0xff]
  %v4601 = vld [vmem:[%s4 + $0x2b0] sm:$0xff]
  %v4602 = vld [vmem:[%s4 + $0x2b8] sm:$0xff]
  %v4603 = vld [vmem:[%s4 + $0x2c0] sm:$0xff]
  %v4604 = vld [vmem:[%s4 + $0x2c8] sm:$0xff]
  %v4605 = vld [vmem:[%s4 + $0x2d0] sm:$0xff]
  %v4606 = vld [vmem:[%s4 + $0x2d8] sm:$0xff]
  %v4607 = vld [vmem:[%s4 + $0x2e0] sm:$0xff]
  %v4608 = vld [vmem:[%s4 + $0x2e8] sm:$0xff]
  %v4609 = vld [vmem:[%s4 + $0x2f0] sm:$0xff]
  %v4610 = vld [vmem:[%s4 + $0x2f8] sm:$0xff]
  %v4611 = vld [vmem:[%s4 + $0x300] sm:$0xff]
  %v4612 = vld [vmem:[%s4 + $0x308] sm:$0xff]
  %v4613 = vld [vmem:[%s4 + $0x310] sm:$0xff]
  %v4614 = vld [vmem:[%s4 + $0x318] sm:$0xff]
  %v4615 = vld [vmem:[%s4 + $0x320] sm:$0xff]
  %v4616 = vld [vmem:[%s4 + $0x328] sm:$0xff]
  %v4617 = vld [vmem:[%s4 + $0x330] sm:$0xff]
  %v4618 = vld [vmem:[%s4 + $0x338] sm:$0xff]
  %v4619 = vld [vmem:[%s4 + $0x340] sm:$0xff]
  %v4620 = vld [vmem:[%s4 + $0x348] sm:$0xff]
  %v4621 = vld [vmem:[%s4 + $0x350] sm:$0xff]
  %v4622 = vld [vmem:[%s4 + $0x358] sm:$0xff]
  %v4623 = vld [vmem:[%s4 + $0x360] sm:$0xff]
  %v4624 = vld [vmem:[%s4 + $0x368] sm:$0xff]
  %v4625 = vld [vmem:[%s4 + $0x370] sm:$0xff]
  %v4626 = vld [vmem:[%s4 + $0x378] sm:$0xff]
  %v4627 = vld [vmem:[%s4 + $0x380] sm:$0xff]
  %v4628 = vld [vmem:[%s4 + $0x388] sm:$0xff]
  %v4629 = vld [vmem:[%s4 + $0x390] sm:$0xff]
  %v4630 = vld [vmem:[%s4 + $0x398] sm:$0xff]
  %v4631 = vld [vmem:[%s4 + $0x3a0] sm:$0xff]
  %v4632 = vld [vmem:[%s4 + $0x3a8] sm:$0xff]
  %v4633 = vld [vmem:[%s4 + $0x3b0] sm:$0xff]
  %v4634 = vld [vmem:[%s4 + $0x3b8] sm:$0xff]
  %v4635 = vld [vmem:[%s4 + $0x3c0] sm:$0xff]
  %v4636 = vld [vmem:[%s4 + $0x3c8] sm:$0xff]
  %v4637 = vld [vmem:[%s4 + $0x3d0] sm:$0xff]
  %v4638 = vld [vmem:[%s4 + $0x3d8] sm:$0xff]
  %v4639 = vld [vmem:[%s4 + $0x3e0] sm:$0xff]
  %v4640 = vld [vmem:[%s4 + $0x3e8] sm:$0xff]
  %v4641 = vld [vmem:[%s4 + $0x3f0] sm:$0xff]
  %v4642 = vld [vmem:[%s4 + $0x3f8] sm:$0xff]
  %v4643 = vld [vmem:[%s5] sm:$0xf]
  %v4645 = vlaneseq
  %v4646 = vshrl.u32 %v4645, 7
  %v4647 = vsub.s32 0, %v4646
  %v4648 = vrot.slane %v4643, %v4647
  %v4649 = vlaneseq
  %v4650 = vshrl.u32 %v4649, 7
  %v4651 = vsub.s32 1, %v4650
  %v4652 = vrot.slane %v4643, %v4651
  %v4653 = vlaneseq
  %v4654 = vshrl.u32 %v4653, 7
  %v4655 = vsub.s32 2, %v4654
  %v4656 = vrot.slane %v4643, %v4655
  %v4657 = vlaneseq
  %v4658 = vshrl.u32 %v4657, 7
  %v4659 = vsub.s32 3, %v4658
  %v4660 = vrot.slane %v4643, %v4659
  %4665 = vmatprep.subr.mxu0 %v4576
  %4666 = vmatpush1.msra.mxu0 %v4575
  %4667 = vmatprep.subr.mxu0 %v4572
  %4668 = vmatpush1.msra.mxu0 %v4571
  %4669 = vmatprep.subr.mxu0 %v4568
  %4670 = vmatpush1.msra.mxu0 %v4567
  %4671 = vmatprep.subr.mxu0 %v4564
  %4672 = vmatpush1.msra.mxu0 %v4563
  %4673 = vmatprep.subr.mxu0 %v4560
  %4674 = vmatpush1.msra.mxu0 %v4559
  %4675 = vmatprep.subr.mxu0 %v4556
  %4676 = vmatpush1.msra.mxu0 %v4555
  %4677 = vmatprep.subr.mxu0 %v4552
  %4678 = vmatpush1.msra.mxu0 %v4551
  %4679 = vmatprep.subr.mxu0 %v4548
  %4680 = vmatpush1.msra.mxu0 %v4547
  %4681 = vmatprep.subr.mxu0 %v4544
  %4682 = vmatpush1.msra.mxu0 %v4543
  %4683 = vmatprep.subr.mxu0 %v4540
  %4684 = vmatpush1.msra.mxu0 %v4539
  %4685 = vmatprep.subr.mxu0 %v4536
  %4686 = vmatpush1.msra.mxu0 %v4535
  %4687 = vmatprep.subr.mxu0 %v4532
  %4688 = vmatpush1.msra.mxu0 %v4531
  %4689 = vmatprep.subr.mxu0 %v4528
  %4690 = vmatpush1.msra.mxu0 %v4527
  %4691 = vmatprep.subr.mxu0 %v4524
  %4692 = vmatpush1.msra.mxu0 %v4523
  %4693 = vmatprep.subr.mxu0 %v4520
  %4694 = vmatpush1.msra.mxu0 %v4519
  %4695 = vmatprep.subr.mxu0 %v4516
  %4696 = vmatpush1.msra.mxu0 %v4515
  %4697 = vmatprep.subr.mxu0 %v4640
  %4698 = vmatpush2.msra.mxu0 %v4639
  %4699 = vmatprep.subr.mxu0 %v4636
  %4700 = vmatpush2.msra.mxu0 %v4635
  %4701 = vmatprep.subr.mxu0 %v4632
  %4702 = vmatpush2.msra.mxu0 %v4631
  %4703 = vmatprep.subr.mxu0 %v4628
  %4704 = vmatpush2.msra.mxu0 %v4627
  %4705 = vmatprep.subr.mxu0 %v4624
  %4706 = vmatpush2.msra.mxu0 %v4623
  %4707 = vmatprep.subr.mxu0 %v4620
  %4708 = vmatpush2.msra.mxu0 %v4619
  %4709 = vmatprep.subr.mxu0 %v4616
  %4710 = vmatpush2.msra.mxu0 %v4615
  %4711 = vmatprep.subr.mxu0 %v4612
  %4712 = vmatpush2.msra.mxu0 %v4611
  %4713 = vmatprep.subr.mxu0 %v4608
  %4714 = vmatpush2.msra.mxu0 %v4607
  %4715 = vmatprep.subr.mxu0 %v4604
  %4716 = vmatpush2.msra.mxu0 %v4603
  %4717 = vmatprep.subr.mxu0 %v4600
  %4718 = vmatpush2.msra.mxu0 %v4599
  %4719 = vmatprep.subr.mxu0 %v4596
  %4720 = vmatpush2.msra.mxu0 %v4595
  %4721 = vmatprep.subr.mxu0 %v4592
  %4722 = vmatpush2.msra.mxu0 %v4591
  %4723 = vmatprep.subr.mxu0 %v4588
  %4724 = vmatpush2.msra.mxu0 %v4587
  %4725 = vmatprep.subr.mxu0 %v4584
  %4726 = vmatpush2.msra.mxu0 %v4583
  %4727 = vmatprep.subr.mxu0 %v4580
  %4728 = vmatpush2.msra.mxu0 %v4579
  %4729 = vmatprep.mubr.f32.mxu0 %v4271
  %4730 = vmatmul.mubr.f32.gmra.mxu0 %v4514
  %v4731 = vpop.f32.mrf.mxu0
  %v4732 = vadd.f32 %v4648, %v4731
  %v4733 = vpop.f32.mrf.mxu0
  %v4734 = vadd.f32 %v4652, %v4733
  %4735 = vdwg.mxu0
  %4736 = vmatprep.subr.mxu0 %v4578
  %4737 = vmatpush1.msra.mxu0 %v4577
  %4738 = vmatprep.subr.mxu0 %v4574
  %4739 = vmatpush1.msra.mxu0 %v4573
  %4740 = vmatprep.subr.mxu0 %v4570
  %4741 = vmatpush1.msra.mxu0 %v4569
  %4742 = vmatprep.subr.mxu0 %v4566
  %4743 = vmatpush1.msra.mxu0 %v4565
  %4744 = vmatprep.subr.mxu0 %v4562
  %4745 = vmatpush1.msra.mxu0 %v4561
  %4746 = vmatprep.subr.mxu0 %v4558
  %4747 = vmatpush1.msra.mxu0 %v4557
  %4748 = vmatprep.subr.mxu0 %v4554
  %4749 = vmatpush1.msra.mxu0 %v4553
  %4750 = vmatprep.subr.mxu0 %v4550
  %4751 = vmatpush1.msra.mxu0 %v4549
  %4752 = vmatprep.subr.mxu0 %v4546
  %4753 = vmatpush1.msra.mxu0 %v4545
  %4754 = vmatprep.subr.mxu0 %v4542
  %4755 = vmatpush1.msra.mxu0 %v4541
  %4756 = vmatprep.subr.mxu0 %v4538
  %4757 = vmatpush1.msra.mxu0 %v4537
  %4758 = vmatprep.subr.mxu0 %v4534
  %4759 = vmatpush1.msra.mxu0 %v4533
  %4760 = vmatprep.subr.mxu0 %v4530
  %4761 = vmatpush1.msra.mxu0 %v4529
  %4762 = vmatprep.subr.mxu0 %v4526
  %4763 = vmatpush1.msra.mxu0 %v4525
  %4764 = vmatprep.subr.mxu0 %v4522
  %4765 = vmatpush1.msra.mxu0 %v4521
  %4766 = vmatprep.subr.mxu0 %v4518
  %4767 = vmatpush1.msra.mxu0 %v4517
  %4768 = vmatprep.subr.mxu0 %v4642
  %4769 = vmatpush2.msra.mxu0 %v4641
  %4770 = vmatprep.subr.mxu0 %v4638
  %4771 = vmatpush2.msra.mxu0 %v4637
  %4772 = vmatprep.subr.mxu0 %v4634
  %4773 = vmatpush2.msra.mxu0 %v4633
  %4774 = vmatprep.subr.mxu0 %v4630
  %4775 = vmatpush2.msra.mxu0 %v4629
  %4776 = vmatprep.subr.mxu0 %v4626
  %4777 = vmatpush2.msra.mxu0 %v4625
  %4778 = vmatprep.subr.mxu0 %v4622
  %4779 = vmatpush2.msra.mxu0 %v4621
  %4780 = vmatprep.subr.mxu0 %v4618
  %4781 = vmatpush2.msra.mxu0 %v4617
  %4782 = vmatprep.subr.mxu0 %v4614
  %4783 = vmatpush2.msra.mxu0 %v4613
  %4784 = vmatprep.subr.mxu0 %v4610
  %4785 = vmatpush2.msra.mxu0 %v4609
  %4786 = vmatprep.subr.mxu0 %v4606
  %4787 = vmatpush2.msra.mxu0 %v4605
  %4788 = vmatprep.subr.mxu0 %v4602
  %4789 = vmatpush2.msra.mxu0 %v4601
  %4790 = vmatprep.subr.mxu0 %v4598
  %4791 = vmatpush2.msra.mxu0 %v4597
  %4792 = vmatprep.subr.mxu0 %v4594
  %4793 = vmatpush2.msra.mxu0 %v4593
  %4794 = vmatprep.subr.mxu0 %v4590
  %4795 = vmatpush2.msra.mxu0 %v4589
  %4796 = vmatprep.subr.mxu0 %v4586
  %4797 = vmatpush2.msra.mxu0 %v4585
  %4798 = vmatprep.subr.mxu0 %v4582
  %4799 = vmatpush2.msra.mxu0 %v4581
  %4800 = vmatprep.mubr.f32.mxu0 %v4271
  %4801 = vmatmul.mubr.f32.gmra.mxu0 %v4514
  %v4802 = vpop.f32.mrf.mxu0
  %v4803 = vadd.f32 %v4656, %v4802
  %v4804 = vpop.f32.mrf.mxu0
  %v4805 = vadd.f32 %v4660, %v4804
  %4806 = vdwg.mxu0
  %v4807 = vxor.u32 %v4732, 2147483648
  %v4808 = vmul.f32 %v4807, 1.442695
  %v4809 = vpow.pop %v4808
  %v4810 = vadd.f32 %v4809, 1.0
  %v4811 = vrcp.pop %v4810
  %v4812 = vmul.f32 1.0, %v4811
  %v4813 = vxor.u32 %v4734, 2147483648
  %v4814 = vmul.f32 %v4813, 1.442695
  %v4815 = vpow.pop %v4814
  %v4816 = vadd.f32 %v4815, 1.0
  %v4817 = vrcp.pop %v4816
  %v4818 = vmul.f32 1.0, %v4817
  %v4819 = vtanh.pop %v4803
  %v4820 = vxor.u32 %v4805, 2147483648
  %v4821 = vmul.f32 %v4820, 1.442695
  %v4822 = vpow.pop %v4821
  %v4823 = vadd.f32 %v4822, 1.0
  %v4824 = vrcp.pop %v4823
  %v4825 = vmul.f32 1.0, %v4824
  %v4826 = vmul.f32 %v4818, %v4269
  %v4827 = vmul.f32 %v4812, %v4819
  %v4828 = vadd.f32 %v4826, %v4827
  %v4829 = vtanh.pop %v4828
  %v4830 = vmul.f32 %v4825, %v4829
  %s4831 = scalar_lea.vmem [#allocation3], 56
  %4832 = vst [vmem:[%s4831] sm:$0xff] %v4830
  %v4833 = vld [vmem:[#allocation3] sm:$0xff]
  %v4834 = vld [vmem:[#allocation3 + $0x8] sm:$0xff]
  %v4835 = vld [vmem:[#allocation3 + $0x10] sm:$0xff]
  %v4836 = vld [vmem:[#allocation3 + $0x18] sm:$0xff]
  %v4837 = vld [vmem:[#allocation3 + $0x20] sm:$0xff]
  %v4838 = vld [vmem:[#allocation3 + $0x28] sm:$0xff]
  %v4839 = vld [vmem:[#allocation3 + $0x30] sm:$0xff]
  %v4840 = vld [vmem:[#allocation3 + $0x38] sm:$0xff]
  %v4841 = vld [vmem:[%s6] sm:$0xff]
  %v4842 = vld [vmem:[%s6 + $0x8] sm:$0xff]
  %v4843 = vld [vmem:[%s6 + $0x10] sm:$0xff]
  %v4844 = vld [vmem:[%s6 + $0x18] sm:$0xff]
  %v4845 = vld [vmem:[%s6 + $0x20] sm:$0xff]
  %v4846 = vld [vmem:[%s6 + $0x28] sm:$0xff]
  %v4847 = vld [vmem:[%s6 + $0x30] sm:$0xff]
  %v4848 = vld [vmem:[%s6 + $0x38] sm:$0xff]
  %v4849 = vld [vmem:[%s6 + $0x40] sm:$0xff]
  %v4850 = vld [vmem:[%s6 + $0x48] sm:$0xff]
  %v4851 = vld [vmem:[%s6 + $0x50] sm:$0xff]
  %v4852 = vld [vmem:[%s6 + $0x58] sm:$0xff]
  %v4853 = vld [vmem:[%s6 + $0x60] sm:$0xff]
  %v4854 = vld [vmem:[%s6 + $0x68] sm:$0xff]
  %v4855 = vld [vmem:[%s6 + $0x70] sm:$0xff]
  %v4856 = vld [vmem:[%s6 + $0x78] sm:$0xff]
  %v4857 = vld [vmem:[%s7] sm:$0x1]
  %v4859 = vlaneseq
  %v4860 = vshrl.u32 %v4859, 7
  %v4861 = vsub.s32 0, %v4860
  %v4862 = vrot.slane %v4857, %v4861
  %4864 = vmatprep.subr.mxu0 0.0
  %4865 = vmatpush1.msra.mxu0 %v4856
  %4866 = vmatprep.subr.mxu0 0.0
  %4867 = vmatpush1.msra.mxu0 %v4855
  %4868 = vmatprep.subr.mxu0 0.0
  %4869 = vmatpush1.msra.mxu0 %v4854
  %4870 = vmatprep.subr.mxu0 0.0
  %4871 = vmatpush1.msra.mxu0 %v4853
  %4872 = vmatprep.subr.mxu0 0.0
  %4873 = vmatpush1.msra.mxu0 %v4852
  %4874 = vmatprep.subr.mxu0 0.0
  %4875 = vmatpush1.msra.mxu0 %v4851
  %4876 = vmatprep.subr.mxu0 0.0
  %4877 = vmatpush1.msra.mxu0 %v4850
  %4878 = vmatprep.subr.mxu0 0.0
  %4879 = vmatpush1.msra.mxu0 %v4849
  %4880 = vmatprep.subr.mxu0 0.0
  %4881 = vmatpush1.msra.mxu0 %v4848
  %4882 = vmatprep.subr.mxu0 0.0
  %4883 = vmatpush1.msra.mxu0 %v4847
  %4884 = vmatprep.subr.mxu0 0.0
  %4885 = vmatpush1.msra.mxu0 %v4846
  %4886 = vmatprep.subr.mxu0 0.0
  %4887 = vmatpush1.msra.mxu0 %v4845
  %4888 = vmatprep.subr.mxu0 0.0
  %4889 = vmatpush1.msra.mxu0 %v4844
  %4890 = vmatprep.subr.mxu0 0.0
  %4891 = vmatpush1.msra.mxu0 %v4843
  %4892 = vmatprep.subr.mxu0 0.0
  %4893 = vmatpush1.msra.mxu0 %v4842
  %4894 = vmatprep.subr.mxu0 0.0
  %4895 = vmatpush1.msra.mxu0 %v4841
  %4896 = vmatprep.subr.mxu0 0.0
  %4897 = vmatpush2.msra.mxu0 0.0
  %4898 = vmatprep.subr.mxu0 0.0
  %4899 = vmatpush2.msra.mxu0 0.0
  %4900 = vmatprep.subr.mxu0 0.0
  %4901 = vmatpush2.msra.mxu0 0.0
  %4902 = vmatprep.subr.mxu0 0.0
  %4903 = vmatpush2.msra.mxu0 0.0
  %4904 = vmatprep.subr.mxu0 0.0
  %4905 = vmatpush2.msra.mxu0 0.0
  %4906 = vmatprep.subr.mxu0 0.0
  %4907 = vmatpush2.msra.mxu0 0.0
  %4908 = vmatprep.subr.mxu0 0.0
  %4909 = vmatpush2.msra.mxu0 0.0
  %4910 = vmatprep.subr.mxu0 0.0
  %4911 = vmatpush2.msra.mxu0 0.0
  %4912 = vmatprep.subr.mxu0 0.0
  %4913 = vmatpush2.msra.mxu0 0.0
  %4914 = vmatprep.subr.mxu0 0.0
  %4915 = vmatpush2.msra.mxu0 0.0
  %4916 = vmatprep.subr.mxu0 0.0
  %4917 = vmatpush2.msra.mxu0 0.0
  %4918 = vmatprep.subr.mxu0 0.0
  %4919 = vmatpush2.msra.mxu0 0.0
  %4920 = vmatprep.subr.mxu0 0.0
  %4921 = vmatpush2.msra.mxu0 0.0
  %4922 = vmatprep.subr.mxu0 0.0
  %4923 = vmatpush2.msra.mxu0 0.0
  %4924 = vmatprep.subr.mxu0 0.0
  %4925 = vmatpush2.msra.mxu0 0.0
  %4926 = vmatprep.subr.mxu0 0.0
  %4927 = vmatpush2.msra.mxu0 0.0
  %4928 = vmatprep.mubr.f32.mxu0 0.0
  %4929 = vmatmul.mubr.f32.gmra.mxu0 %v4833
  %v4930 = vpop.f32.mrf.mxu0
  %v4931 = vadd.f32 %v4862, %v4930
  %v4932 = vpop.f32.mrf.mxu0
  %4933 = vmatprep.mubr.f32.mxu0 0.0
  %4934 = vmatmul.mubr.f32.gmra.mxu0 %v4834
  %v4935 = vpop.f32.mrf.mxu0
  %v4936 = vadd.f32 %v4862, %v4935
  %v4937 = vpop.f32.mrf.mxu0
  %4938 = vmatprep.mubr.f32.mxu0 0.0
  %4939 = vmatmul.mubr.f32.gmra.mxu0 %v4835
  %v4940 = vpop.f32.mrf.mxu0
  %v4941 = vadd.f32 %v4862, %v4940
  %v4942 = vpop.f32.mrf.mxu0
  %4943 = vmatprep.mubr.f32.mxu0 0.0
  %4944 = vmatmul.mubr.f32.gmra.mxu0 %v4836
  %v4945 = vpop.f32.mrf.mxu0
  %v4946 = vadd.f32 %v4862, %v4945
  %v4947 = vpop.f32.mrf.mxu0
  %4948 = vmatprep.mubr.f32.mxu0 0.0
  %4949 = vmatmul.mubr.f32.gmra.mxu0 %v4837
  %v4950 = vpop.f32.mrf.mxu0
  %v4951 = vadd.f32 %v4862, %v4950
  %v4952 = vpop.f32.mrf.mxu0
  %4953 = vmatprep.mubr.f32.mxu0 0.0
  %4954 = vmatmul.mubr.f32.gmra.mxu0 %v4838
  %v4955 = vpop.f32.mrf.mxu0
  %v4956 = vadd.f32 %v4862, %v4955
  %v4957 = vpop.f32.mrf.mxu0
  %4958 = vmatprep.mubr.f32.mxu0 0.0
  %4959 = vmatmul.mubr.f32.gmra.mxu0 %v4839
  %v4960 = vpop.f32.mrf.mxu0
  %v4961 = vadd.f32 %v4862, %v4960
  %v4962 = vpop.f32.mrf.mxu0
  %4963 = vmatprep.mubr.f32.mxu0 0.0
  %4964 = vmatmul.mubr.f32.gmra.mxu0 %v4840
  %v4965 = vpop.f32.mrf.mxu0
  %v4966 = vadd.f32 %v4862, %v4965
  %v4967 = vpop.f32.mrf.mxu0
  %4968 = vdwg.mxu0
  %v4969 = vtanh.pop %v4931
  %v4970 = vtanh.pop %v4936
  %v4971 = vtanh.pop %v4941
  %v4972 = vtanh.pop %v4946
  %v4973 = vtanh.pop %v4951
  %v4974 = vtanh.pop %v4956
  %v4975 = vtanh.pop %v4961
  %v4976 = vtanh.pop %v4966
  %v4977 = vld [vmem:[%s8] sm:$0xff]
  %v4978 = vld [vmem:[%s8 + $0x8] sm:$0xff]
  %v4979 = vld [vmem:[%s8 + $0x10] sm:$0xff]
  %v4980 = vld [vmem:[%s8 + $0x18] sm:$0xff]
  %v4981 = vld [vmem:[%s8 + $0x20] sm:$0xff]
  %v4982 = vld [vmem:[%s8 + $0x28] sm:$0xff]
  %v4983 = vld [vmem:[%s8 + $0x30] sm:$0xff]
  %v4984 = vld [vmem:[%s8 + $0x38] sm:$0xff]
  %v4985 = vld [vmem:[%s9] sm:$0x1]
  %v4987 = vlaneseq
  %v4988 = vshrl.u32 %v4987, 7
  %v4989 = vsub.s32 0, %v4988
  %v4990 = vrot.slane %v4985, %v4989
  %vm4992 = vcmask 523264
  %v4994 = vsel %vm4992, %v4969, 0
  %v4997 = vsel %vm4992, %v4970, 0
  %v5000 = vsel %vm4992, %v4971, 0
  %v5003 = vsel %vm4992, %v4972, 0
  %v5006 = vsel %vm4992, %v4973, 0
  %v5009 = vsel %vm4992, %v4974, 0
  %v5012 = vsel %vm4992, %v4975, 0
  %v5015 = vsel %vm4992, %v4976, 0
  %5017 = vmatprep.subr.mxu0 0.0
  %5018 = vmatpush1.msra.mxu0 0.0
  %5019 = vmatprep.subr.mxu0 0.0
  %5020 = vmatpush1.msra.mxu0 0.0
  %5021 = vmatprep.subr.mxu0 0.0
  %5022 = vmatpush1.msra.mxu0 0.0
  %5023 = vmatprep.subr.mxu0 0.0
  %5024 = vmatpush1.msra.mxu0 0.0
  %5025 = vmatprep.subr.mxu0 0.0
  %5026 = vmatpush1.msra.mxu0 0.0
  %5027 = vmatprep.subr.mxu0 0.0
  %5028 = vmatpush1.msra.mxu0 0.0
  %5029 = vmatprep.subr.mxu0 0.0
  %5030 = vmatpush1.msra.mxu0 0.0
  %5031 = vmatprep.subr.mxu0 0.0
  %5032 = vmatpush1.msra.mxu0 0.0
  %5033 = vmatprep.subr.mxu0 0.0
  %5034 = vmatpush1.msra.mxu0 %v4984
  %5035 = vmatprep.subr.mxu0 0.0
  %5036 = vmatpush1.msra.mxu0 %v4983
  %5037 = vmatprep.subr.mxu0 0.0
  %5038 = vmatpush1.msra.mxu0 %v4982
  %5039 = vmatprep.subr.mxu0 0.0
  %5040 = vmatpush1.msra.mxu0 %v4981
  %5041 = vmatprep.subr.mxu0 0.0
  %5042 = vmatpush1.msra.mxu0 %v4980
  %5043 = vmatprep.subr.mxu0 0.0
  %5044 = vmatpush1.msra.mxu0 %v4979
  %5045 = vmatprep.subr.mxu0 0.0
  %5046 = vmatpush1.msra.mxu0 %v4978
  %5047 = vmatprep.subr.mxu0 0.0
  %5048 = vmatpush1.msra.mxu0 %v4977
  %5049 = vmatprep.subr.mxu0 0.0
  %5050 = vmatpush2.msra.mxu0 0.0
  %5051 = vmatprep.subr.mxu0 0.0
  %5052 = vmatpush2.msra.mxu0 0.0
  %5053 = vmatprep.subr.mxu0 0.0
  %5054 = vmatpush2.msra.mxu0 0.0
  %5055 = vmatprep.subr.mxu0 0.0
  %5056 = vmatpush2.msra.mxu0 0.0
  %5057 = vmatprep.subr.mxu0 0.0
  %5058 = vmatpush2.msra.mxu0 0.0
  %5059 = vmatprep.subr.mxu0 0.0
  %5060 = vmatpush2.msra.mxu0 0.0
  %5061 = vmatprep.subr.mxu0 0.0
  %5062 = vmatpush2.msra.mxu0 0.0
  %5063 = vmatprep.subr.mxu0 0.0
  %5064 = vmatpush2.msra.mxu0 0.0
  %5065 = vmatprep.subr.mxu0 0.0
  %5066 = vmatpush2.msra.mxu0 0.0
  %5067 = vmatprep.subr.mxu0 0.0
  %5068 = vmatpush2.msra.mxu0 0.0
  %5069 = vmatprep.subr.mxu0 0.0
  %5070 = vmatpush2.msra.mxu0 0.0
  %5071 = vmatprep.subr.mxu0 0.0
  %5072 = vmatpush2.msra.mxu0 0.0
  %5073 = vmatprep.subr.mxu0 0.0
  %5074 = vmatpush2.msra.mxu0 0.0
  %5075 = vmatprep.subr.mxu0 0.0
  %5076 = vmatpush2.msra.mxu0 0.0
  %5077 = vmatprep.subr.mxu0 0.0
  %5078 = vmatpush2.msra.mxu0 0.0
  %5079 = vmatprep.subr.mxu0 0.0
  %5080 = vmatpush2.msra.mxu0 0.0
  %5081 = vmatprep.mubr.f32.mxu0 0.0
  %5082 = vmatmul.mubr.f32.gmra.mxu0 %v4994
  %v5083 = vpop.f32.mrf.mxu0
  %v5084 = vadd.f32 %v4990, %v5083
  %v5085 = vpop.f32.mrf.mxu0
  %5086 = vmatprep.mubr.f32.mxu0 0.0
  %5087 = vmatmul.mubr.f32.gmra.mxu0 %v4997
  %v5088 = vpop.f32.mrf.mxu0
  %v5089 = vadd.f32 %v4990, %v5088
  %v5090 = vpop.f32.mrf.mxu0
  %5091 = vmatprep.mubr.f32.mxu0 0.0
  %5092 = vmatmul.mubr.f32.gmra.mxu0 %v5000
  %v5093 = vpop.f32.mrf.mxu0
  %v5094 = vadd.f32 %v4990, %v5093
  %v5095 = vpop.f32.mrf.mxu0
  %5096 = vmatprep.mubr.f32.mxu0 0.0
  %5097 = vmatmul.mubr.f32.gmra.mxu0 %v5003
  %v5098 = vpop.f32.mrf.mxu0
  %v5099 = vadd.f32 %v4990, %v5098
  %v5100 = vpop.f32.mrf.mxu0
  %5101 = vmatprep.mubr.f32.mxu0 0.0
  %5102 = vmatmul.mubr.f32.gmra.mxu0 %v5006
  %v5103 = vpop.f32.mrf.mxu0
  %v5104 = vadd.f32 %v4990, %v5103
  %v5105 = vpop.f32.mrf.mxu0
  %5106 = vmatprep.mubr.f32.mxu0 0.0
  %5107 = vmatmul.mubr.f32.gmra.mxu0 %v5009
  %v5108 = vpop.f32.mrf.mxu0
  %v5109 = vadd.f32 %v4990, %v5108
  %v5110 = vpop.f32.mrf.mxu0
  %5111 = vmatprep.mubr.f32.mxu0 0.0
  %5112 = vmatmul.mubr.f32.gmra.mxu0 %v5012
  %v5113 = vpop.f32.mrf.mxu0
  %v5114 = vadd.f32 %v4990, %v5113
  %v5115 = vpop.f32.mrf.mxu0
  %5116 = vmatprep.mubr.f32.mxu0 0.0
  %5117 = vmatmul.mubr.f32.gmra.mxu0 %v5015
  %v5118 = vpop.f32.mrf.mxu0
  %v5119 = vadd.f32 %v4990, %v5118
  %v5120 = vpop.f32.mrf.mxu0
  %5121 = vdwg.mxu0
  %v5122 = vtanh.pop %v5084
  %v5123 = vtanh.pop %v5089
  %v5124 = vtanh.pop %v5094
  %v5125 = vtanh.pop %v5099
  %v5126 = vtanh.pop %v5104
  %v5127 = vtanh.pop %v5109
  %v5128 = vtanh.pop %v5114
  %v5129 = vtanh.pop %v5119
  %v5130 = vld [vmem:[%s10] sm:$0xff]
  %v5131 = vld [vmem:[%s10 + $0x8] sm:$0xff]
  %v5132 = vld [vmem:[%s10 + $0x10] sm:$0xff]
  %v5133 = vld [vmem:[%s10 + $0x18] sm:$0xff]
  %v5134 = vld [vmem:[%s10 + $0x20] sm:$0xff]
  %v5135 = vld [vmem:[%s10 + $0x28] sm:$0xff]
  %v5136 = vld [vmem:[%s10 + $0x30] sm:$0xff]
  %v5137 = vld [vmem:[%s10 + $0x38] sm:$0xff]
  %v5138 = vld [vmem:[%s11] sm:$0x1]
  %v5140 = vlaneseq
  %v5141 = vshrl.u32 %v5140, 7
  %v5142 = vsub.s32 0, %v5141
  %v5143 = vrot.slane %v5138, %v5142
  %v5146 = vsel %vm4992, %v5122, 0
  %v5149 = vsel %vm4992, %v5123, 0
  %v5152 = vsel %vm4992, %v5124, 0
  %v5155 = vsel %vm4992, %v5125, 0
  %v5158 = vsel %vm4992, %v5126, 0
  %v5161 = vsel %vm4992, %v5127, 0
  %v5164 = vsel %vm4992, %v5128, 0
  %v5167 = vsel %vm4992, %v5129, 0
  %5169 = vmatprep.subr.mxu0 0.0
  %5170 = vmatpush1.msra.mxu0 0.0
  %5171 = vmatprep.subr.mxu0 0.0
  %5172 = vmatpush1.msra.mxu0 0.0
  %5173 = vmatprep.subr.mxu0 0.0
  %5174 = vmatpush1.msra.mxu0 0.0
  %5175 = vmatprep.subr.mxu0 0.0
  %5176 = vmatpush1.msra.mxu0 0.0
  %5177 = vmatprep.subr.mxu0 0.0
  %5178 = vmatpush1.msra.mxu0 0.0
  %5179 = vmatprep.subr.mxu0 0.0
  %5180 = vmatpush1.msra.mxu0 0.0
  %5181 = vmatprep.subr.mxu0 0.0
  %5182 = vmatpush1.msra.mxu0 0.0
  %5183 = vmatprep.subr.mxu0 0.0
  %5184 = vmatpush1.msra.mxu0 0.0
  %5185 = vmatprep.subr.mxu0 0.0
  %5186 = vmatpush1.msra.mxu0 %v5137
  %5187 = vmatprep.subr.mxu0 0.0
  %5188 = vmatpush1.msra.mxu0 %v5136
  %5189 = vmatprep.subr.mxu0 0.0
  %5190 = vmatpush1.msra.mxu0 %v5135
  %5191 = vmatprep.subr.mxu0 0.0
  %5192 = vmatpush1.msra.mxu0 %v5134
  %5193 = vmatprep.subr.mxu0 0.0
  %5194 = vmatpush1.msra.mxu0 %v5133
  %5195 = vmatprep.subr.mxu0 0.0
  %5196 = vmatpush1.msra.mxu0 %v5132
  %5197 = vmatprep.subr.mxu0 0.0
  %5198 = vmatpush1.msra.mxu0 %v5131
  %5199 = vmatprep.subr.mxu0 0.0
  %5200 = vmatpush1.msra.mxu0 %v5130
  %5201 = vmatprep.subr.mxu0 0.0
  %5202 = vmatpush2.msra.mxu0 0.0
  %5203 = vmatprep.subr.mxu0 0.0
  %5204 = vmatpush2.msra.mxu0 0.0
  %5205 = vmatprep.subr.mxu0 0.0
  %5206 = vmatpush2.msra.mxu0 0.0
  %5207 = vmatprep.subr.mxu0 0.0
  %5208 = vmatpush2.msra.mxu0 0.0
  %5209 = vmatprep.subr.mxu0 0.0
  %5210 = vmatpush2.msra.mxu0 0.0
  %5211 = vmatprep.subr.mxu0 0.0
  %5212 = vmatpush2.msra.mxu0 0.0
  %5213 = vmatprep.subr.mxu0 0.0
  %5214 = vmatpush2.msra.mxu0 0.0
  %5215 = vmatprep.subr.mxu0 0.0
  %5216 = vmatpush2.msra.mxu0 0.0
  %5217 = vmatprep.subr.mxu0 0.0
  %5218 = vmatpush2.msra.mxu0 0.0
  %5219 = vmatprep.subr.mxu0 0.0
  %5220 = vmatpush2.msra.mxu0 0.0
  %5221 = vmatprep.subr.mxu0 0.0
  %5222 = vmatpush2.msra.mxu0 0.0
  %5223 = vmatprep.subr.mxu0 0.0
  %5224 = vmatpush2.msra.mxu0 0.0
  %5225 = vmatprep.subr.mxu0 0.0
  %5226 = vmatpush2.msra.mxu0 0.0
  %5227 = vmatprep.subr.mxu0 0.0
  %5228 = vmatpush2.msra.mxu0 0.0
  %5229 = vmatprep.subr.mxu0 0.0
  %5230 = vmatpush2.msra.mxu0 0.0
  %5231 = vmatprep.subr.mxu0 0.0
  %5232 = vmatpush2.msra.mxu0 0.0
  %5233 = vmatprep.mubr.f32.mxu0 0.0
  %5234 = vmatmul.mubr.f32.gmra.mxu0 %v5146
  %v5235 = vpop.f32.mrf.mxu0
  %v5236 = vadd.f32 %v5143, %v5235
  %v5237 = vpop.f32.mrf.mxu0
  %5238 = vmatprep.mubr.f32.mxu0 0.0
  %5239 = vmatmul.mubr.f32.gmra.mxu0 %v5149
  %v5240 = vpop.f32.mrf.mxu0
  %v5241 = vadd.f32 %v5143, %v5240
  %v5242 = vpop.f32.mrf.mxu0
  %5243 = vmatprep.mubr.f32.mxu0 0.0
  %5244 = vmatmul.mubr.f32.gmra.mxu0 %v5152
  %v5245 = vpop.f32.mrf.mxu0
  %v5246 = vadd.f32 %v5143, %v5245
  %v5247 = vpop.f32.mrf.mxu0
  %5248 = vmatprep.mubr.f32.mxu0 0.0
  %5249 = vmatmul.mubr.f32.gmra.mxu0 %v5155
  %v5250 = vpop.f32.mrf.mxu0
  %v5251 = vadd.f32 %v5143, %v5250
  %v5252 = vpop.f32.mrf.mxu0
  %5253 = vmatprep.mubr.f32.mxu0 0.0
  %5254 = vmatmul.mubr.f32.gmra.mxu0 %v5158
  %v5255 = vpop.f32.mrf.mxu0
  %v5256 = vadd.f32 %v5143, %v5255
  %v5257 = vpop.f32.mrf.mxu0
  %5258 = vmatprep.mubr.f32.mxu0 0.0
  %5259 = vmatmul.mubr.f32.gmra.mxu0 %v5161
  %v5260 = vpop.f32.mrf.mxu0
  %v5261 = vadd.f32 %v5143, %v5260
  %v5262 = vpop.f32.mrf.mxu0
  %5263 = vmatprep.mubr.f32.mxu0 0.0
  %5264 = vmatmul.mubr.f32.gmra.mxu0 %v5164
  %v5265 = vpop.f32.mrf.mxu0
  %v5266 = vadd.f32 %v5143, %v5265
  %v5267 = vpop.f32.mrf.mxu0
  %5268 = vmatprep.mubr.f32.mxu0 0.0
  %5269 = vmatmul.mubr.f32.gmra.mxu0 %v5167
  %v5270 = vpop.f32.mrf.mxu0
  %v5271 = vadd.f32 %v5143, %v5270
  %v5272 = vpop.f32.mrf.mxu0
  %5273 = vdwg.mxu0
  %vm5274 = vcmask 31744
  %5275 = vst.msk [vmem:[%s12] sm:$0xff] %vm5274, %v5236
  %5276 = vst.msk [vmem:[%s12 + $0x8] sm:$0xff] %vm5274, %v5241
  %5277 = vst.msk [vmem:[%s12 + $0x10] sm:$0xff] %vm5274, %v5246
  %5278 = vst.msk [vmem:[%s12 + $0x18] sm:$0xff] %vm5274, %v5251
  %5279 = vst.msk [vmem:[%s12 + $0x20] sm:$0xff] %vm5274, %v5256
  %5280 = vst.msk [vmem:[%s12 + $0x28] sm:$0xff] %vm5274, %v5261
  %5281 = vst.msk [vmem:[%s12 + $0x30] sm:$0xff] %vm5274, %v5266
  %5282 = vst.msk [vmem:[%s12 + $0x38] sm:$0xff] %vm5274, %v5271
  // Predicated region
  $region50: #{rnn_forward.1} parent=0 // pred_check
    _
  $region51: #{rnn_forward.1} parent=0 // pred_check_branch
    %5284 = sbr.rel (0) target = $region53
  $region52: #{rnn_forward.1} parent=0 // pred_region
    _
  $region53: #{rnn_forward.1} parent=0 // pred_fallthru
    _
  // Predicated region
  $region54: #{rnn_forward.1} parent=0 // pred_check
    _
  $region55: #{rnn_forward.1} parent=0 // pred_check_branch
    %5286 = sbr.rel (0) target = $region57
  $region56: #{rnn_forward.1} parent=0 // pred_region
    _
  $region57: #{rnn_forward.1} parent=0 // pred_fallthru
    _

</llo_original>
